<compile_context>
chip_gen: v6e
topology: v6e:2x2x1
jax: 0.10.0
libtpu: 0.0.40
codegen_flags: <defaults>
</compile_context>

<pallas_src>
import jax
import jax.numpy as jnp
from jax import lax
from jax.experimental import pallas as pl
from jax.experimental.pallas import tpu as pltpu


def _round_up(x, m):
    return (x + m - 1) // m * m


def _nbytes(shape, dtype):
    n = 1
    for s in shape:
        n *= int(s)
    return n * jnp.dtype(dtype).itemsize


def _make_fused_kernel(D, H, W, CP_IN, CP_OUT, S, PAD):
    """Build the fused conv1+relu1+conv2+relu2 kernel for static shapes."""
    taps = [(kd, kh, kw) for kd in range(3) for kh in range(3) for kw in range(3)]

    def kernel(x_ref, w1_ref, b1_ref, w2_ref, b2_ref, m_ref, o_ref,
               xp_ref, h1p_ref, slab_ref):
        # x_ref:    (1, CP_IN, S)        channel-padded input, spatial flattened
        # w1_ref:   (CP_OUT, 27*CP_IN)   bf16, tap-major K, zero-padded channels
        # b1_ref:   (CP_OUT, 1)          f32 (zero for pad channels)
        # w2_ref:   (Cout, 27*CP_OUT)    bf16
        # b2_ref:   (Cout, 1)            f32
        # m_ref:    (9, S)               f32 0/1 masks for the 9 (kh, kw) halo taps
        # o_ref:    (1, Cout, S)         output (lane-dense store)
        # xp_ref:   (CP_IN,  S + 2*PAD)  f32 zero-padded flat input scratch
        # h1p_ref:  (CP_OUT, S + 2*PAD)  f32 zero-padded flat layer-1 activation
        # slab_ref: (27*max(CP_IN,CP_OUT), S) bf16, SHARED im2col slab for both layers

        # Load the 9 (kh, kw) halo masks once; reused by both layers.
        mrows = [m_ref[i:i + 1, :] for i in range(9)]

        def build_slab(src_ref, cp):
            # Each tap is a static lane-shifted slice of the padded flat buffer.
            # Depth out-of-range taps fall into the zero pad; H/W out-of-range taps are
            # masked.  cp is a multiple of 16, so every bf16 store below is a full,
            # sublane-tile-aligned 16k-row store.
            for t, (kd, kh, kw) in enumerate(taps):
                off = (kd - 1) * H * W + (kh - 1) * W + (kw - 1)
                piece = src_ref[:, PAD + off:PAD + off + S]          # (cp, S) f32
                if kh != 1 or kw != 1:                               # H/W halo mask
                    piece = piece * mrows[kh * 3 + kw]               # f32 VPU (v5e-safe)
                slab_ref[t * cp:(t + 1) * cp, :] = piece.astype(jnp.bfloat16)

        # ---- layer 1: conv3x3x3 + bias + ReLU (one K=27*CP_IN matmul) --------------
        # Zero only the halo strips (PAD is a multiple of 128 -> aligned full vst);
        # the interior is fully overwritten below.  Done every step (megacore-safe).
        xp_ref[:, :PAD] = jnp.zeros((CP_IN, PAD), jnp.float32)
        xp_ref[:, PAD + S:] = jnp.zeros((CP_IN, PAD), jnp.float32)
        xp_ref[:, PAD:PAD + S] = x_ref[0].astype(jnp.float32)
        build_slab(xp_ref, CP_IN)
        h1 = jnp.dot(w1_ref[...], slab_ref[:27 * CP_IN, :],          # (CP_OUT, S) f32
                     preferred_element_type=jnp.float32)
        h1 = jnp.maximum(h1 + b1_ref[...], 0.0)                      # pad rows stay 0

        # ---- layer 2: fused; intermediate never leaves VMEM ------------------------
        h1p_ref[:, :PAD] = jnp.zeros((CP_OUT, PAD), jnp.float32)
        h1p_ref[:, PAD + S:] = jnp.zeros((CP_OUT, PAD), jnp.float32)
        h1p_ref[:, PAD:PAD + S] = h1
        build_slab(h1p_ref, CP_OUT)                                  # reuses slab_ref
        out = jnp.dot(w2_ref[...], slab_ref[:27 * CP_OUT, :],        # (Cout, S) f32
                      preferred_element_type=jnp.float32)
        out = jnp.maximum(out + b2_ref[...], 0.0)

        o_ref[0] = out.astype(o_ref.dtype)                           # lane-dense store

    return kernel


def conv_relu_encoder3d_forward(x_ncdhw, params):
    """Fused forward.  x: (N, Cin, D, H, W) -> (N, Cout, D, H, W)."""
    w1, b1, w2, b2 = params            # w*: (Cout, Cin/Cout, 3, 3, 3) OIDHW; b*: (Cout,)
    N, Cin, D, H, W = x_ncdhw.shape
    Cout = w1.shape[0]
    S = D * H * W
    assert S % 128 == 0, "flattened spatial dim must be a multiple of 128"

    # PAD covers the largest |flat tap offset| and is rounded up to a lane multiple so
    # the interior writes into the padded buffers are lane-aligned.
    # Depth-halo invariant (k=3, pad=1 only): any out-of-depth tap with in-range H/W
    # lands in [-H*W, -1] or [S, S+H*W-1], i.e. inside the zero pad; out-of-range H/W
    # taps are masked regardless of where they land.  Fragile if k/stride/pad change.
    PAD = _round_up(H * W + W + 1, 128)
    assert PAD >= H * W + W + 1

    # Channel counts padded to the bf16 sublane tile (16 rows) so every per-tap slab
    # store is tile-aligned.  The padded weight columns/rows are zero -> free on MXU.
    CP_IN = _round_up(Cin, 16)
    CP_OUT = _round_up(Cout, 16)
    CP_MAX = max(CP_IN, CP_OUT)

    # PyTorch OIDHW weights -> matmul form, K ordered (kd, kh, kw, ci) to match the
    # im2col slab rows built in the kernel.  Layer-1 output channels are padded to
    # CP_OUT so h1 directly fills the padded activation buffer with aligned stores.
    w1p = jnp.zeros((CP_OUT, CP_IN, 3, 3, 3), jnp.float32)
    w1p = w1p.at[:Cout, :Cin].set(w1.astype(jnp.float32))
    w2p = jnp.zeros((Cout, CP_OUT, 3, 3, 3), jnp.float32)
    w2p = w2p.at[:, :Cout].set(w2.astype(jnp.float32))
    w1_mat = jnp.transpose(w1p, (0, 2, 3, 4, 1)).reshape(CP_OUT, 27 * CP_IN)
    w2_mat = jnp.transpose(w2p, (0, 2, 3, 4, 1)).reshape(Cout, 27 * CP_OUT)
    w1_mat = w1_mat.astype(jnp.bfloat16)
    w2_mat = w2_mat.astype(jnp.bfloat16)
    b1c = jnp.zeros((CP_OUT, 1), jnp.float32).at[:Cout, 0].set(b1.astype(jnp.float32))
    b2c = b2.reshape(Cout, 1).astype(jnp.float32)

    # 0/1 masks (one per (kh, kw) tap) zeroing the H/W halo taps over flattened spatial
    # positions.  The depth halo is handled by zero padding inside the kernel.
    p = jnp.arange(S)
    hh = (p // W) % H
    ww = p % W
    mask_rows = []
    for kh in range(3):
        for kw in range(3):
            ok_h = jnp.logical_and(hh + (kh - 1) >= 0, hh + (kh - 1) < H)
            ok_w = jnp.logical_and(ww + (kw - 1) >= 0, ww + (kw - 1) < W)
            mask_rows.append(jnp.logical_and(ok_h, ok_w).astype(jnp.float32))
    masks = jnp.stack(mask_rows, axis=0)            # (9, S)

    # Channels-first + flattened spatial (free reshape), channel-padded to CP_IN so the
    # kernel's interior store is a single fully aligned write.
    x_flat = x_ncdhw.reshape(N, Cin, S)
    if CP_IN != Cin:
        x_flat = jnp.pad(x_flat, ((0, 0), (0, CP_IN - Cin), (0, 0)))

    kernel = _make_fused_kernel(D, H, W, CP_IN, CP_OUT, S, PAD)

    # Explicit VMEM budget: scratch + double-buffered blocks, with headroom, capped at
    # v7x's 64 MiB physical VMEM.  (Default scoped limits are 16/32 MiB.)
    block_bytes = (
        _nbytes((1, CP_IN, S), x_ncdhw.dtype) + _nbytes((1, Cout, S), x_ncdhw.dtype)
        + _nbytes((CP_OUT, 27 * CP_IN), jnp.bfloat16)
        + _nbytes((Cout, 27 * CP_OUT), jnp.bfloat16)
        + _nbytes((CP_OUT, 1), jnp.float32) + _nbytes((Cout, 1), jnp.float32)
        + _nbytes((9, S), jnp.float32))
    scratch_bytes = (
        _nbytes((CP_IN, S + 2 * PAD), jnp.float32)
        + _nbytes((CP_OUT, S + 2 * PAD), jnp.float32)
        + _nbytes((27 * CP_MAX, S), jnp.bfloat16))
    footprint = 2 * block_bytes + scratch_bytes
    vmem_limit = min(64 * 1024 * 1024,
                     max(32 * 1024 * 1024, int(1.5 * footprint) + (4 << 20)))

    flops = 2 * N * S * 27 * (Cin * Cout + Cout * Cout)
    bytes_accessed = (_nbytes((N, CP_IN, S), x_ncdhw.dtype)
                      + _nbytes((N, Cout, S), x_ncdhw.dtype)
                      + _nbytes((CP_OUT, 27 * CP_IN), jnp.bfloat16)
                      + _nbytes((Cout, 27 * CP_OUT), jnp.bfloat16)
                      + _nbytes((9, S), jnp.float32))

    out_flat = pl.pallas_call(
        kernel,
        out_shape=jax.ShapeDtypeStruct((N, Cout, S), x_ncdhw.dtype),
        grid_spec=pltpu.PrefetchScalarGridSpec(
            num_scalar_prefetch=0,
            grid=(N,),
            in_specs=[
                pl.BlockSpec((1, CP_IN, S), lambda n: (n, 0, 0)),
                pl.BlockSpec((CP_OUT, 27 * CP_IN), lambda n: (0, 0)),
                pl.BlockSpec((CP_OUT, 1), lambda n: (0, 0)),
                pl.BlockSpec((Cout, 27 * CP_OUT), lambda n: (0, 0)),
                pl.BlockSpec((Cout, 1), lambda n: (0, 0)),
                pl.BlockSpec((9, S), lambda n: (0, 0)),
            ],
            out_specs=pl.BlockSpec((1, Cout, S), lambda n: (n, 0, 0)),
            scratch_shapes=[
                pltpu.VMEM((CP_IN, S + 2 * PAD), jnp.float32),    # padded flat input
                pltpu.VMEM((CP_OUT, S + 2 * PAD), jnp.float32),   # padded flat conv1 act
                pltpu.VMEM((27 * CP_MAX, S), jnp.bfloat16),       # SHARED im2col slab
            ]),
        compiler_params=pltpu.CompilerParams(
            dimension_semantics=("parallel",),
            vmem_limit_bytes=vmem_limit),
        cost_estimate=pl.CostEstimate(flops=flops, transcendentals=0,
                                      bytes_accessed=bytes_accessed),
    )(x_flat, w1_mat, b1c, w2_mat, b2c, masks)

    return out_flat.reshape(N, Cout, D, H, W)       # free reshape back to NCDHW


# ----------------------------- references ---------------------------------------------
def _conv3d(x, w, b):
    dn = lax.conv_dimension_numbers(x.shape, w.shape, ("NCDHW", "OIDHW", "NCDHW"))
    y = lax.conv_general_dilated(x, w, (1, 1, 1), ((1, 1), (1, 1), (1, 1)),
                                 dimension_numbers=dn,
                                 precision=lax.Precision.HIGHEST)
    return y + b.reshape(1, -1, 1, 1, 1)


def _reference_forward_f32(x, params):
    """Full fp32 reference (PyTorch Conv3d semantics)."""
    w1, b1, w2, b2 = params
    y = jnp.maximum(_conv3d(x, w1, b1), 0.0)
    return jnp.maximum(_conv3d(y, w2, b2), 0.0)


def _reference_forward_bf16_emulated(x, params):
    """Emulates the kernel's numerics: bf16-quantized operands, f32 accumulation."""
    w1, b1, w2, b2 = params
    q = lambda a: a.astype(jnp.bfloat16).astype(jnp.float32)
    y = jnp.maximum(_conv3d(q(x), q(w1), b1), 0.0)
    return jnp.maximum(_conv3d(q(y), q(w2), b2), 0.0)


if __name__ == "__main__":
    # Small shapes: batch=2, in_channels=4, out_channels=8, spatial D=H=W=8
    N, Cin, Cout, D, H, W = 2, 4, 8, 8, 8, 8

    key = jax.random.PRNGKey(0)
    kx, kw1, kb1, kw2, kb2 = jax.random.split(key, 5)

    x = jax.random.normal(kx, (N, Cin, D, H, W), dtype=jnp.float32)

    # Deterministic parameter init (shapes match nn.Conv3d(Cin, Cout, 3, padding=1))
    fan1 = Cin * 27
    fan2 = Cout * 27
    w1 = jax.random.uniform(kw1, (Cout, Cin, 3, 3, 3), jnp.float32,
                            -1.0 / fan1 ** 0.5, 1.0 / fan1 ** 0.5)
    b1 = jax.random.uniform(kb1, (Cout,), jnp.float32,
                            -1.0 / fan1 ** 0.5, 1.0 / fan1 ** 0.5)
    w2 = jax.random.uniform(kw2, (Cout, Cout, 3, 3, 3), jnp.float32,
                            -1.0 / fan2 ** 0.5, 1.0 / fan2 ** 0.5)
    b2 = jax.random.uniform(kb2, (Cout,), jnp.float32,
                            -1.0 / fan2 ** 0.5, 1.0 / fan2 ** 0.5)
    params = (w1, b1, w2, b2)

    out = jax.jit(conv_relu_encoder3d_forward)(x, params)
    out = jax.block_until_ready(out)
    assert out.shape == (N, Cout, D, H, W), out.shape

    # Tight check vs a reference that emulates the kernel's bf16-operand numerics.
    ref_bf16 = jax.block_until_ready(_reference_forward_bf16_emulated(x, params))
    assert jnp.allclose(out, ref_bf16, atol=2e-3, rtol=2e-3), \
        "mismatch vs bf16-emulated reference"

    # Loose sanity check vs the full fp32 reference (bf16 MXU operands -> ~1e-2 agreement).
    ref_f32 = jax.block_until_ready(_reference_forward_f32(x, params))
    assert jnp.allclose(out, ref_f32, atol=5e-2, rtol=5e-2), \
        "mismatch vs fp32 reference"

    print("KERNEL_OK")
</pallas_src>

<mosaic_0001>
module attributes {stable_mosaic.version = 11 : i64} {
  func.func @kernel(%arg0: i32, %arg1: memref<1x16x512xf32, #tpu.memory_space<vmem>>, %arg2: memref<16x432xbf16, #tpu.memory_space<vmem>>, %arg3: memref<16x1xf32, #tpu.memory_space<vmem>>, %arg4: memref<8x432xbf16, #tpu.memory_space<vmem>>, %arg5: memref<8x1xf32, #tpu.memory_space<vmem>>, %arg6: memref<9x512xf32, #tpu.memory_space<vmem>>, %arg7: memref<1x8x512xf32, #tpu.memory_space<vmem>>, %arg8: memref<16x768xf32, #tpu.memory_space<vmem>>, %arg9: memref<16x768xf32, #tpu.memory_space<vmem>>, %arg10: memref<432x512xbf16, #tpu.memory_space<vmem>>) attributes {dimension_semantics = [#tpu.dimension_semantics<parallel>], iteration_bounds = array<i64: 2>, scalar_prefetch = 0 : i64, scratch_operands = 3 : i64, tpu.core_type = #tpu.core_type<tc>, window_params = [{transform_indices = @transform_0, window_bounds = array<i64: 1, 16, 512>}, {pipeline_mode = #tpu.pipeline_mode<synchronous>, transform_indices = @transform_1, window_bounds = array<i64: 16, 432>}, {pipeline_mode = #tpu.pipeline_mode<synchronous>, transform_indices = @transform_2, window_bounds = array<i64: 16, 1>}, {pipeline_mode = #tpu.pipeline_mode<synchronous>, transform_indices = @transform_3, window_bounds = array<i64: 8, 432>}, {pipeline_mode = #tpu.pipeline_mode<synchronous>, transform_indices = @transform_4, window_bounds = array<i64: 8, 1>}, {pipeline_mode = #tpu.pipeline_mode<synchronous>, transform_indices = @transform_5, window_bounds = array<i64: 9, 512>}, {transform_indices = @transform_6, window_bounds = array<i64: 1, 8, 512>}]} {
    %c0 = arith.constant 0 : index
    %c0_0 = arith.constant 0 : index
    %0 = vector.load %arg6[%c0, %c0_0] : memref<9x512xf32, #tpu.memory_space<vmem>>, vector<1x512xf32>
    %c1 = arith.constant 1 : index
    %c0_1 = arith.constant 0 : index
    %1 = vector.load %arg6[%c1, %c0_1] : memref<9x512xf32, #tpu.memory_space<vmem>>, vector<1x512xf32>
    %c2 = arith.constant 2 : index
    %c0_2 = arith.constant 0 : index
    %2 = vector.load %arg6[%c2, %c0_2] : memref<9x512xf32, #tpu.memory_space<vmem>>, vector<1x512xf32>
    %c3 = arith.constant 3 : index
    %c0_3 = arith.constant 0 : index
    %3 = vector.load %arg6[%c3, %c0_3] : memref<9x512xf32, #tpu.memory_space<vmem>>, vector<1x512xf32>
    %c5 = arith.constant 5 : index
    %c0_4 = arith.constant 0 : index
    %4 = vector.load %arg6[%c5, %c0_4] : memref<9x512xf32, #tpu.memory_space<vmem>>, vector<1x512xf32>
    %c6 = arith.constant 6 : index
    %c0_5 = arith.constant 0 : index
    %5 = vector.load %arg6[%c6, %c0_5] : memref<9x512xf32, #tpu.memory_space<vmem>>, vector<1x512xf32>
    %c7 = arith.constant 7 : index
    %c0_6 = arith.constant 0 : index
    %6 = vector.load %arg6[%c7, %c0_6] : memref<9x512xf32, #tpu.memory_space<vmem>>, vector<1x512xf32>
    %c8 = arith.constant 8 : index
    %c0_7 = arith.constant 0 : index
    %7 = vector.load %arg6[%c8, %c0_7] : memref<9x512xf32, #tpu.memory_space<vmem>>, vector<1x512xf32>
    %cst = arith.constant 0.000000e+00 : f32
    %8 = vector.broadcast %cst : f32 to vector<16x128xf32>
    %c0_8 = arith.constant 0 : index
    %c0_9 = arith.constant 0 : index
    %9 = vector.load %arg8[%c0_8, %c0_9] : memref<16x768xf32, #tpu.memory_space<vmem>>, vector<16x128xf32>
    tpu.vector_store %arg8[%c0_8, %c0_9], %8 {strides = array<i32>} : memref<16x768xf32, #tpu.memory_space<vmem>>, vector<16x128xf32>,
    %cst_10 = arith.constant 0.000000e+00 : f32
    %10 = vector.broadcast %cst_10 : f32 to vector<16x128xf32>
    %c0_11 = arith.constant 0 : index
    %c640 = arith.constant 640 : index
    %11 = vector.load %arg8[%c0_11, %c640] : memref<16x768xf32, #tpu.memory_space<vmem>>, vector<16x128xf32>
    tpu.vector_store %arg8[%c0_11, %c640], %10 {strides = array<i32>} : memref<16x768xf32, #tpu.memory_space<vmem>>, vector<16x128xf32>,
    %c0_12 = arith.constant 0 : index
    %c0_13 = arith.constant 0 : index
    %c0_14 = arith.constant 0 : index
    %12 = vector.load %arg1[%c0_12, %c0_13, %c0_14] : memref<1x16x512xf32, #tpu.memory_space<vmem>>, vector<1x16x512xf32>
    %13 = vector.shape_cast %12 : vector<1x16x512xf32> to vector<16x512xf32>
    %c0_15 = arith.constant 0 : index
    %c128 = arith.constant 128 : index
    %14 = vector.load %arg8[%c0_15, %c128] : memref<16x768xf32, #tpu.memory_space<vmem>>, vector<16x512xf32>
    tpu.vector_store %arg8[%c0_15, %c128], %13 {strides = array<i32>} : memref<16x768xf32, #tpu.memory_space<vmem>>, vector<16x512xf32>,
    %c0_16 = arith.constant 0 : index
    %c55 = arith.constant 55 : index
    %15 = vector.load %arg8[%c0_16, %c55] : memref<16x768xf32, #tpu.memory_space<vmem>>, vector<16x512xf32>
    %16 = vector.broadcast %0 : vector<1x512xf32> to vector<16x512xf32>
    %17 = arith.mulf %15, %16 : vector<16x512xf32>
    %18 = arith.truncf %17 : vector<16x512xf32> to vector<16x512xbf16>
    %c0_17 = arith.constant 0 : index
    %c0_18 = arith.constant 0 : index
    %19 = vector.load %arg10[%c0_17, %c0_18] : memref<432x512xbf16, #tpu.memory_space<vmem>>, vector<16x512xbf16>
    tpu.vector_store %arg10[%c0_17, %c0_18], %18 {strides = array<i32>} : memref<432x512xbf16, #tpu.memory_space<vmem>>, vector<16x512xbf16>,
    %c0_19 = arith.constant 0 : index
    %c56 = arith.constant 56 : index
    %20 = vector.load %arg8[%c0_19, %c56] : memref<16x768xf32, #tpu.memory_space<vmem>>, vector<16x512xf32>
    %21 = vector.broadcast %1 : vector<1x512xf32> to vector<16x512xf32>
    %22 = arith.mulf %20, %21 : vector<16x512xf32>
    %23 = arith.truncf %22 : vector<16x512xf32> to vector<16x512xbf16>
    %c16 = arith.constant 16 : index
    %c0_20 = arith.constant 0 : index
    %24 = vector.load %arg10[%c16, %c0_20] : memref<432x512xbf16, #tpu.memory_space<vmem>>, vector<16x512xbf16>
    tpu.vector_store %arg10[%c16, %c0_20], %23 {strides = array<i32>} : memref<432x512xbf16, #tpu.memory_space<vmem>>, vector<16x512xbf16>,
    %c0_21 = arith.constant 0 : index
    %c57 = arith.constant 57 : index
    %25 = vector.load %arg8[%c0_21, %c57] : memref<16x768xf32, #tpu.memory_space<vmem>>, vector<16x512xf32>
    %26 = vector.broadcast %2 : vector<1x512xf32> to vector<16x512xf32>
    %27 = arith.mulf %25, %26 : vector<16x512xf32>
    %28 = arith.truncf %27 : vector<16x512xf32> to vector<16x512xbf16>
    %c32 = arith.constant 32 : index
    %c0_22 = arith.constant 0 : index
    %29 = vector.load %arg10[%c32, %c0_22] : memref<432x512xbf16, #tpu.memory_space<vmem>>, vector<16x512xbf16>
    tpu.vector_store %arg10[%c32, %c0_22], %28 {strides = array<i32>} : memref<432x512xbf16, #tpu.memory_space<vmem>>, vector<16x512xbf16>,
    %c0_23 = arith.constant 0 : index
    %c63 = arith.constant 63 : index
    %30 = vector.load %arg8[%c0_23, %c63] : memref<16x768xf32, #tpu.memory_space<vmem>>, vector<16x512xf32>
    %31 = vector.broadcast %3 : vector<1x512xf32> to vector<16x512xf32>
    %32 = arith.mulf %30, %31 : vector<16x512xf32>
    %33 = arith.truncf %32 : vector<16x512xf32> to vector<16x512xbf16>
    %c48 = arith.constant 48 : index
    %c0_24 = arith.constant 0 : index
    %34 = vector.load %arg10[%c48, %c0_24] : memref<432x512xbf16, #tpu.memory_space<vmem>>, vector<16x512xbf16>
    tpu.vector_store %arg10[%c48, %c0_24], %33 {strides = array<i32>} : memref<432x512xbf16, #tpu.memory_space<vmem>>, vector<16x512xbf16>,
    %c0_25 = arith.constant 0 : index
    %c64 = arith.constant 64 : index
    %35 = vector.load %arg8[%c0_25, %c64] : memref<16x768xf32, #tpu.memory_space<vmem>>, vector<16x512xf32>
    %36 = arith.truncf %35 : vector<16x512xf32> to vector<16x512xbf16>
    %c64_26 = arith.constant 64 : index
    %c0_27 = arith.constant 0 : index
    %37 = vector.load %arg10[%c64_26, %c0_27] : memref<432x512xbf16, #tpu.memory_space<vmem>>, vector<16x512xbf16>
    tpu.vector_store %arg10[%c64_26, %c0_27], %36 {strides = array<i32>} : memref<432x512xbf16, #tpu.memory_space<vmem>>, vector<16x512xbf16>,
    %c0_28 = arith.constant 0 : index
    %c65 = arith.constant 65 : index
    %38 = vector.load %arg8[%c0_28, %c65] : memref<16x768xf32, #tpu.memory_space<vmem>>, vector<16x512xf32>
    %39 = vector.broadcast %4 : vector<1x512xf32> to vector<16x512xf32>
    %40 = arith.mulf %38, %39 : vector<16x512xf32>
    %41 = arith.truncf %40 : vector<16x512xf32> to vector<16x512xbf16>
    %c80 = arith.constant 80 : index
    %c0_29 = arith.constant 0 : index
    %42 = vector.load %arg10[%c80, %c0_29] : memref<432x512xbf16, #tpu.memory_space<vmem>>, vector<16x512xbf16>
    tpu.vector_store %arg10[%c80, %c0_29], %41 {strides = array<i32>} : memref<432x512xbf16, #tpu.memory_space<vmem>>, vector<16x512xbf16>,
    %c0_30 = arith.constant 0 : index
    %c71 = arith.constant 71 : index
    %43 = vector.load %arg8[%c0_30, %c71] : memref<16x768xf32, #tpu.memory_space<vmem>>, vector<16x512xf32>
    %44 = vector.broadcast %5 : vector<1x512xf32> to vector<16x512xf32>
    %45 = arith.mulf %43, %44 : vector<16x512xf32>
    %46 = arith.truncf %45 : vector<16x512xf32> to vector<16x512xbf16>
    %c96 = arith.constant 96 : index
    %c0_31 = arith.constant 0 : index
    %47 = vector.load %arg10[%c96, %c0_31] : memref<432x512xbf16, #tpu.memory_space<vmem>>, vector<16x512xbf16>
    tpu.vector_store %arg10[%c96, %c0_31], %46 {strides = array<i32>} : memref<432x512xbf16, #tpu.memory_space<vmem>>, vector<16x512xbf16>,
    %c0_32 = arith.constant 0 : index
    %c72 = arith.constant 72 : index
    %48 = vector.load %arg8[%c0_32, %c72] : memref<16x768xf32, #tpu.memory_space<vmem>>, vector<16x512xf32>
    %49 = vector.broadcast %6 : vector<1x512xf32> to vector<16x512xf32>
    %50 = arith.mulf %48, %49 : vector<16x512xf32>
    %51 = arith.truncf %50 : vector<16x512xf32> to vector<16x512xbf16>
    %c112 = arith.constant 112 : index
    %c0_33 = arith.constant 0 : index
    %52 = vector.load %arg10[%c112, %c0_33] : memref<432x512xbf16, #tpu.memory_space<vmem>>, vector<16x512xbf16>
    tpu.vector_store %arg10[%c112, %c0_33], %51 {strides = array<i32>} : memref<432x512xbf16, #tpu.memory_space<vmem>>, vector<16x512xbf16>,
    %c0_34 = arith.constant 0 : index
    %c73 = arith.constant 73 : index
    %53 = vector.load %arg8[%c0_34, %c73] : memref<16x768xf32, #tpu.memory_space<vmem>>, vector<16x512xf32>
    %54 = vector.broadcast %7 : vector<1x512xf32> to vector<16x512xf32>
    %55 = arith.mulf %53, %54 : vector<16x512xf32>
    %56 = arith.truncf %55 : vector<16x512xf32> to vector<16x512xbf16>
    %c128_35 = arith.constant 128 : index
    %c0_36 = arith.constant 0 : index
    %57 = vector.load %arg10[%c128_35, %c0_36] : memref<432x512xbf16, #tpu.memory_space<vmem>>, vector<16x512xbf16>
    tpu.vector_store %arg10[%c128_35, %c0_36], %56 {strides = array<i32>} : memref<432x512xbf16, #tpu.memory_space<vmem>>, vector<16x512xbf16>,
    %c0_37 = arith.constant 0 : index
    %c119 = arith.constant 119 : index
    %58 = vector.load %arg8[%c0_37, %c119] : memref<16x768xf32, #tpu.memory_space<vmem>>, vector<16x512xf32>
    %59 = vector.broadcast %0 : vector<1x512xf32> to vector<16x512xf32>
    %60 = arith.mulf %58, %59 : vector<16x512xf32>
    %61 = arith.truncf %60 : vector<16x512xf32> to vector<16x512xbf16>
    %c144 = arith.constant 144 : index
    %c0_38 = arith.constant 0 : index
    %62 = vector.load %arg10[%c144, %c0_38] : memref<432x512xbf16, #tpu.memory_space<vmem>>, vector<16x512xbf16>
    tpu.vector_store %arg10[%c144, %c0_38], %61 {strides = array<i32>} : memref<432x512xbf16, #tpu.memory_space<vmem>>, vector<16x512xbf16>,
    %c0_39 = arith.constant 0 : index
    %c120 = arith.constant 120 : index
    %63 = vector.load %arg8[%c0_39, %c120] : memref<16x768xf32, #tpu.memory_space<vmem>>, vector<16x512xf32>
    %64 = vector.broadcast %1 : vector<1x512xf32> to vector<16x512xf32>
    %65 = arith.mulf %63, %64 : vector<16x512xf32>
    %66 = arith.truncf %65 : vector<16x512xf32> to vector<16x512xbf16>
    %c160 = arith.constant 160 : index
    %c0_40 = arith.constant 0 : index
    %67 = vector.load %arg10[%c160, %c0_40] : memref<432x512xbf16, #tpu.memory_space<vmem>>, vector<16x512xbf16>
    tpu.vector_store %arg10[%c160, %c0_40], %66 {strides = array<i32>} : memref<432x512xbf16, #tpu.memory_space<vmem>>, vector<16x512xbf16>,
    %c0_41 = arith.constant 0 : index
    %c121 = arith.constant 121 : index
    %68 = vector.load %arg8[%c0_41, %c121] : memref<16x768xf32, #tpu.memory_space<vmem>>, vector<16x512xf32>
    %69 = vector.broadcast %2 : vector<1x512xf32> to vector<16x512xf32>
    %70 = arith.mulf %68, %69 : vector<16x512xf32>
    %71 = arith.truncf %70 : vector<16x512xf32> to vector<16x512xbf16>
    %c176 = arith.constant 176 : index
    %c0_42 = arith.constant 0 : index
    %72 = vector.load %arg10[%c176, %c0_42] : memref<432x512xbf16, #tpu.memory_space<vmem>>, vector<16x512xbf16>
    tpu.vector_store %arg10[%c176, %c0_42], %71 {strides = array<i32>} : memref<432x512xbf16, #tpu.memory_space<vmem>>, vector<16x512xbf16>,
    %c0_43 = arith.constant 0 : index
    %c127 = arith.constant 127 : index
    %73 = vector.load %arg8[%c0_43, %c127] : memref<16x768xf32, #tpu.memory_space<vmem>>, vector<16x512xf32>
    %74 = vector.broadcast %3 : vector<1x512xf32> to vector<16x512xf32>
    %75 = arith.mulf %73, %74 : vector<16x512xf32>
    %76 = arith.truncf %75 : vector<16x512xf32> to vector<16x512xbf16>
    %c192 = arith.constant 192 : index
    %c0_44 = arith.constant 0 : index
    %77 = vector.load %arg10[%c192, %c0_44] : memref<432x512xbf16, #tpu.memory_space<vmem>>, vector<16x512xbf16>
    tpu.vector_store %arg10[%c192, %c0_44], %76 {strides = array<i32>} : memref<432x512xbf16, #tpu.memory_space<vmem>>, vector<16x512xbf16>,
    %c0_45 = arith.constant 0 : index
    %c128_46 = arith.constant 128 : index
    %78 = vector.load %arg8[%c0_45, %c128_46] : memref<16x768xf32, #tpu.memory_space<vmem>>, vector<16x512xf32>
    %79 = arith.truncf %78 : vector<16x512xf32> to vector<16x512xbf16>
    %c208 = arith.constant 208 : index
    %c0_47 = arith.constant 0 : index
    %80 = vector.load %arg10[%c208, %c0_47] : memref<432x512xbf16, #tpu.memory_space<vmem>>, vector<16x512xbf16>
    tpu.vector_store %arg10[%c208, %c0_47], %79 {strides = array<i32>} : memref<432x512xbf16, #tpu.memory_space<vmem>>, vector<16x512xbf16>,
    %c0_48 = arith.constant 0 : index
    %c129 = arith.constant 129 : index
    %81 = vector.load %arg8[%c0_48, %c129] : memref<16x768xf32, #tpu.memory_space<vmem>>, vector<16x512xf32>
    %82 = vector.broadcast %4 : vector<1x512xf32> to vector<16x512xf32>
    %83 = arith.mulf %81, %82 : vector<16x512xf32>
    %84 = arith.truncf %83 : vector<16x512xf32> to vector<16x512xbf16>
    %c224 = arith.constant 224 : index
    %c0_49 = arith.constant 0 : index
    %85 = vector.load %arg10[%c224, %c0_49] : memref<432x512xbf16, #tpu.memory_space<vmem>>, vector<16x512xbf16>
    tpu.vector_store %arg10[%c224, %c0_49], %84 {strides = array<i32>} : memref<432x512xbf16, #tpu.memory_space<vmem>>, vector<16x512xbf16>,
    %c0_50 = arith.constant 0 : index
    %c135 = arith.constant 135 : index
    %86 = vector.load %arg8[%c0_50, %c135] : memref<16x768xf32, #tpu.memory_space<vmem>>, vector<16x512xf32>
    %87 = vector.broadcast %5 : vector<1x512xf32> to vector<16x512xf32>
    %88 = arith.mulf %86, %87 : vector<16x512xf32>
    %89 = arith.truncf %88 : vector<16x512xf32> to vector<16x512xbf16>
    %c240 = arith.constant 240 : index
    %c0_51 = arith.constant 0 : index
    %90 = vector.load %arg10[%c240, %c0_51] : memref<432x512xbf16, #tpu.memory_space<vmem>>, vector<16x512xbf16>
    tpu.vector_store %arg10[%c240, %c0_51], %89 {strides = array<i32>} : memref<432x512xbf16, #tpu.memory_space<vmem>>, vector<16x512xbf16>,
    %c0_52 = arith.constant 0 : index
    %c136 = arith.constant 136 : index
    %91 = vector.load %arg8[%c0_52, %c136] : memref<16x768xf32, #tpu.memory_space<vmem>>, vector<16x512xf32>
    %92 = vector.broadcast %6 : vector<1x512xf32> to vector<16x512xf32>
    %93 = arith.mulf %91, %92 : vector<16x512xf32>
    %94 = arith.truncf %93 : vector<16x512xf32> to vector<16x512xbf16>
    %c256 = arith.constant 256 : index
    %c0_53 = arith.constant 0 : index
    %95 = vector.load %arg10[%c256, %c0_53] : memref<432x512xbf16, #tpu.memory_space<vmem>>, vector<16x512xbf16>
    tpu.vector_store %arg10[%c256, %c0_53], %94 {strides = array<i32>} : memref<432x512xbf16, #tpu.memory_space<vmem>>, vector<16x512xbf16>,
    %c0_54 = arith.constant 0 : index
    %c137 = arith.constant 137 : index
    %96 = vector.load %arg8[%c0_54, %c137] : memref<16x768xf32, #tpu.memory_space<vmem>>, vector<16x512xf32>
    %97 = vector.broadcast %7 : vector<1x512xf32> to vector<16x512xf32>
    %98 = arith.mulf %96, %97 : vector<16x512xf32>
    %99 = arith.truncf %98 : vector<16x512xf32> to vector<16x512xbf16>
    %c272 = arith.constant 272 : index
    %c0_55 = arith.constant 0 : index
    %100 = vector.load %arg10[%c272, %c0_55] : memref<432x512xbf16, #tpu.memory_space<vmem>>, vector<16x512xbf16>
    tpu.vector_store %arg10[%c272, %c0_55], %99 {strides = array<i32>} : memref<432x512xbf16, #tpu.memory_space<vmem>>, vector<16x512xbf16>,
    %c0_56 = arith.constant 0 : index
    %c183 = arith.constant 183 : index
    %101 = vector.load %arg8[%c0_56, %c183] : memref<16x768xf32, #tpu.memory_space<vmem>>, vector<16x512xf32>
    %102 = vector.broadcast %0 : vector<1x512xf32> to vector<16x512xf32>
    %103 = arith.mulf %101, %102 : vector<16x512xf32>
    %104 = arith.truncf %103 : vector<16x512xf32> to vector<16x512xbf16>
    %c288 = arith.constant 288 : index
    %c0_57 = arith.constant 0 : index
    %105 = vector.load %arg10[%c288, %c0_57] : memref<432x512xbf16, #tpu.memory_space<vmem>>, vector<16x512xbf16>
    tpu.vector_store %arg10[%c288, %c0_57], %104 {strides = array<i32>} : memref<432x512xbf16, #tpu.memory_space<vmem>>, vector<16x512xbf16>,
    %c0_58 = arith.constant 0 : index
    %c184 = arith.constant 184 : index
    %106 = vector.load %arg8[%c0_58, %c184] : memref<16x768xf32, #tpu.memory_space<vmem>>, vector<16x512xf32>
    %107 = vector.broadcast %1 : vector<1x512xf32> to vector<16x512xf32>
    %108 = arith.mulf %106, %107 : vector<16x512xf32>
    %109 = arith.truncf %108 : vector<16x512xf32> to vector<16x512xbf16>
    %c304 = arith.constant 304 : index
    %c0_59 = arith.constant 0 : index
    %110 = vector.load %arg10[%c304, %c0_59] : memref<432x512xbf16, #tpu.memory_space<vmem>>, vector<16x512xbf16>
    tpu.vector_store %arg10[%c304, %c0_59], %109 {strides = array<i32>} : memref<432x512xbf16, #tpu.memory_space<vmem>>, vector<16x512xbf16>,
    %c0_60 = arith.constant 0 : index
    %c185 = arith.constant 185 : index
    %111 = vector.load %arg8[%c0_60, %c185] : memref<16x768xf32, #tpu.memory_space<vmem>>, vector<16x512xf32>
    %112 = vector.broadcast %2 : vector<1x512xf32> to vector<16x512xf32>
    %113 = arith.mulf %111, %112 : vector<16x512xf32>
    %114 = arith.truncf %113 : vector<16x512xf32> to vector<16x512xbf16>
    %c320 = arith.constant 320 : index
    %c0_61 = arith.constant 0 : index
    %115 = vector.load %arg10[%c320, %c0_61] : memref<432x512xbf16, #tpu.memory_space<vmem>>, vector<16x512xbf16>
    tpu.vector_store %arg10[%c320, %c0_61], %114 {strides = array<i32>} : memref<432x512xbf16, #tpu.memory_space<vmem>>, vector<16x512xbf16>,
    %c0_62 = arith.constant 0 : index
    %c191 = arith.constant 191 : index
    %116 = vector.load %arg8[%c0_62, %c191] : memref<16x768xf32, #tpu.memory_space<vmem>>, vector<16x512xf32>
    %117 = vector.broadcast %3 : vector<1x512xf32> to vector<16x512xf32>
    %118 = arith.mulf %116, %117 : vector<16x512xf32>
    %119 = arith.truncf %118 : vector<16x512xf32> to vector<16x512xbf16>
    %c336 = arith.constant 336 : index
    %c0_63 = arith.constant 0 : index
    %120 = vector.load %arg10[%c336, %c0_63] : memref<432x512xbf16, #tpu.memory_space<vmem>>, vector<16x512xbf16>
    tpu.vector_store %arg10[%c336, %c0_63], %119 {strides = array<i32>} : memref<432x512xbf16, #tpu.memory_space<vmem>>, vector<16x512xbf16>,
    %c0_64 = arith.constant 0 : index
    %c192_65 = arith.constant 192 : index
    %121 = vector.load %arg8[%c0_64, %c192_65] : memref<16x768xf32, #tpu.memory_space<vmem>>, vector<16x512xf32>
    %122 = arith.truncf %121 : vector<16x512xf32> to vector<16x512xbf16>
    %c352 = arith.constant 352 : index
    %c0_66 = arith.constant 0 : index
    %123 = vector.load %arg10[%c352, %c0_66] : memref<432x512xbf16, #tpu.memory_space<vmem>>, vector<16x512xbf16>
    tpu.vector_store %arg10[%c352, %c0_66], %122 {strides = array<i32>} : memref<432x512xbf16, #tpu.memory_space<vmem>>, vector<16x512xbf16>,
    %c0_67 = arith.constant 0 : index
    %c193 = arith.constant 193 : index
    %124 = vector.load %arg8[%c0_67, %c193] : memref<16x768xf32, #tpu.memory_space<vmem>>, vector<16x512xf32>
    %125 = vector.broadcast %4 : vector<1x512xf32> to vector<16x512xf32>
    %126 = arith.mulf %124, %125 : vector<16x512xf32>
    %127 = arith.truncf %126 : vector<16x512xf32> to vector<16x512xbf16>
    %c368 = arith.constant 368 : index
    %c0_68 = arith.constant 0 : index
    %128 = vector.load %arg10[%c368, %c0_68] : memref<432x512xbf16, #tpu.memory_space<vmem>>, vector<16x512xbf16>
    tpu.vector_store %arg10[%c368, %c0_68], %127 {strides = array<i32>} : memref<432x512xbf16, #tpu.memory_space<vmem>>, vector<16x512xbf16>,
    %c0_69 = arith.constant 0 : index
    %c199 = arith.constant 199 : index
    %129 = vector.load %arg8[%c0_69, %c199] : memref<16x768xf32, #tpu.memory_space<vmem>>, vector<16x512xf32>
    %130 = vector.broadcast %5 : vector<1x512xf32> to vector<16x512xf32>
    %131 = arith.mulf %129, %130 : vector<16x512xf32>
    %132 = arith.truncf %131 : vector<16x512xf32> to vector<16x512xbf16>
    %c384 = arith.constant 384 : index
    %c0_70 = arith.constant 0 : index
    %133 = vector.load %arg10[%c384, %c0_70] : memref<432x512xbf16, #tpu.memory_space<vmem>>, vector<16x512xbf16>
    tpu.vector_store %arg10[%c384, %c0_70], %132 {strides = array<i32>} : memref<432x512xbf16, #tpu.memory_space<vmem>>, vector<16x512xbf16>,
    %c0_71 = arith.constant 0 : index
    %c200 = arith.constant 200 : index
    %134 = vector.load %arg8[%c0_71, %c200] : memref<16x768xf32, #tpu.memory_space<vmem>>, vector<16x512xf32>
    %135 = vector.broadcast %6 : vector<1x512xf32> to vector<16x512xf32>
    %136 = arith.mulf %134, %135 : vector<16x512xf32>
    %137 = arith.truncf %136 : vector<16x512xf32> to vector<16x512xbf16>
    %c400 = arith.constant 400 : index
    %c0_72 = arith.constant 0 : index
    %138 = vector.load %arg10[%c400, %c0_72] : memref<432x512xbf16, #tpu.memory_space<vmem>>, vector<16x512xbf16>
    tpu.vector_store %arg10[%c400, %c0_72], %137 {strides = array<i32>} : memref<432x512xbf16, #tpu.memory_space<vmem>>, vector<16x512xbf16>,
    %c0_73 = arith.constant 0 : index
    %c201 = arith.constant 201 : index
    %139 = vector.load %arg8[%c0_73, %c201] : memref<16x768xf32, #tpu.memory_space<vmem>>, vector<16x512xf32>
    %140 = vector.broadcast %7 : vector<1x512xf32> to vector<16x512xf32>
    %141 = arith.mulf %139, %140 : vector<16x512xf32>
    %142 = arith.truncf %141 : vector<16x512xf32> to vector<16x512xbf16>
    %c416 = arith.constant 416 : index
    %c0_74 = arith.constant 0 : index
    %143 = vector.load %arg10[%c416, %c0_74] : memref<432x512xbf16, #tpu.memory_space<vmem>>, vector<16x512xbf16>
    tpu.vector_store %arg10[%c416, %c0_74], %142 {strides = array<i32>} : memref<432x512xbf16, #tpu.memory_space<vmem>>, vector<16x512xbf16>,
    %c0_75 = arith.constant 0 : index
    %c0_76 = arith.constant 0 : index
    %144 = vector.load %arg2[%c0_75, %c0_76] : memref<16x432xbf16, #tpu.memory_space<vmem>>, vector<16x432xbf16>
    %c0_77 = arith.constant 0 : index
    %c0_78 = arith.constant 0 : index
    %145 = vector.load %arg10[%c0_77, %c0_78] : memref<432x512xbf16, #tpu.memory_space<vmem>>, vector<432x512xbf16>
    %cst_79 = arith.constant dense<0.000000e+00> : vector<16x512xf32>
    %146 = tpu.matmul %144, %145, %cst_79 {dimension_numbers = #tpu.dot_dimension_numbers<[1], [0], [0], [1], [0, 0, 1, 1], [], []>} : vector<16x432xbf16>, vector<432x512xbf16>, vector<16x512xf32> -> vector<16x512xf32>
    %c0_80 = arith.constant 0 : index
    %c0_81 = arith.constant 0 : index
    %147 = vector.load %arg3[%c0_80, %c0_81] : memref<16x1xf32, #tpu.memory_space<vmem>>, vector<16x1xf32>
    %148 = vector.broadcast %147 : vector<16x1xf32> to vector<16x512xf32>
    %149 = arith.addf %146, %148 : vector<16x512xf32>
    %cst_82 = arith.constant 0.000000e+00 : f32
    %150 = vector.broadcast %cst_82 : f32 to vector<16x512xf32>
    %151 = arith.maximumf %149, %150 : vector<16x512xf32>
    %cst_83 = arith.constant 0.000000e+00 : f32
    %152 = vector.broadcast %cst_83 : f32 to vector<16x128xf32>
    %c0_84 = arith.constant 0 : index
    %c0_85 = arith.constant 0 : index
    %153 = vector.load %arg9[%c0_84, %c0_85] : memref<16x768xf32, #tpu.memory_space<vmem>>, vector<16x128xf32>
    tpu.vector_store %arg9[%c0_84, %c0_85], %152 {strides = array<i32>} : memref<16x768xf32, #tpu.memory_space<vmem>>, vector<16x128xf32>,
    %cst_86 = arith.constant 0.000000e+00 : f32
    %154 = vector.broadcast %cst_86 : f32 to vector<16x128xf32>
    %c0_87 = arith.constant 0 : index
    %c640_88 = arith.constant 640 : index
    %155 = vector.load %arg9[%c0_87, %c640_88] : memref<16x768xf32, #tpu.memory_space<vmem>>, vector<16x128xf32>
    tpu.vector_store %arg9[%c0_87, %c640_88], %154 {strides = array<i32>} : memref<16x768xf32, #tpu.memory_space<vmem>>, vector<16x128xf32>,
    %c0_89 = arith.constant 0 : index
    %c128_90 = arith.constant 128 : index
    %156 = vector.load %arg9[%c0_89, %c128_90] : memref<16x768xf32, #tpu.memory_space<vmem>>, vector<16x512xf32>
    tpu.vector_store %arg9[%c0_89, %c128_90], %151 {strides = array<i32>} : memref<16x768xf32, #tpu.memory_space<vmem>>, vector<16x512xf32>,
    %c0_91 = arith.constant 0 : index
    %c55_92 = arith.constant 55 : index
    %157 = vector.load %arg9[%c0_91, %c55_92] : memref<16x768xf32, #tpu.memory_space<vmem>>, vector<16x512xf32>
    %158 = vector.broadcast %0 : vector<1x512xf32> to vector<16x512xf32>
    %159 = arith.mulf %157, %158 : vector<16x512xf32>
    %160 = arith.truncf %159 : vector<16x512xf32> to vector<16x512xbf16>
    %c0_93 = arith.constant 0 : index
    %c0_94 = arith.constant 0 : index
    %161 = vector.load %arg10[%c0_93, %c0_94] : memref<432x512xbf16, #tpu.memory_space<vmem>>, vector<16x512xbf16>
    tpu.vector_store %arg10[%c0_93, %c0_94], %160 {strides = array<i32>} : memref<432x512xbf16, #tpu.memory_space<vmem>>, vector<16x512xbf16>,
    %c0_95 = arith.constant 0 : index
    %c56_96 = arith.constant 56 : index
    %162 = vector.load %arg9[%c0_95, %c56_96] : memref<16x768xf32, #tpu.memory_space<vmem>>, vector<16x512xf32>
    %163 = vector.broadcast %1 : vector<1x512xf32> to vector<16x512xf32>
    %164 = arith.mulf %162, %163 : vector<16x512xf32>
    %165 = arith.truncf %164 : vector<16x512xf32> to vector<16x512xbf16>
    %c16_97 = arith.constant 16 : index
    %c0_98 = arith.constant 0 : index
    %166 = vector.load %arg10[%c16_97, %c0_98] : memref<432x512xbf16, #tpu.memory_space<vmem>>, vector<16x512xbf16>
    tpu.vector_store %arg10[%c16_97, %c0_98], %165 {strides = array<i32>} : memref<432x512xbf16, #tpu.memory_space<vmem>>, vector<16x512xbf16>,
    %c0_99 = arith.constant 0 : index
    %c57_100 = arith.constant 57 : index
    %167 = vector.load %arg9[%c0_99, %c57_100] : memref<16x768xf32, #tpu.memory_space<vmem>>, vector<16x512xf32>
    %168 = vector.broadcast %2 : vector<1x512xf32> to vector<16x512xf32>
    %169 = arith.mulf %167, %168 : vector<16x512xf32>
    %170 = arith.truncf %169 : vector<16x512xf32> to vector<16x512xbf16>
    %c32_101 = arith.constant 32 : index
    %c0_102 = arith.constant 0 : index
    %171 = vector.load %arg10[%c32_101, %c0_102] : memref<432x512xbf16, #tpu.memory_space<vmem>>, vector<16x512xbf16>
    tpu.vector_store %arg10[%c32_101, %c0_102], %170 {strides = array<i32>} : memref<432x512xbf16, #tpu.memory_space<vmem>>, vector<16x512xbf16>,
    %c0_103 = arith.constant 0 : index
    %c63_104 = arith.constant 63 : index
    %172 = vector.load %arg9[%c0_103, %c63_104] : memref<16x768xf32, #tpu.memory_space<vmem>>, vector<16x512xf32>
    %173 = vector.broadcast %3 : vector<1x512xf32> to vector<16x512xf32>
    %174 = arith.mulf %172, %173 : vector<16x512xf32>
    %175 = arith.truncf %174 : vector<16x512xf32> to vector<16x512xbf16>
    %c48_105 = arith.constant 48 : index
    %c0_106 = arith.constant 0 : index
    %176 = vector.load %arg10[%c48_105, %c0_106] : memref<432x512xbf16, #tpu.memory_space<vmem>>, vector<16x512xbf16>
    tpu.vector_store %arg10[%c48_105, %c0_106], %175 {strides = array<i32>} : memref<432x512xbf16, #tpu.memory_space<vmem>>, vector<16x512xbf16>,
    %c0_107 = arith.constant 0 : index
    %c64_108 = arith.constant 64 : index
    %177 = vector.load %arg9[%c0_107, %c64_108] : memref<16x768xf32, #tpu.memory_space<vmem>>, vector<16x512xf32>
    %178 = arith.truncf %177 : vector<16x512xf32> to vector<16x512xbf16>
    %c64_109 = arith.constant 64 : index
    %c0_110 = arith.constant 0 : index
    %179 = vector.load %arg10[%c64_109, %c0_110] : memref<432x512xbf16, #tpu.memory_space<vmem>>, vector<16x512xbf16>
    tpu.vector_store %arg10[%c64_109, %c0_110], %178 {strides = array<i32>} : memref<432x512xbf16, #tpu.memory_space<vmem>>, vector<16x512xbf16>,
    %c0_111 = arith.constant 0 : index
    %c65_112 = arith.constant 65 : index
    %180 = vector.load %arg9[%c0_111, %c65_112] : memref<16x768xf32, #tpu.memory_space<vmem>>, vector<16x512xf32>
    %181 = vector.broadcast %4 : vector<1x512xf32> to vector<16x512xf32>
    %182 = arith.mulf %180, %181 : vector<16x512xf32>
    %183 = arith.truncf %182 : vector<16x512xf32> to vector<16x512xbf16>
    %c80_113 = arith.constant 80 : index
    %c0_114 = arith.constant 0 : index
    %184 = vector.load %arg10[%c80_113, %c0_114] : memref<432x512xbf16, #tpu.memory_space<vmem>>, vector<16x512xbf16>
    tpu.vector_store %arg10[%c80_113, %c0_114], %183 {strides = array<i32>} : memref<432x512xbf16, #tpu.memory_space<vmem>>, vector<16x512xbf16>,
    %c0_115 = arith.constant 0 : index
    %c71_116 = arith.constant 71 : index
    %185 = vector.load %arg9[%c0_115, %c71_116] : memref<16x768xf32, #tpu.memory_space<vmem>>, vector<16x512xf32>
    %186 = vector.broadcast %5 : vector<1x512xf32> to vector<16x512xf32>
    %187 = arith.mulf %185, %186 : vector<16x512xf32>
    %188 = arith.truncf %187 : vector<16x512xf32> to vector<16x512xbf16>
    %c96_117 = arith.constant 96 : index
    %c0_118 = arith.constant 0 : index
    %189 = vector.load %arg10[%c96_117, %c0_118] : memref<432x512xbf16, #tpu.memory_space<vmem>>, vector<16x512xbf16>
    tpu.vector_store %arg10[%c96_117, %c0_118], %188 {strides = array<i32>} : memref<432x512xbf16, #tpu.memory_space<vmem>>, vector<16x512xbf16>,
    %c0_119 = arith.constant 0 : index
    %c72_120 = arith.constant 72 : index
    %190 = vector.load %arg9[%c0_119, %c72_120] : memref<16x768xf32, #tpu.memory_space<vmem>>, vector<16x512xf32>
    %191 = vector.broadcast %6 : vector<1x512xf32> to vector<16x512xf32>
    %192 = arith.mulf %190, %191 : vector<16x512xf32>
    %193 = arith.truncf %192 : vector<16x512xf32> to vector<16x512xbf16>
    %c112_121 = arith.constant 112 : index
    %c0_122 = arith.constant 0 : index
    %194 = vector.load %arg10[%c112_121, %c0_122] : memref<432x512xbf16, #tpu.memory_space<vmem>>, vector<16x512xbf16>
    tpu.vector_store %arg10[%c112_121, %c0_122], %193 {strides = array<i32>} : memref<432x512xbf16, #tpu.memory_space<vmem>>, vector<16x512xbf16>,
    %c0_123 = arith.constant 0 : index
    %c73_124 = arith.constant 73 : index
    %195 = vector.load %arg9[%c0_123, %c73_124] : memref<16x768xf32, #tpu.memory_space<vmem>>, vector<16x512xf32>
    %196 = vector.broadcast %7 : vector<1x512xf32> to vector<16x512xf32>
    %197 = arith.mulf %195, %196 : vector<16x512xf32>
    %198 = arith.truncf %197 : vector<16x512xf32> to vector<16x512xbf16>
    %c128_125 = arith.constant 128 : index
    %c0_126 = arith.constant 0 : index
    %199 = vector.load %arg10[%c128_125, %c0_126] : memref<432x512xbf16, #tpu.memory_space<vmem>>, vector<16x512xbf16>
    tpu.vector_store %arg10[%c128_125, %c0_126], %198 {strides = array<i32>} : memref<432x512xbf16, #tpu.memory_space<vmem>>, vector<16x512xbf16>,
    %c0_127 = arith.constant 0 : index
    %c119_128 = arith.constant 119 : index
    %200 = vector.load %arg9[%c0_127, %c119_128] : memref<16x768xf32, #tpu.memory_space<vmem>>, vector<16x512xf32>
    %201 = vector.broadcast %0 : vector<1x512xf32> to vector<16x512xf32>
    %202 = arith.mulf %200, %201 : vector<16x512xf32>
    %203 = arith.truncf %202 : vector<16x512xf32> to vector<16x512xbf16>
    %c144_129 = arith.constant 144 : index
    %c0_130 = arith.constant 0 : index
    %204 = vector.load %arg10[%c144_129, %c0_130] : memref<432x512xbf16, #tpu.memory_space<vmem>>, vector<16x512xbf16>
    tpu.vector_store %arg10[%c144_129, %c0_130], %203 {strides = array<i32>} : memref<432x512xbf16, #tpu.memory_space<vmem>>, vector<16x512xbf16>,
    %c0_131 = arith.constant 0 : index
    %c120_132 = arith.constant 120 : index
    %205 = vector.load %arg9[%c0_131, %c120_132] : memref<16x768xf32, #tpu.memory_space<vmem>>, vector<16x512xf32>
    %206 = vector.broadcast %1 : vector<1x512xf32> to vector<16x512xf32>
    %207 = arith.mulf %205, %206 : vector<16x512xf32>
    %208 = arith.truncf %207 : vector<16x512xf32> to vector<16x512xbf16>
    %c160_133 = arith.constant 160 : index
    %c0_134 = arith.constant 0 : index
    %209 = vector.load %arg10[%c160_133, %c0_134] : memref<432x512xbf16, #tpu.memory_space<vmem>>, vector<16x512xbf16>
    tpu.vector_store %arg10[%c160_133, %c0_134], %208 {strides = array<i32>} : memref<432x512xbf16, #tpu.memory_space<vmem>>, vector<16x512xbf16>,
    %c0_135 = arith.constant 0 : index
    %c121_136 = arith.constant 121 : index
    %210 = vector.load %arg9[%c0_135, %c121_136] : memref<16x768xf32, #tpu.memory_space<vmem>>, vector<16x512xf32>
    %211 = vector.broadcast %2 : vector<1x512xf32> to vector<16x512xf32>
    %212 = arith.mulf %210, %211 : vector<16x512xf32>
    %213 = arith.truncf %212 : vector<16x512xf32> to vector<16x512xbf16>
    %c176_137 = arith.constant 176 : index
    %c0_138 = arith.constant 0 : index
    %214 = vector.load %arg10[%c176_137, %c0_138] : memref<432x512xbf16, #tpu.memory_space<vmem>>, vector<16x512xbf16>
    tpu.vector_store %arg10[%c176_137, %c0_138], %213 {strides = array<i32>} : memref<432x512xbf16, #tpu.memory_space<vmem>>, vector<16x512xbf16>,
    %c0_139 = arith.constant 0 : index
    %c127_140 = arith.constant 127 : index
    %215 = vector.load %arg9[%c0_139, %c127_140] : memref<16x768xf32, #tpu.memory_space<vmem>>, vector<16x512xf32>
    %216 = vector.broadcast %3 : vector<1x512xf32> to vector<16x512xf32>
    %217 = arith.mulf %215, %216 : vector<16x512xf32>
    %218 = arith.truncf %217 : vector<16x512xf32> to vector<16x512xbf16>
    %c192_141 = arith.constant 192 : index
    %c0_142 = arith.constant 0 : index
    %219 = vector.load %arg10[%c192_141, %c0_142] : memref<432x512xbf16, #tpu.memory_space<vmem>>, vector<16x512xbf16>
    tpu.vector_store %arg10[%c192_141, %c0_142], %218 {strides = array<i32>} : memref<432x512xbf16, #tpu.memory_space<vmem>>, vector<16x512xbf16>,
    %c0_143 = arith.constant 0 : index
    %c128_144 = arith.constant 128 : index
    %220 = vector.load %arg9[%c0_143, %c128_144] : memref<16x768xf32, #tpu.memory_space<vmem>>, vector<16x512xf32>
    %221 = arith.truncf %220 : vector<16x512xf32> to vector<16x512xbf16>
    %c208_145 = arith.constant 208 : index
    %c0_146 = arith.constant 0 : index
    %222 = vector.load %arg10[%c208_145, %c0_146] : memref<432x512xbf16, #tpu.memory_space<vmem>>, vector<16x512xbf16>
    tpu.vector_store %arg10[%c208_145, %c0_146], %221 {strides = array<i32>} : memref<432x512xbf16, #tpu.memory_space<vmem>>, vector<16x512xbf16>,
    %c0_147 = arith.constant 0 : index
    %c129_148 = arith.constant 129 : index
    %223 = vector.load %arg9[%c0_147, %c129_148] : memref<16x768xf32, #tpu.memory_space<vmem>>, vector<16x512xf32>
    %224 = vector.broadcast %4 : vector<1x512xf32> to vector<16x512xf32>
    %225 = arith.mulf %223, %224 : vector<16x512xf32>
    %226 = arith.truncf %225 : vector<16x512xf32> to vector<16x512xbf16>
    %c224_149 = arith.constant 224 : index
    %c0_150 = arith.constant 0 : index
    %227 = vector.load %arg10[%c224_149, %c0_150] : memref<432x512xbf16, #tpu.memory_space<vmem>>, vector<16x512xbf16>
    tpu.vector_store %arg10[%c224_149, %c0_150], %226 {strides = array<i32>} : memref<432x512xbf16, #tpu.memory_space<vmem>>, vector<16x512xbf16>,
    %c0_151 = arith.constant 0 : index
    %c135_152 = arith.constant 135 : index
    %228 = vector.load %arg9[%c0_151, %c135_152] : memref<16x768xf32, #tpu.memory_space<vmem>>, vector<16x512xf32>
    %229 = vector.broadcast %5 : vector<1x512xf32> to vector<16x512xf32>
    %230 = arith.mulf %228, %229 : vector<16x512xf32>
    %231 = arith.truncf %230 : vector<16x512xf32> to vector<16x512xbf16>
    %c240_153 = arith.constant 240 : index
    %c0_154 = arith.constant 0 : index
    %232 = vector.load %arg10[%c240_153, %c0_154] : memref<432x512xbf16, #tpu.memory_space<vmem>>, vector<16x512xbf16>
    tpu.vector_store %arg10[%c240_153, %c0_154], %231 {strides = array<i32>} : memref<432x512xbf16, #tpu.memory_space<vmem>>, vector<16x512xbf16>,
    %c0_155 = arith.constant 0 : index
    %c136_156 = arith.constant 136 : index
    %233 = vector.load %arg9[%c0_155, %c136_156] : memref<16x768xf32, #tpu.memory_space<vmem>>, vector<16x512xf32>
    %234 = vector.broadcast %6 : vector<1x512xf32> to vector<16x512xf32>
    %235 = arith.mulf %233, %234 : vector<16x512xf32>
    %236 = arith.truncf %235 : vector<16x512xf32> to vector<16x512xbf16>
    %c256_157 = arith.constant 256 : index
    %c0_158 = arith.constant 0 : index
    %237 = vector.load %arg10[%c256_157, %c0_158] : memref<432x512xbf16, #tpu.memory_space<vmem>>, vector<16x512xbf16>
    tpu.vector_store %arg10[%c256_157, %c0_158], %236 {strides = array<i32>} : memref<432x512xbf16, #tpu.memory_space<vmem>>, vector<16x512xbf16>,
    %c0_159 = arith.constant 0 : index
    %c137_160 = arith.constant 137 : index
    %238 = vector.load %arg9[%c0_159, %c137_160] : memref<16x768xf32, #tpu.memory_space<vmem>>, vector<16x512xf32>
    %239 = vector.broadcast %7 : vector<1x512xf32> to vector<16x512xf32>
    %240 = arith.mulf %238, %239 : vector<16x512xf32>
    %241 = arith.truncf %240 : vector<16x512xf32> to vector<16x512xbf16>
    %c272_161 = arith.constant 272 : index
    %c0_162 = arith.constant 0 : index
    %242 = vector.load %arg10[%c272_161, %c0_162] : memref<432x512xbf16, #tpu.memory_space<vmem>>, vector<16x512xbf16>
    tpu.vector_store %arg10[%c272_161, %c0_162], %241 {strides = array<i32>} : memref<432x512xbf16, #tpu.memory_space<vmem>>, vector<16x512xbf16>,
    %c0_163 = arith.constant 0 : index
    %c183_164 = arith.constant 183 : index
    %243 = vector.load %arg9[%c0_163, %c183_164] : memref<16x768xf32, #tpu.memory_space<vmem>>, vector<16x512xf32>
    %244 = vector.broadcast %0 : vector<1x512xf32> to vector<16x512xf32>
    %245 = arith.mulf %243, %244 : vector<16x512xf32>
    %246 = arith.truncf %245 : vector<16x512xf32> to vector<16x512xbf16>
    %c288_165 = arith.constant 288 : index
    %c0_166 = arith.constant 0 : index
    %247 = vector.load %arg10[%c288_165, %c0_166] : memref<432x512xbf16, #tpu.memory_space<vmem>>, vector<16x512xbf16>
    tpu.vector_store %arg10[%c288_165, %c0_166], %246 {strides = array<i32>} : memref<432x512xbf16, #tpu.memory_space<vmem>>, vector<16x512xbf16>,
    %c0_167 = arith.constant 0 : index
    %c184_168 = arith.constant 184 : index
    %248 = vector.load %arg9[%c0_167, %c184_168] : memref<16x768xf32, #tpu.memory_space<vmem>>, vector<16x512xf32>
    %249 = vector.broadcast %1 : vector<1x512xf32> to vector<16x512xf32>
    %250 = arith.mulf %248, %249 : vector<16x512xf32>
    %251 = arith.truncf %250 : vector<16x512xf32> to vector<16x512xbf16>
    %c304_169 = arith.constant 304 : index
    %c0_170 = arith.constant 0 : index
    %252 = vector.load %arg10[%c304_169, %c0_170] : memref<432x512xbf16, #tpu.memory_space<vmem>>, vector<16x512xbf16>
    tpu.vector_store %arg10[%c304_169, %c0_170], %251 {strides = array<i32>} : memref<432x512xbf16, #tpu.memory_space<vmem>>, vector<16x512xbf16>,
    %c0_171 = arith.constant 0 : index
    %c185_172 = arith.constant 185 : index
    %253 = vector.load %arg9[%c0_171, %c185_172] : memref<16x768xf32, #tpu.memory_space<vmem>>, vector<16x512xf32>
    %254 = vector.broadcast %2 : vector<1x512xf32> to vector<16x512xf32>
    %255 = arith.mulf %253, %254 : vector<16x512xf32>
    %256 = arith.truncf %255 : vector<16x512xf32> to vector<16x512xbf16>
    %c320_173 = arith.constant 320 : index
    %c0_174 = arith.constant 0 : index
    %257 = vector.load %arg10[%c320_173, %c0_174] : memref<432x512xbf16, #tpu.memory_space<vmem>>, vector<16x512xbf16>
    tpu.vector_store %arg10[%c320_173, %c0_174], %256 {strides = array<i32>} : memref<432x512xbf16, #tpu.memory_space<vmem>>, vector<16x512xbf16>,
    %c0_175 = arith.constant 0 : index
    %c191_176 = arith.constant 191 : index
    %258 = vector.load %arg9[%c0_175, %c191_176] : memref<16x768xf32, #tpu.memory_space<vmem>>, vector<16x512xf32>
    %259 = vector.broadcast %3 : vector<1x512xf32> to vector<16x512xf32>
    %260 = arith.mulf %258, %259 : vector<16x512xf32>
    %261 = arith.truncf %260 : vector<16x512xf32> to vector<16x512xbf16>
    %c336_177 = arith.constant 336 : index
    %c0_178 = arith.constant 0 : index
    %262 = vector.load %arg10[%c336_177, %c0_178] : memref<432x512xbf16, #tpu.memory_space<vmem>>, vector<16x512xbf16>
    tpu.vector_store %arg10[%c336_177, %c0_178], %261 {strides = array<i32>} : memref<432x512xbf16, #tpu.memory_space<vmem>>, vector<16x512xbf16>,
    %c0_179 = arith.constant 0 : index
    %c192_180 = arith.constant 192 : index
    %263 = vector.load %arg9[%c0_179, %c192_180] : memref<16x768xf32, #tpu.memory_space<vmem>>, vector<16x512xf32>
    %264 = arith.truncf %263 : vector<16x512xf32> to vector<16x512xbf16>
    %c352_181 = arith.constant 352 : index
    %c0_182 = arith.constant 0 : index
    %265 = vector.load %arg10[%c352_181, %c0_182] : memref<432x512xbf16, #tpu.memory_space<vmem>>, vector<16x512xbf16>
    tpu.vector_store %arg10[%c352_181, %c0_182], %264 {strides = array<i32>} : memref<432x512xbf16, #tpu.memory_space<vmem>>, vector<16x512xbf16>,
    %c0_183 = arith.constant 0 : index
    %c193_184 = arith.constant 193 : index
    %266 = vector.load %arg9[%c0_183, %c193_184] : memref<16x768xf32, #tpu.memory_space<vmem>>, vector<16x512xf32>
    %267 = vector.broadcast %4 : vector<1x512xf32> to vector<16x512xf32>
    %268 = arith.mulf %266, %267 : vector<16x512xf32>
    %269 = arith.truncf %268 : vector<16x512xf32> to vector<16x512xbf16>
    %c368_185 = arith.constant 368 : index
    %c0_186 = arith.constant 0 : index
    %270 = vector.load %arg10[%c368_185, %c0_186] : memref<432x512xbf16, #tpu.memory_space<vmem>>, vector<16x512xbf16>
    tpu.vector_store %arg10[%c368_185, %c0_186], %269 {strides = array<i32>} : memref<432x512xbf16, #tpu.memory_space<vmem>>, vector<16x512xbf16>,
    %c0_187 = arith.constant 0 : index
    %c199_188 = arith.constant 199 : index
    %271 = vector.load %arg9[%c0_187, %c199_188] : memref<16x768xf32, #tpu.memory_space<vmem>>, vector<16x512xf32>
    %272 = vector.broadcast %5 : vector<1x512xf32> to vector<16x512xf32>
    %273 = arith.mulf %271, %272 : vector<16x512xf32>
    %274 = arith.truncf %273 : vector<16x512xf32> to vector<16x512xbf16>
    %c384_189 = arith.constant 384 : index
    %c0_190 = arith.constant 0 : index
    %275 = vector.load %arg10[%c384_189, %c0_190] : memref<432x512xbf16, #tpu.memory_space<vmem>>, vector<16x512xbf16>
    tpu.vector_store %arg10[%c384_189, %c0_190], %274 {strides = array<i32>} : memref<432x512xbf16, #tpu.memory_space<vmem>>, vector<16x512xbf16>,
    %c0_191 = arith.constant 0 : index
    %c200_192 = arith.constant 200 : index
    %276 = vector.load %arg9[%c0_191, %c200_192] : memref<16x768xf32, #tpu.memory_space<vmem>>, vector<16x512xf32>
    %277 = vector.broadcast %6 : vector<1x512xf32> to vector<16x512xf32>
    %278 = arith.mulf %276, %277 : vector<16x512xf32>
    %279 = arith.truncf %278 : vector<16x512xf32> to vector<16x512xbf16>
    %c400_193 = arith.constant 400 : index
    %c0_194 = arith.constant 0 : index
    %280 = vector.load %arg10[%c400_193, %c0_194] : memref<432x512xbf16, #tpu.memory_space<vmem>>, vector<16x512xbf16>
    tpu.vector_store %arg10[%c400_193, %c0_194], %279 {strides = array<i32>} : memref<432x512xbf16, #tpu.memory_space<vmem>>, vector<16x512xbf16>,
    %c0_195 = arith.constant 0 : index
    %c201_196 = arith.constant 201 : index
    %281 = vector.load %arg9[%c0_195, %c201_196] : memref<16x768xf32, #tpu.memory_space<vmem>>, vector<16x512xf32>
    %282 = vector.broadcast %7 : vector<1x512xf32> to vector<16x512xf32>
    %283 = arith.mulf %281, %282 : vector<16x512xf32>
    %284 = arith.truncf %283 : vector<16x512xf32> to vector<16x512xbf16>
    %c416_197 = arith.constant 416 : index
    %c0_198 = arith.constant 0 : index
    %285 = vector.load %arg10[%c416_197, %c0_198] : memref<432x512xbf16, #tpu.memory_space<vmem>>, vector<16x512xbf16>
    tpu.vector_store %arg10[%c416_197, %c0_198], %284 {strides = array<i32>} : memref<432x512xbf16, #tpu.memory_space<vmem>>, vector<16x512xbf16>,
    %c0_199 = arith.constant 0 : index
    %c0_200 = arith.constant 0 : index
    %286 = vector.load %arg4[%c0_199, %c0_200] : memref<8x432xbf16, #tpu.memory_space<vmem>>, vector<8x432xbf16>
    %c0_201 = arith.constant 0 : index
    %c0_202 = arith.constant 0 : index
    %287 = vector.load %arg10[%c0_201, %c0_202] : memref<432x512xbf16, #tpu.memory_space<vmem>>, vector<432x512xbf16>
    %cst_203 = arith.constant dense<0.000000e+00> : vector<8x512xf32>
    %288 = tpu.matmul %286, %287, %cst_203 {dimension_numbers = #tpu.dot_dimension_numbers<[1], [0], [0], [1], [0, 0, 1, 1], [], []>} : vector<8x432xbf16>, vector<432x512xbf16>, vector<8x512xf32> -> vector<8x512xf32>
    %c0_204 = arith.constant 0 : index
    %c0_205 = arith.constant 0 : index
    %289 = vector.load %arg5[%c0_204, %c0_205] : memref<8x1xf32, #tpu.memory_space<vmem>>, vector<8x1xf32>
    %290 = vector.broadcast %289 : vector<8x1xf32> to vector<8x512xf32>
    %291 = arith.addf %288, %290 : vector<8x512xf32>
    %cst_206 = arith.constant 0.000000e+00 : f32
    %292 = vector.broadcast %cst_206 : f32 to vector<8x512xf32>
    %293 = arith.maximumf %291, %292 : vector<8x512xf32>
    %c0_207 = arith.constant 0 : index
    %c0_208 = arith.constant 0 : index
    %c0_209 = arith.constant 0 : index
    %294 = vector.load %arg7[%c0_207, %c0_208, %c0_209] : memref<1x8x512xf32, #tpu.memory_space<vmem>>, vector<1x8x512xf32>
    %295 = vector.shape_cast %294 : vector<1x8x512xf32> to vector<8x512xf32>
    %296 = vector.shape_cast %293 : vector<8x512xf32> to vector<1x8x512xf32>
    tpu.vector_store %arg7[%c0_207, %c0_208, %c0_209], %296 {strides = array<i32>} : memref<1x8x512xf32, #tpu.memory_space<vmem>>, vector<1x8x512xf32>,
    return
  }
  func.func @transform_0(%arg0: i32) -> (i32, i32, i32) {
    %c0_i32 = arith.constant 0 : i32
    %c0_i32_0 = arith.constant 0 : i32
    %c0_i32_1 = arith.constant 0 : i32
    return %arg0, %c0_i32, %c0_i32_0 : i32, i32, i32
  }
  func.func @transform_1(%arg0: i32) -> (i32, i32) {
    %c0_i32 = arith.constant 0 : i32
    %c0_i32_0 = arith.constant 0 : i32
    %c0_i32_1 = arith.constant 0 : i32
    return %c0_i32, %c0_i32_0 : i32, i32
  }
  func.func @transform_2(%arg0: i32) -> (i32, i32) {
    %c0_i32 = arith.constant 0 : i32
    %c0_i32_0 = arith.constant 0 : i32
    %c0_i32_1 = arith.constant 0 : i32
    return %c0_i32, %c0_i32_0 : i32, i32
  }
  func.func @transform_3(%arg0: i32) -> (i32, i32) {
    %c0_i32 = arith.constant 0 : i32
    %c0_i32_0 = arith.constant 0 : i32
    %c0_i32_1 = arith.constant 0 : i32
    return %c0_i32, %c0_i32_0 : i32, i32
  }
  func.func @transform_4(%arg0: i32) -> (i32, i32) {
    %c0_i32 = arith.constant 0 : i32
    %c0_i32_0 = arith.constant 0 : i32
    %c0_i32_1 = arith.constant 0 : i32
    return %c0_i32, %c0_i32_0 : i32, i32
  }
  func.func @transform_5(%arg0: i32) -> (i32, i32) {
    %c0_i32 = arith.constant 0 : i32
    %c0_i32_0 = arith.constant 0 : i32
    %c0_i32_1 = arith.constant 0 : i32
    return %c0_i32, %c0_i32_0 : i32, i32
  }
  func.func @transform_6(%arg0: i32) -> (i32, i32, i32) {
    %c0_i32 = arith.constant 0 : i32
    %c0_i32_0 = arith.constant 0 : i32
    %c0_i32_1 = arith.constant 0 : i32
    return %arg0, %c0_i32, %c0_i32_0 : i32, i32, i32
  }
}

</mosaic_0001>

<llo_original>
// kernel: conv_relu_encoder3d_forward.1
$region0: #{conv_relu_encoder3d_forward.1}
  #allocation0 [shape = 'u32[]', space=smem, size = 0x4, offset = 0x4, fixed_abs, tag = 'smem constant byte address 0x4 - core index']
  #allocation1 [shape = 'u32[144,128]{1,0:T(1,128)}', space=vmem, size = 0x12000, scoped, tag = 'internal scratch']
  #allocation2 [shape = 'f32[16,768]{1,0:T(8,128)}', space=vmem, size = 0xc000, scoped, tag = 'scratch operand']
  #allocation3 [shape = 'f32[16,768]{1,0:T(8,128)}', space=vmem, size = 0xc000, scoped, tag = 'scratch operand']
  #allocation4 [shape = 'bf16[432,512]{1,0:T(8,128)(2,1)}', space=vmem, size = 0x6c000, scoped, tag = 'scratch operand']
  %s0 = inlined_call_operand.vmem [shape: f32[2,16,512], index: 0, kind: input, shape index: {}]
  %s1 = inlined_call_operand.vmem [shape: bf16[16,432], index: 1, kind: input, shape index: {}]
  %s2 = inlined_call_operand.vmem [shape: f32[16,1], index: 2, kind: input, shape index: {}]
  %s3 = inlined_call_operand.vmem [shape: bf16[8,432], index: 3, kind: input, shape index: {}]
  %s4 = inlined_call_operand.vmem [shape: f32[8,1], index: 4, kind: input, shape index: {}]
  %s5 = inlined_call_operand.vmem [shape: f32[9,512], index: 5, kind: input, shape index: {}]
  %s6 = inlined_call_operand.vmem [shape: f32[2,8,512], index: 6, kind: output, shape index: {}]
  %s7 = sld [smem:[#allocation0]]
  $region57: #{conv_relu_encoder3d_forward.1} parent=0
    _
  %s9 = ssub.s32 1, %s7
  %s10 = scalar_select 0, %s9, %s7
  loop: start=0, step=1, limit=4
  $region2: #{conv_relu_encoder3d_forward.1} parent=0 // loop_pre_header
    _
  $region3: #{conv_relu_encoder3d_forward.1} parent=0 // loop_header
    %s12 = sphi 0, %s16
    %p13 = scmp.ge.s32.totalorder %s12, 4
    %s22 = sphi 0, %s24
    %s25 = sphi 0, %s22
    %s26 = sphi 0, %s25
    %s42 = sphi 0, %s26
    %s46 = sphi 0, %s46
    %s48 = sphi 0, %s46
    %s49 = sphi 0, %s48
    %s63 = sphi 0, %s49
    %s67 = sphi 0, %s67
    %s69 = sphi 0, %s67
    %s70 = sphi 0, %s69
    %s84 = sphi 0, %s70
    %s88 = sphi 0, %s88
    %s90 = sphi 0, %s88
    %s91 = sphi 0, %s90
    %s105 = sphi 0, %s91
    %s109 = sphi 0, %s109
    %s111 = sphi 0, %s109
    %s112 = sphi 0, %s111
    %s126 = sphi 0, %s112
    %s130 = sphi 0, %s130
    %s132 = sphi 0, %s130
    %s133 = sphi 0, %s132
    %s147 = sphi 0, %s133
    %s153 = sphi 0, %s155
    %s156 = sphi 0, %s153
    %s157 = sphi 0, %s156
    %s173 = sphi 0, %s157
  $region4: #{conv_relu_encoder3d_forward.1} parent=0 // loop_header_branch
    %15 = sbr.rel (%p13) target = $region8
  $region5: #{conv_relu_encoder3d_forward.1} parent=0 // loop_body
    %s17 = ssub.s32 %s12, 1
    %s18 = ssub.s32 %s12, 2
    %s19 = sadd.s32 %s12, 1
    %s20 = ssub.s32 %s12, %s19
    %p21 = scmp.eq.s32.totalorder %s20, 0
    %s23 = sadd.s32 %s22, 1
    %s24 = scalar_select %p21, %s22, %s23
    %p27 = pneg %p21
    %p28 = scmp.eq.s32.totalorder %s12, 1
    %p29 = por %p27, %p28
    %p30 = scmp.ne.s32.totalorder %s22, %s25
    %p31 = scmp.eq.s32.totalorder %s12, 0
    %p32 = por %p30, %p31
    %p33 = scmp.ne.s32.totalorder %s22, %s25
    %p34 = scmp.eq.s32.totalorder %s17, 1
    %p35 = por %p33, %p34
    %p36 = scmp.ne.s32.totalorder %s25, %s26
    %p37 = scmp.eq.s32.totalorder %s17, 0
    %p38 = por %p36, %p37
    %p39 = scmp.ne.s32.totalorder %s25, %s26
    %p40 = scmp.eq.s32.totalorder %s18, 1
    %p41 = por %p39, %p40
    %p43 = scmp.ne.s32.totalorder %s26, %s42
    %p44 = scmp.eq.s32.totalorder %s18, 0
    %p45 = por %p43, %p44
    %s47 = sadd.s32 %s46, 1
    %p50 = scmp.eq.s32.totalorder %s12, 1
    %p51 = scmp.ne.s32.totalorder %s46, %s48
    %p52 = scmp.eq.s32.totalorder %s12, 0
    %p53 = por %p51, %p52
    %p54 = scmp.ne.s32.totalorder %s46, %s48
    %p55 = scmp.eq.s32.totalorder %s17, 1
    %p56 = por %p54, %p55
    %p57 = scmp.ne.s32.totalorder %s48, %s49
    %p58 = scmp.eq.s32.totalorder %s17, 0
    %p59 = por %p57, %p58
    %p60 = scmp.ne.s32.totalorder %s48, %s49
    %p61 = scmp.eq.s32.totalorder %s18, 1
    %p62 = por %p60, %p61
    %p64 = scmp.ne.s32.totalorder %s49, %s63
    %p65 = scmp.eq.s32.totalorder %s18, 0
    %p66 = por %p64, %p65
    %s68 = sadd.s32 %s67, 1
    %p71 = scmp.eq.s32.totalorder %s12, 1
    %p72 = scmp.ne.s32.totalorder %s67, %s69
    %p73 = scmp.eq.s32.totalorder %s12, 0
    %p74 = por %p72, %p73
    %p75 = scmp.ne.s32.totalorder %s67, %s69
    %p76 = scmp.eq.s32.totalorder %s17, 1
    %p77 = por %p75, %p76
    %p78 = scmp.ne.s32.totalorder %s69, %s70
    %p79 = scmp.eq.s32.totalorder %s17, 0
    %p80 = por %p78, %p79
    %p81 = scmp.ne.s32.totalorder %s69, %s70
    %p82 = scmp.eq.s32.totalorder %s18, 1
    %p83 = por %p81, %p82
    %p85 = scmp.ne.s32.totalorder %s70, %s84
    %p86 = scmp.eq.s32.totalorder %s18, 0
    %p87 = por %p85, %p86
    %s89 = sadd.s32 %s88, 1
    %p92 = scmp.eq.s32.totalorder %s12, 1
    %p93 = scmp.ne.s32.totalorder %s88, %s90
    %p94 = scmp.eq.s32.totalorder %s12, 0
    %p95 = por %p93, %p94
    %p96 = scmp.ne.s32.totalorder %s88, %s90
    %p97 = scmp.eq.s32.totalorder %s17, 1
    %p98 = por %p96, %p97
    %p99 = scmp.ne.s32.totalorder %s90, %s91
    %p100 = scmp.eq.s32.totalorder %s17, 0
    %p101 = por %p99, %p100
    %p102 = scmp.ne.s32.totalorder %s90, %s91
    %p103 = scmp.eq.s32.totalorder %s18, 1
    %p104 = por %p102, %p103
    %p106 = scmp.ne.s32.totalorder %s91, %s105
    %p107 = scmp.eq.s32.totalorder %s18, 0
    %p108 = por %p106, %p107
    %s110 = sadd.s32 %s109, 1
    %p113 = scmp.eq.s32.totalorder %s12, 1
    %p114 = scmp.ne.s32.totalorder %s109, %s111
    %p115 = scmp.eq.s32.totalorder %s12, 0
    %p116 = por %p114, %p115
    %p117 = scmp.ne.s32.totalorder %s109, %s111
    %p118 = scmp.eq.s32.totalorder %s17, 1
    %p119 = por %p117, %p118
    %p120 = scmp.ne.s32.totalorder %s111, %s112
    %p121 = scmp.eq.s32.totalorder %s17, 0
    %p122 = por %p120, %p121
    %p123 = scmp.ne.s32.totalorder %s111, %s112
    %p124 = scmp.eq.s32.totalorder %s18, 1
    %p125 = por %p123, %p124
    %p127 = scmp.ne.s32.totalorder %s112, %s126
    %p128 = scmp.eq.s32.totalorder %s18, 0
    %p129 = por %p127, %p128
    %s131 = sadd.s32 %s130, 1
    %p134 = scmp.eq.s32.totalorder %s12, 1
    %p135 = scmp.ne.s32.totalorder %s130, %s132
    %p136 = scmp.eq.s32.totalorder %s12, 0
    %p137 = por %p135, %p136
    %p138 = scmp.ne.s32.totalorder %s130, %s132
    %p139 = scmp.eq.s32.totalorder %s17, 1
    %p140 = por %p138, %p139
    %p141 = scmp.ne.s32.totalorder %s132, %s133
    %p142 = scmp.eq.s32.totalorder %s17, 0
    %p143 = por %p141, %p142
    %p144 = scmp.ne.s32.totalorder %s132, %s133
    %p145 = scmp.eq.s32.totalorder %s18, 1
    %p146 = por %p144, %p145
    %p148 = scmp.ne.s32.totalorder %s133, %s147
    %p149 = scmp.eq.s32.totalorder %s18, 0
    %p150 = por %p148, %p149
    %s151 = ssub.s32 %s12, %s19
    %p152 = scmp.eq.s32.totalorder %s151, 0
    %s154 = sadd.s32 %s153, 1
    %s155 = scalar_select %p152, %s153, %s154
    %p158 = pneg %p152
    %p159 = scmp.eq.s32.totalorder %s12, 1
    %p160 = por %p158, %p159
    %p161 = scmp.ne.s32.totalorder %s153, %s156
    %p162 = scmp.eq.s32.totalorder %s12, 0
    %p163 = por %p161, %p162
    %p164 = scmp.ne.s32.totalorder %s153, %s156
    %p165 = scmp.eq.s32.totalorder %s17, 1
    %p166 = por %p164, %p165
    %p167 = scmp.ne.s32.totalorder %s156, %s157
    %p168 = scmp.eq.s32.totalorder %s17, 0
    %p169 = por %p167, %p168
    %p170 = scmp.ne.s32.totalorder %s156, %s157
    %p171 = scmp.eq.s32.totalorder %s18, 1
    %p172 = por %p170, %p171
    %p174 = scmp.ne.s32.totalorder %s157, %s173
    %p175 = scmp.eq.s32.totalorder %s18, 0
    %p176 = por %p174, %p175
    %p177 = scmp.le.s32.totalorder 1, %s12
    %p178 = scmp.lt.s32.totalorder %s12, 3
    %p179 = pnand %p177, %p178
    %p180 = pneg %p179
    // Predicated region
    $region9: #{conv_relu_encoder3d_forward.1} parent=5 // pred_check
      _
    $region10: #{conv_relu_encoder3d_forward.1} parent=5 // pred_check_branch
      %182 = sbr.rel (%p179) target = $region12
    $region11: #{conv_relu_encoder3d_forward.1} parent=5 // pred_region
      %s183 = ssub.s32 %s12, 1
      // Predicated region
      $region13: #{conv_relu_encoder3d_forward.1} parent=11 // pred_check
        %p184 = pneg %p59
      $region14: #{conv_relu_encoder3d_forward.1} parent=11 // pred_check_branch
        %186 = sbr.rel (%p184) target = $region16
      $region15: #{conv_relu_encoder3d_forward.1} parent=11 // pred_region
        _
      $region16: #{conv_relu_encoder3d_forward.1} parent=11 // pred_fallthru
        _
      // Predicated region
      $region17: #{conv_relu_encoder3d_forward.1} parent=11 // pred_check
        %p187 = pneg %p80
      $region18: #{conv_relu_encoder3d_forward.1} parent=11 // pred_check_branch
        %189 = sbr.rel (%p187) target = $region20
      $region19: #{conv_relu_encoder3d_forward.1} parent=11 // pred_region
        _
      $region20: #{conv_relu_encoder3d_forward.1} parent=11 // pred_fallthru
        _
      // Predicated region
      $region21: #{conv_relu_encoder3d_forward.1} parent=11 // pred_check
        %p190 = pneg %p101
      $region22: #{conv_relu_encoder3d_forward.1} parent=11 // pred_check_branch
        %192 = sbr.rel (%p190) target = $region24
      $region23: #{conv_relu_encoder3d_forward.1} parent=11 // pred_region
        _
      $region24: #{conv_relu_encoder3d_forward.1} parent=11 // pred_fallthru
        _
      // Predicated region
      $region25: #{conv_relu_encoder3d_forward.1} parent=11 // pred_check
        %p193 = pneg %p122
      $region26: #{conv_relu_encoder3d_forward.1} parent=11 // pred_check_branch
        %195 = sbr.rel (%p193) target = $region28
      $region27: #{conv_relu_encoder3d_forward.1} parent=11 // pred_region
        _
      $region28: #{conv_relu_encoder3d_forward.1} parent=11 // pred_fallthru
        _
      // Predicated region
      $region29: #{conv_relu_encoder3d_forward.1} parent=11 // pred_check
        %p196 = pneg %p143
      $region30: #{conv_relu_encoder3d_forward.1} parent=11 // pred_check_branch
        %198 = sbr.rel (%p196) target = $region32
      $region31: #{conv_relu_encoder3d_forward.1} parent=11 // pred_region
        _
      $region32: #{conv_relu_encoder3d_forward.1} parent=11 // pred_fallthru
        _
    $region12: #{conv_relu_encoder3d_forward.1} parent=5 // pred_fallthru
      _
    %p199 = scmp.lt.s32.totalorder %s12, 2
    // Predicated region
    $region33: #{conv_relu_encoder3d_forward.1} parent=5 // pred_check
      %p200 = pneg %p199
    $region34: #{conv_relu_encoder3d_forward.1} parent=5 // pred_check_branch
      %202 = sbr.rel (%p200) target = $region36
    $region35: #{conv_relu_encoder3d_forward.1} parent=5 // pred_region
      // Predicated region
      $region37: #{conv_relu_encoder3d_forward.1} parent=35 // pred_check
        %p203 = pneg %p32
      $region38: #{conv_relu_encoder3d_forward.1} parent=35 // pred_check_branch
        %205 = sbr.rel (%p203) target = $region40
      $region39: #{conv_relu_encoder3d_forward.1} parent=35 // pred_region
        %p206 = scmp.lt.s32.totalorder %s12, 1
        %s207 = scalar_select %p206, %s12, 1
        %s208 = smul.addr %s207, 8
        %s209 = smul.addr %s208, 8
        %s210 = scalar_lea.vmem %s0, %s209
      $region40: #{conv_relu_encoder3d_forward.1} parent=35 // pred_fallthru
        _
    $region36: #{conv_relu_encoder3d_forward.1} parent=5 // pred_fallthru
      _
    %p211 = scmp.le.s32.totalorder 1, %s12
    %p212 = scmp.lt.s32.totalorder %s12, 3
    %p213 = pnand %p211, %p212
    %p214 = pneg %p213
    // Predicated region
    $region41: #{conv_relu_encoder3d_forward.1} parent=5 // pred_check
      _
    $region42: #{conv_relu_encoder3d_forward.1} parent=5 // pred_check_branch
      %216 = sbr.rel (%p213) target = $region44
    $region43: #{conv_relu_encoder3d_forward.1} parent=5 // pred_region
      %s217 = ssub.s32 %s12, 1
      %p218 = scmp.lt.s32.totalorder %s17, 1
      %s219 = scalar_select %p218, %s17, 1
      %s220 = smul.addr %s219, 8
      %s221 = smul.addr %s220, 8
      %s222 = scalar_lea.vmem %s0, %s221
      %p223 = pneg %p38
      %p224 = pneg %p35
      %p225 = pneg %p59
      %p226 = pneg %p56
      %p227 = pneg %p80
      %p228 = pneg %p77
      %p229 = pneg %p101
      %p230 = pneg %p98
      %p231 = pneg %p122
      %p232 = pneg %p119
      %p233 = pneg %p143
      %p234 = pneg %p140
      %p235 = pneg %p169
      %p236 = pneg %p166
      %p237 = scmp.lt.s32.totalorder %s17, 1
      %s238 = scalar_select %p237, %s17, 1
      %s239 = smul.addr %s238, 4
      %s240 = smul.addr %s239, 8
      %s241 = scalar_lea.vmem %s6, %s240
      %p242 = scmp.lt.s32.totalorder %s17, 1
      %s243 = scalar_select %p242, %s17, 1
      %s244 = smul.addr %s243, 8
      %s245 = smul.addr %s244, 8
      %s246 = scalar_lea.vmem %s0, %s245
      %p247 = scmp.lt.s32.totalorder %s17, 1
      %s248 = scalar_select %p247, %s17, 1
      %s249 = smul.addr %s248, 4
      %s250 = smul.addr %s249, 8
      %s251 = scalar_lea.vmem %s6, %s250
      %v253 = vld [vmem:[%s5] ss:$8 sm:$0xf]
      %s254 = scalar_lea.vmem %s5, 1
      %v255 = vld [vmem:[%s254] ss:$8 sm:$0xf]
      %s256 = scalar_lea.vmem %s5, 2
      %v257 = vld [vmem:[%s256] ss:$8 sm:$0xf]
      %s258 = scalar_lea.vmem %s5, 3
      %v259 = vld [vmem:[%s258] ss:$8 sm:$0xf]
      %s260 = scalar_lea.vmem %s5, 5
      %v261 = vld [vmem:[%s260] ss:$8 sm:$0xf]
      %s262 = scalar_lea.vmem %s5, 6
      %v263 = vld [vmem:[%s262] ss:$8 sm:$0xf]
      %s264 = scalar_lea.vmem %s5, 7
      %v265 = vld [vmem:[%s264] ss:$8 sm:$0xf]
      %s266 = scalar_lea.vmem %s5, 32
      %v267 = vld [vmem:[%s266] ss:$8 sm:$0xf]
      %268 = vst [vmem:[#allocation2] sm:$0xff] 0.0
      %269 = vst [vmem:[#allocation2 + $0x30] sm:$0xff] 0.0
      %270 = vst [vmem:[#allocation2 + $0x28] sm:$0xff] 0.0
      %271 = vst [vmem:[#allocation2 + $0x58] sm:$0xff] 0.0
      %v272 = vld [vmem:[%s246] sm:$0xff]
      %v273 = vld [vmem:[%s246 + $0x8] sm:$0xff]
      %v274 = vld [vmem:[%s246 + $0x10] sm:$0xff]
      %v275 = vld [vmem:[%s246 + $0x18] sm:$0xff]
      %v276 = vld [vmem:[%s246 + $0x20] sm:$0xff]
      %v277 = vld [vmem:[%s246 + $0x28] sm:$0xff]
      %v278 = vld [vmem:[%s246 + $0x30] sm:$0xff]
      %v279 = vld [vmem:[%s246 + $0x38] sm:$0xff]
      %280 = vst [vmem:[#allocation2 + $0x8] sm:$0xff] %v272
      %281 = vst [vmem:[#allocation2 + $0x10] sm:$0xff] %v273
      %282 = vst [vmem:[#allocation2 + $0x18] sm:$0xff] %v274
      %283 = vst [vmem:[#allocation2 + $0x20] sm:$0xff] %v275
      %284 = vst [vmem:[#allocation2 + $0x38] sm:$0xff] %v276
      %285 = vst [vmem:[#allocation2 + $0x40] sm:$0xff] %v277
      %286 = vst [vmem:[#allocation2 + $0x48] sm:$0xff] %v278
      %287 = vst [vmem:[#allocation2 + $0x50] sm:$0xff] %v279
      %v288 = vld [vmem:[#allocation2] sm:$0xff]
      %v289 = vld [vmem:[#allocation2 + $0x8] sm:$0xff]
      %v290 = vld [vmem:[#allocation2 + $0x10] sm:$0xff]
      %v291 = vld [vmem:[#allocation2 + $0x18] sm:$0xff]
      %v292 = vld [vmem:[#allocation2 + $0x20] sm:$0xff]
      %v293 = vld [vmem:[#allocation2 + $0x30] sm:$0xff]
      %v294 = vld [vmem:[#allocation2 + $0x38] sm:$0xff]
      %v295 = vld [vmem:[#allocation2 + $0x40] sm:$0xff]
      %v296 = vld [vmem:[#allocation2 + $0x48] sm:$0xff]
      %v297 = vld [vmem:[#allocation2 + $0x50] sm:$0xff]
      %v299 = vlaneseq
      %v300 = vshrl.u32 %v299, 7
      %v301 = vsub.s32 0, %v300
      %v302 = vrot.slane %v253, %v301
      %v303 = vlaneseq
      %v304 = vshrl.u32 %v303, 7
      %v305 = vsub.s32 1, %v304
      %v306 = vrot.slane %v253, %v305
      %v307 = vlaneseq
      %v308 = vshrl.u32 %v307, 7
      %v309 = vsub.s32 2, %v308
      %v310 = vrot.slane %v253, %v309
      %v311 = vlaneseq
      %v312 = vshrl.u32 %v311, 7
      %v313 = vsub.s32 3, %v312
      %v314 = vrot.slane %v253, %v313
      %315 = vrot.lane.b32.xlu0 %v302, 55
      %v316 = vpop.permute.xlu0 %315
      %317 = vrot.lane.b32.xlu0 %v306, 55
      %v318 = vpop.permute.xlu0 %317
      %319 = vrot.lane.b32.xlu0 %v310, 55
      %v320 = vpop.permute.xlu0 %319
      %321 = vrot.lane.b32.xlu0 %v314, 55
      %v322 = vpop.permute.xlu0 %321
      %vm323 = vcmask 449536
      %v324 = vsel %vm323, %v316, %v318
      %v325 = vsel %vm323, %v318, %v320
      %v326 = vsel %vm323, %v320, %v322
      %v332 = vmul.f32 %v288, %v316
      %v333 = vmul.f32 %v289, %v324
      %v334 = vmul.f32 %v290, %v325
      %v335 = vmul.f32 %v291, %v326
      %v336 = vmul.f32 %v292, %v322
      %v337 = vmul.f32 %v293, %v316
      %v338 = vmul.f32 %v294, %v324
      %v339 = vmul.f32 %v295, %v325
      %v340 = vmul.f32 %v296, %v326
      %v341 = vmul.f32 %v297, %v322
      %v342 = vpack.c.bf16 %v337, %v332
      %v343 = vpack.c.bf16 %v338, %v333
      %v344 = vpack.c.bf16 %v339, %v334
      %v345 = vpack.c.bf16 %v340, %v335
      %v346 = vpack.c.bf16 %v341, %v336
      %v352 = vunpack.c.l.b16 %v342
      %v353 = vunpack.c.l.b16 %v343
      %v354 = vunpack.c.l.b16 %v344
      %v355 = vunpack.c.l.b16 %v345
      %v356 = vunpack.c.l.b16 %v346
      %v357 = vunpack.c.h.b16 %v342
      %v358 = vunpack.c.h.b16 %v343
      %v359 = vunpack.c.h.b16 %v344
      %v360 = vunpack.c.h.b16 %v345
      %v361 = vunpack.c.h.b16 %v346
      %v362 = vpack.c.b16 %v353, %v352
      %v363 = vpack.c.b16 %v355, %v354
      %v364 = vpack.c.b16 %v356, %v356
      %v365 = vpack.c.b16 %v358, %v357
      %v366 = vpack.c.b16 %v360, %v359
      %v367 = vpack.c.b16 %v361, %v361
      %368 = vrot.lane.b32.xlu0 %v362, 73
      %v369 = vpop.permute.xlu0 %368
      %370 = vrot.lane.b32.xlu0 %v363, 73
      %v371 = vpop.permute.xlu0 %370
      %372 = vrot.lane.b32.xlu0 %v364, 73
      %v373 = vpop.permute.xlu0 %372
      %374 = vrot.lane.b32.xlu0 %v365, 73
      %v375 = vpop.permute.xlu0 %374
      %376 = vrot.lane.b32.xlu0 %v366, 73
      %v377 = vpop.permute.xlu0 %376
      %378 = vrot.lane.b32.xlu0 %v367, 73
      %v379 = vpop.permute.xlu0 %378
      %v380 = vrot.slane %v369, 4
      %v381 = vrot.slane %v371, 4
      %v382 = vrot.slane %v373, 4
      %v383 = vrot.slane %v375, 4
      %v384 = vrot.slane %v377, 4
      %v385 = vrot.slane %v379, 4
      %vm386 = vcmask 1043456
      %v387 = vsel %vm386, %v380, %v381
      %vm388 = vcmask 596992
      %v389 = vsel %vm388, %v369, %v387
      %v390 = vsel %vm386, %v381, %v382
      %v391 = vsel %vm388, %v371, %v390
      %v392 = vsel %vm386, %v383, %v384
      %v393 = vsel %vm388, %v375, %v392
      %v394 = vsel %vm386, %v384, %v385
      %v395 = vsel %vm388, %v377, %v394
      %400 = vst [vmem:[#allocation4] sm:$0xff] %v389
      %401 = vst [vmem:[#allocation4 + $0x8] sm:$0xff] %v391
      %402 = vst [vmem:[#allocation4 + $0x10] sm:$0xff] %v393
      %403 = vst [vmem:[#allocation4 + $0x18] sm:$0xff] %v395
      %v404 = vld [vmem:[#allocation2] sm:$0xff]
      %v405 = vld [vmem:[#allocation2 + $0x8] sm:$0xff]
      %v406 = vld [vmem:[#allocation2 + $0x10] sm:$0xff]
      %v407 = vld [vmem:[#allocation2 + $0x18] sm:$0xff]
      %v408 = vld [vmem:[#allocation2 + $0x20] sm:$0xff]
      %v409 = vld [vmem:[#allocation2 + $0x30] sm:$0xff]
      %v410 = vld [vmem:[#allocation2 + $0x38] sm:$0xff]
      %v411 = vld [vmem:[#allocation2 + $0x40] sm:$0xff]
      %v412 = vld [vmem:[#allocation2 + $0x48] sm:$0xff]
      %v413 = vld [vmem:[#allocation2 + $0x50] sm:$0xff]
      %v415 = vlaneseq
      %v416 = vshrl.u32 %v415, 7
      %v417 = vsub.s32 0, %v416
      %v418 = vrot.slane %v255, %v417
      %v419 = vlaneseq
      %v420 = vshrl.u32 %v419, 7
      %v421 = vsub.s32 1, %v420
      %v422 = vrot.slane %v255, %v421
      %v423 = vlaneseq
      %v424 = vshrl.u32 %v423, 7
      %v425 = vsub.s32 2, %v424
      %v426 = vrot.slane %v255, %v425
      %v427 = vlaneseq
      %v428 = vshrl.u32 %v427, 7
      %v429 = vsub.s32 3, %v428
      %v430 = vrot.slane %v255, %v429
      %431 = vrot.lane.b32.xlu0 %v418, 56
      %v432 = vpop.permute.xlu0 %431
      %433 = vrot.lane.b32.xlu0 %v422, 56
      %v434 = vpop.permute.xlu0 %433
      %435 = vrot.lane.b32.xlu0 %v426, 56
      %v436 = vpop.permute.xlu0 %435
      %437 = vrot.lane.b32.xlu0 %v430, 56
      %v438 = vpop.permute.xlu0 %437
      %vm439 = vcmask 457728
      %v440 = vsel %vm439, %v432, %v434
      %v441 = vsel %vm439, %v434, %v436
      %v442 = vsel %vm439, %v436, %v438
      %v448 = vmul.f32 %v404, %v432
      %v449 = vmul.f32 %v405, %v440
      %v450 = vmul.f32 %v406, %v441
      %v451 = vmul.f32 %v407, %v442
      %v452 = vmul.f32 %v408, %v438
      %v453 = vmul.f32 %v409, %v432
      %v454 = vmul.f32 %v410, %v440
      %v455 = vmul.f32 %v411, %v441
      %v456 = vmul.f32 %v412, %v442
      %v457 = vmul.f32 %v413, %v438
      %v458 = vpack.c.bf16 %v453, %v448
      %v459 = vpack.c.bf16 %v454, %v449
      %v460 = vpack.c.bf16 %v455, %v450
      %v461 = vpack.c.bf16 %v456, %v451
      %v462 = vpack.c.bf16 %v457, %v452
      %v468 = vunpack.c.l.b16 %v458
      %v469 = vunpack.c.l.b16 %v459
      %v470 = vunpack.c.l.b16 %v460
      %v471 = vunpack.c.l.b16 %v461
      %v472 = vunpack.c.l.b16 %v462
      %v473 = vunpack.c.h.b16 %v458
      %v474 = vunpack.c.h.b16 %v459
      %v475 = vunpack.c.h.b16 %v460
      %v476 = vunpack.c.h.b16 %v461
      %v477 = vunpack.c.h.b16 %v462
      %v478 = vpack.c.b16 %v469, %v468
      %v479 = vpack.c.b16 %v471, %v470
      %v480 = vpack.c.b16 %v472, %v472
      %v481 = vpack.c.b16 %v474, %v473
      %v482 = vpack.c.b16 %v476, %v475
      %v483 = vpack.c.b16 %v477, %v477
      %484 = vrot.lane.b32.xlu0 %v478, 72
      %v485 = vpop.permute.xlu0 %484
      %486 = vrot.lane.b32.xlu0 %v479, 72
      %v487 = vpop.permute.xlu0 %486
      %488 = vrot.lane.b32.xlu0 %v480, 72
      %v489 = vpop.permute.xlu0 %488
      %490 = vrot.lane.b32.xlu0 %v481, 72
      %v491 = vpop.permute.xlu0 %490
      %492 = vrot.lane.b32.xlu0 %v482, 72
      %v493 = vpop.permute.xlu0 %492
      %494 = vrot.lane.b32.xlu0 %v483, 72
      %v495 = vpop.permute.xlu0 %494
      %v496 = vrot.slane %v485, 4
      %v497 = vrot.slane %v487, 4
      %v498 = vrot.slane %v489, 4
      %v499 = vrot.slane %v491, 4
      %v500 = vrot.slane %v493, 4
      %v501 = vrot.slane %v495, 4
      %v502 = vsel %vm386, %v496, %v497
      %vm503 = vcmask 588800
      %v504 = vsel %vm503, %v485, %v502
      %v505 = vsel %vm386, %v497, %v498
      %v506 = vsel %vm503, %v487, %v505
      %v507 = vsel %vm386, %v499, %v500
      %v508 = vsel %vm503, %v491, %v507
      %v509 = vsel %vm386, %v500, %v501
      %v510 = vsel %vm503, %v493, %v509
      %515 = vst [vmem:[#allocation4 + $0x20] sm:$0xff] %v504
      %516 = vst [vmem:[#allocation4 + $0x28] sm:$0xff] %v506
      %517 = vst [vmem:[#allocation4 + $0x30] sm:$0xff] %v508
      %518 = vst [vmem:[#allocation4 + $0x38] sm:$0xff] %v510
      %v519 = vld [vmem:[#allocation2] sm:$0xff]
      %v520 = vld [vmem:[#allocation2 + $0x8] sm:$0xff]
      %v521 = vld [vmem:[#allocation2 + $0x10] sm:$0xff]
      %v522 = vld [vmem:[#allocation2 + $0x18] sm:$0xff]
      %v523 = vld [vmem:[#allocation2 + $0x20] sm:$0xff]
      %v524 = vld [vmem:[#allocation2 + $0x30] sm:$0xff]
      %v525 = vld [vmem:[#allocation2 + $0x38] sm:$0xff]
      %v526 = vld [vmem:[#allocation2 + $0x40] sm:$0xff]
      %v527 = vld [vmem:[#allocation2 + $0x48] sm:$0xff]
      %v528 = vld [vmem:[#allocation2 + $0x50] sm:$0xff]
      %v530 = vlaneseq
      %v531 = vshrl.u32 %v530, 7
      %v532 = vsub.s32 0, %v531
      %v533 = vrot.slane %v257, %v532
      %v534 = vlaneseq
      %v535 = vshrl.u32 %v534, 7
      %v536 = vsub.s32 1, %v535
      %v537 = vrot.slane %v257, %v536
      %v538 = vlaneseq
      %v539 = vshrl.u32 %v538, 7
      %v540 = vsub.s32 2, %v539
      %v541 = vrot.slane %v257, %v540
      %v542 = vlaneseq
      %v543 = vshrl.u32 %v542, 7
      %v544 = vsub.s32 3, %v543
      %v545 = vrot.slane %v257, %v544
      %546 = vrot.lane.b32.xlu0 %v533, 57
      %v547 = vpop.permute.xlu0 %546
      %548 = vrot.lane.b32.xlu0 %v537, 57
      %v549 = vpop.permute.xlu0 %548
      %550 = vrot.lane.b32.xlu0 %v541, 57
      %v551 = vpop.permute.xlu0 %550
      %552 = vrot.lane.b32.xlu0 %v545, 57
      %v553 = vpop.permute.xlu0 %552
      %vm554 = vcmask 465920
      %v555 = vsel %vm554, %v547, %v549
      %v556 = vsel %vm554, %v549, %v551
      %v557 = vsel %vm554, %v551, %v553
      %v563 = vmul.f32 %v519, %v547
      %v564 = vmul.f32 %v520, %v555
      %v565 = vmul.f32 %v521, %v556
      %v566 = vmul.f32 %v522, %v557
      %v567 = vmul.f32 %v523, %v553
      %v568 = vmul.f32 %v524, %v547
      %v569 = vmul.f32 %v525, %v555
      %v570 = vmul.f32 %v526, %v556
      %v571 = vmul.f32 %v527, %v557
      %v572 = vmul.f32 %v528, %v553
      %v573 = vpack.c.bf16 %v568, %v563
      %v574 = vpack.c.bf16 %v569, %v564
      %v575 = vpack.c.bf16 %v570, %v565
      %v576 = vpack.c.bf16 %v571, %v566
      %v577 = vpack.c.bf16 %v572, %v567
      %v583 = vunpack.c.l.b16 %v573
      %v584 = vunpack.c.l.b16 %v574
      %v585 = vunpack.c.l.b16 %v575
      %v586 = vunpack.c.l.b16 %v576
      %v587 = vunpack.c.l.b16 %v577
      %v588 = vunpack.c.h.b16 %v573
      %v589 = vunpack.c.h.b16 %v574
      %v590 = vunpack.c.h.b16 %v575
      %v591 = vunpack.c.h.b16 %v576
      %v592 = vunpack.c.h.b16 %v577
      %v593 = vpack.c.b16 %v584, %v583
      %v594 = vpack.c.b16 %v586, %v585
      %v595 = vpack.c.b16 %v587, %v587
      %v596 = vpack.c.b16 %v589, %v588
      %v597 = vpack.c.b16 %v591, %v590
      %v598 = vpack.c.b16 %v592, %v592
      %599 = vrot.lane.b32.xlu0 %v593, 71
      %v600 = vpop.permute.xlu0 %599
      %601 = vrot.lane.b32.xlu0 %v594, 71
      %v602 = vpop.permute.xlu0 %601
      %603 = vrot.lane.b32.xlu0 %v595, 71
      %v604 = vpop.permute.xlu0 %603
      %605 = vrot.lane.b32.xlu0 %v596, 71
      %v606 = vpop.permute.xlu0 %605
      %607 = vrot.lane.b32.xlu0 %v597, 71
      %v608 = vpop.permute.xlu0 %607
      %609 = vrot.lane.b32.xlu0 %v598, 71
      %v610 = vpop.permute.xlu0 %609
      %v611 = vrot.slane %v600, 4
      %v612 = vrot.slane %v602, 4
      %v613 = vrot.slane %v604, 4
      %v614 = vrot.slane %v606, 4
      %v615 = vrot.slane %v608, 4
      %v616 = vrot.slane %v610, 4
      %v617 = vsel %vm386, %v611, %v612
      %vm618 = vcmask 580608
      %v619 = vsel %vm618, %v600, %v617
      %v620 = vsel %vm386, %v612, %v613
      %v621 = vsel %vm618, %v602, %v620
      %v622 = vsel %vm386, %v614, %v615
      %v623 = vsel %vm618, %v606, %v622
      %v624 = vsel %vm386, %v615, %v616
      %v625 = vsel %vm618, %v608, %v624
      %630 = vst [vmem:[#allocation4 + $0x40] sm:$0xff] %v619
      %631 = vst [vmem:[#allocation4 + $0x48] sm:$0xff] %v621
      %632 = vst [vmem:[#allocation4 + $0x50] sm:$0xff] %v623
      %633 = vst [vmem:[#allocation4 + $0x58] sm:$0xff] %v625
      %v634 = vld [vmem:[#allocation2] sm:$0xff]
      %v635 = vld [vmem:[#allocation2 + $0x8] sm:$0xff]
      %v636 = vld [vmem:[#allocation2 + $0x10] sm:$0xff]
      %v637 = vld [vmem:[#allocation2 + $0x18] sm:$0xff]
      %v638 = vld [vmem:[#allocation2 + $0x20] sm:$0xff]
      %v639 = vld [vmem:[#allocation2 + $0x30] sm:$0xff]
      %v640 = vld [vmem:[#allocation2 + $0x38] sm:$0xff]
      %v641 = vld [vmem:[#allocation2 + $0x40] sm:$0xff]
      %v642 = vld [vmem:[#allocation2 + $0x48] sm:$0xff]
      %v643 = vld [vmem:[#allocation2 + $0x50] sm:$0xff]
      %v645 = vlaneseq
      %v646 = vshrl.u32 %v645, 7
      %v647 = vsub.s32 0, %v646
      %v648 = vrot.slane %v259, %v647
      %v649 = vlaneseq
      %v650 = vshrl.u32 %v649, 7
      %v651 = vsub.s32 1, %v650
      %v652 = vrot.slane %v259, %v651
      %v653 = vlaneseq
      %v654 = vshrl.u32 %v653, 7
      %v655 = vsub.s32 2, %v654
      %v656 = vrot.slane %v259, %v655
      %v657 = vlaneseq
      %v658 = vshrl.u32 %v657, 7
      %v659 = vsub.s32 3, %v658
      %v660 = vrot.slane %v259, %v659
      %661 = vrot.lane.b32.xlu0 %v648, 63
      %v662 = vpop.permute.xlu0 %661
      %663 = vrot.lane.b32.xlu0 %v652, 63
      %v664 = vpop.permute.xlu0 %663
      %665 = vrot.lane.b32.xlu0 %v656, 63
      %v666 = vpop.permute.xlu0 %665
      %667 = vrot.lane.b32.xlu0 %v660, 63
      %v668 = vpop.permute.xlu0 %667
      %vm669 = vcmask 515072
      %v670 = vsel %vm669, %v662, %v664
      %v671 = vsel %vm669, %v664, %v666
      %v672 = vsel %vm669, %v666, %v668
      %v678 = vmul.f32 %v634, %v662
      %v679 = vmul.f32 %v635, %v670
      %v680 = vmul.f32 %v636, %v671
      %v681 = vmul.f32 %v637, %v672
      %v682 = vmul.f32 %v638, %v668
      %v683 = vmul.f32 %v639, %v662
      %v684 = vmul.f32 %v640, %v670
      %v685 = vmul.f32 %v641, %v671
      %v686 = vmul.f32 %v642, %v672
      %v687 = vmul.f32 %v643, %v668
      %v688 = vpack.c.bf16 %v683, %v678
      %v689 = vpack.c.bf16 %v684, %v679
      %v690 = vpack.c.bf16 %v685, %v680
      %v691 = vpack.c.bf16 %v686, %v681
      %v692 = vpack.c.bf16 %v687, %v682
      %v698 = vunpack.c.l.b16 %v688
      %v699 = vunpack.c.l.b16 %v689
      %v700 = vunpack.c.l.b16 %v690
      %v701 = vunpack.c.l.b16 %v691
      %v702 = vunpack.c.l.b16 %v692
      %v703 = vunpack.c.h.b16 %v688
      %v704 = vunpack.c.h.b16 %v689
      %v705 = vunpack.c.h.b16 %v690
      %v706 = vunpack.c.h.b16 %v691
      %v707 = vunpack.c.h.b16 %v692
      %v708 = vpack.c.b16 %v699, %v698
      %v709 = vpack.c.b16 %v701, %v700
      %v710 = vpack.c.b16 %v702, %v702
      %v711 = vpack.c.b16 %v704, %v703
      %v712 = vpack.c.b16 %v706, %v705
      %v713 = vpack.c.b16 %v707, %v707
      %714 = vrot.lane.b32.xlu0 %v708, 65
      %v715 = vpop.permute.xlu0 %714
      %716 = vrot.lane.b32.xlu0 %v709, 65
      %v717 = vpop.permute.xlu0 %716
      %718 = vrot.lane.b32.xlu0 %v710, 65
      %v719 = vpop.permute.xlu0 %718
      %720 = vrot.lane.b32.xlu0 %v711, 65
      %v721 = vpop.permute.xlu0 %720
      %722 = vrot.lane.b32.xlu0 %v712, 65
      %v723 = vpop.permute.xlu0 %722
      %724 = vrot.lane.b32.xlu0 %v713, 65
      %v725 = vpop.permute.xlu0 %724
      %v726 = vrot.slane %v715, 4
      %v727 = vrot.slane %v717, 4
      %v728 = vrot.slane %v719, 4
      %v729 = vrot.slane %v721, 4
      %v730 = vrot.slane %v723, 4
      %v731 = vrot.slane %v725, 4
      %v732 = vsel %vm386, %v726, %v727
      %vm733 = vcmask 531456
      %v734 = vsel %vm733, %v715, %v732
      %v735 = vsel %vm386, %v727, %v728
      %v736 = vsel %vm733, %v717, %v735
      %v737 = vsel %vm386, %v729, %v730
      %v738 = vsel %vm733, %v721, %v737
      %v739 = vsel %vm386, %v730, %v731
      %v740 = vsel %vm733, %v723, %v739
      %745 = vst [vmem:[#allocation4 + $0x60] sm:$0xff] %v734
      %746 = vst [vmem:[#allocation4 + $0x68] sm:$0xff] %v736
      %747 = vst [vmem:[#allocation4 + $0x70] sm:$0xff] %v738
      %748 = vst [vmem:[#allocation4 + $0x78] sm:$0xff] %v740
      %v749 = vld [vmem:[#allocation2] sm:$0xff]
      %v750 = vld [vmem:[#allocation2 + $0x8] sm:$0xff]
      %v751 = vld [vmem:[#allocation2 + $0x10] sm:$0xff]
      %v752 = vld [vmem:[#allocation2 + $0x18] sm:$0xff]
      %v753 = vld [vmem:[#allocation2 + $0x20] sm:$0xff]
      %v754 = vld [vmem:[#allocation2 + $0x30] sm:$0xff]
      %v755 = vld [vmem:[#allocation2 + $0x38] sm:$0xff]
      %v756 = vld [vmem:[#allocation2 + $0x40] sm:$0xff]
      %v757 = vld [vmem:[#allocation2 + $0x48] sm:$0xff]
      %v758 = vld [vmem:[#allocation2 + $0x50] sm:$0xff]
      %v759 = vpack.c.bf16 %v754, %v749
      %v760 = vpack.c.bf16 %v755, %v750
      %v761 = vpack.c.bf16 %v756, %v751
      %v762 = vpack.c.bf16 %v757, %v752
      %v763 = vpack.c.bf16 %v758, %v753
      %v769 = vunpack.c.l.b16 %v759
      %v770 = vunpack.c.l.b16 %v760
      %v771 = vunpack.c.l.b16 %v761
      %v772 = vunpack.c.l.b16 %v762
      %v773 = vunpack.c.l.b16 %v763
      %v774 = vunpack.c.h.b16 %v759
      %v775 = vunpack.c.h.b16 %v760
      %v776 = vunpack.c.h.b16 %v761
      %v777 = vunpack.c.h.b16 %v762
      %v778 = vunpack.c.h.b16 %v763
      %v779 = vpack.c.b16 %v770, %v769
      %v780 = vpack.c.b16 %v772, %v771
      %v781 = vpack.c.b16 %v773, %v773
      %v782 = vpack.c.b16 %v775, %v774
      %v783 = vpack.c.b16 %v777, %v776
      %v784 = vpack.c.b16 %v778, %v778
      %785 = vrot.lane.b32.xlu0 %v779, 64
      %v786 = vpop.permute.xlu0 %785
      %787 = vrot.lane.b32.xlu0 %v780, 64
      %v788 = vpop.permute.xlu0 %787
      %789 = vrot.lane.b32.xlu0 %v781, 64
      %v790 = vpop.permute.xlu0 %789
      %791 = vrot.lane.b32.xlu0 %v782, 64
      %v792 = vpop.permute.xlu0 %791
      %793 = vrot.lane.b32.xlu0 %v783, 64
      %v794 = vpop.permute.xlu0 %793
      %795 = vrot.lane.b32.xlu0 %v784, 64
      %v796 = vpop.permute.xlu0 %795
      %v797 = vrot.slane %v786, 4
      %v798 = vrot.slane %v788, 4
      %v799 = vrot.slane %v790, 4
      %v800 = vrot.slane %v792, 4
      %v801 = vrot.slane %v794, 4
      %v802 = vrot.slane %v796, 4
      %v803 = vsel %vm386, %v797, %v798
      %vm804 = vcmask 523264
      %v805 = vsel %vm804, %v786, %v803
      %v806 = vsel %vm386, %v798, %v799
      %v807 = vsel %vm804, %v788, %v806
      %v808 = vsel %vm386, %v800, %v801
      %v809 = vsel %vm804, %v792, %v808
      %v810 = vsel %vm386, %v801, %v802
      %v811 = vsel %vm804, %v794, %v810
      %816 = vst [vmem:[#allocation4 + $0x80] sm:$0xff] %v805
      %817 = vst [vmem:[#allocation4 + $0x88] sm:$0xff] %v807
      %818 = vst [vmem:[#allocation4 + $0x90] sm:$0xff] %v809
      %819 = vst [vmem:[#allocation4 + $0x98] sm:$0xff] %v811
      %v820 = vld [vmem:[#allocation2] sm:$0xff]
      %v821 = vld [vmem:[#allocation2 + $0x8] sm:$0xff]
      %v822 = vld [vmem:[#allocation2 + $0x10] sm:$0xff]
      %v823 = vld [vmem:[#allocation2 + $0x18] sm:$0xff]
      %v824 = vld [vmem:[#allocation2 + $0x20] sm:$0xff]
      %v825 = vld [vmem:[#allocation2 + $0x30] sm:$0xff]
      %v826 = vld [vmem:[#allocation2 + $0x38] sm:$0xff]
      %v827 = vld [vmem:[#allocation2 + $0x40] sm:$0xff]
      %v828 = vld [vmem:[#allocation2 + $0x48] sm:$0xff]
      %v829 = vld [vmem:[#allocation2 + $0x50] sm:$0xff]
      %v831 = vlaneseq
      %v832 = vshrl.u32 %v831, 7
      %v833 = vsub.s32 0, %v832
      %v834 = vrot.slane %v261, %v833
      %v835 = vlaneseq
      %v836 = vshrl.u32 %v835, 7
      %v837 = vsub.s32 1, %v836
      %v838 = vrot.slane %v261, %v837
      %v839 = vlaneseq
      %v840 = vshrl.u32 %v839, 7
      %v841 = vsub.s32 2, %v840
      %v842 = vrot.slane %v261, %v841
      %v843 = vlaneseq
      %v844 = vshrl.u32 %v843, 7
      %v845 = vsub.s32 3, %v844
      %v846 = vrot.slane %v261, %v845
      %847 = vrot.lane.b32.xlu0 %v834, 65
      %v848 = vpop.permute.xlu0 %847
      %849 = vrot.lane.b32.xlu0 %v838, 65
      %v850 = vpop.permute.xlu0 %849
      %851 = vrot.lane.b32.xlu0 %v842, 65
      %v852 = vpop.permute.xlu0 %851
      %853 = vrot.lane.b32.xlu0 %v846, 65
      %v854 = vpop.permute.xlu0 %853
      %vm855 = vcmask 531456
      %v856 = vsel %vm855, %v848, %v850
      %v857 = vsel %vm855, %v850, %v852
      %v858 = vsel %vm855, %v852, %v854
      %v864 = vmul.f32 %v820, %v848
      %v865 = vmul.f32 %v821, %v856
      %v866 = vmul.f32 %v822, %v857
      %v867 = vmul.f32 %v823, %v858
      %v868 = vmul.f32 %v824, %v854
      %v869 = vmul.f32 %v825, %v848
      %v870 = vmul.f32 %v826, %v856
      %v871 = vmul.f32 %v827, %v857
      %v872 = vmul.f32 %v828, %v858
      %v873 = vmul.f32 %v829, %v854
      %v874 = vpack.c.bf16 %v869, %v864
      %v875 = vpack.c.bf16 %v870, %v865
      %v876 = vpack.c.bf16 %v871, %v866
      %v877 = vpack.c.bf16 %v872, %v867
      %v878 = vpack.c.bf16 %v873, %v868
      %v884 = vunpack.c.l.b16 %v874
      %v885 = vunpack.c.l.b16 %v875
      %v886 = vunpack.c.l.b16 %v876
      %v887 = vunpack.c.l.b16 %v877
      %v888 = vunpack.c.l.b16 %v878
      %v889 = vunpack.c.h.b16 %v874
      %v890 = vunpack.c.h.b16 %v875
      %v891 = vunpack.c.h.b16 %v876
      %v892 = vunpack.c.h.b16 %v877
      %v893 = vunpack.c.h.b16 %v878
      %v894 = vpack.c.b16 %v885, %v884
      %v895 = vpack.c.b16 %v887, %v886
      %v896 = vpack.c.b16 %v888, %v888
      %v897 = vpack.c.b16 %v890, %v889
      %v898 = vpack.c.b16 %v892, %v891
      %v899 = vpack.c.b16 %v893, %v893
      %900 = vrot.lane.b32.xlu0 %v894, 63
      %v901 = vpop.permute.xlu0 %900
      %902 = vrot.lane.b32.xlu0 %v895, 63
      %v903 = vpop.permute.xlu0 %902
      %904 = vrot.lane.b32.xlu0 %v896, 63
      %v905 = vpop.permute.xlu0 %904
      %906 = vrot.lane.b32.xlu0 %v897, 63
      %v907 = vpop.permute.xlu0 %906
      %908 = vrot.lane.b32.xlu0 %v898, 63
      %v909 = vpop.permute.xlu0 %908
      %910 = vrot.lane.b32.xlu0 %v899, 63
      %v911 = vpop.permute.xlu0 %910
      %v912 = vrot.slane %v901, 4
      %v913 = vrot.slane %v903, 4
      %v914 = vrot.slane %v905, 4
      %v915 = vrot.slane %v907, 4
      %v916 = vrot.slane %v909, 4
      %v917 = vrot.slane %v911, 4
      %v918 = vsel %vm386, %v912, %v913
      %vm919 = vcmask 515072
      %v920 = vsel %vm919, %v901, %v918
      %v921 = vsel %vm386, %v913, %v914
      %v922 = vsel %vm919, %v903, %v921
      %v923 = vsel %vm386, %v915, %v916
      %v924 = vsel %vm919, %v907, %v923
      %v925 = vsel %vm386, %v916, %v917
      %v926 = vsel %vm919, %v909, %v925
      %931 = vst [vmem:[#allocation4 + $0xa0] sm:$0xff] %v920
      %932 = vst [vmem:[#allocation4 + $0xa8] sm:$0xff] %v922
      %933 = vst [vmem:[#allocation4 + $0xb0] sm:$0xff] %v924
      %934 = vst [vmem:[#allocation4 + $0xb8] sm:$0xff] %v926
      %v935 = vld [vmem:[#allocation2] sm:$0xff]
      %v936 = vld [vmem:[#allocation2 + $0x8] sm:$0xff]
      %v937 = vld [vmem:[#allocation2 + $0x10] sm:$0xff]
      %v938 = vld [vmem:[#allocation2 + $0x18] sm:$0xff]
      %v939 = vld [vmem:[#allocation2 + $0x20] sm:$0xff]
      %v940 = vld [vmem:[#allocation2 + $0x30] sm:$0xff]
      %v941 = vld [vmem:[#allocation2 + $0x38] sm:$0xff]
      %v942 = vld [vmem:[#allocation2 + $0x40] sm:$0xff]
      %v943 = vld [vmem:[#allocation2 + $0x48] sm:$0xff]
      %v944 = vld [vmem:[#allocation2 + $0x50] sm:$0xff]
      %v946 = vlaneseq
      %v947 = vshrl.u32 %v946, 7
      %v948 = vsub.s32 0, %v947
      %v949 = vrot.slane %v263, %v948
      %v950 = vlaneseq
      %v951 = vshrl.u32 %v950, 7
      %v952 = vsub.s32 1, %v951
      %v953 = vrot.slane %v263, %v952
      %v954 = vlaneseq
      %v955 = vshrl.u32 %v954, 7
      %v956 = vsub.s32 2, %v955
      %v957 = vrot.slane %v263, %v956
      %v958 = vlaneseq
      %v959 = vshrl.u32 %v958, 7
      %v960 = vsub.s32 3, %v959
      %v961 = vrot.slane %v263, %v960
      %962 = vrot.lane.b32.xlu0 %v949, 71
      %v963 = vpop.permute.xlu0 %962
      %964 = vrot.lane.b32.xlu0 %v953, 71
      %v965 = vpop.permute.xlu0 %964
      %966 = vrot.lane.b32.xlu0 %v957, 71
      %v967 = vpop.permute.xlu0 %966
      %968 = vrot.lane.b32.xlu0 %v961, 71
      %v969 = vpop.permute.xlu0 %968
      %vm970 = vcmask 580608
      %v971 = vsel %vm970, %v963, %v965
      %v972 = vsel %vm970, %v965, %v967
      %v973 = vsel %vm970, %v967, %v969
      %v979 = vmul.f32 %v935, %v963
      %v980 = vmul.f32 %v936, %v971
      %v981 = vmul.f32 %v937, %v972
      %v982 = vmul.f32 %v938, %v973
      %v983 = vmul.f32 %v939, %v969
      %v984 = vmul.f32 %v940, %v963
      %v985 = vmul.f32 %v941, %v971
      %v986 = vmul.f32 %v942, %v972
      %v987 = vmul.f32 %v943, %v973
      %v988 = vmul.f32 %v944, %v969
      %v989 = vpack.c.bf16 %v984, %v979
      %v990 = vpack.c.bf16 %v985, %v980
      %v991 = vpack.c.bf16 %v986, %v981
      %v992 = vpack.c.bf16 %v987, %v982
      %v993 = vpack.c.bf16 %v988, %v983
      %v999 = vunpack.c.l.b16 %v989
      %v1000 = vunpack.c.l.b16 %v990
      %v1001 = vunpack.c.l.b16 %v991
      %v1002 = vunpack.c.l.b16 %v992
      %v1003 = vunpack.c.l.b16 %v993
      %v1004 = vunpack.c.h.b16 %v989
      %v1005 = vunpack.c.h.b16 %v990
      %v1006 = vunpack.c.h.b16 %v991
      %v1007 = vunpack.c.h.b16 %v992
      %v1008 = vunpack.c.h.b16 %v993
      %v1009 = vpack.c.b16 %v1000, %v999
      %v1010 = vpack.c.b16 %v1002, %v1001
      %v1011 = vpack.c.b16 %v1003, %v1003
      %v1012 = vpack.c.b16 %v1005, %v1004
      %v1013 = vpack.c.b16 %v1007, %v1006
      %v1014 = vpack.c.b16 %v1008, %v1008
      %1015 = vrot.lane.b32.xlu0 %v1009, 57
      %v1016 = vpop.permute.xlu0 %1015
      %1017 = vrot.lane.b32.xlu0 %v1010, 57
      %v1018 = vpop.permute.xlu0 %1017
      %1019 = vrot.lane.b32.xlu0 %v1011, 57
      %v1020 = vpop.permute.xlu0 %1019
      %1021 = vrot.lane.b32.xlu0 %v1012, 57
      %v1022 = vpop.permute.xlu0 %1021
      %1023 = vrot.lane.b32.xlu0 %v1013, 57
      %v1024 = vpop.permute.xlu0 %1023
      %1025 = vrot.lane.b32.xlu0 %v1014, 57
      %v1026 = vpop.permute.xlu0 %1025
      %v1027 = vrot.slane %v1016, 4
      %v1028 = vrot.slane %v1018, 4
      %v1029 = vrot.slane %v1020, 4
      %v1030 = vrot.slane %v1022, 4
      %v1031 = vrot.slane %v1024, 4
      %v1032 = vrot.slane %v1026, 4
      %v1033 = vsel %vm386, %v1027, %v1028
      %vm1034 = vcmask 465920
      %v1035 = vsel %vm1034, %v1016, %v1033
      %v1036 = vsel %vm386, %v1028, %v1029
      %v1037 = vsel %vm1034, %v1018, %v1036
      %v1038 = vsel %vm386, %v1030, %v1031
      %v1039 = vsel %vm1034, %v1022, %v1038
      %v1040 = vsel %vm386, %v1031, %v1032
      %v1041 = vsel %vm1034, %v1024, %v1040
      %1046 = vst [vmem:[#allocation4 + $0xc0] sm:$0xff] %v1035
      %1047 = vst [vmem:[#allocation4 + $0xc8] sm:$0xff] %v1037
      %1048 = vst [vmem:[#allocation4 + $0xd0] sm:$0xff] %v1039
      %1049 = vst [vmem:[#allocation4 + $0xd8] sm:$0xff] %v1041
      %v1050 = vld [vmem:[#allocation2] sm:$0xff]
      %v1051 = vld [vmem:[#allocation2 + $0x8] sm:$0xff]
      %v1052 = vld [vmem:[#allocation2 + $0x10] sm:$0xff]
      %v1053 = vld [vmem:[#allocation2 + $0x18] sm:$0xff]
      %v1054 = vld [vmem:[#allocation2 + $0x20] sm:$0xff]
      %v1055 = vld [vmem:[#allocation2 + $0x30] sm:$0xff]
      %v1056 = vld [vmem:[#allocation2 + $0x38] sm:$0xff]
      %v1057 = vld [vmem:[#allocation2 + $0x40] sm:$0xff]
      %v1058 = vld [vmem:[#allocation2 + $0x48] sm:$0xff]
      %v1059 = vld [vmem:[#allocation2 + $0x50] sm:$0xff]
      %v1061 = vlaneseq
      %v1062 = vshrl.u32 %v1061, 7
      %v1063 = vsub.s32 0, %v1062
      %v1064 = vrot.slane %v265, %v1063
      %v1065 = vlaneseq
      %v1066 = vshrl.u32 %v1065, 7
      %v1067 = vsub.s32 1, %v1066
      %v1068 = vrot.slane %v265, %v1067
      %v1069 = vlaneseq
      %v1070 = vshrl.u32 %v1069, 7
      %v1071 = vsub.s32 2, %v1070
      %v1072 = vrot.slane %v265, %v1071
      %v1073 = vlaneseq
      %v1074 = vshrl.u32 %v1073, 7
      %v1075 = vsub.s32 3, %v1074
      %v1076 = vrot.slane %v265, %v1075
      %1077 = vrot.lane.b32.xlu0 %v1064, 72
      %v1078 = vpop.permute.xlu0 %1077
      %1079 = vrot.lane.b32.xlu0 %v1068, 72
      %v1080 = vpop.permute.xlu0 %1079
      %1081 = vrot.lane.b32.xlu0 %v1072, 72
      %v1082 = vpop.permute.xlu0 %1081
      %1083 = vrot.lane.b32.xlu0 %v1076, 72
      %v1084 = vpop.permute.xlu0 %1083
      %vm1085 = vcmask 588800
      %v1086 = vsel %vm1085, %v1078, %v1080
      %v1087 = vsel %vm1085, %v1080, %v1082
      %v1088 = vsel %vm1085, %v1082, %v1084
      %v1094 = vmul.f32 %v1050, %v1078
      %v1095 = vmul.f32 %v1051, %v1086
      %v1096 = vmul.f32 %v1052, %v1087
      %v1097 = vmul.f32 %v1053, %v1088
      %v1098 = vmul.f32 %v1054, %v1084
      %v1099 = vmul.f32 %v1055, %v1078
      %v1100 = vmul.f32 %v1056, %v1086
      %v1101 = vmul.f32 %v1057, %v1087
      %v1102 = vmul.f32 %v1058, %v1088
      %v1103 = vmul.f32 %v1059, %v1084
      %v1104 = vpack.c.bf16 %v1099, %v1094
      %v1105 = vpack.c.bf16 %v1100, %v1095
      %v1106 = vpack.c.bf16 %v1101, %v1096
      %v1107 = vpack.c.bf16 %v1102, %v1097
      %v1108 = vpack.c.bf16 %v1103, %v1098
      %v1114 = vunpack.c.l.b16 %v1104
      %v1115 = vunpack.c.l.b16 %v1105
      %v1116 = vunpack.c.l.b16 %v1106
      %v1117 = vunpack.c.l.b16 %v1107
      %v1118 = vunpack.c.l.b16 %v1108
      %v1119 = vunpack.c.h.b16 %v1104
      %v1120 = vunpack.c.h.b16 %v1105
      %v1121 = vunpack.c.h.b16 %v1106
      %v1122 = vunpack.c.h.b16 %v1107
      %v1123 = vunpack.c.h.b16 %v1108
      %v1124 = vpack.c.b16 %v1115, %v1114
      %v1125 = vpack.c.b16 %v1117, %v1116
      %v1126 = vpack.c.b16 %v1118, %v1118
      %v1127 = vpack.c.b16 %v1120, %v1119
      %v1128 = vpack.c.b16 %v1122, %v1121
      %v1129 = vpack.c.b16 %v1123, %v1123
      %1130 = vrot.lane.b32.xlu0 %v1124, 56
      %v1131 = vpop.permute.xlu0 %1130
      %1132 = vrot.lane.b32.xlu0 %v1125, 56
      %v1133 = vpop.permute.xlu0 %1132
      %1134 = vrot.lane.b32.xlu0 %v1126, 56
      %v1135 = vpop.permute.xlu0 %1134
      %1136 = vrot.lane.b32.xlu0 %v1127, 56
      %v1137 = vpop.permute.xlu0 %1136
      %1138 = vrot.lane.b32.xlu0 %v1128, 56
      %v1139 = vpop.permute.xlu0 %1138
      %1140 = vrot.lane.b32.xlu0 %v1129, 56
      %v1141 = vpop.permute.xlu0 %1140
      %v1142 = vrot.slane %v1131, 4
      %v1143 = vrot.slane %v1133, 4
      %v1144 = vrot.slane %v1135, 4
      %v1145 = vrot.slane %v1137, 4
      %v1146 = vrot.slane %v1139, 4
      %v1147 = vrot.slane %v1141, 4
      %v1148 = vsel %vm386, %v1142, %v1143
      %vm1149 = vcmask 457728
      %v1150 = vsel %vm1149, %v1131, %v1148
      %v1151 = vsel %vm386, %v1143, %v1144
      %v1152 = vsel %vm1149, %v1133, %v1151
      %v1153 = vsel %vm386, %v1145, %v1146
      %v1154 = vsel %vm1149, %v1137, %v1153
      %v1155 = vsel %vm386, %v1146, %v1147
      %v1156 = vsel %vm1149, %v1139, %v1155
      %1161 = vst [vmem:[#allocation4 + $0xe0] sm:$0xff] %v1150
      %1162 = vst [vmem:[#allocation4 + $0xe8] sm:$0xff] %v1152
      %1163 = vst [vmem:[#allocation4 + $0xf0] sm:$0xff] %v1154
      %1164 = vst [vmem:[#allocation4 + $0xf8] sm:$0xff] %v1156
      %v1165 = vld [vmem:[#allocation2] sm:$0xff]
      %v1166 = vld [vmem:[#allocation2 + $0x8] sm:$0xff]
      %v1167 = vld [vmem:[#allocation2 + $0x10] sm:$0xff]
      %v1168 = vld [vmem:[#allocation2 + $0x18] sm:$0xff]
      %v1169 = vld [vmem:[#allocation2 + $0x20] sm:$0xff]
      %v1170 = vld [vmem:[#allocation2 + $0x30] sm:$0xff]
      %v1171 = vld [vmem:[#allocation2 + $0x38] sm:$0xff]
      %v1172 = vld [vmem:[#allocation2 + $0x40] sm:$0xff]
      %v1173 = vld [vmem:[#allocation2 + $0x48] sm:$0xff]
      %v1174 = vld [vmem:[#allocation2 + $0x50] sm:$0xff]
      %v1176 = vlaneseq
      %v1177 = vshrl.u32 %v1176, 7
      %v1178 = vsub.s32 0, %v1177
      %v1179 = vrot.slane %v267, %v1178
      %v1180 = vlaneseq
      %v1181 = vshrl.u32 %v1180, 7
      %v1182 = vsub.s32 1, %v1181
      %v1183 = vrot.slane %v267, %v1182
      %v1184 = vlaneseq
      %v1185 = vshrl.u32 %v1184, 7
      %v1186 = vsub.s32 2, %v1185
      %v1187 = vrot.slane %v267, %v1186
      %v1188 = vlaneseq
      %v1189 = vshrl.u32 %v1188, 7
      %v1190 = vsub.s32 3, %v1189
      %v1191 = vrot.slane %v267, %v1190
      %1192 = vrot.lane.b32.xlu0 %v1179, 73
      %v1193 = vpop.permute.xlu0 %1192
      %1194 = vrot.lane.b32.xlu0 %v1183, 73
      %v1195 = vpop.permute.xlu0 %1194
      %1196 = vrot.lane.b32.xlu0 %v1187, 73
      %v1197 = vpop.permute.xlu0 %1196
      %1198 = vrot.lane.b32.xlu0 %v1191, 73
      %v1199 = vpop.permute.xlu0 %1198
      %vm1200 = vcmask 596992
      %v1201 = vsel %vm1200, %v1193, %v1195
      %v1202 = vsel %vm1200, %v1195, %v1197
      %v1203 = vsel %vm1200, %v1197, %v1199
      %v1209 = vmul.f32 %v1165, %v1193
      %v1210 = vmul.f32 %v1166, %v1201
      %v1211 = vmul.f32 %v1167, %v1202
      %v1212 = vmul.f32 %v1168, %v1203
      %v1213 = vmul.f32 %v1169, %v1199
      %v1214 = vmul.f32 %v1170, %v1193
      %v1215 = vmul.f32 %v1171, %v1201
      %v1216 = vmul.f32 %v1172, %v1202
      %v1217 = vmul.f32 %v1173, %v1203
      %v1218 = vmul.f32 %v1174, %v1199
      %v1219 = vpack.c.bf16 %v1214, %v1209
      %v1220 = vpack.c.bf16 %v1215, %v1210
      %v1221 = vpack.c.bf16 %v1216, %v1211
      %v1222 = vpack.c.bf16 %v1217, %v1212
      %v1223 = vpack.c.bf16 %v1218, %v1213
      %v1229 = vunpack.c.l.b16 %v1219
      %v1230 = vunpack.c.l.b16 %v1220
      %v1231 = vunpack.c.l.b16 %v1221
      %v1232 = vunpack.c.l.b16 %v1222
      %v1233 = vunpack.c.l.b16 %v1223
      %v1234 = vunpack.c.h.b16 %v1219
      %v1235 = vunpack.c.h.b16 %v1220
      %v1236 = vunpack.c.h.b16 %v1221
      %v1237 = vunpack.c.h.b16 %v1222
      %v1238 = vunpack.c.h.b16 %v1223
      %v1239 = vpack.c.b16 %v1230, %v1229
      %v1240 = vpack.c.b16 %v1232, %v1231
      %v1241 = vpack.c.b16 %v1233, %v1233
      %v1242 = vpack.c.b16 %v1235, %v1234
      %v1243 = vpack.c.b16 %v1237, %v1236
      %v1244 = vpack.c.b16 %v1238, %v1238
      %1245 = vrot.lane.b32.xlu0 %v1239, 55
      %v1246 = vpop.permute.xlu0 %1245
      %1247 = vrot.lane.b32.xlu0 %v1240, 55
      %v1248 = vpop.permute.xlu0 %1247
      %1249 = vrot.lane.b32.xlu0 %v1241, 55
      %v1250 = vpop.permute.xlu0 %1249
      %1251 = vrot.lane.b32.xlu0 %v1242, 55
      %v1252 = vpop.permute.xlu0 %1251
      %1253 = vrot.lane.b32.xlu0 %v1243, 55
      %v1254 = vpop.permute.xlu0 %1253
      %1255 = vrot.lane.b32.xlu0 %v1244, 55
      %v1256 = vpop.permute.xlu0 %1255
      %v1257 = vrot.slane %v1246, 4
      %v1258 = vrot.slane %v1248, 4
      %v1259 = vrot.slane %v1250, 4
      %v1260 = vrot.slane %v1252, 4
      %v1261 = vrot.slane %v1254, 4
      %v1262 = vrot.slane %v1256, 4
      %v1263 = vsel %vm386, %v1257, %v1258
      %vm1264 = vcmask 449536
      %v1265 = vsel %vm1264, %v1246, %v1263
      %v1266 = vsel %vm386, %v1258, %v1259
      %v1267 = vsel %vm1264, %v1248, %v1266
      %v1268 = vsel %vm386, %v1260, %v1261
      %v1269 = vsel %vm1264, %v1252, %v1268
      %v1270 = vsel %vm386, %v1261, %v1262
      %v1271 = vsel %vm1264, %v1254, %v1270
      %1276 = vst [vmem:[#allocation4 + $0x100] sm:$0xff] %v1265
      %1277 = vst [vmem:[#allocation4 + $0x108] sm:$0xff] %v1267
      %1278 = vst [vmem:[#allocation4 + $0x110] sm:$0xff] %v1269
      %1279 = vst [vmem:[#allocation4 + $0x118] sm:$0xff] %v1271
      %v1280 = vld [vmem:[#allocation2] sm:$0xff]
      %v1281 = vld [vmem:[#allocation2 + $0x8] sm:$0xff]
      %v1282 = vld [vmem:[#allocation2 + $0x10] sm:$0xff]
      %v1283 = vld [vmem:[#allocation2 + $0x18] sm:$0xff]
      %v1284 = vld [vmem:[#allocation2 + $0x20] sm:$0xff]
      %v1285 = vld [vmem:[#allocation2 + $0x30] sm:$0xff]
      %v1286 = vld [vmem:[#allocation2 + $0x38] sm:$0xff]
      %v1287 = vld [vmem:[#allocation2 + $0x40] sm:$0xff]
      %v1288 = vld [vmem:[#allocation2 + $0x48] sm:$0xff]
      %v1289 = vld [vmem:[#allocation2 + $0x50] sm:$0xff]
      %1290 = vrot.lane.b32.xlu0 %v302, 119
      %v1291 = vpop.permute.xlu0 %1290
      %1292 = vrot.lane.b32.xlu0 %v306, 119
      %v1293 = vpop.permute.xlu0 %1292
      %1294 = vrot.lane.b32.xlu0 %v310, 119
      %v1295 = vpop.permute.xlu0 %1294
      %1296 = vrot.lane.b32.xlu0 %v314, 119
      %v1297 = vpop.permute.xlu0 %1296
      %vm1298 = vcmask 973824
      %v1299 = vsel %vm1298, %v1291, %v1293
      %v1300 = vsel %vm1298, %v1293, %v1295
      %v1301 = vsel %vm1298, %v1295, %v1297
      %v1307 = vmul.f32 %v1280, %v1291
      %v1308 = vmul.f32 %v1281, %v1299
      %v1309 = vmul.f32 %v1282, %v1300
      %v1310 = vmul.f32 %v1283, %v1301
      %v1311 = vmul.f32 %v1284, %v1297
      %v1312 = vmul.f32 %v1285, %v1291
      %v1313 = vmul.f32 %v1286, %v1299
      %v1314 = vmul.f32 %v1287, %v1300
      %v1315 = vmul.f32 %v1288, %v1301
      %v1316 = vmul.f32 %v1289, %v1297
      %v1317 = vpack.c.bf16 %v1312, %v1307
      %v1318 = vpack.c.bf16 %v1313, %v1308
      %v1319 = vpack.c.bf16 %v1314, %v1309
      %v1320 = vpack.c.bf16 %v1315, %v1310
      %v1321 = vpack.c.bf16 %v1316, %v1311
      %v1327 = vunpack.c.l.b16 %v1317
      %v1328 = vunpack.c.l.b16 %v1318
      %v1329 = vunpack.c.l.b16 %v1319
      %v1330 = vunpack.c.l.b16 %v1320
      %v1331 = vunpack.c.l.b16 %v1321
      %v1332 = vunpack.c.h.b16 %v1317
      %v1333 = vunpack.c.h.b16 %v1318
      %v1334 = vunpack.c.h.b16 %v1319
      %v1335 = vunpack.c.h.b16 %v1320
      %v1336 = vunpack.c.h.b16 %v1321
      %v1337 = vpack.c.b16 %v1328, %v1327
      %v1338 = vpack.c.b16 %v1330, %v1329
      %v1339 = vpack.c.b16 %v1331, %v1331
      %v1340 = vpack.c.b16 %v1333, %v1332
      %v1341 = vpack.c.b16 %v1335, %v1334
      %v1342 = vpack.c.b16 %v1336, %v1336
      %1343 = vrot.lane.b32.xlu0 %v1337, 9
      %v1344 = vpop.permute.xlu0 %1343
      %1345 = vrot.lane.b32.xlu0 %v1338, 9
      %v1346 = vpop.permute.xlu0 %1345
      %1347 = vrot.lane.b32.xlu0 %v1339, 9
      %v1348 = vpop.permute.xlu0 %1347
      %1349 = vrot.lane.b32.xlu0 %v1340, 9
      %v1350 = vpop.permute.xlu0 %1349
      %1351 = vrot.lane.b32.xlu0 %v1341, 9
      %v1352 = vpop.permute.xlu0 %1351
      %1353 = vrot.lane.b32.xlu0 %v1342, 9
      %v1354 = vpop.permute.xlu0 %1353
      %v1355 = vrot.slane %v1344, 4
      %v1356 = vrot.slane %v1346, 4
      %v1357 = vrot.slane %v1348, 4
      %v1358 = vrot.slane %v1350, 4
      %v1359 = vrot.slane %v1352, 4
      %v1360 = vrot.slane %v1354, 4
      %v1361 = vsel %vm386, %v1355, %v1356
      %vm1362 = vcmask 72704
      %v1363 = vsel %vm1362, %v1344, %v1361
      %v1364 = vsel %vm386, %v1356, %v1357
      %v1365 = vsel %vm1362, %v1346, %v1364
      %v1366 = vsel %vm386, %v1358, %v1359
      %v1367 = vsel %vm1362, %v1350, %v1366
      %v1368 = vsel %vm386, %v1359, %v1360
      %v1369 = vsel %vm1362, %v1352, %v1368
      %1374 = vst [vmem:[#allocation4 + $0x120] sm:$0xff] %v1363
      %1375 = vst [vmem:[#allocation4 + $0x128] sm:$0xff] %v1365
      %1376 = vst [vmem:[#allocation4 + $0x130] sm:$0xff] %v1367
      %1377 = vst [vmem:[#allocation4 + $0x138] sm:$0xff] %v1369
      %v1378 = vld [vmem:[#allocation2] sm:$0xff]
      %v1379 = vld [vmem:[#allocation2 + $0x8] sm:$0xff]
      %v1380 = vld [vmem:[#allocation2 + $0x10] sm:$0xff]
      %v1381 = vld [vmem:[#allocation2 + $0x18] sm:$0xff]
      %v1382 = vld [vmem:[#allocation2 + $0x20] sm:$0xff]
      %v1383 = vld [vmem:[#allocation2 + $0x30] sm:$0xff]
      %v1384 = vld [vmem:[#allocation2 + $0x38] sm:$0xff]
      %v1385 = vld [vmem:[#allocation2 + $0x40] sm:$0xff]
      %v1386 = vld [vmem:[#allocation2 + $0x48] sm:$0xff]
      %v1387 = vld [vmem:[#allocation2 + $0x50] sm:$0xff]
      %1388 = vrot.lane.b32.xlu0 %v418, 120
      %v1389 = vpop.permute.xlu0 %1388
      %1390 = vrot.lane.b32.xlu0 %v422, 120
      %v1391 = vpop.permute.xlu0 %1390
      %1392 = vrot.lane.b32.xlu0 %v426, 120
      %v1393 = vpop.permute.xlu0 %1392
      %1394 = vrot.lane.b32.xlu0 %v430, 120
      %v1395 = vpop.permute.xlu0 %1394
      %vm1396 = vcmask 982016
      %v1397 = vsel %vm1396, %v1389, %v1391
      %v1398 = vsel %vm1396, %v1391, %v1393
      %v1399 = vsel %vm1396, %v1393, %v1395
      %v1405 = vmul.f32 %v1378, %v1389
      %v1406 = vmul.f32 %v1379, %v1397
      %v1407 = vmul.f32 %v1380, %v1398
      %v1408 = vmul.f32 %v1381, %v1399
      %v1409 = vmul.f32 %v1382, %v1395
      %v1410 = vmul.f32 %v1383, %v1389
      %v1411 = vmul.f32 %v1384, %v1397
      %v1412 = vmul.f32 %v1385, %v1398
      %v1413 = vmul.f32 %v1386, %v1399
      %v1414 = vmul.f32 %v1387, %v1395
      %v1415 = vpack.c.bf16 %v1410, %v1405
      %v1416 = vpack.c.bf16 %v1411, %v1406
      %v1417 = vpack.c.bf16 %v1412, %v1407
      %v1418 = vpack.c.bf16 %v1413, %v1408
      %v1419 = vpack.c.bf16 %v1414, %v1409
      %v1425 = vunpack.c.l.b16 %v1415
      %v1426 = vunpack.c.l.b16 %v1416
      %v1427 = vunpack.c.l.b16 %v1417
      %v1428 = vunpack.c.l.b16 %v1418
      %v1429 = vunpack.c.l.b16 %v1419
      %v1430 = vunpack.c.h.b16 %v1415
      %v1431 = vunpack.c.h.b16 %v1416
      %v1432 = vunpack.c.h.b16 %v1417
      %v1433 = vunpack.c.h.b16 %v1418
      %v1434 = vunpack.c.h.b16 %v1419
      %v1435 = vpack.c.b16 %v1426, %v1425
      %v1436 = vpack.c.b16 %v1428, %v1427
      %v1437 = vpack.c.b16 %v1429, %v1429
      %v1438 = vpack.c.b16 %v1431, %v1430
      %v1439 = vpack.c.b16 %v1433, %v1432
      %v1440 = vpack.c.b16 %v1434, %v1434
      %1441 = vrot.lane.b32.xlu0 %v1435, 8
      %v1442 = vpop.permute.xlu0 %1441
      %1443 = vrot.lane.b32.xlu0 %v1436, 8
      %v1444 = vpop.permute.xlu0 %1443
      %1445 = vrot.lane.b32.xlu0 %v1437, 8
      %v1446 = vpop.permute.xlu0 %1445
      %1447 = vrot.lane.b32.xlu0 %v1438, 8
      %v1448 = vpop.permute.xlu0 %1447
      %1449 = vrot.lane.b32.xlu0 %v1439, 8
      %v1450 = vpop.permute.xlu0 %1449
      %1451 = vrot.lane.b32.xlu0 %v1440, 8
      %v1452 = vpop.permute.xlu0 %1451
      %v1453 = vrot.slane %v1442, 4
      %v1454 = vrot.slane %v1444, 4
      %v1455 = vrot.slane %v1446, 4
      %v1456 = vrot.slane %v1448, 4
      %v1457 = vrot.slane %v1450, 4
      %v1458 = vrot.slane %v1452, 4
      %v1459 = vsel %vm386, %v1453, %v1454
      %vm1460 = vcmask 64512
      %v1461 = vsel %vm1460, %v1442, %v1459
      %v1462 = vsel %vm386, %v1454, %v1455
      %v1463 = vsel %vm1460, %v1444, %v1462
      %v1464 = vsel %vm386, %v1456, %v1457
      %v1465 = vsel %vm1460, %v1448, %v1464
      %v1466 = vsel %vm386, %v1457, %v1458
      %v1467 = vsel %vm1460, %v1450, %v1466
      %1472 = vst [vmem:[#allocation4 + $0x140] sm:$0xff] %v1461
      %1473 = vst [vmem:[#allocation4 + $0x148] sm:$0xff] %v1463
      %1474 = vst [vmem:[#allocation4 + $0x150] sm:$0xff] %v1465
      %1475 = vst [vmem:[#allocation4 + $0x158] sm:$0xff] %v1467
      %v1476 = vld [vmem:[#allocation2] sm:$0xff]
      %v1477 = vld [vmem:[#allocation2 + $0x8] sm:$0xff]
      %v1478 = vld [vmem:[#allocation2 + $0x10] sm:$0xff]
      %v1479 = vld [vmem:[#allocation2 + $0x18] sm:$0xff]
      %v1480 = vld [vmem:[#allocation2 + $0x20] sm:$0xff]
      %v1481 = vld [vmem:[#allocation2 + $0x30] sm:$0xff]
      %v1482 = vld [vmem:[#allocation2 + $0x38] sm:$0xff]
      %v1483 = vld [vmem:[#allocation2 + $0x40] sm:$0xff]
      %v1484 = vld [vmem:[#allocation2 + $0x48] sm:$0xff]
      %v1485 = vld [vmem:[#allocation2 + $0x50] sm:$0xff]
      %1486 = vrot.lane.b32.xlu0 %v533, 121
      %v1487 = vpop.permute.xlu0 %1486
      %1488 = vrot.lane.b32.xlu0 %v537, 121
      %v1489 = vpop.permute.xlu0 %1488
      %1490 = vrot.lane.b32.xlu0 %v541, 121
      %v1491 = vpop.permute.xlu0 %1490
      %1492 = vrot.lane.b32.xlu0 %v545, 121
      %v1493 = vpop.permute.xlu0 %1492
      %vm1494 = vcmask 990208
      %v1495 = vsel %vm1494, %v1487, %v1489
      %v1496 = vsel %vm1494, %v1489, %v1491
      %v1497 = vsel %vm1494, %v1491, %v1493
      %v1503 = vmul.f32 %v1476, %v1487
      %v1504 = vmul.f32 %v1477, %v1495
      %v1505 = vmul.f32 %v1478, %v1496
      %v1506 = vmul.f32 %v1479, %v1497
      %v1507 = vmul.f32 %v1480, %v1493
      %v1508 = vmul.f32 %v1481, %v1487
      %v1509 = vmul.f32 %v1482, %v1495
      %v1510 = vmul.f32 %v1483, %v1496
      %v1511 = vmul.f32 %v1484, %v1497
      %v1512 = vmul.f32 %v1485, %v1493
      %v1513 = vpack.c.bf16 %v1508, %v1503
      %v1514 = vpack.c.bf16 %v1509, %v1504
      %v1515 = vpack.c.bf16 %v1510, %v1505
      %v1516 = vpack.c.bf16 %v1511, %v1506
      %v1517 = vpack.c.bf16 %v1512, %v1507
      %v1523 = vunpack.c.l.b16 %v1513
      %v1524 = vunpack.c.l.b16 %v1514
      %v1525 = vunpack.c.l.b16 %v1515
      %v1526 = vunpack.c.l.b16 %v1516
      %v1527 = vunpack.c.l.b16 %v1517
      %v1528 = vunpack.c.h.b16 %v1513
      %v1529 = vunpack.c.h.b16 %v1514
      %v1530 = vunpack.c.h.b16 %v1515
      %v1531 = vunpack.c.h.b16 %v1516
      %v1532 = vunpack.c.h.b16 %v1517
      %v1533 = vpack.c.b16 %v1524, %v1523
      %v1534 = vpack.c.b16 %v1526, %v1525
      %v1535 = vpack.c.b16 %v1527, %v1527
      %v1536 = vpack.c.b16 %v1529, %v1528
      %v1537 = vpack.c.b16 %v1531, %v1530
      %v1538 = vpack.c.b16 %v1532, %v1532
      %1539 = vrot.lane.b32.xlu0 %v1533, 7
      %v1540 = vpop.permute.xlu0 %1539
      %1541 = vrot.lane.b32.xlu0 %v1534, 7
      %v1542 = vpop.permute.xlu0 %1541
      %1543 = vrot.lane.b32.xlu0 %v1535, 7
      %v1544 = vpop.permute.xlu0 %1543
      %1545 = vrot.lane.b32.xlu0 %v1536, 7
      %v1546 = vpop.permute.xlu0 %1545
      %1547 = vrot.lane.b32.xlu0 %v1537, 7
      %v1548 = vpop.permute.xlu0 %1547
      %1549 = vrot.lane.b32.xlu0 %v1538, 7
      %v1550 = vpop.permute.xlu0 %1549
      %v1551 = vrot.slane %v1540, 4
      %v1552 = vrot.slane %v1542, 4
      %v1553 = vrot.slane %v1544, 4
      %v1554 = vrot.slane %v1546, 4
      %v1555 = vrot.slane %v1548, 4
      %v1556 = vrot.slane %v1550, 4
      %v1557 = vsel %vm386, %v1551, %v1552
      %vm1558 = vcmask 56320
      %v1559 = vsel %vm1558, %v1540, %v1557
      %v1560 = vsel %vm386, %v1552, %v1553
      %v1561 = vsel %vm1558, %v1542, %v1560
      %v1562 = vsel %vm386, %v1554, %v1555
      %v1563 = vsel %vm1558, %v1546, %v1562
      %v1564 = vsel %vm386, %v1555, %v1556
      %v1565 = vsel %vm1558, %v1548, %v1564
      %1570 = vst [vmem:[#allocation4 + $0x160] sm:$0xff] %v1559
      %1571 = vst [vmem:[#allocation4 + $0x168] sm:$0xff] %v1561
      %1572 = vst [vmem:[#allocation4 + $0x170] sm:$0xff] %v1563
      %1573 = vst [vmem:[#allocation4 + $0x178] sm:$0xff] %v1565
      %v1574 = vld [vmem:[#allocation2] sm:$0xff]
      %v1575 = vld [vmem:[#allocation2 + $0x8] sm:$0xff]
      %v1576 = vld [vmem:[#allocation2 + $0x10] sm:$0xff]
      %v1577 = vld [vmem:[#allocation2 + $0x18] sm:$0xff]
      %v1578 = vld [vmem:[#allocation2 + $0x20] sm:$0xff]
      %v1579 = vld [vmem:[#allocation2 + $0x30] sm:$0xff]
      %v1580 = vld [vmem:[#allocation2 + $0x38] sm:$0xff]
      %v1581 = vld [vmem:[#allocation2 + $0x40] sm:$0xff]
      %v1582 = vld [vmem:[#allocation2 + $0x48] sm:$0xff]
      %v1583 = vld [vmem:[#allocation2 + $0x50] sm:$0xff]
      %1584 = vrot.lane.b32.xlu0 %v648, 127
      %v1585 = vpop.permute.xlu0 %1584
      %1586 = vrot.lane.b32.xlu0 %v652, 127
      %v1587 = vpop.permute.xlu0 %1586
      %1588 = vrot.lane.b32.xlu0 %v656, 127
      %v1589 = vpop.permute.xlu0 %1588
      %1590 = vrot.lane.b32.xlu0 %v660, 127
      %v1591 = vpop.permute.xlu0 %1590
      %vm1592 = vcmask 1039360
      %v1593 = vsel %vm1592, %v1585, %v1587
      %v1594 = vsel %vm1592, %v1587, %v1589
      %v1595 = vsel %vm1592, %v1589, %v1591
      %v1601 = vmul.f32 %v1574, %v1585
      %v1602 = vmul.f32 %v1575, %v1593
      %v1603 = vmul.f32 %v1576, %v1594
      %v1604 = vmul.f32 %v1577, %v1595
      %v1605 = vmul.f32 %v1578, %v1591
      %v1606 = vmul.f32 %v1579, %v1585
      %v1607 = vmul.f32 %v1580, %v1593
      %v1608 = vmul.f32 %v1581, %v1594
      %v1609 = vmul.f32 %v1582, %v1595
      %v1610 = vmul.f32 %v1583, %v1591
      %v1611 = vpack.c.bf16 %v1606, %v1601
      %v1612 = vpack.c.bf16 %v1607, %v1602
      %v1613 = vpack.c.bf16 %v1608, %v1603
      %v1614 = vpack.c.bf16 %v1609, %v1604
      %v1615 = vpack.c.bf16 %v1610, %v1605
      %v1621 = vunpack.c.l.b16 %v1611
      %v1622 = vunpack.c.l.b16 %v1612
      %v1623 = vunpack.c.l.b16 %v1613
      %v1624 = vunpack.c.l.b16 %v1614
      %v1625 = vunpack.c.l.b16 %v1615
      %v1626 = vunpack.c.h.b16 %v1611
      %v1627 = vunpack.c.h.b16 %v1612
      %v1628 = vunpack.c.h.b16 %v1613
      %v1629 = vunpack.c.h.b16 %v1614
      %v1630 = vunpack.c.h.b16 %v1615
      %v1631 = vpack.c.b16 %v1622, %v1621
      %v1632 = vpack.c.b16 %v1624, %v1623
      %v1633 = vpack.c.b16 %v1625, %v1625
      %v1634 = vpack.c.b16 %v1627, %v1626
      %v1635 = vpack.c.b16 %v1629, %v1628
      %v1636 = vpack.c.b16 %v1630, %v1630
      %1637 = vrot.lane.b32.xlu0 %v1631, 1
      %v1638 = vpop.permute.xlu0 %1637
      %1639 = vrot.lane.b32.xlu0 %v1632, 1
      %v1640 = vpop.permute.xlu0 %1639
      %1641 = vrot.lane.b32.xlu0 %v1633, 1
      %v1642 = vpop.permute.xlu0 %1641
      %1643 = vrot.lane.b32.xlu0 %v1634, 1
      %v1644 = vpop.permute.xlu0 %1643
      %1645 = vrot.lane.b32.xlu0 %v1635, 1
      %v1646 = vpop.permute.xlu0 %1645
      %1647 = vrot.lane.b32.xlu0 %v1636, 1
      %v1648 = vpop.permute.xlu0 %1647
      %v1649 = vrot.slane %v1638, 4
      %v1650 = vrot.slane %v1640, 4
      %v1651 = vrot.slane %v1642, 4
      %v1652 = vrot.slane %v1644, 4
      %v1653 = vrot.slane %v1646, 4
      %v1654 = vrot.slane %v1648, 4
      %v1655 = vsel %vm386, %v1649, %v1650
      %vm1656 = vcmask 7168
      %v1657 = vsel %vm1656, %v1638, %v1655
      %v1658 = vsel %vm386, %v1650, %v1651
      %v1659 = vsel %vm1656, %v1640, %v1658
      %v1660 = vsel %vm386, %v1652, %v1653
      %v1661 = vsel %vm1656, %v1644, %v1660
      %v1662 = vsel %vm386, %v1653, %v1654
      %v1663 = vsel %vm1656, %v1646, %v1662
      %1668 = vst [vmem:[#allocation4 + $0x180] sm:$0xff] %v1657
      %1669 = vst [vmem:[#allocation4 + $0x188] sm:$0xff] %v1659
      %1670 = vst [vmem:[#allocation4 + $0x190] sm:$0xff] %v1661
      %1671 = vst [vmem:[#allocation4 + $0x198] sm:$0xff] %v1663
      %v1672 = vld [vmem:[#allocation2 + $0x8] sm:$0xff]
      %v1673 = vld [vmem:[#allocation2 + $0x10] sm:$0xff]
      %v1674 = vld [vmem:[#allocation2 + $0x18] sm:$0xff]
      %v1675 = vld [vmem:[#allocation2 + $0x20] sm:$0xff]
      %v1676 = vld [vmem:[#allocation2 + $0x38] sm:$0xff]
      %v1677 = vld [vmem:[#allocation2 + $0x40] sm:$0xff]
      %v1678 = vld [vmem:[#allocation2 + $0x48] sm:$0xff]
      %v1679 = vld [vmem:[#allocation2 + $0x50] sm:$0xff]
      %v1680 = vpack.c.bf16 %v1676, %v1672
      %v1681 = vpack.c.bf16 %v1677, %v1673
      %v1682 = vpack.c.bf16 %v1678, %v1674
      %v1683 = vpack.c.bf16 %v1679, %v1675
      %v1688 = vunpack.c.l.b16 %v1680
      %v1689 = vunpack.c.l.b16 %v1681
      %v1690 = vunpack.c.l.b16 %v1682
      %v1691 = vunpack.c.l.b16 %v1683
      %v1692 = vunpack.c.h.b16 %v1680
      %v1693 = vunpack.c.h.b16 %v1681
      %v1694 = vunpack.c.h.b16 %v1682
      %v1695 = vunpack.c.h.b16 %v1683
      %v1696 = vpack.c.b16 %v1689, %v1688
      %v1697 = vpack.c.b16 %v1691, %v1690
      %v1698 = vpack.c.b16 %v1693, %v1692
      %v1699 = vpack.c.b16 %v1695, %v1694
      %1704 = vst [vmem:[#allocation4 + $0x1a0] sm:$0xff] %v1696
      %1705 = vst [vmem:[#allocation4 + $0x1a8] sm:$0xff] %v1697
      %1706 = vst [vmem:[#allocation4 + $0x1b0] sm:$0xff] %v1698
      %1707 = vst [vmem:[#allocation4 + $0x1b8] sm:$0xff] %v1699
      %v1708 = vld [vmem:[#allocation2 + $0x8] sm:$0xff]
      %v1709 = vld [vmem:[#allocation2 + $0x10] sm:$0xff]
      %v1710 = vld [vmem:[#allocation2 + $0x18] sm:$0xff]
      %v1711 = vld [vmem:[#allocation2 + $0x20] sm:$0xff]
      %v1712 = vld [vmem:[#allocation2 + $0x28] sm:$0xff]
      %v1713 = vld [vmem:[#allocation2 + $0x38] sm:$0xff]
      %v1714 = vld [vmem:[#allocation2 + $0x40] sm:$0xff]
      %v1715 = vld [vmem:[#allocation2 + $0x48] sm:$0xff]
      %v1716 = vld [vmem:[#allocation2 + $0x50] sm:$0xff]
      %v1717 = vld [vmem:[#allocation2 + $0x58] sm:$0xff]
      %1718 = vrot.lane.b32.xlu0 %v834, 1
      %v1719 = vpop.permute.xlu0 %1718
      %1720 = vrot.lane.b32.xlu0 %v838, 1
      %v1721 = vpop.permute.xlu0 %1720
      %1722 = vrot.lane.b32.xlu0 %v842, 1
      %v1723 = vpop.permute.xlu0 %1722
      %1724 = vrot.lane.b32.xlu0 %v846, 1
      %v1725 = vpop.permute.xlu0 %1724
      %vm1726 = vcmask 7168
      %v1727 = vsel %vm1726, %v1719, %v1721
      %v1728 = vsel %vm1726, %v1721, %v1723
      %v1729 = vsel %vm1726, %v1723, %v1725
      %v1735 = vmul.f32 %v1708, %v1719
      %v1736 = vmul.f32 %v1709, %v1727
      %v1737 = vmul.f32 %v1710, %v1728
      %v1738 = vmul.f32 %v1711, %v1729
      %v1739 = vmul.f32 %v1712, %v1725
      %v1740 = vmul.f32 %v1713, %v1719
      %v1741 = vmul.f32 %v1714, %v1727
      %v1742 = vmul.f32 %v1715, %v1728
      %v1743 = vmul.f32 %v1716, %v1729
      %v1744 = vmul.f32 %v1717, %v1725
      %v1745 = vpack.c.bf16 %v1740, %v1735
      %v1746 = vpack.c.bf16 %v1741, %v1736
      %v1747 = vpack.c.bf16 %v1742, %v1737
      %v1748 = vpack.c.bf16 %v1743, %v1738
      %v1749 = vpack.c.bf16 %v1744, %v1739
      %v1755 = vunpack.c.l.b16 %v1745
      %v1756 = vunpack.c.l.b16 %v1746
      %v1757 = vunpack.c.l.b16 %v1747
      %v1758 = vunpack.c.l.b16 %v1748
      %v1759 = vunpack.c.l.b16 %v1749
      %v1760 = vunpack.c.h.b16 %v1745
      %v1761 = vunpack.c.h.b16 %v1746
      %v1762 = vunpack.c.h.b16 %v1747
      %v1763 = vunpack.c.h.b16 %v1748
      %v1764 = vunpack.c.h.b16 %v1749
      %v1765 = vpack.c.b16 %v1756, %v1755
      %v1766 = vpack.c.b16 %v1758, %v1757
      %v1767 = vpack.c.b16 %v1759, %v1759
      %v1768 = vpack.c.b16 %v1761, %v1760
      %v1769 = vpack.c.b16 %v1763, %v1762
      %v1770 = vpack.c.b16 %v1764, %v1764
      %1771 = vrot.lane.b32.xlu0 %v1765, 127
      %v1772 = vpop.permute.xlu0 %1771
      %1773 = vrot.lane.b32.xlu0 %v1766, 127
      %v1774 = vpop.permute.xlu0 %1773
      %1775 = vrot.lane.b32.xlu0 %v1767, 127
      %v1776 = vpop.permute.xlu0 %1775
      %1777 = vrot.lane.b32.xlu0 %v1768, 127
      %v1778 = vpop.permute.xlu0 %1777
      %1779 = vrot.lane.b32.xlu0 %v1769, 127
      %v1780 = vpop.permute.xlu0 %1779
      %1781 = vrot.lane.b32.xlu0 %v1770, 127
      %v1782 = vpop.permute.xlu0 %1781
      %v1783 = vrot.slane %v1772, 4
      %v1784 = vrot.slane %v1774, 4
      %v1785 = vrot.slane %v1776, 4
      %v1786 = vrot.slane %v1778, 4
      %v1787 = vrot.slane %v1780, 4
      %v1788 = vrot.slane %v1782, 4
      %v1789 = vsel %vm386, %v1783, %v1784
      %vm1790 = vcmask 1039360
      %v1791 = vsel %vm1790, %v1772, %v1789
      %v1792 = vsel %vm386, %v1784, %v1785
      %v1793 = vsel %vm1790, %v1774, %v1792
      %v1794 = vsel %vm386, %v1786, %v1787
      %v1795 = vsel %vm1790, %v1778, %v1794
      %v1796 = vsel %vm386, %v1787, %v1788
      %v1797 = vsel %vm1790, %v1780, %v1796
      %1802 = vst [vmem:[#allocation4 + $0x1c0] sm:$0xff] %v1791
      %1803 = vst [vmem:[#allocation4 + $0x1c8] sm:$0xff] %v1793
      %1804 = vst [vmem:[#allocation4 + $0x1d0] sm:$0xff] %v1795
      %1805 = vst [vmem:[#allocation4 + $0x1d8] sm:$0xff] %v1797
      %v1806 = vld [vmem:[#allocation2 + $0x8] sm:$0xff]
      %v1807 = vld [vmem:[#allocation2 + $0x10] sm:$0xff]
      %v1808 = vld [vmem:[#allocation2 + $0x18] sm:$0xff]
      %v1809 = vld [vmem:[#allocation2 + $0x20] sm:$0xff]
      %v1810 = vld [vmem:[#allocation2 + $0x28] sm:$0xff]
      %v1811 = vld [vmem:[#allocation2 + $0x38] sm:$0xff]
      %v1812 = vld [vmem:[#allocation2 + $0x40] sm:$0xff]
      %v1813 = vld [vmem:[#allocation2 + $0x48] sm:$0xff]
      %v1814 = vld [vmem:[#allocation2 + $0x50] sm:$0xff]
      %v1815 = vld [vmem:[#allocation2 + $0x58] sm:$0xff]
      %1816 = vrot.lane.b32.xlu0 %v949, 7
      %v1817 = vpop.permute.xlu0 %1816
      %1818 = vrot.lane.b32.xlu0 %v953, 7
      %v1819 = vpop.permute.xlu0 %1818
      %1820 = vrot.lane.b32.xlu0 %v957, 7
      %v1821 = vpop.permute.xlu0 %1820
      %1822 = vrot.lane.b32.xlu0 %v961, 7
      %v1823 = vpop.permute.xlu0 %1822
      %vm1824 = vcmask 56320
      %v1825 = vsel %vm1824, %v1817, %v1819
      %v1826 = vsel %vm1824, %v1819, %v1821
      %v1827 = vsel %vm1824, %v1821, %v1823
      %v1833 = vmul.f32 %v1806, %v1817
      %v1834 = vmul.f32 %v1807, %v1825
      %v1835 = vmul.f32 %v1808, %v1826
      %v1836 = vmul.f32 %v1809, %v1827
      %v1837 = vmul.f32 %v1810, %v1823
      %v1838 = vmul.f32 %v1811, %v1817
      %v1839 = vmul.f32 %v1812, %v1825
      %v1840 = vmul.f32 %v1813, %v1826
      %v1841 = vmul.f32 %v1814, %v1827
      %v1842 = vmul.f32 %v1815, %v1823
      %v1843 = vpack.c.bf16 %v1838, %v1833
      %v1844 = vpack.c.bf16 %v1839, %v1834
      %v1845 = vpack.c.bf16 %v1840, %v1835
      %v1846 = vpack.c.bf16 %v1841, %v1836
      %v1847 = vpack.c.bf16 %v1842, %v1837
      %v1853 = vunpack.c.l.b16 %v1843
      %v1854 = vunpack.c.l.b16 %v1844
      %v1855 = vunpack.c.l.b16 %v1845
      %v1856 = vunpack.c.l.b16 %v1846
      %v1857 = vunpack.c.l.b16 %v1847
      %v1858 = vunpack.c.h.b16 %v1843
      %v1859 = vunpack.c.h.b16 %v1844
      %v1860 = vunpack.c.h.b16 %v1845
      %v1861 = vunpack.c.h.b16 %v1846
      %v1862 = vunpack.c.h.b16 %v1847
      %v1863 = vpack.c.b16 %v1854, %v1853
      %v1864 = vpack.c.b16 %v1856, %v1855
      %v1865 = vpack.c.b16 %v1857, %v1857
      %v1866 = vpack.c.b16 %v1859, %v1858
      %v1867 = vpack.c.b16 %v1861, %v1860
      %v1868 = vpack.c.b16 %v1862, %v1862
      %1869 = vrot.lane.b32.xlu0 %v1863, 121
      %v1870 = vpop.permute.xlu0 %1869
      %1871 = vrot.lane.b32.xlu0 %v1864, 121
      %v1872 = vpop.permute.xlu0 %1871
      %1873 = vrot.lane.b32.xlu0 %v1865, 121
      %v1874 = vpop.permute.xlu0 %1873
      %1875 = vrot.lane.b32.xlu0 %v1866, 121
      %v1876 = vpop.permute.xlu0 %1875
      %1877 = vrot.lane.b32.xlu0 %v1867, 121
      %v1878 = vpop.permute.xlu0 %1877
      %1879 = vrot.lane.b32.xlu0 %v1868, 121
      %v1880 = vpop.permute.xlu0 %1879
      %v1881 = vrot.slane %v1870, 4
      %v1882 = vrot.slane %v1872, 4
      %v1883 = vrot.slane %v1874, 4
      %v1884 = vrot.slane %v1876, 4
      %v1885 = vrot.slane %v1878, 4
      %v1886 = vrot.slane %v1880, 4
      %v1887 = vsel %vm386, %v1881, %v1882
      %vm1888 = vcmask 990208
      %v1889 = vsel %vm1888, %v1870, %v1887
      %v1890 = vsel %vm386, %v1882, %v1883
      %v1891 = vsel %vm1888, %v1872, %v1890
      %v1892 = vsel %vm386, %v1884, %v1885
      %v1893 = vsel %vm1888, %v1876, %v1892
      %v1894 = vsel %vm386, %v1885, %v1886
      %v1895 = vsel %vm1888, %v1878, %v1894
      %1900 = vst [vmem:[#allocation4 + $0x1e0] sm:$0xff] %v1889
      %1901 = vst [vmem:[#allocation4 + $0x1e8] sm:$0xff] %v1891
      %1902 = vst [vmem:[#allocation4 + $0x1f0] sm:$0xff] %v1893
      %1903 = vst [vmem:[#allocation4 + $0x1f8] sm:$0xff] %v1895
      %v1904 = vld [vmem:[#allocation2 + $0x8] sm:$0xff]
      %v1905 = vld [vmem:[#allocation2 + $0x10] sm:$0xff]
      %v1906 = vld [vmem:[#allocation2 + $0x18] sm:$0xff]
      %v1907 = vld [vmem:[#allocation2 + $0x20] sm:$0xff]
      %v1908 = vld [vmem:[#allocation2 + $0x28] sm:$0xff]
      %v1909 = vld [vmem:[#allocation2 + $0x38] sm:$0xff]
      %v1910 = vld [vmem:[#allocation2 + $0x40] sm:$0xff]
      %v1911 = vld [vmem:[#allocation2 + $0x48] sm:$0xff]
      %v1912 = vld [vmem:[#allocation2 + $0x50] sm:$0xff]
      %v1913 = vld [vmem:[#allocation2 + $0x58] sm:$0xff]
      %1914 = vrot.lane.b32.xlu0 %v1064, 8
      %v1915 = vpop.permute.xlu0 %1914
      %1916 = vrot.lane.b32.xlu0 %v1068, 8
      %v1917 = vpop.permute.xlu0 %1916
      %1918 = vrot.lane.b32.xlu0 %v1072, 8
      %v1919 = vpop.permute.xlu0 %1918
      %1920 = vrot.lane.b32.xlu0 %v1076, 8
      %v1921 = vpop.permute.xlu0 %1920
      %vm1922 = vcmask 64512
      %v1923 = vsel %vm1922, %v1915, %v1917
      %v1924 = vsel %vm1922, %v1917, %v1919
      %v1925 = vsel %vm1922, %v1919, %v1921
      %v1931 = vmul.f32 %v1904, %v1915
      %v1932 = vmul.f32 %v1905, %v1923
      %v1933 = vmul.f32 %v1906, %v1924
      %v1934 = vmul.f32 %v1907, %v1925
      %v1935 = vmul.f32 %v1908, %v1921
      %v1936 = vmul.f32 %v1909, %v1915
      %v1937 = vmul.f32 %v1910, %v1923
      %v1938 = vmul.f32 %v1911, %v1924
      %v1939 = vmul.f32 %v1912, %v1925
      %v1940 = vmul.f32 %v1913, %v1921
      %v1941 = vpack.c.bf16 %v1936, %v1931
      %v1942 = vpack.c.bf16 %v1937, %v1932
      %v1943 = vpack.c.bf16 %v1938, %v1933
      %v1944 = vpack.c.bf16 %v1939, %v1934
      %v1945 = vpack.c.bf16 %v1940, %v1935
      %v1951 = vunpack.c.l.b16 %v1941
      %v1952 = vunpack.c.l.b16 %v1942
      %v1953 = vunpack.c.l.b16 %v1943
      %v1954 = vunpack.c.l.b16 %v1944
      %v1955 = vunpack.c.l.b16 %v1945
      %v1956 = vunpack.c.h.b16 %v1941
      %v1957 = vunpack.c.h.b16 %v1942
      %v1958 = vunpack.c.h.b16 %v1943
      %v1959 = vunpack.c.h.b16 %v1944
      %v1960 = vunpack.c.h.b16 %v1945
      %v1961 = vpack.c.b16 %v1952, %v1951
      %v1962 = vpack.c.b16 %v1954, %v1953
      %v1963 = vpack.c.b16 %v1955, %v1955
      %v1964 = vpack.c.b16 %v1957, %v1956
      %v1965 = vpack.c.b16 %v1959, %v1958
      %v1966 = vpack.c.b16 %v1960, %v1960
      %1967 = vrot.lane.b32.xlu0 %v1961, 120
      %v1968 = vpop.permute.xlu0 %1967
      %1969 = vrot.lane.b32.xlu0 %v1962, 120
      %v1970 = vpop.permute.xlu0 %1969
      %1971 = vrot.lane.b32.xlu0 %v1963, 120
      %v1972 = vpop.permute.xlu0 %1971
      %1973 = vrot.lane.b32.xlu0 %v1964, 120
      %v1974 = vpop.permute.xlu0 %1973
      %1975 = vrot.lane.b32.xlu0 %v1965, 120
      %v1976 = vpop.permute.xlu0 %1975
      %1977 = vrot.lane.b32.xlu0 %v1966, 120
      %v1978 = vpop.permute.xlu0 %1977
      %v1979 = vrot.slane %v1968, 4
      %v1980 = vrot.slane %v1970, 4
      %v1981 = vrot.slane %v1972, 4
      %v1982 = vrot.slane %v1974, 4
      %v1983 = vrot.slane %v1976, 4
      %v1984 = vrot.slane %v1978, 4
      %v1985 = vsel %vm386, %v1979, %v1980
      %vm1986 = vcmask 982016
      %v1987 = vsel %vm1986, %v1968, %v1985
      %v1988 = vsel %vm386, %v1980, %v1981
      %v1989 = vsel %vm1986, %v1970, %v1988
      %v1990 = vsel %vm386, %v1982, %v1983
      %v1991 = vsel %vm1986, %v1974, %v1990
      %v1992 = vsel %vm386, %v1983, %v1984
      %v1993 = vsel %vm1986, %v1976, %v1992
      %1998 = vst [vmem:[#allocation4 + $0x200] sm:$0xff] %v1987
      %1999 = vst [vmem:[#allocation4 + $0x208] sm:$0xff] %v1989
      %2000 = vst [vmem:[#allocation4 + $0x210] sm:$0xff] %v1991
      %2001 = vst [vmem:[#allocation4 + $0x218] sm:$0xff] %v1993
      %v2002 = vld [vmem:[#allocation2 + $0x8] sm:$0xff]
      %v2003 = vld [vmem:[#allocation2 + $0x10] sm:$0xff]
      %v2004 = vld [vmem:[#allocation2 + $0x18] sm:$0xff]
      %v2005 = vld [vmem:[#allocation2 + $0x20] sm:$0xff]
      %v2006 = vld [vmem:[#allocation2 + $0x28] sm:$0xff]
      %v2007 = vld [vmem:[#allocation2 + $0x38] sm:$0xff]
      %v2008 = vld [vmem:[#allocation2 + $0x40] sm:$0xff]
      %v2009 = vld [vmem:[#allocation2 + $0x48] sm:$0xff]
      %v2010 = vld [vmem:[#allocation2 + $0x50] sm:$0xff]
      %v2011 = vld [vmem:[#allocation2 + $0x58] sm:$0xff]
      %2012 = vrot.lane.b32.xlu0 %v1179, 9
      %v2013 = vpop.permute.xlu0 %2012
      %2014 = vrot.lane.b32.xlu0 %v1183, 9
      %v2015 = vpop.permute.xlu0 %2014
      %2016 = vrot.lane.b32.xlu0 %v1187, 9
      %v2017 = vpop.permute.xlu0 %2016
      %2018 = vrot.lane.b32.xlu0 %v1191, 9
      %v2019 = vpop.permute.xlu0 %2018
      %vm2020 = vcmask 72704
      %v2021 = vsel %vm2020, %v2013, %v2015
      %v2022 = vsel %vm2020, %v2015, %v2017
      %v2023 = vsel %vm2020, %v2017, %v2019
      %v2029 = vmul.f32 %v2002, %v2013
      %v2030 = vmul.f32 %v2003, %v2021
      %v2031 = vmul.f32 %v2004, %v2022
      %v2032 = vmul.f32 %v2005, %v2023
      %v2033 = vmul.f32 %v2006, %v2019
      %v2034 = vmul.f32 %v2007, %v2013
      %v2035 = vmul.f32 %v2008, %v2021
      %v2036 = vmul.f32 %v2009, %v2022
      %v2037 = vmul.f32 %v2010, %v2023
      %v2038 = vmul.f32 %v2011, %v2019
      %v2039 = vpack.c.bf16 %v2034, %v2029
      %v2040 = vpack.c.bf16 %v2035, %v2030
      %v2041 = vpack.c.bf16 %v2036, %v2031
      %v2042 = vpack.c.bf16 %v2037, %v2032
      %v2043 = vpack.c.bf16 %v2038, %v2033
      %v2049 = vunpack.c.l.b16 %v2039
      %v2050 = vunpack.c.l.b16 %v2040
      %v2051 = vunpack.c.l.b16 %v2041
      %v2052 = vunpack.c.l.b16 %v2042
      %v2053 = vunpack.c.l.b16 %v2043
      %v2054 = vunpack.c.h.b16 %v2039
      %v2055 = vunpack.c.h.b16 %v2040
      %v2056 = vunpack.c.h.b16 %v2041
      %v2057 = vunpack.c.h.b16 %v2042
      %v2058 = vunpack.c.h.b16 %v2043
      %v2059 = vpack.c.b16 %v2050, %v2049
      %v2060 = vpack.c.b16 %v2052, %v2051
      %v2061 = vpack.c.b16 %v2053, %v2053
      %v2062 = vpack.c.b16 %v2055, %v2054
      %v2063 = vpack.c.b16 %v2057, %v2056
      %v2064 = vpack.c.b16 %v2058, %v2058
      %2065 = vrot.lane.b32.xlu0 %v2059, 119
      %v2066 = vpop.permute.xlu0 %2065
      %2067 = vrot.lane.b32.xlu0 %v2060, 119
      %v2068 = vpop.permute.xlu0 %2067
      %2069 = vrot.lane.b32.xlu0 %v2061, 119
      %v2070 = vpop.permute.xlu0 %2069
      %2071 = vrot.lane.b32.xlu0 %v2062, 119
      %v2072 = vpop.permute.xlu0 %2071
      %2073 = vrot.lane.b32.xlu0 %v2063, 119
      %v2074 = vpop.permute.xlu0 %2073
      %2075 = vrot.lane.b32.xlu0 %v2064, 119
      %v2076 = vpop.permute.xlu0 %2075
      %v2077 = vrot.slane %v2066, 4
      %v2078 = vrot.slane %v2068, 4
      %v2079 = vrot.slane %v2070, 4
      %v2080 = vrot.slane %v2072, 4
      %v2081 = vrot.slane %v2074, 4
      %v2082 = vrot.slane %v2076, 4
      %v2083 = vsel %vm386, %v2077, %v2078
      %vm2084 = vcmask 973824
      %v2085 = vsel %vm2084, %v2066, %v2083
      %v2086 = vsel %vm386, %v2078, %v2079
      %v2087 = vsel %vm2084, %v2068, %v2086
      %v2088 = vsel %vm386, %v2080, %v2081
      %v2089 = vsel %vm2084, %v2072, %v2088
      %v2090 = vsel %vm386, %v2081, %v2082
      %v2091 = vsel %vm2084, %v2074, %v2090
      %2096 = vst [vmem:[#allocation4 + $0x220] sm:$0xff] %v2085
      %2097 = vst [vmem:[#allocation4 + $0x228] sm:$0xff] %v2087
      %2098 = vst [vmem:[#allocation4 + $0x230] sm:$0xff] %v2089
      %2099 = vst [vmem:[#allocation4 + $0x238] sm:$0xff] %v2091
      %v2100 = vld [vmem:[#allocation2 + $0x8] sm:$0xff]
      %v2101 = vld [vmem:[#allocation2 + $0x10] sm:$0xff]
      %v2102 = vld [vmem:[#allocation2 + $0x18] sm:$0xff]
      %v2103 = vld [vmem:[#allocation2 + $0x20] sm:$0xff]
      %v2104 = vld [vmem:[#allocation2 + $0x28] sm:$0xff]
      %v2105 = vld [vmem:[#allocation2 + $0x38] sm:$0xff]
      %v2106 = vld [vmem:[#allocation2 + $0x40] sm:$0xff]
      %v2107 = vld [vmem:[#allocation2 + $0x48] sm:$0xff]
      %v2108 = vld [vmem:[#allocation2 + $0x50] sm:$0xff]
      %v2109 = vld [vmem:[#allocation2 + $0x58] sm:$0xff]
      %v2110 = vmul.f32 %v2100, %v316
      %v2111 = vmul.f32 %v2101, %v324
      %v2112 = vmul.f32 %v2102, %v325
      %v2113 = vmul.f32 %v2103, %v326
      %v2114 = vmul.f32 %v2104, %v322
      %v2115 = vmul.f32 %v2105, %v316
      %v2116 = vmul.f32 %v2106, %v324
      %v2117 = vmul.f32 %v2107, %v325
      %v2118 = vmul.f32 %v2108, %v326
      %v2119 = vmul.f32 %v2109, %v322
      %v2120 = vpack.c.bf16 %v2115, %v2110
      %v2121 = vpack.c.bf16 %v2116, %v2111
      %v2122 = vpack.c.bf16 %v2117, %v2112
      %v2123 = vpack.c.bf16 %v2118, %v2113
      %v2124 = vpack.c.bf16 %v2119, %v2114
      %v2130 = vunpack.c.l.b16 %v2120
      %v2131 = vunpack.c.l.b16 %v2121
      %v2132 = vunpack.c.l.b16 %v2122
      %v2133 = vunpack.c.l.b16 %v2123
      %v2134 = vunpack.c.l.b16 %v2124
      %v2135 = vunpack.c.h.b16 %v2120
      %v2136 = vunpack.c.h.b16 %v2121
      %v2137 = vunpack.c.h.b16 %v2122
      %v2138 = vunpack.c.h.b16 %v2123
      %v2139 = vunpack.c.h.b16 %v2124
      %v2140 = vpack.c.b16 %v2131, %v2130
      %v2141 = vpack.c.b16 %v2133, %v2132
      %v2142 = vpack.c.b16 %v2134, %v2134
      %v2143 = vpack.c.b16 %v2136, %v2135
      %v2144 = vpack.c.b16 %v2138, %v2137
      %v2145 = vpack.c.b16 %v2139, %v2139
      %2146 = vrot.lane.b32.xlu0 %v2140, 73
      %v2147 = vpop.permute.xlu0 %2146
      %2148 = vrot.lane.b32.xlu0 %v2141, 73
      %v2149 = vpop.permute.xlu0 %2148
      %2150 = vrot.lane.b32.xlu0 %v2142, 73
      %v2151 = vpop.permute.xlu0 %2150
      %2152 = vrot.lane.b32.xlu0 %v2143, 73
      %v2153 = vpop.permute.xlu0 %2152
      %2154 = vrot.lane.b32.xlu0 %v2144, 73
      %v2155 = vpop.permute.xlu0 %2154
      %2156 = vrot.lane.b32.xlu0 %v2145, 73
      %v2157 = vpop.permute.xlu0 %2156
      %v2158 = vrot.slane %v2147, 4
      %v2159 = vrot.slane %v2149, 4
      %v2160 = vrot.slane %v2151, 4
      %v2161 = vrot.slane %v2153, 4
      %v2162 = vrot.slane %v2155, 4
      %v2163 = vrot.slane %v2157, 4
      %v2164 = vsel %vm386, %v2158, %v2159
      %v2165 = vsel %vm388, %v2147, %v2164
      %v2166 = vsel %vm386, %v2159, %v2160
      %v2167 = vsel %vm388, %v2149, %v2166
      %v2168 = vsel %vm386, %v2161, %v2162
      %v2169 = vsel %vm388, %v2153, %v2168
      %v2170 = vsel %vm386, %v2162, %v2163
      %v2171 = vsel %vm388, %v2155, %v2170
      %2176 = vst [vmem:[#allocation4 + $0x240] sm:$0xff] %v2165
      %2177 = vst [vmem:[#allocation4 + $0x248] sm:$0xff] %v2167
      %2178 = vst [vmem:[#allocation4 + $0x250] sm:$0xff] %v2169
      %2179 = vst [vmem:[#allocation4 + $0x258] sm:$0xff] %v2171
      %v2180 = vld [vmem:[#allocation2 + $0x8] sm:$0xff]
      %v2181 = vld [vmem:[#allocation2 + $0x10] sm:$0xff]
      %v2182 = vld [vmem:[#allocation2 + $0x18] sm:$0xff]
      %v2183 = vld [vmem:[#allocation2 + $0x20] sm:$0xff]
      %v2184 = vld [vmem:[#allocation2 + $0x28] sm:$0xff]
      %v2185 = vld [vmem:[#allocation2 + $0x38] sm:$0xff]
      %v2186 = vld [vmem:[#allocation2 + $0x40] sm:$0xff]
      %v2187 = vld [vmem:[#allocation2 + $0x48] sm:$0xff]
      %v2188 = vld [vmem:[#allocation2 + $0x50] sm:$0xff]
      %v2189 = vld [vmem:[#allocation2 + $0x58] sm:$0xff]
      %v2190 = vmul.f32 %v2180, %v432
      %v2191 = vmul.f32 %v2181, %v440
      %v2192 = vmul.f32 %v2182, %v441
      %v2193 = vmul.f32 %v2183, %v442
      %v2194 = vmul.f32 %v2184, %v438
      %v2195 = vmul.f32 %v2185, %v432
      %v2196 = vmul.f32 %v2186, %v440
      %v2197 = vmul.f32 %v2187, %v441
      %v2198 = vmul.f32 %v2188, %v442
      %v2199 = vmul.f32 %v2189, %v438
      %v2200 = vpack.c.bf16 %v2195, %v2190
      %v2201 = vpack.c.bf16 %v2196, %v2191
      %v2202 = vpack.c.bf16 %v2197, %v2192
      %v2203 = vpack.c.bf16 %v2198, %v2193
      %v2204 = vpack.c.bf16 %v2199, %v2194
      %v2210 = vunpack.c.l.b16 %v2200
      %v2211 = vunpack.c.l.b16 %v2201
      %v2212 = vunpack.c.l.b16 %v2202
      %v2213 = vunpack.c.l.b16 %v2203
      %v2214 = vunpack.c.l.b16 %v2204
      %v2215 = vunpack.c.h.b16 %v2200
      %v2216 = vunpack.c.h.b16 %v2201
      %v2217 = vunpack.c.h.b16 %v2202
      %v2218 = vunpack.c.h.b16 %v2203
      %v2219 = vunpack.c.h.b16 %v2204
      %v2220 = vpack.c.b16 %v2211, %v2210
      %v2221 = vpack.c.b16 %v2213, %v2212
      %v2222 = vpack.c.b16 %v2214, %v2214
      %v2223 = vpack.c.b16 %v2216, %v2215
      %v2224 = vpack.c.b16 %v2218, %v2217
      %v2225 = vpack.c.b16 %v2219, %v2219
      %2226 = vrot.lane.b32.xlu0 %v2220, 72
      %v2227 = vpop.permute.xlu0 %2226
      %2228 = vrot.lane.b32.xlu0 %v2221, 72
      %v2229 = vpop.permute.xlu0 %2228
      %2230 = vrot.lane.b32.xlu0 %v2222, 72
      %v2231 = vpop.permute.xlu0 %2230
      %2232 = vrot.lane.b32.xlu0 %v2223, 72
      %v2233 = vpop.permute.xlu0 %2232
      %2234 = vrot.lane.b32.xlu0 %v2224, 72
      %v2235 = vpop.permute.xlu0 %2234
      %2236 = vrot.lane.b32.xlu0 %v2225, 72
      %v2237 = vpop.permute.xlu0 %2236
      %v2238 = vrot.slane %v2227, 4
      %v2239 = vrot.slane %v2229, 4
      %v2240 = vrot.slane %v2231, 4
      %v2241 = vrot.slane %v2233, 4
      %v2242 = vrot.slane %v2235, 4
      %v2243 = vrot.slane %v2237, 4
      %v2244 = vsel %vm386, %v2238, %v2239
      %v2245 = vsel %vm503, %v2227, %v2244
      %v2246 = vsel %vm386, %v2239, %v2240
      %v2247 = vsel %vm503, %v2229, %v2246
      %v2248 = vsel %vm386, %v2241, %v2242
      %v2249 = vsel %vm503, %v2233, %v2248
      %v2250 = vsel %vm386, %v2242, %v2243
      %v2251 = vsel %vm503, %v2235, %v2250
      %2256 = vst [vmem:[#allocation4 + $0x260] sm:$0xff] %v2245
      %2257 = vst [vmem:[#allocation4 + $0x268] sm:$0xff] %v2247
      %2258 = vst [vmem:[#allocation4 + $0x270] sm:$0xff] %v2249
      %2259 = vst [vmem:[#allocation4 + $0x278] sm:$0xff] %v2251
      %v2260 = vld [vmem:[#allocation2 + $0x8] sm:$0xff]
      %v2261 = vld [vmem:[#allocation2 + $0x10] sm:$0xff]
      %v2262 = vld [vmem:[#allocation2 + $0x18] sm:$0xff]
      %v2263 = vld [vmem:[#allocation2 + $0x20] sm:$0xff]
      %v2264 = vld [vmem:[#allocation2 + $0x28] sm:$0xff]
      %v2265 = vld [vmem:[#allocation2 + $0x38] sm:$0xff]
      %v2266 = vld [vmem:[#allocation2 + $0x40] sm:$0xff]
      %v2267 = vld [vmem:[#allocation2 + $0x48] sm:$0xff]
      %v2268 = vld [vmem:[#allocation2 + $0x50] sm:$0xff]
      %v2269 = vld [vmem:[#allocation2 + $0x58] sm:$0xff]
      %v2270 = vmul.f32 %v2260, %v547
      %v2271 = vmul.f32 %v2261, %v555
      %v2272 = vmul.f32 %v2262, %v556
      %v2273 = vmul.f32 %v2263, %v557
      %v2274 = vmul.f32 %v2264, %v553
      %v2275 = vmul.f32 %v2265, %v547
      %v2276 = vmul.f32 %v2266, %v555
      %v2277 = vmul.f32 %v2267, %v556
      %v2278 = vmul.f32 %v2268, %v557
      %v2279 = vmul.f32 %v2269, %v553
      %v2280 = vpack.c.bf16 %v2275, %v2270
      %v2281 = vpack.c.bf16 %v2276, %v2271
      %v2282 = vpack.c.bf16 %v2277, %v2272
      %v2283 = vpack.c.bf16 %v2278, %v2273
      %v2284 = vpack.c.bf16 %v2279, %v2274
      %v2290 = vunpack.c.l.b16 %v2280
      %v2291 = vunpack.c.l.b16 %v2281
      %v2292 = vunpack.c.l.b16 %v2282
      %v2293 = vunpack.c.l.b16 %v2283
      %v2294 = vunpack.c.l.b16 %v2284
      %v2295 = vunpack.c.h.b16 %v2280
      %v2296 = vunpack.c.h.b16 %v2281
      %v2297 = vunpack.c.h.b16 %v2282
      %v2298 = vunpack.c.h.b16 %v2283
      %v2299 = vunpack.c.h.b16 %v2284
      %v2300 = vpack.c.b16 %v2291, %v2290
      %v2301 = vpack.c.b16 %v2293, %v2292
      %v2302 = vpack.c.b16 %v2294, %v2294
      %v2303 = vpack.c.b16 %v2296, %v2295
      %v2304 = vpack.c.b16 %v2298, %v2297
      %v2305 = vpack.c.b16 %v2299, %v2299
      %2306 = vrot.lane.b32.xlu0 %v2300, 71
      %v2307 = vpop.permute.xlu0 %2306
      %2308 = vrot.lane.b32.xlu0 %v2301, 71
      %v2309 = vpop.permute.xlu0 %2308
      %2310 = vrot.lane.b32.xlu0 %v2302, 71
      %v2311 = vpop.permute.xlu0 %2310
      %2312 = vrot.lane.b32.xlu0 %v2303, 71
      %v2313 = vpop.permute.xlu0 %2312
      %2314 = vrot.lane.b32.xlu0 %v2304, 71
      %v2315 = vpop.permute.xlu0 %2314
      %2316 = vrot.lane.b32.xlu0 %v2305, 71
      %v2317 = vpop.permute.xlu0 %2316
      %v2318 = vrot.slane %v2307, 4
      %v2319 = vrot.slane %v2309, 4
      %v2320 = vrot.slane %v2311, 4
      %v2321 = vrot.slane %v2313, 4
      %v2322 = vrot.slane %v2315, 4
      %v2323 = vrot.slane %v2317, 4
      %v2324 = vsel %vm386, %v2318, %v2319
      %v2325 = vsel %vm618, %v2307, %v2324
      %v2326 = vsel %vm386, %v2319, %v2320
      %v2327 = vsel %vm618, %v2309, %v2326
      %v2328 = vsel %vm386, %v2321, %v2322
      %v2329 = vsel %vm618, %v2313, %v2328
      %v2330 = vsel %vm386, %v2322, %v2323
      %v2331 = vsel %vm618, %v2315, %v2330
      %2336 = vst [vmem:[#allocation4 + $0x280] sm:$0xff] %v2325
      %2337 = vst [vmem:[#allocation4 + $0x288] sm:$0xff] %v2327
      %2338 = vst [vmem:[#allocation4 + $0x290] sm:$0xff] %v2329
      %2339 = vst [vmem:[#allocation4 + $0x298] sm:$0xff] %v2331
      %v2340 = vld [vmem:[#allocation2 + $0x8] sm:$0xff]
      %v2341 = vld [vmem:[#allocation2 + $0x10] sm:$0xff]
      %v2342 = vld [vmem:[#allocation2 + $0x18] sm:$0xff]
      %v2343 = vld [vmem:[#allocation2 + $0x20] sm:$0xff]
      %v2344 = vld [vmem:[#allocation2 + $0x28] sm:$0xff]
      %v2345 = vld [vmem:[#allocation2 + $0x38] sm:$0xff]
      %v2346 = vld [vmem:[#allocation2 + $0x40] sm:$0xff]
      %v2347 = vld [vmem:[#allocation2 + $0x48] sm:$0xff]
      %v2348 = vld [vmem:[#allocation2 + $0x50] sm:$0xff]
      %v2349 = vld [vmem:[#allocation2 + $0x58] sm:$0xff]
      %v2350 = vmul.f32 %v2340, %v662
      %v2351 = vmul.f32 %v2341, %v670
      %v2352 = vmul.f32 %v2342, %v671
      %v2353 = vmul.f32 %v2343, %v672
      %v2354 = vmul.f32 %v2344, %v668
      %v2355 = vmul.f32 %v2345, %v662
      %v2356 = vmul.f32 %v2346, %v670
      %v2357 = vmul.f32 %v2347, %v671
      %v2358 = vmul.f32 %v2348, %v672
      %v2359 = vmul.f32 %v2349, %v668
      %v2360 = vpack.c.bf16 %v2355, %v2350
      %v2361 = vpack.c.bf16 %v2356, %v2351
      %v2362 = vpack.c.bf16 %v2357, %v2352
      %v2363 = vpack.c.bf16 %v2358, %v2353
      %v2364 = vpack.c.bf16 %v2359, %v2354
      %v2370 = vunpack.c.l.b16 %v2360
      %v2371 = vunpack.c.l.b16 %v2361
      %v2372 = vunpack.c.l.b16 %v2362
      %v2373 = vunpack.c.l.b16 %v2363
      %v2374 = vunpack.c.l.b16 %v2364
      %v2375 = vunpack.c.h.b16 %v2360
      %v2376 = vunpack.c.h.b16 %v2361
      %v2377 = vunpack.c.h.b16 %v2362
      %v2378 = vunpack.c.h.b16 %v2363
      %v2379 = vunpack.c.h.b16 %v2364
      %v2380 = vpack.c.b16 %v2371, %v2370
      %v2381 = vpack.c.b16 %v2373, %v2372
      %v2382 = vpack.c.b16 %v2374, %v2374
      %v2383 = vpack.c.b16 %v2376, %v2375
      %v2384 = vpack.c.b16 %v2378, %v2377
      %v2385 = vpack.c.b16 %v2379, %v2379
      %2386 = vrot.lane.b32.xlu0 %v2380, 65
      %v2387 = vpop.permute.xlu0 %2386
      %2388 = vrot.lane.b32.xlu0 %v2381, 65
      %v2389 = vpop.permute.xlu0 %2388
      %2390 = vrot.lane.b32.xlu0 %v2382, 65
      %v2391 = vpop.permute.xlu0 %2390
      %2392 = vrot.lane.b32.xlu0 %v2383, 65
      %v2393 = vpop.permute.xlu0 %2392
      %2394 = vrot.lane.b32.xlu0 %v2384, 65
      %v2395 = vpop.permute.xlu0 %2394
      %2396 = vrot.lane.b32.xlu0 %v2385, 65
      %v2397 = vpop.permute.xlu0 %2396
      %v2398 = vrot.slane %v2387, 4
      %v2399 = vrot.slane %v2389, 4
      %v2400 = vrot.slane %v2391, 4
      %v2401 = vrot.slane %v2393, 4
      %v2402 = vrot.slane %v2395, 4
      %v2403 = vrot.slane %v2397, 4
      %v2404 = vsel %vm386, %v2398, %v2399
      %v2405 = vsel %vm733, %v2387, %v2404
      %v2406 = vsel %vm386, %v2399, %v2400
      %v2407 = vsel %vm733, %v2389, %v2406
      %v2408 = vsel %vm386, %v2401, %v2402
      %v2409 = vsel %vm733, %v2393, %v2408
      %v2410 = vsel %vm386, %v2402, %v2403
      %v2411 = vsel %vm733, %v2395, %v2410
      %2416 = vst [vmem:[#allocation4 + $0x2a0] sm:$0xff] %v2405
      %2417 = vst [vmem:[#allocation4 + $0x2a8] sm:$0xff] %v2407
      %2418 = vst [vmem:[#allocation4 + $0x2b0] sm:$0xff] %v2409
      %2419 = vst [vmem:[#allocation4 + $0x2b8] sm:$0xff] %v2411
      %v2420 = vld [vmem:[#allocation2 + $0x8] sm:$0xff]
      %v2421 = vld [vmem:[#allocation2 + $0x10] sm:$0xff]
      %v2422 = vld [vmem:[#allocation2 + $0x18] sm:$0xff]
      %v2423 = vld [vmem:[#allocation2 + $0x20] sm:$0xff]
      %v2424 = vld [vmem:[#allocation2 + $0x28] sm:$0xff]
      %v2425 = vld [vmem:[#allocation2 + $0x38] sm:$0xff]
      %v2426 = vld [vmem:[#allocation2 + $0x40] sm:$0xff]
      %v2427 = vld [vmem:[#allocation2 + $0x48] sm:$0xff]
      %v2428 = vld [vmem:[#allocation2 + $0x50] sm:$0xff]
      %v2429 = vld [vmem:[#allocation2 + $0x58] sm:$0xff]
      %v2430 = vpack.c.bf16 %v2425, %v2420
      %v2431 = vpack.c.bf16 %v2426, %v2421
      %v2432 = vpack.c.bf16 %v2427, %v2422
      %v2433 = vpack.c.bf16 %v2428, %v2423
      %v2434 = vpack.c.bf16 %v2429, %v2424
      %v2440 = vunpack.c.l.b16 %v2430
      %v2441 = vunpack.c.l.b16 %v2431
      %v2442 = vunpack.c.l.b16 %v2432
      %v2443 = vunpack.c.l.b16 %v2433
      %v2444 = vunpack.c.l.b16 %v2434
      %v2445 = vunpack.c.h.b16 %v2430
      %v2446 = vunpack.c.h.b16 %v2431
      %v2447 = vunpack.c.h.b16 %v2432
      %v2448 = vunpack.c.h.b16 %v2433
      %v2449 = vunpack.c.h.b16 %v2434
      %v2450 = vpack.c.b16 %v2441, %v2440
      %v2451 = vpack.c.b16 %v2443, %v2442
      %v2452 = vpack.c.b16 %v2444, %v2444
      %v2453 = vpack.c.b16 %v2446, %v2445
      %v2454 = vpack.c.b16 %v2448, %v2447
      %v2455 = vpack.c.b16 %v2449, %v2449
      %2456 = vrot.lane.b32.xlu0 %v2450, 64
      %v2457 = vpop.permute.xlu0 %2456
      %2458 = vrot.lane.b32.xlu0 %v2451, 64
      %v2459 = vpop.permute.xlu0 %2458
      %2460 = vrot.lane.b32.xlu0 %v2452, 64
      %v2461 = vpop.permute.xlu0 %2460
      %2462 = vrot.lane.b32.xlu0 %v2453, 64
      %v2463 = vpop.permute.xlu0 %2462
      %2464 = vrot.lane.b32.xlu0 %v2454, 64
      %v2465 = vpop.permute.xlu0 %2464
      %2466 = vrot.lane.b32.xlu0 %v2455, 64
      %v2467 = vpop.permute.xlu0 %2466
      %v2468 = vrot.slane %v2457, 4
      %v2469 = vrot.slane %v2459, 4
      %v2470 = vrot.slane %v2461, 4
      %v2471 = vrot.slane %v2463, 4
      %v2472 = vrot.slane %v2465, 4
      %v2473 = vrot.slane %v2467, 4
      %v2474 = vsel %vm386, %v2468, %v2469
      %v2475 = vsel %vm804, %v2457, %v2474
      %v2476 = vsel %vm386, %v2469, %v2470
      %v2477 = vsel %vm804, %v2459, %v2476
      %v2478 = vsel %vm386, %v2471, %v2472
      %v2479 = vsel %vm804, %v2463, %v2478
      %v2480 = vsel %vm386, %v2472, %v2473
      %v2481 = vsel %vm804, %v2465, %v2480
      %2486 = vst [vmem:[#allocation4 + $0x2c0] sm:$0xff] %v2475
      %2487 = vst [vmem:[#allocation4 + $0x2c8] sm:$0xff] %v2477
      %2488 = vst [vmem:[#allocation4 + $0x2d0] sm:$0xff] %v2479
      %2489 = vst [vmem:[#allocation4 + $0x2d8] sm:$0xff] %v2481
      %v2490 = vld [vmem:[#allocation2 + $0x8] sm:$0xff]
      %v2491 = vld [vmem:[#allocation2 + $0x10] sm:$0xff]
      %v2492 = vld [vmem:[#allocation2 + $0x18] sm:$0xff]
      %v2493 = vld [vmem:[#allocation2 + $0x20] sm:$0xff]
      %v2494 = vld [vmem:[#allocation2 + $0x28] sm:$0xff]
      %v2495 = vld [vmem:[#allocation2 + $0x38] sm:$0xff]
      %v2496 = vld [vmem:[#allocation2 + $0x40] sm:$0xff]
      %v2497 = vld [vmem:[#allocation2 + $0x48] sm:$0xff]
      %v2498 = vld [vmem:[#allocation2 + $0x50] sm:$0xff]
      %v2499 = vld [vmem:[#allocation2 + $0x58] sm:$0xff]
      %v2500 = vmul.f32 %v2490, %v848
      %v2501 = vmul.f32 %v2491, %v856
      %v2502 = vmul.f32 %v2492, %v857
      %v2503 = vmul.f32 %v2493, %v858
      %v2504 = vmul.f32 %v2494, %v854
      %v2505 = vmul.f32 %v2495, %v848
      %v2506 = vmul.f32 %v2496, %v856
      %v2507 = vmul.f32 %v2497, %v857
      %v2508 = vmul.f32 %v2498, %v858
      %v2509 = vmul.f32 %v2499, %v854
      %v2510 = vpack.c.bf16 %v2505, %v2500
      %v2511 = vpack.c.bf16 %v2506, %v2501
      %v2512 = vpack.c.bf16 %v2507, %v2502
      %v2513 = vpack.c.bf16 %v2508, %v2503
      %v2514 = vpack.c.bf16 %v2509, %v2504
      %v2520 = vunpack.c.l.b16 %v2510
      %v2521 = vunpack.c.l.b16 %v2511
      %v2522 = vunpack.c.l.b16 %v2512
      %v2523 = vunpack.c.l.b16 %v2513
      %v2524 = vunpack.c.l.b16 %v2514
      %v2525 = vunpack.c.h.b16 %v2510
      %v2526 = vunpack.c.h.b16 %v2511
      %v2527 = vunpack.c.h.b16 %v2512
      %v2528 = vunpack.c.h.b16 %v2513
      %v2529 = vunpack.c.h.b16 %v2514
      %v2530 = vpack.c.b16 %v2521, %v2520
      %v2531 = vpack.c.b16 %v2523, %v2522
      %v2532 = vpack.c.b16 %v2524, %v2524
      %v2533 = vpack.c.b16 %v2526, %v2525
      %v2534 = vpack.c.b16 %v2528, %v2527
      %v2535 = vpack.c.b16 %v2529, %v2529
      %2536 = vrot.lane.b32.xlu0 %v2530, 63
      %v2537 = vpop.permute.xlu0 %2536
      %2538 = vrot.lane.b32.xlu0 %v2531, 63
      %v2539 = vpop.permute.xlu0 %2538
      %2540 = vrot.lane.b32.xlu0 %v2532, 63
      %v2541 = vpop.permute.xlu0 %2540
      %2542 = vrot.lane.b32.xlu0 %v2533, 63
      %v2543 = vpop.permute.xlu0 %2542
      %2544 = vrot.lane.b32.xlu0 %v2534, 63
      %v2545 = vpop.permute.xlu0 %2544
      %2546 = vrot.lane.b32.xlu0 %v2535, 63
      %v2547 = vpop.permute.xlu0 %2546
      %v2548 = vrot.slane %v2537, 4
      %v2549 = vrot.slane %v2539, 4
      %v2550 = vrot.slane %v2541, 4
      %v2551 = vrot.slane %v2543, 4
      %v2552 = vrot.slane %v2545, 4
      %v2553 = vrot.slane %v2547, 4
      %v2554 = vsel %vm386, %v2548, %v2549
      %v2555 = vsel %vm919, %v2537, %v2554
      %v2556 = vsel %vm386, %v2549, %v2550
      %v2557 = vsel %vm919, %v2539, %v2556
      %v2558 = vsel %vm386, %v2551, %v2552
      %v2559 = vsel %vm919, %v2543, %v2558
      %v2560 = vsel %vm386, %v2552, %v2553
      %v2561 = vsel %vm919, %v2545, %v2560
      %2566 = vst [vmem:[#allocation4 + $0x2e0] sm:$0xff] %v2555
      %2567 = vst [vmem:[#allocation4 + $0x2e8] sm:$0xff] %v2557
      %2568 = vst [vmem:[#allocation4 + $0x2f0] sm:$0xff] %v2559
      %2569 = vst [vmem:[#allocation4 + $0x2f8] sm:$0xff] %v2561
      %v2570 = vld [vmem:[#allocation2 + $0x8] sm:$0xff]
      %v2571 = vld [vmem:[#allocation2 + $0x10] sm:$0xff]
      %v2572 = vld [vmem:[#allocation2 + $0x18] sm:$0xff]
      %v2573 = vld [vmem:[#allocation2 + $0x20] sm:$0xff]
      %v2574 = vld [vmem:[#allocation2 + $0x28] sm:$0xff]
      %v2575 = vld [vmem:[#allocation2 + $0x38] sm:$0xff]
      %v2576 = vld [vmem:[#allocation2 + $0x40] sm:$0xff]
      %v2577 = vld [vmem:[#allocation2 + $0x48] sm:$0xff]
      %v2578 = vld [vmem:[#allocation2 + $0x50] sm:$0xff]
      %v2579 = vld [vmem:[#allocation2 + $0x58] sm:$0xff]
      %v2580 = vmul.f32 %v2570, %v963
      %v2581 = vmul.f32 %v2571, %v971
      %v2582 = vmul.f32 %v2572, %v972
      %v2583 = vmul.f32 %v2573, %v973
      %v2584 = vmul.f32 %v2574, %v969
      %v2585 = vmul.f32 %v2575, %v963
      %v2586 = vmul.f32 %v2576, %v971
      %v2587 = vmul.f32 %v2577, %v972
      %v2588 = vmul.f32 %v2578, %v973
      %v2589 = vmul.f32 %v2579, %v969
      %v2590 = vpack.c.bf16 %v2585, %v2580
      %v2591 = vpack.c.bf16 %v2586, %v2581
      %v2592 = vpack.c.bf16 %v2587, %v2582
      %v2593 = vpack.c.bf16 %v2588, %v2583
      %v2594 = vpack.c.bf16 %v2589, %v2584
      %v2600 = vunpack.c.l.b16 %v2590
      %v2601 = vunpack.c.l.b16 %v2591
      %v2602 = vunpack.c.l.b16 %v2592
      %v2603 = vunpack.c.l.b16 %v2593
      %v2604 = vunpack.c.l.b16 %v2594
      %v2605 = vunpack.c.h.b16 %v2590
      %v2606 = vunpack.c.h.b16 %v2591
      %v2607 = vunpack.c.h.b16 %v2592
      %v2608 = vunpack.c.h.b16 %v2593
      %v2609 = vunpack.c.h.b16 %v2594
      %v2610 = vpack.c.b16 %v2601, %v2600
      %v2611 = vpack.c.b16 %v2603, %v2602
      %v2612 = vpack.c.b16 %v2604, %v2604
      %v2613 = vpack.c.b16 %v2606, %v2605
      %v2614 = vpack.c.b16 %v2608, %v2607
      %v2615 = vpack.c.b16 %v2609, %v2609
      %2616 = vrot.lane.b32.xlu0 %v2610, 57
      %v2617 = vpop.permute.xlu0 %2616
      %2618 = vrot.lane.b32.xlu0 %v2611, 57
      %v2619 = vpop.permute.xlu0 %2618
      %2620 = vrot.lane.b32.xlu0 %v2612, 57
      %v2621 = vpop.permute.xlu0 %2620
      %2622 = vrot.lane.b32.xlu0 %v2613, 57
      %v2623 = vpop.permute.xlu0 %2622
      %2624 = vrot.lane.b32.xlu0 %v2614, 57
      %v2625 = vpop.permute.xlu0 %2624
      %2626 = vrot.lane.b32.xlu0 %v2615, 57
      %v2627 = vpop.permute.xlu0 %2626
      %v2628 = vrot.slane %v2617, 4
      %v2629 = vrot.slane %v2619, 4
      %v2630 = vrot.slane %v2621, 4
      %v2631 = vrot.slane %v2623, 4
      %v2632 = vrot.slane %v2625, 4
      %v2633 = vrot.slane %v2627, 4
      %v2634 = vsel %vm386, %v2628, %v2629
      %v2635 = vsel %vm1034, %v2617, %v2634
      %v2636 = vsel %vm386, %v2629, %v2630
      %v2637 = vsel %vm1034, %v2619, %v2636
      %v2638 = vsel %vm386, %v2631, %v2632
      %v2639 = vsel %vm1034, %v2623, %v2638
      %v2640 = vsel %vm386, %v2632, %v2633
      %v2641 = vsel %vm1034, %v2625, %v2640
      %2646 = vst [vmem:[#allocation4 + $0x300] sm:$0xff] %v2635
      %2647 = vst [vmem:[#allocation4 + $0x308] sm:$0xff] %v2637
      %2648 = vst [vmem:[#allocation4 + $0x310] sm:$0xff] %v2639
      %2649 = vst [vmem:[#allocation4 + $0x318] sm:$0xff] %v2641
      %v2650 = vld [vmem:[#allocation2 + $0x8] sm:$0xff]
      %v2651 = vld [vmem:[#allocation2 + $0x10] sm:$0xff]
      %v2652 = vld [vmem:[#allocation2 + $0x18] sm:$0xff]
      %v2653 = vld [vmem:[#allocation2 + $0x20] sm:$0xff]
      %v2654 = vld [vmem:[#allocation2 + $0x28] sm:$0xff]
      %v2655 = vld [vmem:[#allocation2 + $0x38] sm:$0xff]
      %v2656 = vld [vmem:[#allocation2 + $0x40] sm:$0xff]
      %v2657 = vld [vmem:[#allocation2 + $0x48] sm:$0xff]
      %v2658 = vld [vmem:[#allocation2 + $0x50] sm:$0xff]
      %v2659 = vld [vmem:[#allocation2 + $0x58] sm:$0xff]
      %v2660 = vmul.f32 %v2650, %v1078
      %v2661 = vmul.f32 %v2651, %v1086
      %v2662 = vmul.f32 %v2652, %v1087
      %v2663 = vmul.f32 %v2653, %v1088
      %v2664 = vmul.f32 %v2654, %v1084
      %v2665 = vmul.f32 %v2655, %v1078
      %v2666 = vmul.f32 %v2656, %v1086
      %v2667 = vmul.f32 %v2657, %v1087
      %v2668 = vmul.f32 %v2658, %v1088
      %v2669 = vmul.f32 %v2659, %v1084
      %v2670 = vpack.c.bf16 %v2665, %v2660
      %v2671 = vpack.c.bf16 %v2666, %v2661
      %v2672 = vpack.c.bf16 %v2667, %v2662
      %v2673 = vpack.c.bf16 %v2668, %v2663
      %v2674 = vpack.c.bf16 %v2669, %v2664
      %v2680 = vunpack.c.l.b16 %v2670
      %v2681 = vunpack.c.l.b16 %v2671
      %v2682 = vunpack.c.l.b16 %v2672
      %v2683 = vunpack.c.l.b16 %v2673
      %v2684 = vunpack.c.l.b16 %v2674
      %v2685 = vunpack.c.h.b16 %v2670
      %v2686 = vunpack.c.h.b16 %v2671
      %v2687 = vunpack.c.h.b16 %v2672
      %v2688 = vunpack.c.h.b16 %v2673
      %v2689 = vunpack.c.h.b16 %v2674
      %v2690 = vpack.c.b16 %v2681, %v2680
      %v2691 = vpack.c.b16 %v2683, %v2682
      %v2692 = vpack.c.b16 %v2684, %v2684
      %v2693 = vpack.c.b16 %v2686, %v2685
      %v2694 = vpack.c.b16 %v2688, %v2687
      %v2695 = vpack.c.b16 %v2689, %v2689
      %2696 = vrot.lane.b32.xlu0 %v2690, 56
      %v2697 = vpop.permute.xlu0 %2696
      %2698 = vrot.lane.b32.xlu0 %v2691, 56
      %v2699 = vpop.permute.xlu0 %2698
      %2700 = vrot.lane.b32.xlu0 %v2692, 56
      %v2701 = vpop.permute.xlu0 %2700
      %2702 = vrot.lane.b32.xlu0 %v2693, 56
      %v2703 = vpop.permute.xlu0 %2702
      %2704 = vrot.lane.b32.xlu0 %v2694, 56
      %v2705 = vpop.permute.xlu0 %2704
      %2706 = vrot.lane.b32.xlu0 %v2695, 56
      %v2707 = vpop.permute.xlu0 %2706
      %v2708 = vrot.slane %v2697, 4
      %v2709 = vrot.slane %v2699, 4
      %v2710 = vrot.slane %v2701, 4
      %v2711 = vrot.slane %v2703, 4
      %v2712 = vrot.slane %v2705, 4
      %v2713 = vrot.slane %v2707, 4
      %v2714 = vsel %vm386, %v2708, %v2709
      %v2715 = vsel %vm1149, %v2697, %v2714
      %v2716 = vsel %vm386, %v2709, %v2710
      %v2717 = vsel %vm1149, %v2699, %v2716
      %v2718 = vsel %vm386, %v2711, %v2712
      %v2719 = vsel %vm1149, %v2703, %v2718
      %v2720 = vsel %vm386, %v2712, %v2713
      %v2721 = vsel %vm1149, %v2705, %v2720
      %2726 = vst [vmem:[#allocation4 + $0x320] sm:$0xff] %v2715
      %2727 = vst [vmem:[#allocation4 + $0x328] sm:$0xff] %v2717
      %2728 = vst [vmem:[#allocation4 + $0x330] sm:$0xff] %v2719
      %2729 = vst [vmem:[#allocation4 + $0x338] sm:$0xff] %v2721
      %v2730 = vld [vmem:[#allocation2 + $0x8] sm:$0xff]
      %v2731 = vld [vmem:[#allocation2 + $0x10] sm:$0xff]
      %v2732 = vld [vmem:[#allocation2 + $0x18] sm:$0xff]
      %v2733 = vld [vmem:[#allocation2 + $0x20] sm:$0xff]
      %v2734 = vld [vmem:[#allocation2 + $0x28] sm:$0xff]
      %v2735 = vld [vmem:[#allocation2 + $0x38] sm:$0xff]
      %v2736 = vld [vmem:[#allocation2 + $0x40] sm:$0xff]
      %v2737 = vld [vmem:[#allocation2 + $0x48] sm:$0xff]
      %v2738 = vld [vmem:[#allocation2 + $0x50] sm:$0xff]
      %v2739 = vld [vmem:[#allocation2 + $0x58] sm:$0xff]
      %v2740 = vmul.f32 %v2730, %v1193
      %v2741 = vmul.f32 %v2731, %v1201
      %v2742 = vmul.f32 %v2732, %v1202
      %v2743 = vmul.f32 %v2733, %v1203
      %v2744 = vmul.f32 %v2734, %v1199
      %v2745 = vmul.f32 %v2735, %v1193
      %v2746 = vmul.f32 %v2736, %v1201
      %v2747 = vmul.f32 %v2737, %v1202
      %v2748 = vmul.f32 %v2738, %v1203
      %v2749 = vmul.f32 %v2739, %v1199
      %v2750 = vpack.c.bf16 %v2745, %v2740
      %v2751 = vpack.c.bf16 %v2746, %v2741
      %v2752 = vpack.c.bf16 %v2747, %v2742
      %v2753 = vpack.c.bf16 %v2748, %v2743
      %v2754 = vpack.c.bf16 %v2749, %v2744
      %v2760 = vunpack.c.l.b16 %v2750
      %v2761 = vunpack.c.l.b16 %v2751
      %v2762 = vunpack.c.l.b16 %v2752
      %v2763 = vunpack.c.l.b16 %v2753
      %v2764 = vunpack.c.l.b16 %v2754
      %v2765 = vunpack.c.h.b16 %v2750
      %v2766 = vunpack.c.h.b16 %v2751
      %v2767 = vunpack.c.h.b16 %v2752
      %v2768 = vunpack.c.h.b16 %v2753
      %v2769 = vunpack.c.h.b16 %v2754
      %v2770 = vpack.c.b16 %v2761, %v2760
      %v2771 = vpack.c.b16 %v2763, %v2762
      %v2772 = vpack.c.b16 %v2764, %v2764
      %v2773 = vpack.c.b16 %v2766, %v2765
      %v2774 = vpack.c.b16 %v2768, %v2767
      %v2775 = vpack.c.b16 %v2769, %v2769
      %2776 = vrot.lane.b32.xlu0 %v2770, 55
      %v2777 = vpop.permute.xlu0 %2776
      %2778 = vrot.lane.b32.xlu0 %v2771, 55
      %v2779 = vpop.permute.xlu0 %2778
      %2780 = vrot.lane.b32.xlu0 %v2772, 55
      %v2781 = vpop.permute.xlu0 %2780
      %2782 = vrot.lane.b32.xlu0 %v2773, 55
      %v2783 = vpop.permute.xlu0 %2782
      %2784 = vrot.lane.b32.xlu0 %v2774, 55
      %v2785 = vpop.permute.xlu0 %2784
      %2786 = vrot.lane.b32.xlu0 %v2775, 55
      %v2787 = vpop.permute.xlu0 %2786
      %v2788 = vrot.slane %v2777, 4
      %v2789 = vrot.slane %v2779, 4
      %v2790 = vrot.slane %v2781, 4
      %v2791 = vrot.slane %v2783, 4
      %v2792 = vrot.slane %v2785, 4
      %v2793 = vrot.slane %v2787, 4
      %v2794 = vsel %vm386, %v2788, %v2789
      %v2795 = vsel %vm1264, %v2777, %v2794
      %v2796 = vsel %vm386, %v2789, %v2790
      %v2797 = vsel %vm1264, %v2779, %v2796
      %v2798 = vsel %vm386, %v2791, %v2792
      %v2799 = vsel %vm1264, %v2783, %v2798
      %v2800 = vsel %vm386, %v2792, %v2793
      %v2801 = vsel %vm1264, %v2785, %v2800
      %2806 = vst [vmem:[#allocation4 + $0x340] sm:$0xff] %v2795
      %2807 = vst [vmem:[#allocation4 + $0x348] sm:$0xff] %v2797
      %2808 = vst [vmem:[#allocation4 + $0x350] sm:$0xff] %v2799
      %2809 = vst [vmem:[#allocation4 + $0x358] sm:$0xff] %v2801
      %v2810 = vld [vmem:[%s1] sm:$0xff]
      %v2811 = vld [vmem:[%s1 + $0x8] sm:$0xff]
      %v2812 = vld [vmem:[%s1 + $0x10] sm:$0xff]
      %v2813 = vld [vmem:[%s1 + $0x18] sm:$0xff]
      %v2814 = vld [vmem:[#allocation4] sm:$0xff]
      %v2815 = vld [vmem:[#allocation4 + $0x8] sm:$0xff]
      %v2816 = vld [vmem:[#allocation4 + $0x10] sm:$0xff]
      %v2817 = vld [vmem:[#allocation4 + $0x18] sm:$0xff]
      %v2818 = vld [vmem:[#allocation4 + $0x20] sm:$0xff]
      %v2819 = vld [vmem:[#allocation4 + $0x28] sm:$0xff]
      %v2820 = vld [vmem:[#allocation4 + $0x30] sm:$0xff]
      %v2821 = vld [vmem:[#allocation4 + $0x38] sm:$0xff]
      %v2822 = vld [vmem:[#allocation4 + $0x40] sm:$0xff]
      %v2823 = vld [vmem:[#allocation4 + $0x48] sm:$0xff]
      %v2824 = vld [vmem:[#allocation4 + $0x50] sm:$0xff]
      %v2825 = vld [vmem:[#allocation4 + $0x58] sm:$0xff]
      %v2826 = vld [vmem:[#allocation4 + $0x60] sm:$0xff]
      %v2827 = vld [vmem:[#allocation4 + $0x68] sm:$0xff]
      %v2828 = vld [vmem:[#allocation4 + $0x70] sm:$0xff]
      %v2829 = vld [vmem:[#allocation4 + $0x78] sm:$0xff]
      %v2830 = vld [vmem:[#allocation4 + $0x80] sm:$0xff]
      %v2831 = vld [vmem:[#allocation4 + $0x88] sm:$0xff]
      %v2832 = vld [vmem:[#allocation4 + $0x90] sm:$0xff]
      %v2833 = vld [vmem:[#allocation4 + $0x98] sm:$0xff]
      %v2834 = vld [vmem:[#allocation4 + $0xa0] sm:$0xff]
      %v2835 = vld [vmem:[#allocation4 + $0xa8] sm:$0xff]
      %v2836 = vld [vmem:[#allocation4 + $0xb0] sm:$0xff]
      %v2837 = vld [vmem:[#allocation4 + $0xb8] sm:$0xff]
      %v2838 = vld [vmem:[#allocation4 + $0xc0] sm:$0xff]
      %v2839 = vld [vmem:[#allocation4 + $0xc8] sm:$0xff]
      %v2840 = vld [vmem:[#allocation4 + $0xd0] sm:$0xff]
      %v2841 = vld [vmem:[#allocation4 + $0xd8] sm:$0xff]
      %v2842 = vld [vmem:[#allocation4 + $0xe0] sm:$0xff]
      %v2843 = vld [vmem:[#allocation4 + $0xe8] sm:$0xff]
      %v2844 = vld [vmem:[#allocation4 + $0xf0] sm:$0xff]
      %v2845 = vld [vmem:[#allocation4 + $0xf8] sm:$0xff]
      %v2846 = vld [vmem:[#allocation4 + $0x100] sm:$0xff]
      %v2847 = vld [vmem:[#allocation4 + $0x108] sm:$0xff]
      %v2848 = vld [vmem:[#allocation4 + $0x110] sm:$0xff]
      %v2849 = vld [vmem:[#allocation4 + $0x118] sm:$0xff]
      %v2850 = vld [vmem:[#allocation4 + $0x120] sm:$0xff]
      %v2851 = vld [vmem:[#allocation4 + $0x128] sm:$0xff]
      %v2852 = vld [vmem:[#allocation4 + $0x130] sm:$0xff]
      %v2853 = vld [vmem:[#allocation4 + $0x138] sm:$0xff]
      %v2854 = vld [vmem:[#allocation4 + $0x140] sm:$0xff]
      %v2855 = vld [vmem:[#allocation4 + $0x148] sm:$0xff]
      %v2856 = vld [vmem:[#allocation4 + $0x150] sm:$0xff]
      %v2857 = vld [vmem:[#allocation4 + $0x158] sm:$0xff]
      %v2858 = vld [vmem:[#allocation4 + $0x160] sm:$0xff]
      %v2859 = vld [vmem:[#allocation4 + $0x168] sm:$0xff]
      %v2860 = vld [vmem:[#allocation4 + $0x170] sm:$0xff]
      %v2861 = vld [vmem:[#allocation4 + $0x178] sm:$0xff]
      %v2862 = vld [vmem:[#allocation4 + $0x180] sm:$0xff]
      %v2863 = vld [vmem:[#allocation4 + $0x188] sm:$0xff]
      %v2864 = vld [vmem:[#allocation4 + $0x190] sm:$0xff]
      %v2865 = vld [vmem:[#allocation4 + $0x198] sm:$0xff]
      %v2866 = vld [vmem:[#allocation4 + $0x1a0] sm:$0xff]
      %v2867 = vld [vmem:[#allocation4 + $0x1a8] sm:$0xff]
      %v2868 = vld [vmem:[#allocation4 + $0x1b0] sm:$0xff]
      %v2869 = vld [vmem:[#allocation4 + $0x1b8] sm:$0xff]
      %v2870 = vld [vmem:[#allocation4 + $0x1c0] sm:$0xff]
      %v2871 = vld [vmem:[#allocation4 + $0x1c8] sm:$0xff]
      %v2872 = vld [vmem:[#allocation4 + $0x1d0] sm:$0xff]
      %v2873 = vld [vmem:[#allocation4 + $0x1d8] sm:$0xff]
      %v2874 = vld [vmem:[#allocation4 + $0x1e0] sm:$0xff]
      %v2875 = vld [vmem:[#allocation4 + $0x1e8] sm:$0xff]
      %v2876 = vld [vmem:[#allocation4 + $0x1f0] sm:$0xff]
      %v2877 = vld [vmem:[#allocation4 + $0x1f8] sm:$0xff]
      %v2878 = vld [vmem:[#allocation4 + $0x200] sm:$0xff]
      %v2879 = vld [vmem:[#allocation4 + $0x208] sm:$0xff]
      %v2880 = vld [vmem:[#allocation4 + $0x210] sm:$0xff]
      %v2881 = vld [vmem:[#allocation4 + $0x218] sm:$0xff]
      %v2882 = vld [vmem:[#allocation4 + $0x220] sm:$0xff]
      %v2883 = vld [vmem:[#allocation4 + $0x228] sm:$0xff]
      %v2884 = vld [vmem:[#allocation4 + $0x230] sm:$0xff]
      %v2885 = vld [vmem:[#allocation4 + $0x238] sm:$0xff]
      %v2886 = vld [vmem:[#allocation4 + $0x240] sm:$0xff]
      %v2887 = vld [vmem:[#allocation4 + $0x248] sm:$0xff]
      %v2888 = vld [vmem:[#allocation4 + $0x250] sm:$0xff]
      %v2889 = vld [vmem:[#allocation4 + $0x258] sm:$0xff]
      %v2890 = vld [vmem:[#allocation4 + $0x260] sm:$0xff]
      %v2891 = vld [vmem:[#allocation4 + $0x268] sm:$0xff]
      %v2892 = vld [vmem:[#allocation4 + $0x270] sm:$0xff]
      %v2893 = vld [vmem:[#allocation4 + $0x278] sm:$0xff]
      %v2894 = vld [vmem:[#allocation4 + $0x280] sm:$0xff]
      %v2895 = vld [vmem:[#allocation4 + $0x288] sm:$0xff]
      %v2896 = vld [vmem:[#allocation4 + $0x290] sm:$0xff]
      %v2897 = vld [vmem:[#allocation4 + $0x298] sm:$0xff]
      %v2898 = vld [vmem:[#allocation4 + $0x2a0] sm:$0xff]
      %v2899 = vld [vmem:[#allocation4 + $0x2a8] sm:$0xff]
      %v2900 = vld [vmem:[#allocation4 + $0x2b0] sm:$0xff]
      %v2901 = vld [vmem:[#allocation4 + $0x2b8] sm:$0xff]
      %v2902 = vld [vmem:[#allocation4 + $0x2c0] sm:$0xff]
      %v2903 = vld [vmem:[#allocation4 + $0x2c8] sm:$0xff]
      %v2904 = vld [vmem:[#allocation4 + $0x2d0] sm:$0xff]
      %v2905 = vld [vmem:[#allocation4 + $0x2d8] sm:$0xff]
      %v2906 = vld [vmem:[#allocation4 + $0x2e0] sm:$0xff]
      %v2907 = vld [vmem:[#allocation4 + $0x2e8] sm:$0xff]
      %v2908 = vld [vmem:[#allocation4 + $0x2f0] sm:$0xff]
      %v2909 = vld [vmem:[#allocation4 + $0x2f8] sm:$0xff]
      %v2910 = vld [vmem:[#allocation4 + $0x300] sm:$0xff]
      %v2911 = vld [vmem:[#allocation4 + $0x308] sm:$0xff]
      %v2912 = vld [vmem:[#allocation4 + $0x310] sm:$0xff]
      %v2913 = vld [vmem:[#allocation4 + $0x318] sm:$0xff]
      %v2914 = vld [vmem:[#allocation4 + $0x320] sm:$0xff]
      %v2915 = vld [vmem:[#allocation4 + $0x328] sm:$0xff]
      %v2916 = vld [vmem:[#allocation4 + $0x330] sm:$0xff]
      %v2917 = vld [vmem:[#allocation4 + $0x338] sm:$0xff]
      %v2918 = vld [vmem:[#allocation4 + $0x340] sm:$0xff]
      %v2919 = vld [vmem:[#allocation4 + $0x348] sm:$0xff]
      %v2920 = vld [vmem:[#allocation4 + $0x350] sm:$0xff]
      %v2921 = vld [vmem:[#allocation4 + $0x358] sm:$0xff]
      %v2922 = vld [vmem:[%s2] sm:$0xff]
      %v2923 = vld [vmem:[%s2 + $0x8] sm:$0xff]
      %2925 = vset.pattern.permute.xlu0 0
      %2926 = vperm.xlu0 %2925, %v2922
      %v2927 = vpop.permute.xlu0 %2926
      %2930 = vset.pattern.permute.xlu0 0
      %2931 = vperm.xlu0 %2930, %v2923
      %v2932 = vpop.permute.xlu0 %2931
      %v2938 = vunpack.c.l.b16 %v2810
      %v2939 = vunpack.c.h.b16 %v2810
      %v2940 = vunpack.c.l.b16 %v2811
      %v2941 = vunpack.c.h.b16 %v2811
      %v2942 = vunpack.c.l.b16 %v2812
      %v2943 = vunpack.c.h.b16 %v2812
      %v2944 = vunpack.c.l.b16 %v2813
      %v2945 = vunpack.c.h.b16 %v2813
      %v2946 = vpack.c.b16 %v2942, %v2938
      %v2947 = vpack.c.b16 %v2943, %v2939
      %v2948 = vpack.c.b16 %v2944, %v2940
      %v2949 = vpack.c.b16 %v2945, %v2941
      %v3061 = vunpack.c.l.b16 %v2814
      %v3062 = vunpack.c.h.b16 %v2814
      %v3063 = vunpack.c.l.b16 %v2815
      %v3064 = vunpack.c.h.b16 %v2815
      %v3065 = vunpack.c.l.b16 %v2816
      %v3066 = vunpack.c.h.b16 %v2816
      %v3067 = vunpack.c.l.b16 %v2817
      %v3068 = vunpack.c.h.b16 %v2817
      %v3069 = vunpack.c.l.b16 %v2818
      %v3070 = vunpack.c.h.b16 %v2818
      %v3071 = vunpack.c.l.b16 %v2819
      %v3072 = vunpack.c.h.b16 %v2819
      %v3073 = vunpack.c.l.b16 %v2820
      %v3074 = vunpack.c.h.b16 %v2820
      %v3075 = vunpack.c.l.b16 %v2821
      %v3076 = vunpack.c.h.b16 %v2821
      %v3077 = vunpack.c.l.b16 %v2822
      %v3078 = vunpack.c.h.b16 %v2822
      %v3079 = vunpack.c.l.b16 %v2823
      %v3080 = vunpack.c.h.b16 %v2823
      %v3081 = vunpack.c.l.b16 %v2824
      %v3082 = vunpack.c.h.b16 %v2824
      %v3083 = vunpack.c.l.b16 %v2825
      %v3084 = vunpack.c.h.b16 %v2825
      %v3085 = vunpack.c.l.b16 %v2826
      %v3086 = vunpack.c.h.b16 %v2826
      %v3087 = vunpack.c.l.b16 %v2827
      %v3088 = vunpack.c.h.b16 %v2827
      %v3089 = vunpack.c.l.b16 %v2828
      %v3090 = vunpack.c.h.b16 %v2828
      %v3091 = vunpack.c.l.b16 %v2829
      %v3092 = vunpack.c.h.b16 %v2829
      %v3093 = vunpack.c.l.b16 %v2830
      %v3094 = vunpack.c.h.b16 %v2830
      %v3095 = vunpack.c.l.b16 %v2831
      %v3096 = vunpack.c.h.b16 %v2831
      %v3097 = vunpack.c.l.b16 %v2832
      %v3098 = vunpack.c.h.b16 %v2832
      %v3099 = vunpack.c.l.b16 %v2833
      %v3100 = vunpack.c.h.b16 %v2833
      %v3101 = vunpack.c.l.b16 %v2834
      %v3102 = vunpack.c.h.b16 %v2834
      %v3103 = vunpack.c.l.b16 %v2835
      %v3104 = vunpack.c.h.b16 %v2835
      %v3105 = vunpack.c.l.b16 %v2836
      %v3106 = vunpack.c.h.b16 %v2836
      %v3107 = vunpack.c.l.b16 %v2837
      %v3108 = vunpack.c.h.b16 %v2837
      %v3109 = vunpack.c.l.b16 %v2838
      %v3110 = vunpack.c.h.b16 %v2838
      %v3111 = vunpack.c.l.b16 %v2839
      %v3112 = vunpack.c.h.b16 %v2839
      %v3113 = vunpack.c.l.b16 %v2840
      %v3114 = vunpack.c.h.b16 %v2840
      %v3115 = vunpack.c.l.b16 %v2841
      %v3116 = vunpack.c.h.b16 %v2841
      %v3117 = vunpack.c.l.b16 %v2842
      %v3118 = vunpack.c.h.b16 %v2842
      %v3119 = vunpack.c.l.b16 %v2843
      %v3120 = vunpack.c.h.b16 %v2843
      %v3121 = vunpack.c.l.b16 %v2844
      %v3122 = vunpack.c.h.b16 %v2844
      %v3123 = vunpack.c.l.b16 %v2845
      %v3124 = vunpack.c.h.b16 %v2845
      %v3125 = vunpack.c.l.b16 %v2846
      %v3126 = vunpack.c.h.b16 %v2846
      %v3127 = vunpack.c.l.b16 %v2847
      %v3128 = vunpack.c.h.b16 %v2847
      %v3129 = vunpack.c.l.b16 %v2848
      %v3130 = vunpack.c.h.b16 %v2848
      %v3131 = vunpack.c.l.b16 %v2849
      %v3132 = vunpack.c.h.b16 %v2849
      %v3133 = vunpack.c.l.b16 %v2850
      %v3134 = vunpack.c.h.b16 %v2850
      %v3135 = vunpack.c.l.b16 %v2851
      %v3136 = vunpack.c.h.b16 %v2851
      %v3137 = vunpack.c.l.b16 %v2852
      %v3138 = vunpack.c.h.b16 %v2852
      %v3139 = vunpack.c.l.b16 %v2853
      %v3140 = vunpack.c.h.b16 %v2853
      %v3141 = vunpack.c.l.b16 %v2854
      %v3142 = vunpack.c.h.b16 %v2854
      %v3143 = vunpack.c.l.b16 %v2855
      %v3144 = vunpack.c.h.b16 %v2855
      %v3145 = vunpack.c.l.b16 %v2856
      %v3146 = vunpack.c.h.b16 %v2856
      %v3147 = vunpack.c.l.b16 %v2857
      %v3148 = vunpack.c.h.b16 %v2857
      %v3149 = vunpack.c.l.b16 %v2858
      %v3150 = vunpack.c.h.b16 %v2858
      %v3151 = vunpack.c.l.b16 %v2859
      %v3152 = vunpack.c.h.b16 %v2859
      %v3153 = vunpack.c.l.b16 %v2860
      %v3154 = vunpack.c.h.b16 %v2860
      %v3155 = vunpack.c.l.b16 %v2861
      %v3156 = vunpack.c.h.b16 %v2861
      %v3157 = vunpack.c.l.b16 %v2862
      %v3158 = vunpack.c.h.b16 %v2862
      %v3159 = vunpack.c.l.b16 %v2863
      %v3160 = vunpack.c.h.b16 %v2863
      %v3161 = vunpack.c.l.b16 %v2864
      %v3162 = vunpack.c.h.b16 %v2864
      %v3163 = vunpack.c.l.b16 %v2865
      %v3164 = vunpack.c.h.b16 %v2865
      %v3165 = vunpack.c.l.b16 %v2866
      %v3166 = vunpack.c.h.b16 %v2866
      %v3167 = vunpack.c.l.b16 %v2867
      %v3168 = vunpack.c.h.b16 %v2867
      %v3169 = vunpack.c.l.b16 %v2868
      %v3170 = vunpack.c.h.b16 %v2868
      %v3171 = vunpack.c.l.b16 %v2869
      %v3172 = vunpack.c.h.b16 %v2869
      %v3173 = vunpack.c.l.b16 %v2870
      %v3174 = vunpack.c.h.b16 %v2870
      %v3175 = vunpack.c.l.b16 %v2871
      %v3176 = vunpack.c.h.b16 %v2871
      %v3177 = vunpack.c.l.b16 %v2872
      %v3178 = vunpack.c.h.b16 %v2872
      %v3179 = vunpack.c.l.b16 %v2873
      %v3180 = vunpack.c.h.b16 %v2873
      %v3181 = vunpack.c.l.b16 %v2874
      %v3182 = vunpack.c.h.b16 %v2874
      %v3183 = vunpack.c.l.b16 %v2875
      %v3184 = vunpack.c.h.b16 %v2875
      %v3185 = vunpack.c.l.b16 %v2876
      %v3186 = vunpack.c.h.b16 %v2876
      %v3187 = vunpack.c.l.b16 %v2877
      %v3188 = vunpack.c.h.b16 %v2877
      %v3189 = vunpack.c.l.b16 %v2878
      %v3190 = vunpack.c.h.b16 %v2878
      %v3191 = vunpack.c.l.b16 %v2879
      %v3192 = vunpack.c.h.b16 %v2879
      %v3193 = vunpack.c.l.b16 %v2880
      %v3194 = vunpack.c.h.b16 %v2880
      %v3195 = vunpack.c.l.b16 %v2881
      %v3196 = vunpack.c.h.b16 %v2881
      %v3197 = vunpack.c.l.b16 %v2882
      %v3198 = vunpack.c.h.b16 %v2882
      %v3199 = vunpack.c.l.b16 %v2883
      %v3200 = vunpack.c.h.b16 %v2883
      %v3201 = vunpack.c.l.b16 %v2884
      %v3202 = vunpack.c.h.b16 %v2884
      %v3203 = vunpack.c.l.b16 %v2885
      %v3204 = vunpack.c.h.b16 %v2885
      %v3205 = vunpack.c.l.b16 %v2886
      %v3206 = vunpack.c.h.b16 %v2886
      %v3207 = vunpack.c.l.b16 %v2887
      %v3208 = vunpack.c.h.b16 %v2887
      %v3209 = vunpack.c.l.b16 %v2888
      %v3210 = vunpack.c.h.b16 %v2888
      %v3211 = vunpack.c.l.b16 %v2889
      %v3212 = vunpack.c.h.b16 %v2889
      %v3213 = vunpack.c.l.b16 %v2890
      %v3214 = vunpack.c.h.b16 %v2890
      %v3215 = vunpack.c.l.b16 %v2891
      %v3216 = vunpack.c.h.b16 %v2891
      %v3217 = vunpack.c.l.b16 %v2892
      %v3218 = vunpack.c.h.b16 %v2892
      %v3219 = vunpack.c.l.b16 %v2893
      %v3220 = vunpack.c.h.b16 %v2893
      %v3221 = vunpack.c.l.b16 %v2894
      %v3222 = vunpack.c.h.b16 %v2894
      %v3223 = vunpack.c.l.b16 %v2895
      %v3224 = vunpack.c.h.b16 %v2895
      %v3225 = vunpack.c.l.b16 %v2896
      %v3226 = vunpack.c.h.b16 %v2896
      %v3227 = vunpack.c.l.b16 %v2897
      %v3228 = vunpack.c.h.b16 %v2897
      %v3229 = vunpack.c.l.b16 %v2898
      %v3230 = vunpack.c.h.b16 %v2898
      %v3231 = vunpack.c.l.b16 %v2899
      %v3232 = vunpack.c.h.b16 %v2899
      %v3233 = vunpack.c.l.b16 %v2900
      %v3234 = vunpack.c.h.b16 %v2900
      %v3235 = vunpack.c.l.b16 %v2901
      %v3236 = vunpack.c.h.b16 %v2901
      %v3237 = vunpack.c.l.b16 %v2902
      %v3238 = vunpack.c.h.b16 %v2902
      %v3239 = vunpack.c.l.b16 %v2903
      %v3240 = vunpack.c.h.b16 %v2903
      %v3241 = vunpack.c.l.b16 %v2904
      %v3242 = vunpack.c.h.b16 %v2904
      %v3243 = vunpack.c.l.b16 %v2905
      %v3244 = vunpack.c.h.b16 %v2905
      %v3245 = vunpack.c.l.b16 %v2906
      %v3246 = vunpack.c.h.b16 %v2906
      %v3247 = vunpack.c.l.b16 %v2907
      %v3248 = vunpack.c.h.b16 %v2907
      %v3249 = vunpack.c.l.b16 %v2908
      %v3250 = vunpack.c.h.b16 %v2908
      %v3251 = vunpack.c.l.b16 %v2909
      %v3252 = vunpack.c.h.b16 %v2909
      %v3253 = vunpack.c.l.b16 %v2910
      %v3254 = vunpack.c.h.b16 %v2910
      %v3255 = vunpack.c.l.b16 %v2911
      %v3256 = vunpack.c.h.b16 %v2911
      %v3257 = vunpack.c.l.b16 %v2912
      %v3258 = vunpack.c.h.b16 %v2912
      %v3259 = vunpack.c.l.b16 %v2913
      %v3260 = vunpack.c.h.b16 %v2913
      %v3261 = vunpack.c.l.b16 %v2914
      %v3262 = vunpack.c.h.b16 %v2914
      %v3263 = vunpack.c.l.b16 %v2915
      %v3264 = vunpack.c.h.b16 %v2915
      %v3265 = vunpack.c.l.b16 %v2916
      %v3266 = vunpack.c.h.b16 %v2916
      %v3267 = vunpack.c.l.b16 %v2917
      %v3268 = vunpack.c.h.b16 %v2917
      %v3269 = vunpack.c.l.b16 %v2918
      %v3270 = vunpack.c.h.b16 %v2918
      %v3271 = vunpack.c.l.b16 %v2919
      %v3272 = vunpack.c.h.b16 %v2919
      %v3273 = vunpack.c.l.b16 %v2920
      %v3274 = vunpack.c.h.b16 %v2920
      %v3275 = vunpack.c.l.b16 %v2921
      %v3276 = vunpack.c.h.b16 %v2921
      %v3277 = vpack.c.b16 %v3065, %v3061
      %v3278 = vpack.c.b16 %v3066, %v3062
      %v3279 = vpack.c.b16 %v3067, %v3063
      %v3280 = vpack.c.b16 %v3068, %v3064
      %v3281 = vpack.c.b16 %v3073, %v3069
      %v3282 = vpack.c.b16 %v3074, %v3070
      %v3283 = vpack.c.b16 %v3075, %v3071
      %v3284 = vpack.c.b16 %v3076, %v3072
      %v3285 = vpack.c.b16 %v3081, %v3077
      %v3286 = vpack.c.b16 %v3082, %v3078
      %v3287 = vpack.c.b16 %v3083, %v3079
      %v3288 = vpack.c.b16 %v3084, %v3080
      %v3289 = vpack.c.b16 %v3089, %v3085
      %v3290 = vpack.c.b16 %v3090, %v3086
      %v3291 = vpack.c.b16 %v3091, %v3087
      %v3292 = vpack.c.b16 %v3092, %v3088
      %v3293 = vpack.c.b16 %v3097, %v3093
      %v3294 = vpack.c.b16 %v3098, %v3094
      %v3295 = vpack.c.b16 %v3099, %v3095
      %v3296 = vpack.c.b16 %v3100, %v3096
      %v3297 = vpack.c.b16 %v3105, %v3101
      %v3298 = vpack.c.b16 %v3106, %v3102
      %v3299 = vpack.c.b16 %v3107, %v3103
      %v3300 = vpack.c.b16 %v3108, %v3104
      %v3301 = vpack.c.b16 %v3113, %v3109
      %v3302 = vpack.c.b16 %v3114, %v3110
      %v3303 = vpack.c.b16 %v3115, %v3111
      %v3304 = vpack.c.b16 %v3116, %v3112
      %v3305 = vpack.c.b16 %v3121, %v3117
      %v3306 = vpack.c.b16 %v3122, %v3118
      %v3307 = vpack.c.b16 %v3123, %v3119
      %v3308 = vpack.c.b16 %v3124, %v3120
      %v3309 = vpack.c.b16 %v3129, %v3125
      %v3310 = vpack.c.b16 %v3130, %v3126
      %v3311 = vpack.c.b16 %v3131, %v3127
      %v3312 = vpack.c.b16 %v3132, %v3128
      %v3313 = vpack.c.b16 %v3137, %v3133
      %v3314 = vpack.c.b16 %v3138, %v3134
      %v3315 = vpack.c.b16 %v3139, %v3135
      %v3316 = vpack.c.b16 %v3140, %v3136
      %v3317 = vpack.c.b16 %v3145, %v3141
      %v3318 = vpack.c.b16 %v3146, %v3142
      %v3319 = vpack.c.b16 %v3147, %v3143
      %v3320 = vpack.c.b16 %v3148, %v3144
      %v3321 = vpack.c.b16 %v3153, %v3149
      %v3322 = vpack.c.b16 %v3154, %v3150
      %v3323 = vpack.c.b16 %v3155, %v3151
      %v3324 = vpack.c.b16 %v3156, %v3152
      %v3325 = vpack.c.b16 %v3161, %v3157
      %v3326 = vpack.c.b16 %v3162, %v3158
      %v3327 = vpack.c.b16 %v3163, %v3159
      %v3328 = vpack.c.b16 %v3164, %v3160
      %v3329 = vpack.c.b16 %v3169, %v3165
      %v3330 = vpack.c.b16 %v3170, %v3166
      %v3331 = vpack.c.b16 %v3171, %v3167
      %v3332 = vpack.c.b16 %v3172, %v3168
      %v3333 = vpack.c.b16 %v3177, %v3173
      %v3334 = vpack.c.b16 %v3178, %v3174
      %v3335 = vpack.c.b16 %v3179, %v3175
      %v3336 = vpack.c.b16 %v3180, %v3176
      %v3337 = vpack.c.b16 %v3185, %v3181
      %v3338 = vpack.c.b16 %v3186, %v3182
      %v3339 = vpack.c.b16 %v3187, %v3183
      %v3340 = vpack.c.b16 %v3188, %v3184
      %v3341 = vpack.c.b16 %v3193, %v3189
      %v3342 = vpack.c.b16 %v3194, %v3190
      %v3343 = vpack.c.b16 %v3195, %v3191
      %v3344 = vpack.c.b16 %v3196, %v3192
      %v3345 = vpack.c.b16 %v3201, %v3197
      %v3346 = vpack.c.b16 %v3202, %v3198
      %v3347 = vpack.c.b16 %v3203, %v3199
      %v3348 = vpack.c.b16 %v3204, %v3200
      %v3349 = vpack.c.b16 %v3209, %v3205
      %v3350 = vpack.c.b16 %v3210, %v3206
      %v3351 = vpack.c.b16 %v3211, %v3207
      %v3352 = vpack.c.b16 %v3212, %v3208
      %v3353 = vpack.c.b16 %v3217, %v3213
      %v3354 = vpack.c.b16 %v3218, %v3214
      %v3355 = vpack.c.b16 %v3219, %v3215
      %v3356 = vpack.c.b16 %v3220, %v3216
      %v3357 = vpack.c.b16 %v3225, %v3221
      %v3358 = vpack.c.b16 %v3226, %v3222
      %v3359 = vpack.c.b16 %v3227, %v3223
      %v3360 = vpack.c.b16 %v3228, %v3224
      %v3361 = vpack.c.b16 %v3233, %v3229
      %v3362 = vpack.c.b16 %v3234, %v3230
      %v3363 = vpack.c.b16 %v3235, %v3231
      %v3364 = vpack.c.b16 %v3236, %v3232
      %v3365 = vpack.c.b16 %v3241, %v3237
      %v3366 = vpack.c.b16 %v3242, %v3238
      %v3367 = vpack.c.b16 %v3243, %v3239
      %v3368 = vpack.c.b16 %v3244, %v3240
      %v3369 = vpack.c.b16 %v3249, %v3245
      %v3370 = vpack.c.b16 %v3250, %v3246
      %v3371 = vpack.c.b16 %v3251, %v3247
      %v3372 = vpack.c.b16 %v3252, %v3248
      %v3373 = vpack.c.b16 %v3257, %v3253
      %v3374 = vpack.c.b16 %v3258, %v3254
      %v3375 = vpack.c.b16 %v3259, %v3255
      %v3376 = vpack.c.b16 %v3260, %v3256
      %v3377 = vpack.c.b16 %v3265, %v3261
      %v3378 = vpack.c.b16 %v3266, %v3262
      %v3379 = vpack.c.b16 %v3267, %v3263
      %v3380 = vpack.c.b16 %v3268, %v3264
      %v3381 = vpack.c.b16 %v3273, %v3269
      %v3382 = vpack.c.b16 %v3274, %v3270
      %v3383 = vpack.c.b16 %v3275, %v3271
      %v3384 = vpack.c.b16 %v3276, %v3272
      %vm3493 = vcmask 392192
      %v3495 = vsel %vm3493, %v2949, 0
      %3497 = vmatprep.subr.bf16.mxu0 %v3306
      %3498 = vmatpush1.bf16.msra.mxu0 %v3305
      %3499 = vmatprep.subr.bf16.mxu0 %v3302
      %3500 = vmatpush1.bf16.msra.mxu0 %v3301
      %3501 = vmatprep.subr.bf16.mxu0 %v3298
      %3502 = vmatpush1.bf16.msra.mxu0 %v3297
      %3503 = vmatprep.subr.bf16.mxu0 %v3294
      %3504 = vmatpush1.bf16.msra.mxu0 %v3293
      %3505 = vmatprep.subr.bf16.mxu0 %v3290
      %3506 = vmatpush1.bf16.msra.mxu0 %v3289
      %3507 = vmatprep.subr.bf16.mxu0 %v3286
      %3508 = vmatpush1.bf16.msra.mxu0 %v3285
      %3509 = vmatprep.subr.bf16.mxu0 %v3282
      %3510 = vmatpush1.bf16.msra.mxu0 %v3281
      %3511 = vmatprep.subr.bf16.mxu0 %v3278
      %3512 = vmatpush1.bf16.msra.mxu0 %v3277
      %3513 = vmatprep.subr.bf16.mxu0 %v3338
      %3514 = vmatpush2.bf16.msra.mxu0 %v3337
      %3515 = vmatprep.subr.bf16.mxu0 %v3334
      %3516 = vmatpush2.bf16.msra.mxu0 %v3333
      %3517 = vmatprep.subr.bf16.mxu0 %v3330
      %3518 = vmatpush2.bf16.msra.mxu0 %v3329
      %3519 = vmatprep.subr.bf16.mxu0 %v3326
      %3520 = vmatpush2.bf16.msra.mxu0 %v3325
      %3521 = vmatprep.subr.bf16.mxu0 %v3322
      %3522 = vmatpush2.bf16.msra.mxu0 %v3321
      %3523 = vmatprep.subr.bf16.mxu0 %v3318
      %3524 = vmatpush2.bf16.msra.mxu0 %v3317
      %3525 = vmatprep.subr.bf16.mxu0 %v3314
      %3526 = vmatpush2.bf16.msra.mxu0 %v3313
      %3527 = vmatprep.subr.bf16.mxu0 %v3310
      %3528 = vmatpush2.bf16.msra.mxu0 %v3309
      %3529 = vmatprep.mubr.bf16.mxu0 %v2947
      %3530 = vmatmul.mubr.bf16.gmra.mxu0 %v2946
      %v3531 = vpop.f32.mrf.mxu0
      %v3532 = vadd.f32 %v2927, %v3531
      %v3533 = vpop.f32.mrf.mxu0
      %v3534 = vadd.f32 %v2927, %v3533
      %v3535 = vpop.f32.mrf.mxu0
      %v3536 = vadd.f32 %v2932, %v3535
      %v3537 = vpop.f32.mrf.mxu0
      %v3538 = vadd.f32 %v2932, %v3537
      %3539 = vdwg.mxu0
      %3540 = vmatprep.subr.bf16.mxu0 %v3370
      %3541 = vmatpush1.bf16.msra.mxu0 %v3369
      %3542 = vmatprep.subr.bf16.mxu0 %v3366
      %3543 = vmatpush1.bf16.msra.mxu0 %v3365
      %3544 = vmatprep.subr.bf16.mxu0 %v3362
      %3545 = vmatpush1.bf16.msra.mxu0 %v3361
      %3546 = vmatprep.subr.bf16.mxu0 %v3358
      %3547 = vmatpush1.bf16.msra.mxu0 %v3357
      %3548 = vmatprep.subr.bf16.mxu0 %v3354
      %3549 = vmatpush1.bf16.msra.mxu0 %v3353
      %3550 = vmatprep.subr.bf16.mxu0 %v3350
      %3551 = vmatpush1.bf16.msra.mxu0 %v3349
      %3552 = vmatprep.subr.bf16.mxu0 %v3346
      %3553 = vmatpush1.bf16.msra.mxu0 %v3345
      %3554 = vmatprep.subr.bf16.mxu0 %v3342
      %3555 = vmatpush1.bf16.msra.mxu0 %v3341
      %3556 = vmatprep.subr.bf16.mxu0 0
      %3557 = vmatpush2.bf16.msra.mxu0 0
      %3558 = vmatprep.subr.bf16.mxu0 0
      %3559 = vmatpush2.bf16.msra.mxu0 0
      %3560 = vmatprep.subr.bf16.mxu0 0
      %3561 = vmatpush2.bf16.msra.mxu0 0
      %3562 = vmatprep.subr.bf16.mxu0 0
      %3563 = vmatpush2.bf16.msra.mxu0 0
      %3564 = vmatprep.subr.bf16.mxu0 0
      %3565 = vmatpush2.bf16.msra.mxu0 0
      %3566 = vmatprep.subr.bf16.mxu0 %v3382
      %3567 = vmatpush2.bf16.msra.mxu0 %v3381
      %3568 = vmatprep.subr.bf16.mxu0 %v3378
      %3569 = vmatpush2.bf16.msra.mxu0 %v3377
      %3570 = vmatprep.subr.bf16.mxu0 %v3374
      %3571 = vmatpush2.bf16.msra.mxu0 %v3373
      %3572 = vmatprep.mubr.bf16.mxu0 %v3495
      %3573 = vmatmul.mubr.bf16.gmra.mxu0 %v2948
      %v3574 = vpop.f32.mrf.mxu0
      %v3575 = vadd.f32 %v3532, %v3574
      %v3576 = vpop.f32.mrf.mxu0
      %v3577 = vadd.f32 %v3534, %v3576
      %v3578 = vpop.f32.mrf.mxu0
      %v3579 = vadd.f32 %v3536, %v3578
      %v3580 = vpop.f32.mrf.mxu0
      %v3581 = vadd.f32 %v3538, %v3580
      %3582 = vdwg.mxu0
      %3583 = vmatprep.subr.bf16.mxu0 %v3308
      %3584 = vmatpush1.bf16.msra.mxu0 %v3307
      %3585 = vmatprep.subr.bf16.mxu0 %v3304
      %3586 = vmatpush1.bf16.msra.mxu0 %v3303
      %3587 = vmatprep.subr.bf16.mxu0 %v3300
      %3588 = vmatpush1.bf16.msra.mxu0 %v3299
      %3589 = vmatprep.subr.bf16.mxu0 %v3296
      %3590 = vmatpush1.bf16.msra.mxu0 %v3295
      %3591 = vmatprep.subr.bf16.mxu0 %v3292
      %3592 = vmatpush1.bf16.msra.mxu0 %v3291
      %3593 = vmatprep.subr.bf16.mxu0 %v3288
      %3594 = vmatpush1.bf16.msra.mxu0 %v3287
      %3595 = vmatprep.subr.bf16.mxu0 %v3284
      %3596 = vmatpush1.bf16.msra.mxu0 %v3283
      %3597 = vmatprep.subr.bf16.mxu0 %v3280
      %3598 = vmatpush1.bf16.msra.mxu0 %v3279
      %3599 = vmatprep.subr.bf16.mxu0 %v3340
      %3600 = vmatpush2.bf16.msra.mxu0 %v3339
      %3601 = vmatprep.subr.bf16.mxu0 %v3336
      %3602 = vmatpush2.bf16.msra.mxu0 %v3335
      %3603 = vmatprep.subr.bf16.mxu0 %v3332
      %3604 = vmatpush2.bf16.msra.mxu0 %v3331
      %3605 = vmatprep.subr.bf16.mxu0 %v3328
      %3606 = vmatpush2.bf16.msra.mxu0 %v3327
      %3607 = vmatprep.subr.bf16.mxu0 %v3324
      %3608 = vmatpush2.bf16.msra.mxu0 %v3323
      %3609 = vmatprep.subr.bf16.mxu0 %v3320
      %3610 = vmatpush2.bf16.msra.mxu0 %v3319
      %3611 = vmatprep.subr.bf16.mxu0 %v3316
      %3612 = vmatpush2.bf16.msra.mxu0 %v3315
      %3613 = vmatprep.subr.bf16.mxu0 %v3312
      %3614 = vmatpush2.bf16.msra.mxu0 %v3311
      %3615 = vmatprep.mubr.bf16.mxu0 %v2947
      %3616 = vmatmul.mubr.bf16.gmra.mxu0 %v2946
      %v3617 = vpop.f32.mrf.mxu0
      %v3618 = vadd.f32 %v2927, %v3617
      %v3619 = vpop.f32.mrf.mxu0
      %v3620 = vadd.f32 %v2927, %v3619
      %v3621 = vpop.f32.mrf.mxu0
      %v3622 = vadd.f32 %v2932, %v3621
      %v3623 = vpop.f32.mrf.mxu0
      %v3624 = vadd.f32 %v2932, %v3623
      %3625 = vdwg.mxu0
      %3626 = vmatprep.subr.bf16.mxu0 %v3372
      %3627 = vmatpush1.bf16.msra.mxu0 %v3371
      %3628 = vmatprep.subr.bf16.mxu0 %v3368
      %3629 = vmatpush1.bf16.msra.mxu0 %v3367
      %3630 = vmatprep.subr.bf16.mxu0 %v3364
      %3631 = vmatpush1.bf16.msra.mxu0 %v3363
      %3632 = vmatprep.subr.bf16.mxu0 %v3360
      %3633 = vmatpush1.bf16.msra.mxu0 %v3359
      %3634 = vmatprep.subr.bf16.mxu0 %v3356
      %3635 = vmatpush1.bf16.msra.mxu0 %v3355
      %3636 = vmatprep.subr.bf16.mxu0 %v3352
      %3637 = vmatpush1.bf16.msra.mxu0 %v3351
      %3638 = vmatprep.subr.bf16.mxu0 %v3348
      %3639 = vmatpush1.bf16.msra.mxu0 %v3347
      %3640 = vmatprep.subr.bf16.mxu0 %v3344
      %3641 = vmatpush1.bf16.msra.mxu0 %v3343
      %3642 = vmatprep.subr.bf16.mxu0 0
      %3643 = vmatpush2.bf16.msra.mxu0 0
      %3644 = vmatprep.subr.bf16.mxu0 0
      %3645 = vmatpush2.bf16.msra.mxu0 0
      %3646 = vmatprep.subr.bf16.mxu0 0
      %3647 = vmatpush2.bf16.msra.mxu0 0
      %3648 = vmatprep.subr.bf16.mxu0 0
      %3649 = vmatpush2.bf16.msra.mxu0 0
      %3650 = vmatprep.subr.bf16.mxu0 0
      %3651 = vmatpush2.bf16.msra.mxu0 0
      %3652 = vmatprep.subr.bf16.mxu0 %v3384
      %3653 = vmatpush2.bf16.msra.mxu0 %v3383
      %3654 = vmatprep.subr.bf16.mxu0 %v3380
      %3655 = vmatpush2.bf16.msra.mxu0 %v3379
      %3656 = vmatprep.subr.bf16.mxu0 %v3376
      %3657 = vmatpush2.bf16.msra.mxu0 %v3375
      %3658 = vmatprep.mubr.bf16.mxu0 %v3495
      %3659 = vmatmul.mubr.bf16.gmra.mxu0 %v2948
      %v3660 = vpop.f32.mrf.mxu0
      %v3661 = vadd.f32 %v3618, %v3660
      %v3662 = vpop.f32.mrf.mxu0
      %v3663 = vadd.f32 %v3620, %v3662
      %v3664 = vpop.f32.mrf.mxu0
      %v3665 = vadd.f32 %v3622, %v3664
      %v3666 = vpop.f32.mrf.mxu0
      %v3667 = vadd.f32 %v3624, %v3666
      %3668 = vdwg.mxu0
      %v3669 = vmax.f32 %v3575, 0.0
      %v3670 = vmax.f32 %v3577, 0.0
      %v3671 = vmax.f32 %v3661, 0.0
      %v3672 = vmax.f32 %v3663, 0.0
      %v3673 = vmax.f32 %v3579, 0.0
      %v3674 = vmax.f32 %v3581, 0.0
      %v3675 = vmax.f32 %v3665, 0.0
      %v3676 = vmax.f32 %v3667, 0.0
      %3677 = vst [vmem:[#allocation3] sm:$0xff] 0.0
      %3678 = vst [vmem:[#allocation3 + $0x30] sm:$0xff] 0.0
      %3679 = vst [vmem:[#allocation3 + $0x28] sm:$0xff] 0.0
      %3680 = vst [vmem:[#allocation3 + $0x58] sm:$0xff] 0.0
      %3681 = vst [vmem:[#allocation3 + $0x8] sm:$0xff] %v3669
      %3682 = vst [vmem:[#allocation3 + $0x10] sm:$0xff] %v3670
      %3683 = vst [vmem:[#allocation3 + $0x18] sm:$0xff] %v3671
      %3684 = vst [vmem:[#allocation3 + $0x20] sm:$0xff] %v3672
      %3685 = vst [vmem:[#allocation3 + $0x38] sm:$0xff] %v3673
      %3686 = vst [vmem:[#allocation3 + $0x40] sm:$0xff] %v3674
      %3687 = vst [vmem:[#allocation3 + $0x48] sm:$0xff] %v3675
      %3688 = vst [vmem:[#allocation3 + $0x50] sm:$0xff] %v3676
      %v3689 = vld [vmem:[#allocation3] sm:$0xff]
      %v3690 = vld [vmem:[#allocation3 + $0x8] sm:$0xff]
      %v3691 = vld [vmem:[#allocation3 + $0x10] sm:$0xff]
      %v3692 = vld [vmem:[#allocation3 + $0x18] sm:$0xff]
      %v3693 = vld [vmem:[#allocation3 + $0x20] sm:$0xff]
      %v3694 = vld [vmem:[#allocation3 + $0x30] sm:$0xff]
      %v3695 = vld [vmem:[#allocation3 + $0x38] sm:$0xff]
      %v3696 = vld [vmem:[#allocation3 + $0x40] sm:$0xff]
      %v3697 = vld [vmem:[#allocation3 + $0x48] sm:$0xff]
      %v3698 = vld [vmem:[#allocation3 + $0x50] sm:$0xff]
      %v3699 = vmul.f32 %v3689, %v316
      %v3700 = vmul.f32 %v3690, %v324
      %v3701 = vmul.f32 %v3691, %v325
      %v3702 = vmul.f32 %v3692, %v326
      %v3703 = vmul.f32 %v3693, %v322
      %v3704 = vmul.f32 %v3694, %v316
      %v3705 = vmul.f32 %v3695, %v324
      %v3706 = vmul.f32 %v3696, %v325
      %v3707 = vmul.f32 %v3697, %v326
      %v3708 = vmul.f32 %v3698, %v322
      %v3709 = vpack.c.bf16 %v3704, %v3699
      %v3710 = vpack.c.bf16 %v3705, %v3700
      %v3711 = vpack.c.bf16 %v3706, %v3701
      %v3712 = vpack.c.bf16 %v3707, %v3702
      %v3713 = vpack.c.bf16 %v3708, %v3703
      %v3719 = vunpack.c.l.b16 %v3709
      %v3720 = vunpack.c.l.b16 %v3710
      %v3721 = vunpack.c.l.b16 %v3711
      %v3722 = vunpack.c.l.b16 %v3712
      %v3723 = vunpack.c.l.b16 %v3713
      %v3724 = vunpack.c.h.b16 %v3709
      %v3725 = vunpack.c.h.b16 %v3710
      %v3726 = vunpack.c.h.b16 %v3711
      %v3727 = vunpack.c.h.b16 %v3712
      %v3728 = vunpack.c.h.b16 %v3713
      %v3729 = vpack.c.b16 %v3720, %v3719
      %v3730 = vpack.c.b16 %v3722, %v3721
      %v3731 = vpack.c.b16 %v3723, %v3723
      %v3732 = vpack.c.b16 %v3725, %v3724
      %v3733 = vpack.c.b16 %v3727, %v3726
      %v3734 = vpack.c.b16 %v3728, %v3728
      %3735 = vrot.lane.b32.xlu0 %v3729, 73
      %v3736 = vpop.permute.xlu0 %3735
      %3737 = vrot.lane.b32.xlu0 %v3730, 73
      %v3738 = vpop.permute.xlu0 %3737
      %3739 = vrot.lane.b32.xlu0 %v3731, 73
      %v3740 = vpop.permute.xlu0 %3739
      %3741 = vrot.lane.b32.xlu0 %v3732, 73
      %v3742 = vpop.permute.xlu0 %3741
      %3743 = vrot.lane.b32.xlu0 %v3733, 73
      %v3744 = vpop.permute.xlu0 %3743
      %3745 = vrot.lane.b32.xlu0 %v3734, 73
      %v3746 = vpop.permute.xlu0 %3745
      %v3747 = vrot.slane %v3736, 4
      %v3748 = vrot.slane %v3738, 4
      %v3749 = vrot.slane %v3740, 4
      %v3750 = vrot.slane %v3742, 4
      %v3751 = vrot.slane %v3744, 4
      %v3752 = vrot.slane %v3746, 4
      %v3753 = vsel %vm386, %v3747, %v3748
      %v3754 = vsel %vm388, %v3736, %v3753
      %v3755 = vsel %vm386, %v3748, %v3749
      %v3756 = vsel %vm388, %v3738, %v3755
      %v3757 = vsel %vm386, %v3750, %v3751
      %v3758 = vsel %vm388, %v3742, %v3757
      %v3759 = vsel %vm386, %v3751, %v3752
      %v3760 = vsel %vm388, %v3744, %v3759
      %3765 = vst [vmem:[#allocation4] sm:$0xff] %v3754
      %3766 = vst [vmem:[#allocation4 + $0x8] sm:$0xff] %v3756
      %3767 = vst [vmem:[#allocation4 + $0x10] sm:$0xff] %v3758
      %3768 = vst [vmem:[#allocation4 + $0x18] sm:$0xff] %v3760
      %v3769 = vld [vmem:[#allocation3] sm:$0xff]
      %v3770 = vld [vmem:[#allocation3 + $0x8] sm:$0xff]
      %v3771 = vld [vmem:[#allocation3 + $0x10] sm:$0xff]
      %v3772 = vld [vmem:[#allocation3 + $0x18] sm:$0xff]
      %v3773 = vld [vmem:[#allocation3 + $0x20] sm:$0xff]
      %v3774 = vld [vmem:[#allocation3 + $0x30] sm:$0xff]
      %v3775 = vld [vmem:[#allocation3 + $0x38] sm:$0xff]
      %v3776 = vld [vmem:[#allocation3 + $0x40] sm:$0xff]
      %v3777 = vld [vmem:[#allocation3 + $0x48] sm:$0xff]
      %v3778 = vld [vmem:[#allocation3 + $0x50] sm:$0xff]
      %v3779 = vmul.f32 %v3769, %v432
      %v3780 = vmul.f32 %v3770, %v440
      %v3781 = vmul.f32 %v3771, %v441
      %v3782 = vmul.f32 %v3772, %v442
      %v3783 = vmul.f32 %v3773, %v438
      %v3784 = vmul.f32 %v3774, %v432
      %v3785 = vmul.f32 %v3775, %v440
      %v3786 = vmul.f32 %v3776, %v441
      %v3787 = vmul.f32 %v3777, %v442
      %v3788 = vmul.f32 %v3778, %v438
      %v3789 = vpack.c.bf16 %v3784, %v3779
      %v3790 = vpack.c.bf16 %v3785, %v3780
      %v3791 = vpack.c.bf16 %v3786, %v3781
      %v3792 = vpack.c.bf16 %v3787, %v3782
      %v3793 = vpack.c.bf16 %v3788, %v3783
      %v3799 = vunpack.c.l.b16 %v3789
      %v3800 = vunpack.c.l.b16 %v3790
      %v3801 = vunpack.c.l.b16 %v3791
      %v3802 = vunpack.c.l.b16 %v3792
      %v3803 = vunpack.c.l.b16 %v3793
      %v3804 = vunpack.c.h.b16 %v3789
      %v3805 = vunpack.c.h.b16 %v3790
      %v3806 = vunpack.c.h.b16 %v3791
      %v3807 = vunpack.c.h.b16 %v3792
      %v3808 = vunpack.c.h.b16 %v3793
      %v3809 = vpack.c.b16 %v3800, %v3799
      %v3810 = vpack.c.b16 %v3802, %v3801
      %v3811 = vpack.c.b16 %v3803, %v3803
      %v3812 = vpack.c.b16 %v3805, %v3804
      %v3813 = vpack.c.b16 %v3807, %v3806
      %v3814 = vpack.c.b16 %v3808, %v3808
      %3815 = vrot.lane.b32.xlu0 %v3809, 72
      %v3816 = vpop.permute.xlu0 %3815
      %3817 = vrot.lane.b32.xlu0 %v3810, 72
      %v3818 = vpop.permute.xlu0 %3817
      %3819 = vrot.lane.b32.xlu0 %v3811, 72
      %v3820 = vpop.permute.xlu0 %3819
      %3821 = vrot.lane.b32.xlu0 %v3812, 72
      %v3822 = vpop.permute.xlu0 %3821
      %3823 = vrot.lane.b32.xlu0 %v3813, 72
      %v3824 = vpop.permute.xlu0 %3823
      %3825 = vrot.lane.b32.xlu0 %v3814, 72
      %v3826 = vpop.permute.xlu0 %3825
      %v3827 = vrot.slane %v3816, 4
      %v3828 = vrot.slane %v3818, 4
      %v3829 = vrot.slane %v3820, 4
      %v3830 = vrot.slane %v3822, 4
      %v3831 = vrot.slane %v3824, 4
      %v3832 = vrot.slane %v3826, 4
      %v3833 = vsel %vm386, %v3827, %v3828
      %v3834 = vsel %vm503, %v3816, %v3833
      %v3835 = vsel %vm386, %v3828, %v3829
      %v3836 = vsel %vm503, %v3818, %v3835
      %v3837 = vsel %vm386, %v3830, %v3831
      %v3838 = vsel %vm503, %v3822, %v3837
      %v3839 = vsel %vm386, %v3831, %v3832
      %v3840 = vsel %vm503, %v3824, %v3839
      %3845 = vst [vmem:[#allocation4 + $0x20] sm:$0xff] %v3834
      %3846 = vst [vmem:[#allocation4 + $0x28] sm:$0xff] %v3836
      %3847 = vst [vmem:[#allocation4 + $0x30] sm:$0xff] %v3838
      %3848 = vst [vmem:[#allocation4 + $0x38] sm:$0xff] %v3840
      %v3849 = vld [vmem:[#allocation3] sm:$0xff]
      %v3850 = vld [vmem:[#allocation3 + $0x8] sm:$0xff]
      %v3851 = vld [vmem:[#allocation3 + $0x10] sm:$0xff]
      %v3852 = vld [vmem:[#allocation3 + $0x18] sm:$0xff]
      %v3853 = vld [vmem:[#allocation3 + $0x20] sm:$0xff]
      %v3854 = vld [vmem:[#allocation3 + $0x30] sm:$0xff]
      %v3855 = vld [vmem:[#allocation3 + $0x38] sm:$0xff]
      %v3856 = vld [vmem:[#allocation3 + $0x40] sm:$0xff]
      %v3857 = vld [vmem:[#allocation3 + $0x48] sm:$0xff]
      %v3858 = vld [vmem:[#allocation3 + $0x50] sm:$0xff]
      %v3859 = vmul.f32 %v3849, %v547
      %v3860 = vmul.f32 %v3850, %v555
      %v3861 = vmul.f32 %v3851, %v556
      %v3862 = vmul.f32 %v3852, %v557
      %v3863 = vmul.f32 %v3853, %v553
      %v3864 = vmul.f32 %v3854, %v547
      %v3865 = vmul.f32 %v3855, %v555
      %v3866 = vmul.f32 %v3856, %v556
      %v3867 = vmul.f32 %v3857, %v557
      %v3868 = vmul.f32 %v3858, %v553
      %v3869 = vpack.c.bf16 %v3864, %v3859
      %v3870 = vpack.c.bf16 %v3865, %v3860
      %v3871 = vpack.c.bf16 %v3866, %v3861
      %v3872 = vpack.c.bf16 %v3867, %v3862
      %v3873 = vpack.c.bf16 %v3868, %v3863
      %v3879 = vunpack.c.l.b16 %v3869
      %v3880 = vunpack.c.l.b16 %v3870
      %v3881 = vunpack.c.l.b16 %v3871
      %v3882 = vunpack.c.l.b16 %v3872
      %v3883 = vunpack.c.l.b16 %v3873
      %v3884 = vunpack.c.h.b16 %v3869
      %v3885 = vunpack.c.h.b16 %v3870
      %v3886 = vunpack.c.h.b16 %v3871
      %v3887 = vunpack.c.h.b16 %v3872
      %v3888 = vunpack.c.h.b16 %v3873
      %v3889 = vpack.c.b16 %v3880, %v3879
      %v3890 = vpack.c.b16 %v3882, %v3881
      %v3891 = vpack.c.b16 %v3883, %v3883
      %v3892 = vpack.c.b16 %v3885, %v3884
      %v3893 = vpack.c.b16 %v3887, %v3886
      %v3894 = vpack.c.b16 %v3888, %v3888
      %3895 = vrot.lane.b32.xlu0 %v3889, 71
      %v3896 = vpop.permute.xlu0 %3895
      %3897 = vrot.lane.b32.xlu0 %v3890, 71
      %v3898 = vpop.permute.xlu0 %3897
      %3899 = vrot.lane.b32.xlu0 %v3891, 71
      %v3900 = vpop.permute.xlu0 %3899
      %3901 = vrot.lane.b32.xlu0 %v3892, 71
      %v3902 = vpop.permute.xlu0 %3901
      %3903 = vrot.lane.b32.xlu0 %v3893, 71
      %v3904 = vpop.permute.xlu0 %3903
      %3905 = vrot.lane.b32.xlu0 %v3894, 71
      %v3906 = vpop.permute.xlu0 %3905
      %v3907 = vrot.slane %v3896, 4
      %v3908 = vrot.slane %v3898, 4
      %v3909 = vrot.slane %v3900, 4
      %v3910 = vrot.slane %v3902, 4
      %v3911 = vrot.slane %v3904, 4
      %v3912 = vrot.slane %v3906, 4
      %v3913 = vsel %vm386, %v3907, %v3908
      %v3914 = vsel %vm618, %v3896, %v3913
      %v3915 = vsel %vm386, %v3908, %v3909
      %v3916 = vsel %vm618, %v3898, %v3915
      %v3917 = vsel %vm386, %v3910, %v3911
      %v3918 = vsel %vm618, %v3902, %v3917
      %v3919 = vsel %vm386, %v3911, %v3912
      %v3920 = vsel %vm618, %v3904, %v3919
      %3925 = vst [vmem:[#allocation4 + $0x40] sm:$0xff] %v3914
      %3926 = vst [vmem:[#allocation4 + $0x48] sm:$0xff] %v3916
      %3927 = vst [vmem:[#allocation4 + $0x50] sm:$0xff] %v3918
      %3928 = vst [vmem:[#allocation4 + $0x58] sm:$0xff] %v3920
      %v3929 = vld [vmem:[#allocation3] sm:$0xff]
      %v3930 = vld [vmem:[#allocation3 + $0x8] sm:$0xff]
      %v3931 = vld [vmem:[#allocation3 + $0x10] sm:$0xff]
      %v3932 = vld [vmem:[#allocation3 + $0x18] sm:$0xff]
      %v3933 = vld [vmem:[#allocation3 + $0x20] sm:$0xff]
      %v3934 = vld [vmem:[#allocation3 + $0x30] sm:$0xff]
      %v3935 = vld [vmem:[#allocation3 + $0x38] sm:$0xff]
      %v3936 = vld [vmem:[#allocation3 + $0x40] sm:$0xff]
      %v3937 = vld [vmem:[#allocation3 + $0x48] sm:$0xff]
      %v3938 = vld [vmem:[#allocation3 + $0x50] sm:$0xff]
      %v3939 = vmul.f32 %v3929, %v662
      %v3940 = vmul.f32 %v3930, %v670
      %v3941 = vmul.f32 %v3931, %v671
      %v3942 = vmul.f32 %v3932, %v672
      %v3943 = vmul.f32 %v3933, %v668
      %v3944 = vmul.f32 %v3934, %v662
      %v3945 = vmul.f32 %v3935, %v670
      %v3946 = vmul.f32 %v3936, %v671
      %v3947 = vmul.f32 %v3937, %v672
      %v3948 = vmul.f32 %v3938, %v668
      %v3949 = vpack.c.bf16 %v3944, %v3939
      %v3950 = vpack.c.bf16 %v3945, %v3940
      %v3951 = vpack.c.bf16 %v3946, %v3941
      %v3952 = vpack.c.bf16 %v3947, %v3942
      %v3953 = vpack.c.bf16 %v3948, %v3943
      %v3959 = vunpack.c.l.b16 %v3949
      %v3960 = vunpack.c.l.b16 %v3950
      %v3961 = vunpack.c.l.b16 %v3951
      %v3962 = vunpack.c.l.b16 %v3952
      %v3963 = vunpack.c.l.b16 %v3953
      %v3964 = vunpack.c.h.b16 %v3949
      %v3965 = vunpack.c.h.b16 %v3950
      %v3966 = vunpack.c.h.b16 %v3951
      %v3967 = vunpack.c.h.b16 %v3952
      %v3968 = vunpack.c.h.b16 %v3953
      %v3969 = vpack.c.b16 %v3960, %v3959
      %v3970 = vpack.c.b16 %v3962, %v3961
      %v3971 = vpack.c.b16 %v3963, %v3963
      %v3972 = vpack.c.b16 %v3965, %v3964
      %v3973 = vpack.c.b16 %v3967, %v3966
      %v3974 = vpack.c.b16 %v3968, %v3968
      %3975 = vrot.lane.b32.xlu0 %v3969, 65
      %v3976 = vpop.permute.xlu0 %3975
      %3977 = vrot.lane.b32.xlu0 %v3970, 65
      %v3978 = vpop.permute.xlu0 %3977
      %3979 = vrot.lane.b32.xlu0 %v3971, 65
      %v3980 = vpop.permute.xlu0 %3979
      %3981 = vrot.lane.b32.xlu0 %v3972, 65
      %v3982 = vpop.permute.xlu0 %3981
      %3983 = vrot.lane.b32.xlu0 %v3973, 65
      %v3984 = vpop.permute.xlu0 %3983
      %3985 = vrot.lane.b32.xlu0 %v3974, 65
      %v3986 = vpop.permute.xlu0 %3985
      %v3987 = vrot.slane %v3976, 4
      %v3988 = vrot.slane %v3978, 4
      %v3989 = vrot.slane %v3980, 4
      %v3990 = vrot.slane %v3982, 4
      %v3991 = vrot.slane %v3984, 4
      %v3992 = vrot.slane %v3986, 4
      %v3993 = vsel %vm386, %v3987, %v3988
      %v3994 = vsel %vm733, %v3976, %v3993
      %v3995 = vsel %vm386, %v3988, %v3989
      %v3996 = vsel %vm733, %v3978, %v3995
      %v3997 = vsel %vm386, %v3990, %v3991
      %v3998 = vsel %vm733, %v3982, %v3997
      %v3999 = vsel %vm386, %v3991, %v3992
      %v4000 = vsel %vm733, %v3984, %v3999
      %4005 = vst [vmem:[#allocation4 + $0x60] sm:$0xff] %v3994
      %4006 = vst [vmem:[#allocation4 + $0x68] sm:$0xff] %v3996
      %4007 = vst [vmem:[#allocation4 + $0x70] sm:$0xff] %v3998
      %4008 = vst [vmem:[#allocation4 + $0x78] sm:$0xff] %v4000
      %v4009 = vld [vmem:[#allocation3] sm:$0xff]
      %v4010 = vld [vmem:[#allocation3 + $0x8] sm:$0xff]
      %v4011 = vld [vmem:[#allocation3 + $0x10] sm:$0xff]
      %v4012 = vld [vmem:[#allocation3 + $0x18] sm:$0xff]
      %v4013 = vld [vmem:[#allocation3 + $0x20] sm:$0xff]
      %v4014 = vld [vmem:[#allocation3 + $0x30] sm:$0xff]
      %v4015 = vld [vmem:[#allocation3 + $0x38] sm:$0xff]
      %v4016 = vld [vmem:[#allocation3 + $0x40] sm:$0xff]
      %v4017 = vld [vmem:[#allocation3 + $0x48] sm:$0xff]
      %v4018 = vld [vmem:[#allocation3 + $0x50] sm:$0xff]
      %v4019 = vpack.c.bf16 %v4014, %v4009
      %v4020 = vpack.c.bf16 %v4015, %v4010
      %v4021 = vpack.c.bf16 %v4016, %v4011
      %v4022 = vpack.c.bf16 %v4017, %v4012
      %v4023 = vpack.c.bf16 %v4018, %v4013
      %v4029 = vunpack.c.l.b16 %v4019
      %v4030 = vunpack.c.l.b16 %v4020
      %v4031 = vunpack.c.l.b16 %v4021
      %v4032 = vunpack.c.l.b16 %v4022
      %v4033 = vunpack.c.l.b16 %v4023
      %v4034 = vunpack.c.h.b16 %v4019
      %v4035 = vunpack.c.h.b16 %v4020
      %v4036 = vunpack.c.h.b16 %v4021
      %v4037 = vunpack.c.h.b16 %v4022
      %v4038 = vunpack.c.h.b16 %v4023
      %v4039 = vpack.c.b16 %v4030, %v4029
      %v4040 = vpack.c.b16 %v4032, %v4031
      %v4041 = vpack.c.b16 %v4033, %v4033
      %v4042 = vpack.c.b16 %v4035, %v4034
      %v4043 = vpack.c.b16 %v4037, %v4036
      %v4044 = vpack.c.b16 %v4038, %v4038
      %4045 = vrot.lane.b32.xlu0 %v4039, 64
      %v4046 = vpop.permute.xlu0 %4045
      %4047 = vrot.lane.b32.xlu0 %v4040, 64
      %v4048 = vpop.permute.xlu0 %4047
      %4049 = vrot.lane.b32.xlu0 %v4041, 64
      %v4050 = vpop.permute.xlu0 %4049
      %4051 = vrot.lane.b32.xlu0 %v4042, 64
      %v4052 = vpop.permute.xlu0 %4051
      %4053 = vrot.lane.b32.xlu0 %v4043, 64
      %v4054 = vpop.permute.xlu0 %4053
      %4055 = vrot.lane.b32.xlu0 %v4044, 64
      %v4056 = vpop.permute.xlu0 %4055
      %v4057 = vrot.slane %v4046, 4
      %v4058 = vrot.slane %v4048, 4
      %v4059 = vrot.slane %v4050, 4
      %v4060 = vrot.slane %v4052, 4
      %v4061 = vrot.slane %v4054, 4
      %v4062 = vrot.slane %v4056, 4
      %v4063 = vsel %vm386, %v4057, %v4058
      %v4064 = vsel %vm804, %v4046, %v4063
      %v4065 = vsel %vm386, %v4058, %v4059
      %v4066 = vsel %vm804, %v4048, %v4065
      %v4067 = vsel %vm386, %v4060, %v4061
      %v4068 = vsel %vm804, %v4052, %v4067
      %v4069 = vsel %vm386, %v4061, %v4062
      %v4070 = vsel %vm804, %v4054, %v4069
      %4075 = vst [vmem:[#allocation4 + $0x80] sm:$0xff] %v4064
      %4076 = vst [vmem:[#allocation4 + $0x88] sm:$0xff] %v4066
      %4077 = vst [vmem:[#allocation4 + $0x90] sm:$0xff] %v4068
      %4078 = vst [vmem:[#allocation4 + $0x98] sm:$0xff] %v4070
      %v4079 = vld [vmem:[#allocation3] sm:$0xff]
      %v4080 = vld [vmem:[#allocation3 + $0x8] sm:$0xff]
      %v4081 = vld [vmem:[#allocation3 + $0x10] sm:$0xff]
      %v4082 = vld [vmem:[#allocation3 + $0x18] sm:$0xff]
      %v4083 = vld [vmem:[#allocation3 + $0x20] sm:$0xff]
      %v4084 = vld [vmem:[#allocation3 + $0x30] sm:$0xff]
      %v4085 = vld [vmem:[#allocation3 + $0x38] sm:$0xff]
      %v4086 = vld [vmem:[#allocation3 + $0x40] sm:$0xff]
      %v4087 = vld [vmem:[#allocation3 + $0x48] sm:$0xff]
      %v4088 = vld [vmem:[#allocation3 + $0x50] sm:$0xff]
      %v4089 = vmul.f32 %v4079, %v848
      %v4090 = vmul.f32 %v4080, %v856
      %v4091 = vmul.f32 %v4081, %v857
      %v4092 = vmul.f32 %v4082, %v858
      %v4093 = vmul.f32 %v4083, %v854
      %v4094 = vmul.f32 %v4084, %v848
      %v4095 = vmul.f32 %v4085, %v856
      %v4096 = vmul.f32 %v4086, %v857
      %v4097 = vmul.f32 %v4087, %v858
      %v4098 = vmul.f32 %v4088, %v854
      %v4099 = vpack.c.bf16 %v4094, %v4089
      %v4100 = vpack.c.bf16 %v4095, %v4090
      %v4101 = vpack.c.bf16 %v4096, %v4091
      %v4102 = vpack.c.bf16 %v4097, %v4092
      %v4103 = vpack.c.bf16 %v4098, %v4093
      %v4109 = vunpack.c.l.b16 %v4099
      %v4110 = vunpack.c.l.b16 %v4100
      %v4111 = vunpack.c.l.b16 %v4101
      %v4112 = vunpack.c.l.b16 %v4102
      %v4113 = vunpack.c.l.b16 %v4103
      %v4114 = vunpack.c.h.b16 %v4099
      %v4115 = vunpack.c.h.b16 %v4100
      %v4116 = vunpack.c.h.b16 %v4101
      %v4117 = vunpack.c.h.b16 %v4102
      %v4118 = vunpack.c.h.b16 %v4103
      %v4119 = vpack.c.b16 %v4110, %v4109
      %v4120 = vpack.c.b16 %v4112, %v4111
      %v4121 = vpack.c.b16 %v4113, %v4113
      %v4122 = vpack.c.b16 %v4115, %v4114
      %v4123 = vpack.c.b16 %v4117, %v4116
      %v4124 = vpack.c.b16 %v4118, %v4118
      %4125 = vrot.lane.b32.xlu0 %v4119, 63
      %v4126 = vpop.permute.xlu0 %4125
      %4127 = vrot.lane.b32.xlu0 %v4120, 63
      %v4128 = vpop.permute.xlu0 %4127
      %4129 = vrot.lane.b32.xlu0 %v4121, 63
      %v4130 = vpop.permute.xlu0 %4129
      %4131 = vrot.lane.b32.xlu0 %v4122, 63
      %v4132 = vpop.permute.xlu0 %4131
      %4133 = vrot.lane.b32.xlu0 %v4123, 63
      %v4134 = vpop.permute.xlu0 %4133
      %4135 = vrot.lane.b32.xlu0 %v4124, 63
      %v4136 = vpop.permute.xlu0 %4135
      %v4137 = vrot.slane %v4126, 4
      %v4138 = vrot.slane %v4128, 4
      %v4139 = vrot.slane %v4130, 4
      %v4140 = vrot.slane %v4132, 4
      %v4141 = vrot.slane %v4134, 4
      %v4142 = vrot.slane %v4136, 4
      %v4143 = vsel %vm386, %v4137, %v4138
      %v4144 = vsel %vm919, %v4126, %v4143
      %v4145 = vsel %vm386, %v4138, %v4139
      %v4146 = vsel %vm919, %v4128, %v4145
      %v4147 = vsel %vm386, %v4140, %v4141
      %v4148 = vsel %vm919, %v4132, %v4147
      %v4149 = vsel %vm386, %v4141, %v4142
      %v4150 = vsel %vm919, %v4134, %v4149
      %4155 = vst [vmem:[#allocation4 + $0xa0] sm:$0xff] %v4144
      %4156 = vst [vmem:[#allocation4 + $0xa8] sm:$0xff] %v4146
      %4157 = vst [vmem:[#allocation4 + $0xb0] sm:$0xff] %v4148
      %4158 = vst [vmem:[#allocation4 + $0xb8] sm:$0xff] %v4150
      %v4159 = vld [vmem:[#allocation3] sm:$0xff]
      %v4160 = vld [vmem:[#allocation3 + $0x8] sm:$0xff]
      %v4161 = vld [vmem:[#allocation3 + $0x10] sm:$0xff]
      %v4162 = vld [vmem:[#allocation3 + $0x18] sm:$0xff]
      %v4163 = vld [vmem:[#allocation3 + $0x20] sm:$0xff]
      %v4164 = vld [vmem:[#allocation3 + $0x30] sm:$0xff]
      %v4165 = vld [vmem:[#allocation3 + $0x38] sm:$0xff]
      %v4166 = vld [vmem:[#allocation3 + $0x40] sm:$0xff]
      %v4167 = vld [vmem:[#allocation3 + $0x48] sm:$0xff]
      %v4168 = vld [vmem:[#allocation3 + $0x50] sm:$0xff]
      %v4169 = vmul.f32 %v4159, %v963
      %v4170 = vmul.f32 %v4160, %v971
      %v4171 = vmul.f32 %v4161, %v972
      %v4172 = vmul.f32 %v4162, %v973
      %v4173 = vmul.f32 %v4163, %v969
      %v4174 = vmul.f32 %v4164, %v963
      %v4175 = vmul.f32 %v4165, %v971
      %v4176 = vmul.f32 %v4166, %v972
      %v4177 = vmul.f32 %v4167, %v973
      %v4178 = vmul.f32 %v4168, %v969
      %v4179 = vpack.c.bf16 %v4174, %v4169
      %v4180 = vpack.c.bf16 %v4175, %v4170
      %v4181 = vpack.c.bf16 %v4176, %v4171
      %v4182 = vpack.c.bf16 %v4177, %v4172
      %v4183 = vpack.c.bf16 %v4178, %v4173
      %v4189 = vunpack.c.l.b16 %v4179
      %v4190 = vunpack.c.l.b16 %v4180
      %v4191 = vunpack.c.l.b16 %v4181
      %v4192 = vunpack.c.l.b16 %v4182
      %v4193 = vunpack.c.l.b16 %v4183
      %v4194 = vunpack.c.h.b16 %v4179
      %v4195 = vunpack.c.h.b16 %v4180
      %v4196 = vunpack.c.h.b16 %v4181
      %v4197 = vunpack.c.h.b16 %v4182
      %v4198 = vunpack.c.h.b16 %v4183
      %v4199 = vpack.c.b16 %v4190, %v4189
      %v4200 = vpack.c.b16 %v4192, %v4191
      %v4201 = vpack.c.b16 %v4193, %v4193
      %v4202 = vpack.c.b16 %v4195, %v4194
      %v4203 = vpack.c.b16 %v4197, %v4196
      %v4204 = vpack.c.b16 %v4198, %v4198
      %4205 = vrot.lane.b32.xlu0 %v4199, 57
      %v4206 = vpop.permute.xlu0 %4205
      %4207 = vrot.lane.b32.xlu0 %v4200, 57
      %v4208 = vpop.permute.xlu0 %4207
      %4209 = vrot.lane.b32.xlu0 %v4201, 57
      %v4210 = vpop.permute.xlu0 %4209
      %4211 = vrot.lane.b32.xlu0 %v4202, 57
      %v4212 = vpop.permute.xlu0 %4211
      %4213 = vrot.lane.b32.xlu0 %v4203, 57
      %v4214 = vpop.permute.xlu0 %4213
      %4215 = vrot.lane.b32.xlu0 %v4204, 57
      %v4216 = vpop.permute.xlu0 %4215
      %v4217 = vrot.slane %v4206, 4
      %v4218 = vrot.slane %v4208, 4
      %v4219 = vrot.slane %v4210, 4
      %v4220 = vrot.slane %v4212, 4
      %v4221 = vrot.slane %v4214, 4
      %v4222 = vrot.slane %v4216, 4
      %v4223 = vsel %vm386, %v4217, %v4218
      %v4224 = vsel %vm1034, %v4206, %v4223
      %v4225 = vsel %vm386, %v4218, %v4219
      %v4226 = vsel %vm1034, %v4208, %v4225
      %v4227 = vsel %vm386, %v4220, %v4221
      %v4228 = vsel %vm1034, %v4212, %v4227
      %v4229 = vsel %vm386, %v4221, %v4222
      %v4230 = vsel %vm1034, %v4214, %v4229
      %4235 = vst [vmem:[#allocation4 + $0xc0] sm:$0xff] %v4224
      %4236 = vst [vmem:[#allocation4 + $0xc8] sm:$0xff] %v4226
      %4237 = vst [vmem:[#allocation4 + $0xd0] sm:$0xff] %v4228
      %4238 = vst [vmem:[#allocation4 + $0xd8] sm:$0xff] %v4230
      %v4239 = vld [vmem:[#allocation3] sm:$0xff]
      %v4240 = vld [vmem:[#allocation3 + $0x8] sm:$0xff]
      %v4241 = vld [vmem:[#allocation3 + $0x10] sm:$0xff]
      %v4242 = vld [vmem:[#allocation3 + $0x18] sm:$0xff]
      %v4243 = vld [vmem:[#allocation3 + $0x20] sm:$0xff]
      %v4244 = vld [vmem:[#allocation3 + $0x30] sm:$0xff]
      %v4245 = vld [vmem:[#allocation3 + $0x38] sm:$0xff]
      %v4246 = vld [vmem:[#allocation3 + $0x40] sm:$0xff]
      %v4247 = vld [vmem:[#allocation3 + $0x48] sm:$0xff]
      %v4248 = vld [vmem:[#allocation3 + $0x50] sm:$0xff]
      %v4249 = vmul.f32 %v4239, %v1078
      %v4250 = vmul.f32 %v4240, %v1086
      %v4251 = vmul.f32 %v4241, %v1087
      %v4252 = vmul.f32 %v4242, %v1088
      %v4253 = vmul.f32 %v4243, %v1084
      %v4254 = vmul.f32 %v4244, %v1078
      %v4255 = vmul.f32 %v4245, %v1086
      %v4256 = vmul.f32 %v4246, %v1087
      %v4257 = vmul.f32 %v4247, %v1088
      %v4258 = vmul.f32 %v4248, %v1084
      %v4259 = vpack.c.bf16 %v4254, %v4249
      %v4260 = vpack.c.bf16 %v4255, %v4250
      %v4261 = vpack.c.bf16 %v4256, %v4251
      %v4262 = vpack.c.bf16 %v4257, %v4252
      %v4263 = vpack.c.bf16 %v4258, %v4253
      %v4269 = vunpack.c.l.b16 %v4259
      %v4270 = vunpack.c.l.b16 %v4260
      %v4271 = vunpack.c.l.b16 %v4261
      %v4272 = vunpack.c.l.b16 %v4262
      %v4273 = vunpack.c.l.b16 %v4263
      %v4274 = vunpack.c.h.b16 %v4259
      %v4275 = vunpack.c.h.b16 %v4260
      %v4276 = vunpack.c.h.b16 %v4261
      %v4277 = vunpack.c.h.b16 %v4262
      %v4278 = vunpack.c.h.b16 %v4263
      %v4279 = vpack.c.b16 %v4270, %v4269
      %v4280 = vpack.c.b16 %v4272, %v4271
      %v4281 = vpack.c.b16 %v4273, %v4273
      %v4282 = vpack.c.b16 %v4275, %v4274
      %v4283 = vpack.c.b16 %v4277, %v4276
      %v4284 = vpack.c.b16 %v4278, %v4278
      %4285 = vrot.lane.b32.xlu0 %v4279, 56
      %v4286 = vpop.permute.xlu0 %4285
      %4287 = vrot.lane.b32.xlu0 %v4280, 56
      %v4288 = vpop.permute.xlu0 %4287
      %4289 = vrot.lane.b32.xlu0 %v4281, 56
      %v4290 = vpop.permute.xlu0 %4289
      %4291 = vrot.lane.b32.xlu0 %v4282, 56
      %v4292 = vpop.permute.xlu0 %4291
      %4293 = vrot.lane.b32.xlu0 %v4283, 56
      %v4294 = vpop.permute.xlu0 %4293
      %4295 = vrot.lane.b32.xlu0 %v4284, 56
      %v4296 = vpop.permute.xlu0 %4295
      %v4297 = vrot.slane %v4286, 4
      %v4298 = vrot.slane %v4288, 4
      %v4299 = vrot.slane %v4290, 4
      %v4300 = vrot.slane %v4292, 4
      %v4301 = vrot.slane %v4294, 4
      %v4302 = vrot.slane %v4296, 4
      %v4303 = vsel %vm386, %v4297, %v4298
      %v4304 = vsel %vm1149, %v4286, %v4303
      %v4305 = vsel %vm386, %v4298, %v4299
      %v4306 = vsel %vm1149, %v4288, %v4305
      %v4307 = vsel %vm386, %v4300, %v4301
      %v4308 = vsel %vm1149, %v4292, %v4307
      %v4309 = vsel %vm386, %v4301, %v4302
      %v4310 = vsel %vm1149, %v4294, %v4309
      %4315 = vst [vmem:[#allocation4 + $0xe0] sm:$0xff] %v4304
      %4316 = vst [vmem:[#allocation4 + $0xe8] sm:$0xff] %v4306
      %4317 = vst [vmem:[#allocation4 + $0xf0] sm:$0xff] %v4308
      %4318 = vst [vmem:[#allocation4 + $0xf8] sm:$0xff] %v4310
      %v4319 = vld [vmem:[#allocation3] sm:$0xff]
      %v4320 = vld [vmem:[#allocation3 + $0x8] sm:$0xff]
      %v4321 = vld [vmem:[#allocation3 + $0x10] sm:$0xff]
      %v4322 = vld [vmem:[#allocation3 + $0x18] sm:$0xff]
      %v4323 = vld [vmem:[#allocation3 + $0x20] sm:$0xff]
      %v4324 = vld [vmem:[#allocation3 + $0x30] sm:$0xff]
      %v4325 = vld [vmem:[#allocation3 + $0x38] sm:$0xff]
      %v4326 = vld [vmem:[#allocation3 + $0x40] sm:$0xff]
      %v4327 = vld [vmem:[#allocation3 + $0x48] sm:$0xff]
      %v4328 = vld [vmem:[#allocation3 + $0x50] sm:$0xff]
      %v4329 = vmul.f32 %v4319, %v1193
      %v4330 = vmul.f32 %v4320, %v1201
      %v4331 = vmul.f32 %v4321, %v1202
      %v4332 = vmul.f32 %v4322, %v1203
      %v4333 = vmul.f32 %v4323, %v1199
      %v4334 = vmul.f32 %v4324, %v1193
      %v4335 = vmul.f32 %v4325, %v1201
      %v4336 = vmul.f32 %v4326, %v1202
      %v4337 = vmul.f32 %v4327, %v1203
      %v4338 = vmul.f32 %v4328, %v1199
      %v4339 = vpack.c.bf16 %v4334, %v4329
      %v4340 = vpack.c.bf16 %v4335, %v4330
      %v4341 = vpack.c.bf16 %v4336, %v4331
      %v4342 = vpack.c.bf16 %v4337, %v4332
      %v4343 = vpack.c.bf16 %v4338, %v4333
      %v4349 = vunpack.c.l.b16 %v4339
      %v4350 = vunpack.c.l.b16 %v4340
      %v4351 = vunpack.c.l.b16 %v4341
      %v4352 = vunpack.c.l.b16 %v4342
      %v4353 = vunpack.c.l.b16 %v4343
      %v4354 = vunpack.c.h.b16 %v4339
      %v4355 = vunpack.c.h.b16 %v4340
      %v4356 = vunpack.c.h.b16 %v4341
      %v4357 = vunpack.c.h.b16 %v4342
      %v4358 = vunpack.c.h.b16 %v4343
      %v4359 = vpack.c.b16 %v4350, %v4349
      %v4360 = vpack.c.b16 %v4352, %v4351
      %v4361 = vpack.c.b16 %v4353, %v4353
      %v4362 = vpack.c.b16 %v4355, %v4354
      %v4363 = vpack.c.b16 %v4357, %v4356
      %v4364 = vpack.c.b16 %v4358, %v4358
      %4365 = vrot.lane.b32.xlu0 %v4359, 55
      %v4366 = vpop.permute.xlu0 %4365
      %4367 = vrot.lane.b32.xlu0 %v4360, 55
      %v4368 = vpop.permute.xlu0 %4367
      %4369 = vrot.lane.b32.xlu0 %v4361, 55
      %v4370 = vpop.permute.xlu0 %4369
      %4371 = vrot.lane.b32.xlu0 %v4362, 55
      %v4372 = vpop.permute.xlu0 %4371
      %4373 = vrot.lane.b32.xlu0 %v4363, 55
      %v4374 = vpop.permute.xlu0 %4373
      %4375 = vrot.lane.b32.xlu0 %v4364, 55
      %v4376 = vpop.permute.xlu0 %4375
      %v4377 = vrot.slane %v4366, 4
      %v4378 = vrot.slane %v4368, 4
      %v4379 = vrot.slane %v4370, 4
      %v4380 = vrot.slane %v4372, 4
      %v4381 = vrot.slane %v4374, 4
      %v4382 = vrot.slane %v4376, 4
      %v4383 = vsel %vm386, %v4377, %v4378
      %v4384 = vsel %vm1264, %v4366, %v4383
      %v4385 = vsel %vm386, %v4378, %v4379
      %v4386 = vsel %vm1264, %v4368, %v4385
      %v4387 = vsel %vm386, %v4380, %v4381
      %v4388 = vsel %vm1264, %v4372, %v4387
      %v4389 = vsel %vm386, %v4381, %v4382
      %v4390 = vsel %vm1264, %v4374, %v4389
      %4395 = vst [vmem:[#allocation4 + $0x100] sm:$0xff] %v4384
      %4396 = vst [vmem:[#allocation4 + $0x108] sm:$0xff] %v4386
      %4397 = vst [vmem:[#allocation4 + $0x110] sm:$0xff] %v4388
      %4398 = vst [vmem:[#allocation4 + $0x118] sm:$0xff] %v4390
      %v4399 = vld [vmem:[#allocation3] sm:$0xff]
      %v4400 = vld [vmem:[#allocation3 + $0x8] sm:$0xff]
      %v4401 = vld [vmem:[#allocation3 + $0x10] sm:$0xff]
      %v4402 = vld [vmem:[#allocation3 + $0x18] sm:$0xff]
      %v4403 = vld [vmem:[#allocation3 + $0x20] sm:$0xff]
      %v4404 = vld [vmem:[#allocation3 + $0x30] sm:$0xff]
      %v4405 = vld [vmem:[#allocation3 + $0x38] sm:$0xff]
      %v4406 = vld [vmem:[#allocation3 + $0x40] sm:$0xff]
      %v4407 = vld [vmem:[#allocation3 + $0x48] sm:$0xff]
      %v4408 = vld [vmem:[#allocation3 + $0x50] sm:$0xff]
      %v4409 = vmul.f32 %v4399, %v1291
      %v4410 = vmul.f32 %v4400, %v1299
      %v4411 = vmul.f32 %v4401, %v1300
      %v4412 = vmul.f32 %v4402, %v1301
      %v4413 = vmul.f32 %v4403, %v1297
      %v4414 = vmul.f32 %v4404, %v1291
      %v4415 = vmul.f32 %v4405, %v1299
      %v4416 = vmul.f32 %v4406, %v1300
      %v4417 = vmul.f32 %v4407, %v1301
      %v4418 = vmul.f32 %v4408, %v1297
      %v4419 = vpack.c.bf16 %v4414, %v4409
      %v4420 = vpack.c.bf16 %v4415, %v4410
      %v4421 = vpack.c.bf16 %v4416, %v4411
      %v4422 = vpack.c.bf16 %v4417, %v4412
      %v4423 = vpack.c.bf16 %v4418, %v4413
      %v4429 = vunpack.c.l.b16 %v4419
      %v4430 = vunpack.c.l.b16 %v4420
      %v4431 = vunpack.c.l.b16 %v4421
      %v4432 = vunpack.c.l.b16 %v4422
      %v4433 = vunpack.c.l.b16 %v4423
      %v4434 = vunpack.c.h.b16 %v4419
      %v4435 = vunpack.c.h.b16 %v4420
      %v4436 = vunpack.c.h.b16 %v4421
      %v4437 = vunpack.c.h.b16 %v4422
      %v4438 = vunpack.c.h.b16 %v4423
      %v4439 = vpack.c.b16 %v4430, %v4429
      %v4440 = vpack.c.b16 %v4432, %v4431
      %v4441 = vpack.c.b16 %v4433, %v4433
      %v4442 = vpack.c.b16 %v4435, %v4434
      %v4443 = vpack.c.b16 %v4437, %v4436
      %v4444 = vpack.c.b16 %v4438, %v4438
      %4445 = vrot.lane.b32.xlu0 %v4439, 9
      %v4446 = vpop.permute.xlu0 %4445
      %4447 = vrot.lane.b32.xlu0 %v4440, 9
      %v4448 = vpop.permute.xlu0 %4447
      %4449 = vrot.lane.b32.xlu0 %v4441, 9
      %v4450 = vpop.permute.xlu0 %4449
      %4451 = vrot.lane.b32.xlu0 %v4442, 9
      %v4452 = vpop.permute.xlu0 %4451
      %4453 = vrot.lane.b32.xlu0 %v4443, 9
      %v4454 = vpop.permute.xlu0 %4453
      %4455 = vrot.lane.b32.xlu0 %v4444, 9
      %v4456 = vpop.permute.xlu0 %4455
      %v4457 = vrot.slane %v4446, 4
      %v4458 = vrot.slane %v4448, 4
      %v4459 = vrot.slane %v4450, 4
      %v4460 = vrot.slane %v4452, 4
      %v4461 = vrot.slane %v4454, 4
      %v4462 = vrot.slane %v4456, 4
      %v4463 = vsel %vm386, %v4457, %v4458
      %v4464 = vsel %vm1362, %v4446, %v4463
      %v4465 = vsel %vm386, %v4458, %v4459
      %v4466 = vsel %vm1362, %v4448, %v4465
      %v4467 = vsel %vm386, %v4460, %v4461
      %v4468 = vsel %vm1362, %v4452, %v4467
      %v4469 = vsel %vm386, %v4461, %v4462
      %v4470 = vsel %vm1362, %v4454, %v4469
      %4475 = vst [vmem:[#allocation4 + $0x120] sm:$0xff] %v4464
      %4476 = vst [vmem:[#allocation4 + $0x128] sm:$0xff] %v4466
      %4477 = vst [vmem:[#allocation4 + $0x130] sm:$0xff] %v4468
      %4478 = vst [vmem:[#allocation4 + $0x138] sm:$0xff] %v4470
      %v4479 = vld [vmem:[#allocation3] sm:$0xff]
      %v4480 = vld [vmem:[#allocation3 + $0x8] sm:$0xff]
      %v4481 = vld [vmem:[#allocation3 + $0x10] sm:$0xff]
      %v4482 = vld [vmem:[#allocation3 + $0x18] sm:$0xff]
      %v4483 = vld [vmem:[#allocation3 + $0x20] sm:$0xff]
      %v4484 = vld [vmem:[#allocation3 + $0x30] sm:$0xff]
      %v4485 = vld [vmem:[#allocation3 + $0x38] sm:$0xff]
      %v4486 = vld [vmem:[#allocation3 + $0x40] sm:$0xff]
      %v4487 = vld [vmem:[#allocation3 + $0x48] sm:$0xff]
      %v4488 = vld [vmem:[#allocation3 + $0x50] sm:$0xff]
      %v4489 = vmul.f32 %v4479, %v1389
      %v4490 = vmul.f32 %v4480, %v1397
      %v4491 = vmul.f32 %v4481, %v1398
      %v4492 = vmul.f32 %v4482, %v1399
      %v4493 = vmul.f32 %v4483, %v1395
      %v4494 = vmul.f32 %v4484, %v1389
      %v4495 = vmul.f32 %v4485, %v1397
      %v4496 = vmul.f32 %v4486, %v1398
      %v4497 = vmul.f32 %v4487, %v1399
      %v4498 = vmul.f32 %v4488, %v1395
      %v4499 = vpack.c.bf16 %v4494, %v4489
      %v4500 = vpack.c.bf16 %v4495, %v4490
      %v4501 = vpack.c.bf16 %v4496, %v4491
      %v4502 = vpack.c.bf16 %v4497, %v4492
      %v4503 = vpack.c.bf16 %v4498, %v4493
      %v4509 = vunpack.c.l.b16 %v4499
      %v4510 = vunpack.c.l.b16 %v4500
      %v4511 = vunpack.c.l.b16 %v4501
      %v4512 = vunpack.c.l.b16 %v4502
      %v4513 = vunpack.c.l.b16 %v4503
      %v4514 = vunpack.c.h.b16 %v4499
      %v4515 = vunpack.c.h.b16 %v4500
      %v4516 = vunpack.c.h.b16 %v4501
      %v4517 = vunpack.c.h.b16 %v4502
      %v4518 = vunpack.c.h.b16 %v4503
      %v4519 = vpack.c.b16 %v4510, %v4509
      %v4520 = vpack.c.b16 %v4512, %v4511
      %v4521 = vpack.c.b16 %v4513, %v4513
      %v4522 = vpack.c.b16 %v4515, %v4514
      %v4523 = vpack.c.b16 %v4517, %v4516
      %v4524 = vpack.c.b16 %v4518, %v4518
      %4525 = vrot.lane.b32.xlu0 %v4519, 8
      %v4526 = vpop.permute.xlu0 %4525
      %4527 = vrot.lane.b32.xlu0 %v4520, 8
      %v4528 = vpop.permute.xlu0 %4527
      %4529 = vrot.lane.b32.xlu0 %v4521, 8
      %v4530 = vpop.permute.xlu0 %4529
      %4531 = vrot.lane.b32.xlu0 %v4522, 8
      %v4532 = vpop.permute.xlu0 %4531
      %4533 = vrot.lane.b32.xlu0 %v4523, 8
      %v4534 = vpop.permute.xlu0 %4533
      %4535 = vrot.lane.b32.xlu0 %v4524, 8
      %v4536 = vpop.permute.xlu0 %4535
      %v4537 = vrot.slane %v4526, 4
      %v4538 = vrot.slane %v4528, 4
      %v4539 = vrot.slane %v4530, 4
      %v4540 = vrot.slane %v4532, 4
      %v4541 = vrot.slane %v4534, 4
      %v4542 = vrot.slane %v4536, 4
      %v4543 = vsel %vm386, %v4537, %v4538
      %v4544 = vsel %vm1460, %v4526, %v4543
      %v4545 = vsel %vm386, %v4538, %v4539
      %v4546 = vsel %vm1460, %v4528, %v4545
      %v4547 = vsel %vm386, %v4540, %v4541
      %v4548 = vsel %vm1460, %v4532, %v4547
      %v4549 = vsel %vm386, %v4541, %v4542
      %v4550 = vsel %vm1460, %v4534, %v4549
      %4555 = vst [vmem:[#allocation4 + $0x140] sm:$0xff] %v4544
      %4556 = vst [vmem:[#allocation4 + $0x148] sm:$0xff] %v4546
      %4557 = vst [vmem:[#allocation4 + $0x150] sm:$0xff] %v4548
      %4558 = vst [vmem:[#allocation4 + $0x158] sm:$0xff] %v4550
      %v4559 = vld [vmem:[#allocation3] sm:$0xff]
      %v4560 = vld [vmem:[#allocation3 + $0x8] sm:$0xff]
      %v4561 = vld [vmem:[#allocation3 + $0x10] sm:$0xff]
      %v4562 = vld [vmem:[#allocation3 + $0x18] sm:$0xff]
      %v4563 = vld [vmem:[#allocation3 + $0x20] sm:$0xff]
      %v4564 = vld [vmem:[#allocation3 + $0x30] sm:$0xff]
      %v4565 = vld [vmem:[#allocation3 + $0x38] sm:$0xff]
      %v4566 = vld [vmem:[#allocation3 + $0x40] sm:$0xff]
      %v4567 = vld [vmem:[#allocation3 + $0x48] sm:$0xff]
      %v4568 = vld [vmem:[#allocation3 + $0x50] sm:$0xff]
      %v4569 = vmul.f32 %v4559, %v1487
      %v4570 = vmul.f32 %v4560, %v1495
      %v4571 = vmul.f32 %v4561, %v1496
      %v4572 = vmul.f32 %v4562, %v1497
      %v4573 = vmul.f32 %v4563, %v1493
      %v4574 = vmul.f32 %v4564, %v1487
      %v4575 = vmul.f32 %v4565, %v1495
      %v4576 = vmul.f32 %v4566, %v1496
      %v4577 = vmul.f32 %v4567, %v1497
      %v4578 = vmul.f32 %v4568, %v1493
      %v4579 = vpack.c.bf16 %v4574, %v4569
      %v4580 = vpack.c.bf16 %v4575, %v4570
      %v4581 = vpack.c.bf16 %v4576, %v4571
      %v4582 = vpack.c.bf16 %v4577, %v4572
      %v4583 = vpack.c.bf16 %v4578, %v4573
      %v4589 = vunpack.c.l.b16 %v4579
      %v4590 = vunpack.c.l.b16 %v4580
      %v4591 = vunpack.c.l.b16 %v4581
      %v4592 = vunpack.c.l.b16 %v4582
      %v4593 = vunpack.c.l.b16 %v4583
      %v4594 = vunpack.c.h.b16 %v4579
      %v4595 = vunpack.c.h.b16 %v4580
      %v4596 = vunpack.c.h.b16 %v4581
      %v4597 = vunpack.c.h.b16 %v4582
      %v4598 = vunpack.c.h.b16 %v4583
      %v4599 = vpack.c.b16 %v4590, %v4589
      %v4600 = vpack.c.b16 %v4592, %v4591
      %v4601 = vpack.c.b16 %v4593, %v4593
      %v4602 = vpack.c.b16 %v4595, %v4594
      %v4603 = vpack.c.b16 %v4597, %v4596
      %v4604 = vpack.c.b16 %v4598, %v4598
      %4605 = vrot.lane.b32.xlu0 %v4599, 7
      %v4606 = vpop.permute.xlu0 %4605
      %4607 = vrot.lane.b32.xlu0 %v4600, 7
      %v4608 = vpop.permute.xlu0 %4607
      %4609 = vrot.lane.b32.xlu0 %v4601, 7
      %v4610 = vpop.permute.xlu0 %4609
      %4611 = vrot.lane.b32.xlu0 %v4602, 7
      %v4612 = vpop.permute.xlu0 %4611
      %4613 = vrot.lane.b32.xlu0 %v4603, 7
      %v4614 = vpop.permute.xlu0 %4613
      %4615 = vrot.lane.b32.xlu0 %v4604, 7
      %v4616 = vpop.permute.xlu0 %4615
      %v4617 = vrot.slane %v4606, 4
      %v4618 = vrot.slane %v4608, 4
      %v4619 = vrot.slane %v4610, 4
      %v4620 = vrot.slane %v4612, 4
      %v4621 = vrot.slane %v4614, 4
      %v4622 = vrot.slane %v4616, 4
      %v4623 = vsel %vm386, %v4617, %v4618
      %v4624 = vsel %vm1558, %v4606, %v4623
      %v4625 = vsel %vm386, %v4618, %v4619
      %v4626 = vsel %vm1558, %v4608, %v4625
      %v4627 = vsel %vm386, %v4620, %v4621
      %v4628 = vsel %vm1558, %v4612, %v4627
      %v4629 = vsel %vm386, %v4621, %v4622
      %v4630 = vsel %vm1558, %v4614, %v4629
      %4635 = vst [vmem:[#allocation4 + $0x160] sm:$0xff] %v4624
      %4636 = vst [vmem:[#allocation4 + $0x168] sm:$0xff] %v4626
      %4637 = vst [vmem:[#allocation4 + $0x170] sm:$0xff] %v4628
      %4638 = vst [vmem:[#allocation4 + $0x178] sm:$0xff] %v4630
      %v4639 = vld [vmem:[#allocation3] sm:$0xff]
      %v4640 = vld [vmem:[#allocation3 + $0x8] sm:$0xff]
      %v4641 = vld [vmem:[#allocation3 + $0x10] sm:$0xff]
      %v4642 = vld [vmem:[#allocation3 + $0x18] sm:$0xff]
      %v4643 = vld [vmem:[#allocation3 + $0x20] sm:$0xff]
      %v4644 = vld [vmem:[#allocation3 + $0x30] sm:$0xff]
      %v4645 = vld [vmem:[#allocation3 + $0x38] sm:$0xff]
      %v4646 = vld [vmem:[#allocation3 + $0x40] sm:$0xff]
      %v4647 = vld [vmem:[#allocation3 + $0x48] sm:$0xff]
      %v4648 = vld [vmem:[#allocation3 + $0x50] sm:$0xff]
      %v4649 = vmul.f32 %v4639, %v1585
      %v4650 = vmul.f32 %v4640, %v1593
      %v4651 = vmul.f32 %v4641, %v1594
      %v4652 = vmul.f32 %v4642, %v1595
      %v4653 = vmul.f32 %v4643, %v1591
      %v4654 = vmul.f32 %v4644, %v1585
      %v4655 = vmul.f32 %v4645, %v1593
      %v4656 = vmul.f32 %v4646, %v1594
      %v4657 = vmul.f32 %v4647, %v1595
      %v4658 = vmul.f32 %v4648, %v1591
      %v4659 = vpack.c.bf16 %v4654, %v4649
      %v4660 = vpack.c.bf16 %v4655, %v4650
      %v4661 = vpack.c.bf16 %v4656, %v4651
      %v4662 = vpack.c.bf16 %v4657, %v4652
      %v4663 = vpack.c.bf16 %v4658, %v4653
      %v4669 = vunpack.c.l.b16 %v4659
      %v4670 = vunpack.c.l.b16 %v4660
      %v4671 = vunpack.c.l.b16 %v4661
      %v4672 = vunpack.c.l.b16 %v4662
      %v4673 = vunpack.c.l.b16 %v4663
      %v4674 = vunpack.c.h.b16 %v4659
      %v4675 = vunpack.c.h.b16 %v4660
      %v4676 = vunpack.c.h.b16 %v4661
      %v4677 = vunpack.c.h.b16 %v4662
      %v4678 = vunpack.c.h.b16 %v4663
      %v4679 = vpack.c.b16 %v4670, %v4669
      %v4680 = vpack.c.b16 %v4672, %v4671
      %v4681 = vpack.c.b16 %v4673, %v4673
      %v4682 = vpack.c.b16 %v4675, %v4674
      %v4683 = vpack.c.b16 %v4677, %v4676
      %v4684 = vpack.c.b16 %v4678, %v4678
      %4685 = vrot.lane.b32.xlu0 %v4679, 1
      %v4686 = vpop.permute.xlu0 %4685
      %4687 = vrot.lane.b32.xlu0 %v4680, 1
      %v4688 = vpop.permute.xlu0 %4687
      %4689 = vrot.lane.b32.xlu0 %v4681, 1
      %v4690 = vpop.permute.xlu0 %4689
      %4691 = vrot.lane.b32.xlu0 %v4682, 1
      %v4692 = vpop.permute.xlu0 %4691
      %4693 = vrot.lane.b32.xlu0 %v4683, 1
      %v4694 = vpop.permute.xlu0 %4693
      %4695 = vrot.lane.b32.xlu0 %v4684, 1
      %v4696 = vpop.permute.xlu0 %4695
      %v4697 = vrot.slane %v4686, 4
      %v4698 = vrot.slane %v4688, 4
      %v4699 = vrot.slane %v4690, 4
      %v4700 = vrot.slane %v4692, 4
      %v4701 = vrot.slane %v4694, 4
      %v4702 = vrot.slane %v4696, 4
      %v4703 = vsel %vm386, %v4697, %v4698
      %v4704 = vsel %vm1656, %v4686, %v4703
      %v4705 = vsel %vm386, %v4698, %v4699
      %v4706 = vsel %vm1656, %v4688, %v4705
      %v4707 = vsel %vm386, %v4700, %v4701
      %v4708 = vsel %vm1656, %v4692, %v4707
      %v4709 = vsel %vm386, %v4701, %v4702
      %v4710 = vsel %vm1656, %v4694, %v4709
      %4715 = vst [vmem:[#allocation4 + $0x180] sm:$0xff] %v4704
      %4716 = vst [vmem:[#allocation4 + $0x188] sm:$0xff] %v4706
      %4717 = vst [vmem:[#allocation4 + $0x190] sm:$0xff] %v4708
      %4718 = vst [vmem:[#allocation4 + $0x198] sm:$0xff] %v4710
      %v4719 = vld [vmem:[#allocation3 + $0x8] sm:$0xff]
      %v4720 = vld [vmem:[#allocation3 + $0x10] sm:$0xff]
      %v4721 = vld [vmem:[#allocation3 + $0x18] sm:$0xff]
      %v4722 = vld [vmem:[#allocation3 + $0x20] sm:$0xff]
      %v4723 = vld [vmem:[#allocation3 + $0x38] sm:$0xff]
      %v4724 = vld [vmem:[#allocation3 + $0x40] sm:$0xff]
      %v4725 = vld [vmem:[#allocation3 + $0x48] sm:$0xff]
      %v4726 = vld [vmem:[#allocation3 + $0x50] sm:$0xff]
      %v4727 = vpack.c.bf16 %v4723, %v4719
      %v4728 = vpack.c.bf16 %v4724, %v4720
      %v4729 = vpack.c.bf16 %v4725, %v4721
      %v4730 = vpack.c.bf16 %v4726, %v4722
      %v4735 = vunpack.c.l.b16 %v4727
      %v4736 = vunpack.c.l.b16 %v4728
      %v4737 = vunpack.c.l.b16 %v4729
      %v4738 = vunpack.c.l.b16 %v4730
      %v4739 = vunpack.c.h.b16 %v4727
      %v4740 = vunpack.c.h.b16 %v4728
      %v4741 = vunpack.c.h.b16 %v4729
      %v4742 = vunpack.c.h.b16 %v4730
      %v4743 = vpack.c.b16 %v4736, %v4735
      %v4744 = vpack.c.b16 %v4738, %v4737
      %v4745 = vpack.c.b16 %v4740, %v4739
      %v4746 = vpack.c.b16 %v4742, %v4741
      %4751 = vst [vmem:[#allocation4 + $0x1a0] sm:$0xff] %v4743
      %4752 = vst [vmem:[#allocation4 + $0x1a8] sm:$0xff] %v4744
      %4753 = vst [vmem:[#allocation4 + $0x1b0] sm:$0xff] %v4745
      %4754 = vst [vmem:[#allocation4 + $0x1b8] sm:$0xff] %v4746
      %v4755 = vld [vmem:[#allocation3 + $0x8] sm:$0xff]
      %v4756 = vld [vmem:[#allocation3 + $0x10] sm:$0xff]
      %v4757 = vld [vmem:[#allocation3 + $0x18] sm:$0xff]
      %v4758 = vld [vmem:[#allocation3 + $0x20] sm:$0xff]
      %v4759 = vld [vmem:[#allocation3 + $0x28] sm:$0xff]
      %v4760 = vld [vmem:[#allocation3 + $0x38] sm:$0xff]
      %v4761 = vld [vmem:[#allocation3 + $0x40] sm:$0xff]
      %v4762 = vld [vmem:[#allocation3 + $0x48] sm:$0xff]
      %v4763 = vld [vmem:[#allocation3 + $0x50] sm:$0xff]
      %v4764 = vld [vmem:[#allocation3 + $0x58] sm:$0xff]
      %v4765 = vmul.f32 %v4755, %v1719
      %v4766 = vmul.f32 %v4756, %v1727
      %v4767 = vmul.f32 %v4757, %v1728
      %v4768 = vmul.f32 %v4758, %v1729
      %v4769 = vmul.f32 %v4759, %v1725
      %v4770 = vmul.f32 %v4760, %v1719
      %v4771 = vmul.f32 %v4761, %v1727
      %v4772 = vmul.f32 %v4762, %v1728
      %v4773 = vmul.f32 %v4763, %v1729
      %v4774 = vmul.f32 %v4764, %v1725
      %v4775 = vpack.c.bf16 %v4770, %v4765
      %v4776 = vpack.c.bf16 %v4771, %v4766
      %v4777 = vpack.c.bf16 %v4772, %v4767
      %v4778 = vpack.c.bf16 %v4773, %v4768
      %v4779 = vpack.c.bf16 %v4774, %v4769
      %v4785 = vunpack.c.l.b16 %v4775
      %v4786 = vunpack.c.l.b16 %v4776
      %v4787 = vunpack.c.l.b16 %v4777
      %v4788 = vunpack.c.l.b16 %v4778
      %v4789 = vunpack.c.l.b16 %v4779
      %v4790 = vunpack.c.h.b16 %v4775
      %v4791 = vunpack.c.h.b16 %v4776
      %v4792 = vunpack.c.h.b16 %v4777
      %v4793 = vunpack.c.h.b16 %v4778
      %v4794 = vunpack.c.h.b16 %v4779
      %v4795 = vpack.c.b16 %v4786, %v4785
      %v4796 = vpack.c.b16 %v4788, %v4787
      %v4797 = vpack.c.b16 %v4789, %v4789
      %v4798 = vpack.c.b16 %v4791, %v4790
      %v4799 = vpack.c.b16 %v4793, %v4792
      %v4800 = vpack.c.b16 %v4794, %v4794
      %4801 = vrot.lane.b32.xlu0 %v4795, 127
      %v4802 = vpop.permute.xlu0 %4801
      %4803 = vrot.lane.b32.xlu0 %v4796, 127
      %v4804 = vpop.permute.xlu0 %4803
      %4805 = vrot.lane.b32.xlu0 %v4797, 127
      %v4806 = vpop.permute.xlu0 %4805
      %4807 = vrot.lane.b32.xlu0 %v4798, 127
      %v4808 = vpop.permute.xlu0 %4807
      %4809 = vrot.lane.b32.xlu0 %v4799, 127
      %v4810 = vpop.permute.xlu0 %4809
      %4811 = vrot.lane.b32.xlu0 %v4800, 127
      %v4812 = vpop.permute.xlu0 %4811
      %v4813 = vrot.slane %v4802, 4
      %v4814 = vrot.slane %v4804, 4
      %v4815 = vrot.slane %v4806, 4
      %v4816 = vrot.slane %v4808, 4
      %v4817 = vrot.slane %v4810, 4
      %v4818 = vrot.slane %v4812, 4
      %v4819 = vsel %vm386, %v4813, %v4814
      %v4820 = vsel %vm1790, %v4802, %v4819
      %v4821 = vsel %vm386, %v4814, %v4815
      %v4822 = vsel %vm1790, %v4804, %v4821
      %v4823 = vsel %vm386, %v4816, %v4817
      %v4824 = vsel %vm1790, %v4808, %v4823
      %v4825 = vsel %vm386, %v4817, %v4818
      %v4826 = vsel %vm1790, %v4810, %v4825
      %4831 = vst [vmem:[#allocation4 + $0x1c0] sm:$0xff] %v4820
      %4832 = vst [vmem:[#allocation4 + $0x1c8] sm:$0xff] %v4822
      %4833 = vst [vmem:[#allocation4 + $0x1d0] sm:$0xff] %v4824
      %4834 = vst [vmem:[#allocation4 + $0x1d8] sm:$0xff] %v4826
      %v4835 = vld [vmem:[#allocation3 + $0x8] sm:$0xff]
      %v4836 = vld [vmem:[#allocation3 + $0x10] sm:$0xff]
      %v4837 = vld [vmem:[#allocation3 + $0x18] sm:$0xff]
      %v4838 = vld [vmem:[#allocation3 + $0x20] sm:$0xff]
      %v4839 = vld [vmem:[#allocation3 + $0x28] sm:$0xff]
      %v4840 = vld [vmem:[#allocation3 + $0x38] sm:$0xff]
      %v4841 = vld [vmem:[#allocation3 + $0x40] sm:$0xff]
      %v4842 = vld [vmem:[#allocation3 + $0x48] sm:$0xff]
      %v4843 = vld [vmem:[#allocation3 + $0x50] sm:$0xff]
      %v4844 = vld [vmem:[#allocation3 + $0x58] sm:$0xff]
      %v4845 = vmul.f32 %v4835, %v1817
      %v4846 = vmul.f32 %v4836, %v1825
      %v4847 = vmul.f32 %v4837, %v1826
      %v4848 = vmul.f32 %v4838, %v1827
      %v4849 = vmul.f32 %v4839, %v1823
      %v4850 = vmul.f32 %v4840, %v1817
      %v4851 = vmul.f32 %v4841, %v1825
      %v4852 = vmul.f32 %v4842, %v1826
      %v4853 = vmul.f32 %v4843, %v1827
      %v4854 = vmul.f32 %v4844, %v1823
      %v4855 = vpack.c.bf16 %v4850, %v4845
      %v4856 = vpack.c.bf16 %v4851, %v4846
      %v4857 = vpack.c.bf16 %v4852, %v4847
      %v4858 = vpack.c.bf16 %v4853, %v4848
      %v4859 = vpack.c.bf16 %v4854, %v4849
      %v4865 = vunpack.c.l.b16 %v4855
      %v4866 = vunpack.c.l.b16 %v4856
      %v4867 = vunpack.c.l.b16 %v4857
      %v4868 = vunpack.c.l.b16 %v4858
      %v4869 = vunpack.c.l.b16 %v4859
      %v4870 = vunpack.c.h.b16 %v4855
      %v4871 = vunpack.c.h.b16 %v4856
      %v4872 = vunpack.c.h.b16 %v4857
      %v4873 = vunpack.c.h.b16 %v4858
      %v4874 = vunpack.c.h.b16 %v4859
      %v4875 = vpack.c.b16 %v4866, %v4865
      %v4876 = vpack.c.b16 %v4868, %v4867
      %v4877 = vpack.c.b16 %v4869, %v4869
      %v4878 = vpack.c.b16 %v4871, %v4870
      %v4879 = vpack.c.b16 %v4873, %v4872
      %v4880 = vpack.c.b16 %v4874, %v4874
      %4881 = vrot.lane.b32.xlu0 %v4875, 121
      %v4882 = vpop.permute.xlu0 %4881
      %4883 = vrot.lane.b32.xlu0 %v4876, 121
      %v4884 = vpop.permute.xlu0 %4883
      %4885 = vrot.lane.b32.xlu0 %v4877, 121
      %v4886 = vpop.permute.xlu0 %4885
      %4887 = vrot.lane.b32.xlu0 %v4878, 121
      %v4888 = vpop.permute.xlu0 %4887
      %4889 = vrot.lane.b32.xlu0 %v4879, 121
      %v4890 = vpop.permute.xlu0 %4889
      %4891 = vrot.lane.b32.xlu0 %v4880, 121
      %v4892 = vpop.permute.xlu0 %4891
      %v4893 = vrot.slane %v4882, 4
      %v4894 = vrot.slane %v4884, 4
      %v4895 = vrot.slane %v4886, 4
      %v4896 = vrot.slane %v4888, 4
      %v4897 = vrot.slane %v4890, 4
      %v4898 = vrot.slane %v4892, 4
      %v4899 = vsel %vm386, %v4893, %v4894
      %v4900 = vsel %vm1888, %v4882, %v4899
      %v4901 = vsel %vm386, %v4894, %v4895
      %v4902 = vsel %vm1888, %v4884, %v4901
      %v4903 = vsel %vm386, %v4896, %v4897
      %v4904 = vsel %vm1888, %v4888, %v4903
      %v4905 = vsel %vm386, %v4897, %v4898
      %v4906 = vsel %vm1888, %v4890, %v4905
      %4911 = vst [vmem:[#allocation4 + $0x1e0] sm:$0xff] %v4900
      %4912 = vst [vmem:[#allocation4 + $0x1e8] sm:$0xff] %v4902
      %4913 = vst [vmem:[#allocation4 + $0x1f0] sm:$0xff] %v4904
      %4914 = vst [vmem:[#allocation4 + $0x1f8] sm:$0xff] %v4906
      %v4915 = vld [vmem:[#allocation3 + $0x8] sm:$0xff]
      %v4916 = vld [vmem:[#allocation3 + $0x10] sm:$0xff]
      %v4917 = vld [vmem:[#allocation3 + $0x18] sm:$0xff]
      %v4918 = vld [vmem:[#allocation3 + $0x20] sm:$0xff]
      %v4919 = vld [vmem:[#allocation3 + $0x28] sm:$0xff]
      %v4920 = vld [vmem:[#allocation3 + $0x38] sm:$0xff]
      %v4921 = vld [vmem:[#allocation3 + $0x40] sm:$0xff]
      %v4922 = vld [vmem:[#allocation3 + $0x48] sm:$0xff]
      %v4923 = vld [vmem:[#allocation3 + $0x50] sm:$0xff]
      %v4924 = vld [vmem:[#allocation3 + $0x58] sm:$0xff]
      %v4925 = vmul.f32 %v4915, %v1915
      %v4926 = vmul.f32 %v4916, %v1923
      %v4927 = vmul.f32 %v4917, %v1924
      %v4928 = vmul.f32 %v4918, %v1925
      %v4929 = vmul.f32 %v4919, %v1921
      %v4930 = vmul.f32 %v4920, %v1915
      %v4931 = vmul.f32 %v4921, %v1923
      %v4932 = vmul.f32 %v4922, %v1924
      %v4933 = vmul.f32 %v4923, %v1925
      %v4934 = vmul.f32 %v4924, %v1921
      %v4935 = vpack.c.bf16 %v4930, %v4925
      %v4936 = vpack.c.bf16 %v4931, %v4926
      %v4937 = vpack.c.bf16 %v4932, %v4927
      %v4938 = vpack.c.bf16 %v4933, %v4928
      %v4939 = vpack.c.bf16 %v4934, %v4929
      %v4945 = vunpack.c.l.b16 %v4935
      %v4946 = vunpack.c.l.b16 %v4936
      %v4947 = vunpack.c.l.b16 %v4937
      %v4948 = vunpack.c.l.b16 %v4938
      %v4949 = vunpack.c.l.b16 %v4939
      %v4950 = vunpack.c.h.b16 %v4935
      %v4951 = vunpack.c.h.b16 %v4936
      %v4952 = vunpack.c.h.b16 %v4937
      %v4953 = vunpack.c.h.b16 %v4938
      %v4954 = vunpack.c.h.b16 %v4939
      %v4955 = vpack.c.b16 %v4946, %v4945
      %v4956 = vpack.c.b16 %v4948, %v4947
      %v4957 = vpack.c.b16 %v4949, %v4949
      %v4958 = vpack.c.b16 %v4951, %v4950
      %v4959 = vpack.c.b16 %v4953, %v4952
      %v4960 = vpack.c.b16 %v4954, %v4954
      %4961 = vrot.lane.b32.xlu0 %v4955, 120
      %v4962 = vpop.permute.xlu0 %4961
      %4963 = vrot.lane.b32.xlu0 %v4956, 120
      %v4964 = vpop.permute.xlu0 %4963
      %4965 = vrot.lane.b32.xlu0 %v4957, 120
      %v4966 = vpop.permute.xlu0 %4965
      %4967 = vrot.lane.b32.xlu0 %v4958, 120
      %v4968 = vpop.permute.xlu0 %4967
      %4969 = vrot.lane.b32.xlu0 %v4959, 120
      %v4970 = vpop.permute.xlu0 %4969
      %4971 = vrot.lane.b32.xlu0 %v4960, 120
      %v4972 = vpop.permute.xlu0 %4971
      %v4973 = vrot.slane %v4962, 4
      %v4974 = vrot.slane %v4964, 4
      %v4975 = vrot.slane %v4966, 4
      %v4976 = vrot.slane %v4968, 4
      %v4977 = vrot.slane %v4970, 4
      %v4978 = vrot.slane %v4972, 4
      %v4979 = vsel %vm386, %v4973, %v4974
      %v4980 = vsel %vm1986, %v4962, %v4979
      %v4981 = vsel %vm386, %v4974, %v4975
      %v4982 = vsel %vm1986, %v4964, %v4981
      %v4983 = vsel %vm386, %v4976, %v4977
      %v4984 = vsel %vm1986, %v4968, %v4983
      %v4985 = vsel %vm386, %v4977, %v4978
      %v4986 = vsel %vm1986, %v4970, %v4985
      %4991 = vst [vmem:[#allocation4 + $0x200] sm:$0xff] %v4980
      %4992 = vst [vmem:[#allocation4 + $0x208] sm:$0xff] %v4982
      %4993 = vst [vmem:[#allocation4 + $0x210] sm:$0xff] %v4984
      %4994 = vst [vmem:[#allocation4 + $0x218] sm:$0xff] %v4986
      %v4995 = vld [vmem:[#allocation3 + $0x8] sm:$0xff]
      %v4996 = vld [vmem:[#allocation3 + $0x10] sm:$0xff]
      %v4997 = vld [vmem:[#allocation3 + $0x18] sm:$0xff]
      %v4998 = vld [vmem:[#allocation3 + $0x20] sm:$0xff]
      %v4999 = vld [vmem:[#allocation3 + $0x28] sm:$0xff]
      %v5000 = vld [vmem:[#allocation3 + $0x38] sm:$0xff]
      %v5001 = vld [vmem:[#allocation3 + $0x40] sm:$0xff]
      %v5002 = vld [vmem:[#allocation3 + $0x48] sm:$0xff]
      %v5003 = vld [vmem:[#allocation3 + $0x50] sm:$0xff]
      %v5004 = vld [vmem:[#allocation3 + $0x58] sm:$0xff]
      %v5005 = vmul.f32 %v4995, %v2013
      %v5006 = vmul.f32 %v4996, %v2021
      %v5007 = vmul.f32 %v4997, %v2022
      %v5008 = vmul.f32 %v4998, %v2023
      %v5009 = vmul.f32 %v4999, %v2019
      %v5010 = vmul.f32 %v5000, %v2013
      %v5011 = vmul.f32 %v5001, %v2021
      %v5012 = vmul.f32 %v5002, %v2022
      %v5013 = vmul.f32 %v5003, %v2023
      %v5014 = vmul.f32 %v5004, %v2019
      %v5015 = vpack.c.bf16 %v5010, %v5005
      %v5016 = vpack.c.bf16 %v5011, %v5006
      %v5017 = vpack.c.bf16 %v5012, %v5007
      %v5018 = vpack.c.bf16 %v5013, %v5008
      %v5019 = vpack.c.bf16 %v5014, %v5009
      %v5025 = vunpack.c.l.b16 %v5015
      %v5026 = vunpack.c.l.b16 %v5016
      %v5027 = vunpack.c.l.b16 %v5017
      %v5028 = vunpack.c.l.b16 %v5018
      %v5029 = vunpack.c.l.b16 %v5019
      %v5030 = vunpack.c.h.b16 %v5015
      %v5031 = vunpack.c.h.b16 %v5016
      %v5032 = vunpack.c.h.b16 %v5017
      %v5033 = vunpack.c.h.b16 %v5018
      %v5034 = vunpack.c.h.b16 %v5019
      %v5035 = vpack.c.b16 %v5026, %v5025
      %v5036 = vpack.c.b16 %v5028, %v5027
      %v5037 = vpack.c.b16 %v5029, %v5029
      %v5038 = vpack.c.b16 %v5031, %v5030
      %v5039 = vpack.c.b16 %v5033, %v5032
      %v5040 = vpack.c.b16 %v5034, %v5034
      %5041 = vrot.lane.b32.xlu0 %v5035, 119
      %v5042 = vpop.permute.xlu0 %5041
      %5043 = vrot.lane.b32.xlu0 %v5036, 119
      %v5044 = vpop.permute.xlu0 %5043
      %5045 = vrot.lane.b32.xlu0 %v5037, 119
      %v5046 = vpop.permute.xlu0 %5045
      %5047 = vrot.lane.b32.xlu0 %v5038, 119
      %v5048 = vpop.permute.xlu0 %5047
      %5049 = vrot.lane.b32.xlu0 %v5039, 119
      %v5050 = vpop.permute.xlu0 %5049
      %5051 = vrot.lane.b32.xlu0 %v5040, 119
      %v5052 = vpop.permute.xlu0 %5051
      %v5053 = vrot.slane %v5042, 4
      %v5054 = vrot.slane %v5044, 4
      %v5055 = vrot.slane %v5046, 4
      %v5056 = vrot.slane %v5048, 4
      %v5057 = vrot.slane %v5050, 4
      %v5058 = vrot.slane %v5052, 4
      %v5059 = vsel %vm386, %v5053, %v5054
      %v5060 = vsel %vm2084, %v5042, %v5059
      %v5061 = vsel %vm386, %v5054, %v5055
      %v5062 = vsel %vm2084, %v5044, %v5061
      %v5063 = vsel %vm386, %v5056, %v5057
      %v5064 = vsel %vm2084, %v5048, %v5063
      %v5065 = vsel %vm386, %v5057, %v5058
      %v5066 = vsel %vm2084, %v5050, %v5065
      %5071 = vst [vmem:[#allocation4 + $0x220] sm:$0xff] %v5060
      %5072 = vst [vmem:[#allocation4 + $0x228] sm:$0xff] %v5062
      %5073 = vst [vmem:[#allocation4 + $0x230] sm:$0xff] %v5064
      %5074 = vst [vmem:[#allocation4 + $0x238] sm:$0xff] %v5066
      %v5075 = vld [vmem:[#allocation3 + $0x8] sm:$0xff]
      %v5076 = vld [vmem:[#allocation3 + $0x10] sm:$0xff]
      %v5077 = vld [vmem:[#allocation3 + $0x18] sm:$0xff]
      %v5078 = vld [vmem:[#allocation3 + $0x20] sm:$0xff]
      %v5079 = vld [vmem:[#allocation3 + $0x28] sm:$0xff]
      %v5080 = vld [vmem:[#allocation3 + $0x38] sm:$0xff]
      %v5081 = vld [vmem:[#allocation3 + $0x40] sm:$0xff]
      %v5082 = vld [vmem:[#allocation3 + $0x48] sm:$0xff]
      %v5083 = vld [vmem:[#allocation3 + $0x50] sm:$0xff]
      %v5084 = vld [vmem:[#allocation3 + $0x58] sm:$0xff]
      %v5085 = vmul.f32 %v5075, %v316
      %v5086 = vmul.f32 %v5076, %v324
      %v5087 = vmul.f32 %v5077, %v325
      %v5088 = vmul.f32 %v5078, %v326
      %v5089 = vmul.f32 %v5079, %v322
      %v5090 = vmul.f32 %v5080, %v316
      %v5091 = vmul.f32 %v5081, %v324
      %v5092 = vmul.f32 %v5082, %v325
      %v5093 = vmul.f32 %v5083, %v326
      %v5094 = vmul.f32 %v5084, %v322
      %v5095 = vpack.c.bf16 %v5090, %v5085
      %v5096 = vpack.c.bf16 %v5091, %v5086
      %v5097 = vpack.c.bf16 %v5092, %v5087
      %v5098 = vpack.c.bf16 %v5093, %v5088
      %v5099 = vpack.c.bf16 %v5094, %v5089
      %v5105 = vunpack.c.l.b16 %v5095
      %v5106 = vunpack.c.l.b16 %v5096
      %v5107 = vunpack.c.l.b16 %v5097
      %v5108 = vunpack.c.l.b16 %v5098
      %v5109 = vunpack.c.l.b16 %v5099
      %v5110 = vunpack.c.h.b16 %v5095
      %v5111 = vunpack.c.h.b16 %v5096
      %v5112 = vunpack.c.h.b16 %v5097
      %v5113 = vunpack.c.h.b16 %v5098
      %v5114 = vunpack.c.h.b16 %v5099
      %v5115 = vpack.c.b16 %v5106, %v5105
      %v5116 = vpack.c.b16 %v5108, %v5107
      %v5117 = vpack.c.b16 %v5109, %v5109
      %v5118 = vpack.c.b16 %v5111, %v5110
      %v5119 = vpack.c.b16 %v5113, %v5112
      %v5120 = vpack.c.b16 %v5114, %v5114
      %5121 = vrot.lane.b32.xlu0 %v5115, 73
      %v5122 = vpop.permute.xlu0 %5121
      %5123 = vrot.lane.b32.xlu0 %v5116, 73
      %v5124 = vpop.permute.xlu0 %5123
      %5125 = vrot.lane.b32.xlu0 %v5117, 73
      %v5126 = vpop.permute.xlu0 %5125
      %5127 = vrot.lane.b32.xlu0 %v5118, 73
      %v5128 = vpop.permute.xlu0 %5127
      %5129 = vrot.lane.b32.xlu0 %v5119, 73
      %v5130 = vpop.permute.xlu0 %5129
      %5131 = vrot.lane.b32.xlu0 %v5120, 73
      %v5132 = vpop.permute.xlu0 %5131
      %v5133 = vrot.slane %v5122, 4
      %v5134 = vrot.slane %v5124, 4
      %v5135 = vrot.slane %v5126, 4
      %v5136 = vrot.slane %v5128, 4
      %v5137 = vrot.slane %v5130, 4
      %v5138 = vrot.slane %v5132, 4
      %v5139 = vsel %vm386, %v5133, %v5134
      %v5140 = vsel %vm388, %v5122, %v5139
      %v5141 = vsel %vm386, %v5134, %v5135
      %v5142 = vsel %vm388, %v5124, %v5141
      %v5143 = vsel %vm386, %v5136, %v5137
      %v5144 = vsel %vm388, %v5128, %v5143
      %v5145 = vsel %vm386, %v5137, %v5138
      %v5146 = vsel %vm388, %v5130, %v5145
      %5151 = vst [vmem:[#allocation4 + $0x240] sm:$0xff] %v5140
      %5152 = vst [vmem:[#allocation4 + $0x248] sm:$0xff] %v5142
      %5153 = vst [vmem:[#allocation4 + $0x250] sm:$0xff] %v5144
      %5154 = vst [vmem:[#allocation4 + $0x258] sm:$0xff] %v5146
      %v5155 = vld [vmem:[#allocation3 + $0x8] sm:$0xff]
      %v5156 = vld [vmem:[#allocation3 + $0x10] sm:$0xff]
      %v5157 = vld [vmem:[#allocation3 + $0x18] sm:$0xff]
      %v5158 = vld [vmem:[#allocation3 + $0x20] sm:$0xff]
      %v5159 = vld [vmem:[#allocation3 + $0x28] sm:$0xff]
      %v5160 = vld [vmem:[#allocation3 + $0x38] sm:$0xff]
      %v5161 = vld [vmem:[#allocation3 + $0x40] sm:$0xff]
      %v5162 = vld [vmem:[#allocation3 + $0x48] sm:$0xff]
      %v5163 = vld [vmem:[#allocation3 + $0x50] sm:$0xff]
      %v5164 = vld [vmem:[#allocation3 + $0x58] sm:$0xff]
      %v5165 = vmul.f32 %v5155, %v432
      %v5166 = vmul.f32 %v5156, %v440
      %v5167 = vmul.f32 %v5157, %v441
      %v5168 = vmul.f32 %v5158, %v442
      %v5169 = vmul.f32 %v5159, %v438
      %v5170 = vmul.f32 %v5160, %v432
      %v5171 = vmul.f32 %v5161, %v440
      %v5172 = vmul.f32 %v5162, %v441
      %v5173 = vmul.f32 %v5163, %v442
      %v5174 = vmul.f32 %v5164, %v438
      %v5175 = vpack.c.bf16 %v5170, %v5165
      %v5176 = vpack.c.bf16 %v5171, %v5166
      %v5177 = vpack.c.bf16 %v5172, %v5167
      %v5178 = vpack.c.bf16 %v5173, %v5168
      %v5179 = vpack.c.bf16 %v5174, %v5169
      %v5185 = vunpack.c.l.b16 %v5175
      %v5186 = vunpack.c.l.b16 %v5176
      %v5187 = vunpack.c.l.b16 %v5177
      %v5188 = vunpack.c.l.b16 %v5178
      %v5189 = vunpack.c.l.b16 %v5179
      %v5190 = vunpack.c.h.b16 %v5175
      %v5191 = vunpack.c.h.b16 %v5176
      %v5192 = vunpack.c.h.b16 %v5177
      %v5193 = vunpack.c.h.b16 %v5178
      %v5194 = vunpack.c.h.b16 %v5179
      %v5195 = vpack.c.b16 %v5186, %v5185
      %v5196 = vpack.c.b16 %v5188, %v5187
      %v5197 = vpack.c.b16 %v5189, %v5189
      %v5198 = vpack.c.b16 %v5191, %v5190
      %v5199 = vpack.c.b16 %v5193, %v5192
      %v5200 = vpack.c.b16 %v5194, %v5194
      %5201 = vrot.lane.b32.xlu0 %v5195, 72
      %v5202 = vpop.permute.xlu0 %5201
      %5203 = vrot.lane.b32.xlu0 %v5196, 72
      %v5204 = vpop.permute.xlu0 %5203
      %5205 = vrot.lane.b32.xlu0 %v5197, 72
      %v5206 = vpop.permute.xlu0 %5205
      %5207 = vrot.lane.b32.xlu0 %v5198, 72
      %v5208 = vpop.permute.xlu0 %5207
      %5209 = vrot.lane.b32.xlu0 %v5199, 72
      %v5210 = vpop.permute.xlu0 %5209
      %5211 = vrot.lane.b32.xlu0 %v5200, 72
      %v5212 = vpop.permute.xlu0 %5211
      %v5213 = vrot.slane %v5202, 4
      %v5214 = vrot.slane %v5204, 4
      %v5215 = vrot.slane %v5206, 4
      %v5216 = vrot.slane %v5208, 4
      %v5217 = vrot.slane %v5210, 4
      %v5218 = vrot.slane %v5212, 4
      %v5219 = vsel %vm386, %v5213, %v5214
      %v5220 = vsel %vm503, %v5202, %v5219
      %v5221 = vsel %vm386, %v5214, %v5215
      %v5222 = vsel %vm503, %v5204, %v5221
      %v5223 = vsel %vm386, %v5216, %v5217
      %v5224 = vsel %vm503, %v5208, %v5223
      %v5225 = vsel %vm386, %v5217, %v5218
      %v5226 = vsel %vm503, %v5210, %v5225
      %5231 = vst [vmem:[#allocation4 + $0x260] sm:$0xff] %v5220
      %5232 = vst [vmem:[#allocation4 + $0x268] sm:$0xff] %v5222
      %5233 = vst [vmem:[#allocation4 + $0x270] sm:$0xff] %v5224
      %5234 = vst [vmem:[#allocation4 + $0x278] sm:$0xff] %v5226
      %v5235 = vld [vmem:[#allocation3 + $0x8] sm:$0xff]
      %v5236 = vld [vmem:[#allocation3 + $0x10] sm:$0xff]
      %v5237 = vld [vmem:[#allocation3 + $0x18] sm:$0xff]
      %v5238 = vld [vmem:[#allocation3 + $0x20] sm:$0xff]
      %v5239 = vld [vmem:[#allocation3 + $0x28] sm:$0xff]
      %v5240 = vld [vmem:[#allocation3 + $0x38] sm:$0xff]
      %v5241 = vld [vmem:[#allocation3 + $0x40] sm:$0xff]
      %v5242 = vld [vmem:[#allocation3 + $0x48] sm:$0xff]
      %v5243 = vld [vmem:[#allocation3 + $0x50] sm:$0xff]
      %v5244 = vld [vmem:[#allocation3 + $0x58] sm:$0xff]
      %v5245 = vmul.f32 %v5235, %v547
      %v5246 = vmul.f32 %v5236, %v555
      %v5247 = vmul.f32 %v5237, %v556
      %v5248 = vmul.f32 %v5238, %v557
      %v5249 = vmul.f32 %v5239, %v553
      %v5250 = vmul.f32 %v5240, %v547
      %v5251 = vmul.f32 %v5241, %v555
      %v5252 = vmul.f32 %v5242, %v556
      %v5253 = vmul.f32 %v5243, %v557
      %v5254 = vmul.f32 %v5244, %v553
      %v5255 = vpack.c.bf16 %v5250, %v5245
      %v5256 = vpack.c.bf16 %v5251, %v5246
      %v5257 = vpack.c.bf16 %v5252, %v5247
      %v5258 = vpack.c.bf16 %v5253, %v5248
      %v5259 = vpack.c.bf16 %v5254, %v5249
      %v5265 = vunpack.c.l.b16 %v5255
      %v5266 = vunpack.c.l.b16 %v5256
      %v5267 = vunpack.c.l.b16 %v5257
      %v5268 = vunpack.c.l.b16 %v5258
      %v5269 = vunpack.c.l.b16 %v5259
      %v5270 = vunpack.c.h.b16 %v5255
      %v5271 = vunpack.c.h.b16 %v5256
      %v5272 = vunpack.c.h.b16 %v5257
      %v5273 = vunpack.c.h.b16 %v5258
      %v5274 = vunpack.c.h.b16 %v5259
      %v5275 = vpack.c.b16 %v5266, %v5265
      %v5276 = vpack.c.b16 %v5268, %v5267
      %v5277 = vpack.c.b16 %v5269, %v5269
      %v5278 = vpack.c.b16 %v5271, %v5270
      %v5279 = vpack.c.b16 %v5273, %v5272
      %v5280 = vpack.c.b16 %v5274, %v5274
      %5281 = vrot.lane.b32.xlu0 %v5275, 71
      %v5282 = vpop.permute.xlu0 %5281
      %5283 = vrot.lane.b32.xlu0 %v5276, 71
      %v5284 = vpop.permute.xlu0 %5283
      %5285 = vrot.lane.b32.xlu0 %v5277, 71
      %v5286 = vpop.permute.xlu0 %5285
      %5287 = vrot.lane.b32.xlu0 %v5278, 71
      %v5288 = vpop.permute.xlu0 %5287
      %5289 = vrot.lane.b32.xlu0 %v5279, 71
      %v5290 = vpop.permute.xlu0 %5289
      %5291 = vrot.lane.b32.xlu0 %v5280, 71
      %v5292 = vpop.permute.xlu0 %5291
      %v5293 = vrot.slane %v5282, 4
      %v5294 = vrot.slane %v5284, 4
      %v5295 = vrot.slane %v5286, 4
      %v5296 = vrot.slane %v5288, 4
      %v5297 = vrot.slane %v5290, 4
      %v5298 = vrot.slane %v5292, 4
      %v5299 = vsel %vm386, %v5293, %v5294
      %v5300 = vsel %vm618, %v5282, %v5299
      %v5301 = vsel %vm386, %v5294, %v5295
      %v5302 = vsel %vm618, %v5284, %v5301
      %v5303 = vsel %vm386, %v5296, %v5297
      %v5304 = vsel %vm618, %v5288, %v5303
      %v5305 = vsel %vm386, %v5297, %v5298
      %v5306 = vsel %vm618, %v5290, %v5305
      %5311 = vst [vmem:[#allocation4 + $0x280] sm:$0xff] %v5300
      %5312 = vst [vmem:[#allocation4 + $0x288] sm:$0xff] %v5302
      %5313 = vst [vmem:[#allocation4 + $0x290] sm:$0xff] %v5304
      %5314 = vst [vmem:[#allocation4 + $0x298] sm:$0xff] %v5306
      %v5315 = vld [vmem:[#allocation3 + $0x8] sm:$0xff]
      %v5316 = vld [vmem:[#allocation3 + $0x10] sm:$0xff]
      %v5317 = vld [vmem:[#allocation3 + $0x18] sm:$0xff]
      %v5318 = vld [vmem:[#allocation3 + $0x20] sm:$0xff]
      %v5319 = vld [vmem:[#allocation3 + $0x28] sm:$0xff]
      %v5320 = vld [vmem:[#allocation3 + $0x38] sm:$0xff]
      %v5321 = vld [vmem:[#allocation3 + $0x40] sm:$0xff]
      %v5322 = vld [vmem:[#allocation3 + $0x48] sm:$0xff]
      %v5323 = vld [vmem:[#allocation3 + $0x50] sm:$0xff]
      %v5324 = vld [vmem:[#allocation3 + $0x58] sm:$0xff]
      %v5325 = vmul.f32 %v5315, %v662
      %v5326 = vmul.f32 %v5316, %v670
      %v5327 = vmul.f32 %v5317, %v671
      %v5328 = vmul.f32 %v5318, %v672
      %v5329 = vmul.f32 %v5319, %v668
      %v5330 = vmul.f32 %v5320, %v662
      %v5331 = vmul.f32 %v5321, %v670
      %v5332 = vmul.f32 %v5322, %v671
      %v5333 = vmul.f32 %v5323, %v672
      %v5334 = vmul.f32 %v5324, %v668
      %v5335 = vpack.c.bf16 %v5330, %v5325
      %v5336 = vpack.c.bf16 %v5331, %v5326
      %v5337 = vpack.c.bf16 %v5332, %v5327
      %v5338 = vpack.c.bf16 %v5333, %v5328
      %v5339 = vpack.c.bf16 %v5334, %v5329
      %v5345 = vunpack.c.l.b16 %v5335
      %v5346 = vunpack.c.l.b16 %v5336
      %v5347 = vunpack.c.l.b16 %v5337
      %v5348 = vunpack.c.l.b16 %v5338
      %v5349 = vunpack.c.l.b16 %v5339
      %v5350 = vunpack.c.h.b16 %v5335
      %v5351 = vunpack.c.h.b16 %v5336
      %v5352 = vunpack.c.h.b16 %v5337
      %v5353 = vunpack.c.h.b16 %v5338
      %v5354 = vunpack.c.h.b16 %v5339
      %v5355 = vpack.c.b16 %v5346, %v5345
      %v5356 = vpack.c.b16 %v5348, %v5347
      %v5357 = vpack.c.b16 %v5349, %v5349
      %v5358 = vpack.c.b16 %v5351, %v5350
      %v5359 = vpack.c.b16 %v5353, %v5352
      %v5360 = vpack.c.b16 %v5354, %v5354
      %5361 = vrot.lane.b32.xlu0 %v5355, 65
      %v5362 = vpop.permute.xlu0 %5361
      %5363 = vrot.lane.b32.xlu0 %v5356, 65
      %v5364 = vpop.permute.xlu0 %5363
      %5365 = vrot.lane.b32.xlu0 %v5357, 65
      %v5366 = vpop.permute.xlu0 %5365
      %5367 = vrot.lane.b32.xlu0 %v5358, 65
      %v5368 = vpop.permute.xlu0 %5367
      %5369 = vrot.lane.b32.xlu0 %v5359, 65
      %v5370 = vpop.permute.xlu0 %5369
      %5371 = vrot.lane.b32.xlu0 %v5360, 65
      %v5372 = vpop.permute.xlu0 %5371
      %v5373 = vrot.slane %v5362, 4
      %v5374 = vrot.slane %v5364, 4
      %v5375 = vrot.slane %v5366, 4
      %v5376 = vrot.slane %v5368, 4
      %v5377 = vrot.slane %v5370, 4
      %v5378 = vrot.slane %v5372, 4
      %v5379 = vsel %vm386, %v5373, %v5374
      %v5380 = vsel %vm733, %v5362, %v5379
      %v5381 = vsel %vm386, %v5374, %v5375
      %v5382 = vsel %vm733, %v5364, %v5381
      %v5383 = vsel %vm386, %v5376, %v5377
      %v5384 = vsel %vm733, %v5368, %v5383
      %v5385 = vsel %vm386, %v5377, %v5378
      %v5386 = vsel %vm733, %v5370, %v5385
      %5391 = vst [vmem:[#allocation4 + $0x2a0] sm:$0xff] %v5380
      %5392 = vst [vmem:[#allocation4 + $0x2a8] sm:$0xff] %v5382
      %5393 = vst [vmem:[#allocation4 + $0x2b0] sm:$0xff] %v5384
      %5394 = vst [vmem:[#allocation4 + $0x2b8] sm:$0xff] %v5386
      %v5395 = vld [vmem:[#allocation3 + $0x8] sm:$0xff]
      %v5396 = vld [vmem:[#allocation3 + $0x10] sm:$0xff]
      %v5397 = vld [vmem:[#allocation3 + $0x18] sm:$0xff]
      %v5398 = vld [vmem:[#allocation3 + $0x20] sm:$0xff]
      %v5399 = vld [vmem:[#allocation3 + $0x28] sm:$0xff]
      %v5400 = vld [vmem:[#allocation3 + $0x38] sm:$0xff]
      %v5401 = vld [vmem:[#allocation3 + $0x40] sm:$0xff]
      %v5402 = vld [vmem:[#allocation3 + $0x48] sm:$0xff]
      %v5403 = vld [vmem:[#allocation3 + $0x50] sm:$0xff]
      %v5404 = vld [vmem:[#allocation3 + $0x58] sm:$0xff]
      %v5405 = vpack.c.bf16 %v5400, %v5395
      %v5406 = vpack.c.bf16 %v5401, %v5396
      %v5407 = vpack.c.bf16 %v5402, %v5397
      %v5408 = vpack.c.bf16 %v5403, %v5398
      %v5409 = vpack.c.bf16 %v5404, %v5399
      %v5415 = vunpack.c.l.b16 %v5405
      %v5416 = vunpack.c.l.b16 %v5406
      %v5417 = vunpack.c.l.b16 %v5407
      %v5418 = vunpack.c.l.b16 %v5408
      %v5419 = vunpack.c.l.b16 %v5409
      %v5420 = vunpack.c.h.b16 %v5405
      %v5421 = vunpack.c.h.b16 %v5406
      %v5422 = vunpack.c.h.b16 %v5407
      %v5423 = vunpack.c.h.b16 %v5408
      %v5424 = vunpack.c.h.b16 %v5409
      %v5425 = vpack.c.b16 %v5416, %v5415
      %v5426 = vpack.c.b16 %v5418, %v5417
      %v5427 = vpack.c.b16 %v5419, %v5419
      %v5428 = vpack.c.b16 %v5421, %v5420
      %v5429 = vpack.c.b16 %v5423, %v5422
      %v5430 = vpack.c.b16 %v5424, %v5424
      %5431 = vrot.lane.b32.xlu0 %v5425, 64
      %v5432 = vpop.permute.xlu0 %5431
      %5433 = vrot.lane.b32.xlu0 %v5426, 64
      %v5434 = vpop.permute.xlu0 %5433
      %5435 = vrot.lane.b32.xlu0 %v5427, 64
      %v5436 = vpop.permute.xlu0 %5435
      %5437 = vrot.lane.b32.xlu0 %v5428, 64
      %v5438 = vpop.permute.xlu0 %5437
      %5439 = vrot.lane.b32.xlu0 %v5429, 64
      %v5440 = vpop.permute.xlu0 %5439
      %5441 = vrot.lane.b32.xlu0 %v5430, 64
      %v5442 = vpop.permute.xlu0 %5441
      %v5443 = vrot.slane %v5432, 4
      %v5444 = vrot.slane %v5434, 4
      %v5445 = vrot.slane %v5436, 4
      %v5446 = vrot.slane %v5438, 4
      %v5447 = vrot.slane %v5440, 4
      %v5448 = vrot.slane %v5442, 4
      %v5449 = vsel %vm386, %v5443, %v5444
      %v5450 = vsel %vm804, %v5432, %v5449
      %v5451 = vsel %vm386, %v5444, %v5445
      %v5452 = vsel %vm804, %v5434, %v5451
      %v5453 = vsel %vm386, %v5446, %v5447
      %v5454 = vsel %vm804, %v5438, %v5453
      %v5455 = vsel %vm386, %v5447, %v5448
      %v5456 = vsel %vm804, %v5440, %v5455
      %5461 = vst [vmem:[#allocation4 + $0x2c0] sm:$0xff] %v5450
      %5462 = vst [vmem:[#allocation4 + $0x2c8] sm:$0xff] %v5452
      %5463 = vst [vmem:[#allocation4 + $0x2d0] sm:$0xff] %v5454
      %5464 = vst [vmem:[#allocation4 + $0x2d8] sm:$0xff] %v5456
      %v5465 = vld [vmem:[#allocation3 + $0x8] sm:$0xff]
      %v5466 = vld [vmem:[#allocation3 + $0x10] sm:$0xff]
      %v5467 = vld [vmem:[#allocation3 + $0x18] sm:$0xff]
      %v5468 = vld [vmem:[#allocation3 + $0x20] sm:$0xff]
      %v5469 = vld [vmem:[#allocation3 + $0x28] sm:$0xff]
      %v5470 = vld [vmem:[#allocation3 + $0x38] sm:$0xff]
      %v5471 = vld [vmem:[#allocation3 + $0x40] sm:$0xff]
      %v5472 = vld [vmem:[#allocation3 + $0x48] sm:$0xff]
      %v5473 = vld [vmem:[#allocation3 + $0x50] sm:$0xff]
      %v5474 = vld [vmem:[#allocation3 + $0x58] sm:$0xff]
      %v5475 = vmul.f32 %v5465, %v848
      %v5476 = vmul.f32 %v5466, %v856
      %v5477 = vmul.f32 %v5467, %v857
      %v5478 = vmul.f32 %v5468, %v858
      %v5479 = vmul.f32 %v5469, %v854
      %v5480 = vmul.f32 %v5470, %v848
      %v5481 = vmul.f32 %v5471, %v856
      %v5482 = vmul.f32 %v5472, %v857
      %v5483 = vmul.f32 %v5473, %v858
      %v5484 = vmul.f32 %v5474, %v854
      %v5485 = vpack.c.bf16 %v5480, %v5475
      %v5486 = vpack.c.bf16 %v5481, %v5476
      %v5487 = vpack.c.bf16 %v5482, %v5477
      %v5488 = vpack.c.bf16 %v5483, %v5478
      %v5489 = vpack.c.bf16 %v5484, %v5479
      %v5495 = vunpack.c.l.b16 %v5485
      %v5496 = vunpack.c.l.b16 %v5486
      %v5497 = vunpack.c.l.b16 %v5487
      %v5498 = vunpack.c.l.b16 %v5488
      %v5499 = vunpack.c.l.b16 %v5489
      %v5500 = vunpack.c.h.b16 %v5485
      %v5501 = vunpack.c.h.b16 %v5486
      %v5502 = vunpack.c.h.b16 %v5487
      %v5503 = vunpack.c.h.b16 %v5488
      %v5504 = vunpack.c.h.b16 %v5489
      %v5505 = vpack.c.b16 %v5496, %v5495
      %v5506 = vpack.c.b16 %v5498, %v5497
      %v5507 = vpack.c.b16 %v5499, %v5499
      %v5508 = vpack.c.b16 %v5501, %v5500
      %v5509 = vpack.c.b16 %v5503, %v5502
      %v5510 = vpack.c.b16 %v5504, %v5504
      %5511 = vrot.lane.b32.xlu0 %v5505, 63
      %v5512 = vpop.permute.xlu0 %5511
      %5513 = vrot.lane.b32.xlu0 %v5506, 63
      %v5514 = vpop.permute.xlu0 %5513
      %5515 = vrot.lane.b32.xlu0 %v5507, 63
      %v5516 = vpop.permute.xlu0 %5515
      %5517 = vrot.lane.b32.xlu0 %v5508, 63
      %v5518 = vpop.permute.xlu0 %5517
      %5519 = vrot.lane.b32.xlu0 %v5509, 63
      %v5520 = vpop.permute.xlu0 %5519
      %5521 = vrot.lane.b32.xlu0 %v5510, 63
      %v5522 = vpop.permute.xlu0 %5521
      %v5523 = vrot.slane %v5512, 4
      %v5524 = vrot.slane %v5514, 4
      %v5525 = vrot.slane %v5516, 4
      %v5526 = vrot.slane %v5518, 4
      %v5527 = vrot.slane %v5520, 4
      %v5528 = vrot.slane %v5522, 4
      %v5529 = vsel %vm386, %v5523, %v5524
      %v5530 = vsel %vm919, %v5512, %v5529
      %v5531 = vsel %vm386, %v5524, %v5525
      %v5532 = vsel %vm919, %v5514, %v5531
      %v5533 = vsel %vm386, %v5526, %v5527
      %v5534 = vsel %vm919, %v5518, %v5533
      %v5535 = vsel %vm386, %v5527, %v5528
      %v5536 = vsel %vm919, %v5520, %v5535
      %5541 = vst [vmem:[#allocation4 + $0x2e0] sm:$0xff] %v5530
      %5542 = vst [vmem:[#allocation4 + $0x2e8] sm:$0xff] %v5532
      %5543 = vst [vmem:[#allocation4 + $0x2f0] sm:$0xff] %v5534
      %5544 = vst [vmem:[#allocation4 + $0x2f8] sm:$0xff] %v5536
      %v5545 = vld [vmem:[#allocation3 + $0x8] sm:$0xff]
      %v5546 = vld [vmem:[#allocation3 + $0x10] sm:$0xff]
      %v5547 = vld [vmem:[#allocation3 + $0x18] sm:$0xff]
      %v5548 = vld [vmem:[#allocation3 + $0x20] sm:$0xff]
      %v5549 = vld [vmem:[#allocation3 + $0x28] sm:$0xff]
      %v5550 = vld [vmem:[#allocation3 + $0x38] sm:$0xff]
      %v5551 = vld [vmem:[#allocation3 + $0x40] sm:$0xff]
      %v5552 = vld [vmem:[#allocation3 + $0x48] sm:$0xff]
      %v5553 = vld [vmem:[#allocation3 + $0x50] sm:$0xff]
      %v5554 = vld [vmem:[#allocation3 + $0x58] sm:$0xff]
      %v5555 = vmul.f32 %v5545, %v963
      %v5556 = vmul.f32 %v5546, %v971
      %v5557 = vmul.f32 %v5547, %v972
      %v5558 = vmul.f32 %v5548, %v973
      %v5559 = vmul.f32 %v5549, %v969
      %v5560 = vmul.f32 %v5550, %v963
      %v5561 = vmul.f32 %v5551, %v971
      %v5562 = vmul.f32 %v5552, %v972
      %v5563 = vmul.f32 %v5553, %v973
      %v5564 = vmul.f32 %v5554, %v969
      %v5565 = vpack.c.bf16 %v5560, %v5555
      %v5566 = vpack.c.bf16 %v5561, %v5556
      %v5567 = vpack.c.bf16 %v5562, %v5557
      %v5568 = vpack.c.bf16 %v5563, %v5558
      %v5569 = vpack.c.bf16 %v5564, %v5559
      %v5575 = vunpack.c.l.b16 %v5565
      %v5576 = vunpack.c.l.b16 %v5566
      %v5577 = vunpack.c.l.b16 %v5567
      %v5578 = vunpack.c.l.b16 %v5568
      %v5579 = vunpack.c.l.b16 %v5569
      %v5580 = vunpack.c.h.b16 %v5565
      %v5581 = vunpack.c.h.b16 %v5566
      %v5582 = vunpack.c.h.b16 %v5567
      %v5583 = vunpack.c.h.b16 %v5568
      %v5584 = vunpack.c.h.b16 %v5569
      %v5585 = vpack.c.b16 %v5576, %v5575
      %v5586 = vpack.c.b16 %v5578, %v5577
      %v5587 = vpack.c.b16 %v5579, %v5579
      %v5588 = vpack.c.b16 %v5581, %v5580
      %v5589 = vpack.c.b16 %v5583, %v5582
      %v5590 = vpack.c.b16 %v5584, %v5584
      %5591 = vrot.lane.b32.xlu0 %v5585, 57
      %v5592 = vpop.permute.xlu0 %5591
      %5593 = vrot.lane.b32.xlu0 %v5586, 57
      %v5594 = vpop.permute.xlu0 %5593
      %5595 = vrot.lane.b32.xlu0 %v5587, 57
      %v5596 = vpop.permute.xlu0 %5595
      %5597 = vrot.lane.b32.xlu0 %v5588, 57
      %v5598 = vpop.permute.xlu0 %5597
      %5599 = vrot.lane.b32.xlu0 %v5589, 57
      %v5600 = vpop.permute.xlu0 %5599
      %5601 = vrot.lane.b32.xlu0 %v5590, 57
      %v5602 = vpop.permute.xlu0 %5601
      %v5603 = vrot.slane %v5592, 4
      %v5604 = vrot.slane %v5594, 4
      %v5605 = vrot.slane %v5596, 4
      %v5606 = vrot.slane %v5598, 4
      %v5607 = vrot.slane %v5600, 4
      %v5608 = vrot.slane %v5602, 4
      %v5609 = vsel %vm386, %v5603, %v5604
      %v5610 = vsel %vm1034, %v5592, %v5609
      %v5611 = vsel %vm386, %v5604, %v5605
      %v5612 = vsel %vm1034, %v5594, %v5611
      %v5613 = vsel %vm386, %v5606, %v5607
      %v5614 = vsel %vm1034, %v5598, %v5613
      %v5615 = vsel %vm386, %v5607, %v5608
      %v5616 = vsel %vm1034, %v5600, %v5615
      %5621 = vst [vmem:[#allocation4 + $0x300] sm:$0xff] %v5610
      %5622 = vst [vmem:[#allocation4 + $0x308] sm:$0xff] %v5612
      %5623 = vst [vmem:[#allocation4 + $0x310] sm:$0xff] %v5614
      %5624 = vst [vmem:[#allocation4 + $0x318] sm:$0xff] %v5616
      %v5625 = vld [vmem:[#allocation3 + $0x8] sm:$0xff]
      %v5626 = vld [vmem:[#allocation3 + $0x10] sm:$0xff]
      %v5627 = vld [vmem:[#allocation3 + $0x18] sm:$0xff]
      %v5628 = vld [vmem:[#allocation3 + $0x20] sm:$0xff]
      %v5629 = vld [vmem:[#allocation3 + $0x28] sm:$0xff]
      %v5630 = vld [vmem:[#allocation3 + $0x38] sm:$0xff]
      %v5631 = vld [vmem:[#allocation3 + $0x40] sm:$0xff]
      %v5632 = vld [vmem:[#allocation3 + $0x48] sm:$0xff]
      %v5633 = vld [vmem:[#allocation3 + $0x50] sm:$0xff]
      %v5634 = vld [vmem:[#allocation3 + $0x58] sm:$0xff]
      %v5635 = vmul.f32 %v5625, %v1078
      %v5636 = vmul.f32 %v5626, %v1086
      %v5637 = vmul.f32 %v5627, %v1087
      %v5638 = vmul.f32 %v5628, %v1088
      %v5639 = vmul.f32 %v5629, %v1084
      %v5640 = vmul.f32 %v5630, %v1078
      %v5641 = vmul.f32 %v5631, %v1086
      %v5642 = vmul.f32 %v5632, %v1087
      %v5643 = vmul.f32 %v5633, %v1088
      %v5644 = vmul.f32 %v5634, %v1084
      %v5645 = vpack.c.bf16 %v5640, %v5635
      %v5646 = vpack.c.bf16 %v5641, %v5636
      %v5647 = vpack.c.bf16 %v5642, %v5637
      %v5648 = vpack.c.bf16 %v5643, %v5638
      %v5649 = vpack.c.bf16 %v5644, %v5639
      %v5655 = vunpack.c.l.b16 %v5645
      %v5656 = vunpack.c.l.b16 %v5646
      %v5657 = vunpack.c.l.b16 %v5647
      %v5658 = vunpack.c.l.b16 %v5648
      %v5659 = vunpack.c.l.b16 %v5649
      %v5660 = vunpack.c.h.b16 %v5645
      %v5661 = vunpack.c.h.b16 %v5646
      %v5662 = vunpack.c.h.b16 %v5647
      %v5663 = vunpack.c.h.b16 %v5648
      %v5664 = vunpack.c.h.b16 %v5649
      %v5665 = vpack.c.b16 %v5656, %v5655
      %v5666 = vpack.c.b16 %v5658, %v5657
      %v5667 = vpack.c.b16 %v5659, %v5659
      %v5668 = vpack.c.b16 %v5661, %v5660
      %v5669 = vpack.c.b16 %v5663, %v5662
      %v5670 = vpack.c.b16 %v5664, %v5664
      %5671 = vrot.lane.b32.xlu0 %v5665, 56
      %v5672 = vpop.permute.xlu0 %5671
      %5673 = vrot.lane.b32.xlu0 %v5666, 56
      %v5674 = vpop.permute.xlu0 %5673
      %5675 = vrot.lane.b32.xlu0 %v5667, 56
      %v5676 = vpop.permute.xlu0 %5675
      %5677 = vrot.lane.b32.xlu0 %v5668, 56
      %v5678 = vpop.permute.xlu0 %5677
      %5679 = vrot.lane.b32.xlu0 %v5669, 56
      %v5680 = vpop.permute.xlu0 %5679
      %5681 = vrot.lane.b32.xlu0 %v5670, 56
      %v5682 = vpop.permute.xlu0 %5681
      %v5683 = vrot.slane %v5672, 4
      %v5684 = vrot.slane %v5674, 4
      %v5685 = vrot.slane %v5676, 4
      %v5686 = vrot.slane %v5678, 4
      %v5687 = vrot.slane %v5680, 4
      %v5688 = vrot.slane %v5682, 4
      %v5689 = vsel %vm386, %v5683, %v5684
      %v5690 = vsel %vm1149, %v5672, %v5689
      %v5691 = vsel %vm386, %v5684, %v5685
      %v5692 = vsel %vm1149, %v5674, %v5691
      %v5693 = vsel %vm386, %v5686, %v5687
      %v5694 = vsel %vm1149, %v5678, %v5693
      %v5695 = vsel %vm386, %v5687, %v5688
      %v5696 = vsel %vm1149, %v5680, %v5695
      %5701 = vst [vmem:[#allocation4 + $0x320] sm:$0xff] %v5690
      %5702 = vst [vmem:[#allocation4 + $0x328] sm:$0xff] %v5692
      %5703 = vst [vmem:[#allocation4 + $0x330] sm:$0xff] %v5694
      %5704 = vst [vmem:[#allocation4 + $0x338] sm:$0xff] %v5696
      %v5705 = vld [vmem:[#allocation3 + $0x8] sm:$0xff]
      %v5706 = vld [vmem:[#allocation3 + $0x10] sm:$0xff]
      %v5707 = vld [vmem:[#allocation3 + $0x18] sm:$0xff]
      %v5708 = vld [vmem:[#allocation3 + $0x20] sm:$0xff]
      %v5709 = vld [vmem:[#allocation3 + $0x28] sm:$0xff]
      %v5710 = vld [vmem:[#allocation3 + $0x38] sm:$0xff]
      %v5711 = vld [vmem:[#allocation3 + $0x40] sm:$0xff]
      %v5712 = vld [vmem:[#allocation3 + $0x48] sm:$0xff]
      %v5713 = vld [vmem:[#allocation3 + $0x50] sm:$0xff]
      %v5714 = vld [vmem:[#allocation3 + $0x58] sm:$0xff]
      %v5715 = vmul.f32 %v5705, %v1193
      %v5716 = vmul.f32 %v5706, %v1201
      %v5717 = vmul.f32 %v5707, %v1202
      %v5718 = vmul.f32 %v5708, %v1203
      %v5719 = vmul.f32 %v5709, %v1199
      %v5720 = vmul.f32 %v5710, %v1193
      %v5721 = vmul.f32 %v5711, %v1201
      %v5722 = vmul.f32 %v5712, %v1202
      %v5723 = vmul.f32 %v5713, %v1203
      %v5724 = vmul.f32 %v5714, %v1199
      %v5725 = vpack.c.bf16 %v5720, %v5715
      %v5726 = vpack.c.bf16 %v5721, %v5716
      %v5727 = vpack.c.bf16 %v5722, %v5717
      %v5728 = vpack.c.bf16 %v5723, %v5718
      %v5729 = vpack.c.bf16 %v5724, %v5719
      %v5735 = vunpack.c.l.b16 %v5725
      %v5736 = vunpack.c.l.b16 %v5726
      %v5737 = vunpack.c.l.b16 %v5727
      %v5738 = vunpack.c.l.b16 %v5728
      %v5739 = vunpack.c.l.b16 %v5729
      %v5740 = vunpack.c.h.b16 %v5725
      %v5741 = vunpack.c.h.b16 %v5726
      %v5742 = vunpack.c.h.b16 %v5727
      %v5743 = vunpack.c.h.b16 %v5728
      %v5744 = vunpack.c.h.b16 %v5729
      %v5745 = vpack.c.b16 %v5736, %v5735
      %v5746 = vpack.c.b16 %v5738, %v5737
      %v5747 = vpack.c.b16 %v5739, %v5739
      %v5748 = vpack.c.b16 %v5741, %v5740
      %v5749 = vpack.c.b16 %v5743, %v5742
      %v5750 = vpack.c.b16 %v5744, %v5744
      %5751 = vrot.lane.b32.xlu0 %v5745, 55
      %v5752 = vpop.permute.xlu0 %5751
      %5753 = vrot.lane.b32.xlu0 %v5746, 55
      %v5754 = vpop.permute.xlu0 %5753
      %5755 = vrot.lane.b32.xlu0 %v5747, 55
      %v5756 = vpop.permute.xlu0 %5755
      %5757 = vrot.lane.b32.xlu0 %v5748, 55
      %v5758 = vpop.permute.xlu0 %5757
      %5759 = vrot.lane.b32.xlu0 %v5749, 55
      %v5760 = vpop.permute.xlu0 %5759
      %5761 = vrot.lane.b32.xlu0 %v5750, 55
      %v5762 = vpop.permute.xlu0 %5761
      %v5763 = vrot.slane %v5752, 4
      %v5764 = vrot.slane %v5754, 4
      %v5765 = vrot.slane %v5756, 4
      %v5766 = vrot.slane %v5758, 4
      %v5767 = vrot.slane %v5760, 4
      %v5768 = vrot.slane %v5762, 4
      %v5769 = vsel %vm386, %v5763, %v5764
      %v5770 = vsel %vm1264, %v5752, %v5769
      %v5771 = vsel %vm386, %v5764, %v5765
      %v5772 = vsel %vm1264, %v5754, %v5771
      %v5773 = vsel %vm386, %v5766, %v5767
      %v5774 = vsel %vm1264, %v5758, %v5773
      %v5775 = vsel %vm386, %v5767, %v5768
      %v5776 = vsel %vm1264, %v5760, %v5775
      %5781 = vst [vmem:[#allocation4 + $0x340] sm:$0xff] %v5770
      %5782 = vst [vmem:[#allocation4 + $0x348] sm:$0xff] %v5772
      %5783 = vst [vmem:[#allocation4 + $0x350] sm:$0xff] %v5774
      %5784 = vst [vmem:[#allocation4 + $0x358] sm:$0xff] %v5776
      %v5785 = vld [vmem:[%s3] sm:$0xff]
      %v5786 = vld [vmem:[%s3 + $0x8] sm:$0xff]
      %v5787 = vld [vmem:[#allocation4] sm:$0xff]
      %v5788 = vld [vmem:[#allocation4 + $0x8] sm:$0xff]
      %v5789 = vld [vmem:[#allocation4 + $0x10] sm:$0xff]
      %v5790 = vld [vmem:[#allocation4 + $0x18] sm:$0xff]
      %v5791 = vld [vmem:[#allocation4 + $0x20] sm:$0xff]
      %v5792 = vld [vmem:[#allocation4 + $0x28] sm:$0xff]
      %v5793 = vld [vmem:[#allocation4 + $0x30] sm:$0xff]
      %v5794 = vld [vmem:[#allocation4 + $0x38] sm:$0xff]
      %v5795 = vld [vmem:[#allocation4 + $0x40] sm:$0xff]
      %v5796 = vld [vmem:[#allocation4 + $0x48] sm:$0xff]
      %v5797 = vld [vmem:[#allocation4 + $0x50] sm:$0xff]
      %v5798 = vld [vmem:[#allocation4 + $0x58] sm:$0xff]
      %v5799 = vld [vmem:[#allocation4 + $0x60] sm:$0xff]
      %v5800 = vld [vmem:[#allocation4 + $0x68] sm:$0xff]
      %v5801 = vld [vmem:[#allocation4 + $0x70] sm:$0xff]
      %v5802 = vld [vmem:[#allocation4 + $0x78] sm:$0xff]
      %v5803 = vld [vmem:[#allocation4 + $0x80] sm:$0xff]
      %v5804 = vld [vmem:[#allocation4 + $0x88] sm:$0xff]
      %v5805 = vld [vmem:[#allocation4 + $0x90] sm:$0xff]
      %v5806 = vld [vmem:[#allocation4 + $0x98] sm:$0xff]
      %v5807 = vld [vmem:[#allocation4 + $0xa0] sm:$0xff]
      %v5808 = vld [vmem:[#allocation4 + $0xa8] sm:$0xff]
      %v5809 = vld [vmem:[#allocation4 + $0xb0] sm:$0xff]
      %v5810 = vld [vmem:[#allocation4 + $0xb8] sm:$0xff]
      %v5811 = vld [vmem:[#allocation4 + $0xc0] sm:$0xff]
      %v5812 = vld [vmem:[#allocation4 + $0xc8] sm:$0xff]
      %v5813 = vld [vmem:[#allocation4 + $0xd0] sm:$0xff]
      %v5814 = vld [vmem:[#allocation4 + $0xd8] sm:$0xff]
      %v5815 = vld [vmem:[#allocation4 + $0xe0] sm:$0xff]
      %v5816 = vld [vmem:[#allocation4 + $0xe8] sm:$0xff]
      %v5817 = vld [vmem:[#allocation4 + $0xf0] sm:$0xff]
      %v5818 = vld [vmem:[#allocation4 + $0xf8] sm:$0xff]
      %v5819 = vld [vmem:[#allocation4 + $0x100] sm:$0xff]
      %v5820 = vld [vmem:[#allocation4 + $0x108] sm:$0xff]
      %v5821 = vld [vmem:[#allocation4 + $0x110] sm:$0xff]
      %v5822 = vld [vmem:[#allocation4 + $0x118] sm:$0xff]
      %v5823 = vld [vmem:[#allocation4 + $0x120] sm:$0xff]
      %v5824 = vld [vmem:[#allocation4 + $0x128] sm:$0xff]
      %v5825 = vld [vmem:[#allocation4 + $0x130] sm:$0xff]
      %v5826 = vld [vmem:[#allocation4 + $0x138] sm:$0xff]
      %v5827 = vld [vmem:[#allocation4 + $0x140] sm:$0xff]
      %v5828 = vld [vmem:[#allocation4 + $0x148] sm:$0xff]
      %v5829 = vld [vmem:[#allocation4 + $0x150] sm:$0xff]
      %v5830 = vld [vmem:[#allocation4 + $0x158] sm:$0xff]
      %v5831 = vld [vmem:[#allocation4 + $0x160] sm:$0xff]
      %v5832 = vld [vmem:[#allocation4 + $0x168] sm:$0xff]
      %v5833 = vld [vmem:[#allocation4 + $0x170] sm:$0xff]
      %v5834 = vld [vmem:[#allocation4 + $0x178] sm:$0xff]
      %v5835 = vld [vmem:[#allocation4 + $0x180] sm:$0xff]
      %v5836 = vld [vmem:[#allocation4 + $0x188] sm:$0xff]
      %v5837 = vld [vmem:[#allocation4 + $0x190] sm:$0xff]
      %v5838 = vld [vmem:[#allocation4 + $0x198] sm:$0xff]
      %v5839 = vld [vmem:[#allocation4 + $0x1a0] sm:$0xff]
      %v5840 = vld [vmem:[#allocation4 + $0x1a8] sm:$0xff]
      %v5841 = vld [vmem:[#allocation4 + $0x1b0] sm:$0xff]
      %v5842 = vld [vmem:[#allocation4 + $0x1b8] sm:$0xff]
      %v5843 = vld [vmem:[#allocation4 + $0x1c0] sm:$0xff]
      %v5844 = vld [vmem:[#allocation4 + $0x1c8] sm:$0xff]
      %v5845 = vld [vmem:[#allocation4 + $0x1d0] sm:$0xff]
      %v5846 = vld [vmem:[#allocation4 + $0x1d8] sm:$0xff]
      %v5847 = vld [vmem:[#allocation4 + $0x1e0] sm:$0xff]
      %v5848 = vld [vmem:[#allocation4 + $0x1e8] sm:$0xff]
      %v5849 = vld [vmem:[#allocation4 + $0x1f0] sm:$0xff]
      %v5850 = vld [vmem:[#allocation4 + $0x1f8] sm:$0xff]
      %v5851 = vld [vmem:[#allocation4 + $0x200] sm:$0xff]
      %v5852 = vld [vmem:[#allocation4 + $0x208] sm:$0xff]
      %v5853 = vld [vmem:[#allocation4 + $0x210] sm:$0xff]
      %v5854 = vld [vmem:[#allocation4 + $0x218] sm:$0xff]
      %v5855 = vld [vmem:[#allocation4 + $0x220] sm:$0xff]
      %v5856 = vld [vmem:[#allocation4 + $0x228] sm:$0xff]
      %v5857 = vld [vmem:[#allocation4 + $0x230] sm:$0xff]
      %v5858 = vld [vmem:[#allocation4 + $0x238] sm:$0xff]
      %v5859 = vld [vmem:[#allocation4 + $0x240] sm:$0xff]
      %v5860 = vld [vmem:[#allocation4 + $0x248] sm:$0xff]
      %v5861 = vld [vmem:[#allocation4 + $0x250] sm:$0xff]
      %v5862 = vld [vmem:[#allocation4 + $0x258] sm:$0xff]
      %v5863 = vld [vmem:[#allocation4 + $0x260] sm:$0xff]
      %v5864 = vld [vmem:[#allocation4 + $0x268] sm:$0xff]
      %v5865 = vld [vmem:[#allocation4 + $0x270] sm:$0xff]
      %v5866 = vld [vmem:[#allocation4 + $0x278] sm:$0xff]
      %v5867 = vld [vmem:[#allocation4 + $0x280] sm:$0xff]
      %v5868 = vld [vmem:[#allocation4 + $0x288] sm:$0xff]
      %v5869 = vld [vmem:[#allocation4 + $0x290] sm:$0xff]
      %v5870 = vld [vmem:[#allocation4 + $0x298] sm:$0xff]
      %v5871 = vld [vmem:[#allocation4 + $0x2a0] sm:$0xff]
      %v5872 = vld [vmem:[#allocation4 + $0x2a8] sm:$0xff]
      %v5873 = vld [vmem:[#allocation4 + $0x2b0] sm:$0xff]
      %v5874 = vld [vmem:[#allocation4 + $0x2b8] sm:$0xff]
      %v5875 = vld [vmem:[#allocation4 + $0x2c0] sm:$0xff]
      %v5876 = vld [vmem:[#allocation4 + $0x2c8] sm:$0xff]
      %v5877 = vld [vmem:[#allocation4 + $0x2d0] sm:$0xff]
      %v5878 = vld [vmem:[#allocation4 + $0x2d8] sm:$0xff]
      %v5879 = vld [vmem:[#allocation4 + $0x2e0] sm:$0xff]
      %v5880 = vld [vmem:[#allocation4 + $0x2e8] sm:$0xff]
      %v5881 = vld [vmem:[#allocation4 + $0x2f0] sm:$0xff]
      %v5882 = vld [vmem:[#allocation4 + $0x2f8] sm:$0xff]
      %v5883 = vld [vmem:[#allocation4 + $0x300] sm:$0xff]
      %v5884 = vld [vmem:[#allocation4 + $0x308] sm:$0xff]
      %v5885 = vld [vmem:[#allocation4 + $0x310] sm:$0xff]
      %v5886 = vld [vmem:[#allocation4 + $0x318] sm:$0xff]
      %v5887 = vld [vmem:[#allocation4 + $0x320] sm:$0xff]
      %v5888 = vld [vmem:[#allocation4 + $0x328] sm:$0xff]
      %v5889 = vld [vmem:[#allocation4 + $0x330] sm:$0xff]
      %v5890 = vld [vmem:[#allocation4 + $0x338] sm:$0xff]
      %v5891 = vld [vmem:[#allocation4 + $0x340] sm:$0xff]
      %v5892 = vld [vmem:[#allocation4 + $0x348] sm:$0xff]
      %v5893 = vld [vmem:[#allocation4 + $0x350] sm:$0xff]
      %v5894 = vld [vmem:[#allocation4 + $0x358] sm:$0xff]
      %v5895 = vld [vmem:[%s4] sm:$0xff]
      %5897 = vset.pattern.permute.xlu0 0
      %5898 = vperm.xlu0 %5897, %v5895
      %v5899 = vpop.permute.xlu0 %5898
      %v5903 = vunpack.c.l.b16 %v5785
      %v5904 = vunpack.c.h.b16 %v5785
      %v5905 = vunpack.c.l.b16 %v5786
      %v5906 = vunpack.c.h.b16 %v5786
      %v5907 = vpack.c.b16 %v5903, %v5903
      %v5908 = vpack.c.b16 %v5904, %v5904
      %v5909 = vpack.c.b16 %v5905, %v5905
      %v5910 = vpack.c.b16 %v5906, %v5906
      %v6022 = vunpack.c.l.b16 %v5787
      %v6023 = vunpack.c.h.b16 %v5787
      %v6024 = vunpack.c.l.b16 %v5788
      %v6025 = vunpack.c.h.b16 %v5788
      %v6026 = vunpack.c.l.b16 %v5789
      %v6027 = vunpack.c.h.b16 %v5789
      %v6028 = vunpack.c.l.b16 %v5790
      %v6029 = vunpack.c.h.b16 %v5790
      %v6030 = vunpack.c.l.b16 %v5791
      %v6031 = vunpack.c.h.b16 %v5791
      %v6032 = vunpack.c.l.b16 %v5792
      %v6033 = vunpack.c.h.b16 %v5792
      %v6034 = vunpack.c.l.b16 %v5793
      %v6035 = vunpack.c.h.b16 %v5793
      %v6036 = vunpack.c.l.b16 %v5794
      %v6037 = vunpack.c.h.b16 %v5794
      %v6038 = vunpack.c.l.b16 %v5795
      %v6039 = vunpack.c.h.b16 %v5795
      %v6040 = vunpack.c.l.b16 %v5796
      %v6041 = vunpack.c.h.b16 %v5796
      %v6042 = vunpack.c.l.b16 %v5797
      %v6043 = vunpack.c.h.b16 %v5797
      %v6044 = vunpack.c.l.b16 %v5798
      %v6045 = vunpack.c.h.b16 %v5798
      %v6046 = vunpack.c.l.b16 %v5799
      %v6047 = vunpack.c.h.b16 %v5799
      %v6048 = vunpack.c.l.b16 %v5800
      %v6049 = vunpack.c.h.b16 %v5800
      %v6050 = vunpack.c.l.b16 %v5801
      %v6051 = vunpack.c.h.b16 %v5801
      %v6052 = vunpack.c.l.b16 %v5802
      %v6053 = vunpack.c.h.b16 %v5802
      %v6054 = vunpack.c.l.b16 %v5803
      %v6055 = vunpack.c.h.b16 %v5803
      %v6056 = vunpack.c.l.b16 %v5804
      %v6057 = vunpack.c.h.b16 %v5804
      %v6058 = vunpack.c.l.b16 %v5805
      %v6059 = vunpack.c.h.b16 %v5805
      %v6060 = vunpack.c.l.b16 %v5806
      %v6061 = vunpack.c.h.b16 %v5806
      %v6062 = vunpack.c.l.b16 %v5807
      %v6063 = vunpack.c.h.b16 %v5807
      %v6064 = vunpack.c.l.b16 %v5808
      %v6065 = vunpack.c.h.b16 %v5808
      %v6066 = vunpack.c.l.b16 %v5809
      %v6067 = vunpack.c.h.b16 %v5809
      %v6068 = vunpack.c.l.b16 %v5810
      %v6069 = vunpack.c.h.b16 %v5810
      %v6070 = vunpack.c.l.b16 %v5811
      %v6071 = vunpack.c.h.b16 %v5811
      %v6072 = vunpack.c.l.b16 %v5812
      %v6073 = vunpack.c.h.b16 %v5812
      %v6074 = vunpack.c.l.b16 %v5813
      %v6075 = vunpack.c.h.b16 %v5813
      %v6076 = vunpack.c.l.b16 %v5814
      %v6077 = vunpack.c.h.b16 %v5814
      %v6078 = vunpack.c.l.b16 %v5815
      %v6079 = vunpack.c.h.b16 %v5815
      %v6080 = vunpack.c.l.b16 %v5816
      %v6081 = vunpack.c.h.b16 %v5816
      %v6082 = vunpack.c.l.b16 %v5817
      %v6083 = vunpack.c.h.b16 %v5817
      %v6084 = vunpack.c.l.b16 %v5818
      %v6085 = vunpack.c.h.b16 %v5818
      %v6086 = vunpack.c.l.b16 %v5819
      %v6087 = vunpack.c.h.b16 %v5819
      %v6088 = vunpack.c.l.b16 %v5820
      %v6089 = vunpack.c.h.b16 %v5820
      %v6090 = vunpack.c.l.b16 %v5821
      %v6091 = vunpack.c.h.b16 %v5821
      %v6092 = vunpack.c.l.b16 %v5822
      %v6093 = vunpack.c.h.b16 %v5822
      %v6094 = vunpack.c.l.b16 %v5823
      %v6095 = vunpack.c.h.b16 %v5823
      %v6096 = vunpack.c.l.b16 %v5824
      %v6097 = vunpack.c.h.b16 %v5824
      %v6098 = vunpack.c.l.b16 %v5825
      %v6099 = vunpack.c.h.b16 %v5825
      %v6100 = vunpack.c.l.b16 %v5826
      %v6101 = vunpack.c.h.b16 %v5826
      %v6102 = vunpack.c.l.b16 %v5827
      %v6103 = vunpack.c.h.b16 %v5827
      %v6104 = vunpack.c.l.b16 %v5828
      %v6105 = vunpack.c.h.b16 %v5828
      %v6106 = vunpack.c.l.b16 %v5829
      %v6107 = vunpack.c.h.b16 %v5829
      %v6108 = vunpack.c.l.b16 %v5830
      %v6109 = vunpack.c.h.b16 %v5830
      %v6110 = vunpack.c.l.b16 %v5831
      %v6111 = vunpack.c.h.b16 %v5831
      %v6112 = vunpack.c.l.b16 %v5832
      %v6113 = vunpack.c.h.b16 %v5832
      %v6114 = vunpack.c.l.b16 %v5833
      %v6115 = vunpack.c.h.b16 %v5833
      %v6116 = vunpack.c.l.b16 %v5834
      %v6117 = vunpack.c.h.b16 %v5834
      %v6118 = vunpack.c.l.b16 %v5835
      %v6119 = vunpack.c.h.b16 %v5835
      %v6120 = vunpack.c.l.b16 %v5836
      %v6121 = vunpack.c.h.b16 %v5836
      %v6122 = vunpack.c.l.b16 %v5837
      %v6123 = vunpack.c.h.b16 %v5837
      %v6124 = vunpack.c.l.b16 %v5838
      %v6125 = vunpack.c.h.b16 %v5838
      %v6126 = vunpack.c.l.b16 %v5839
      %v6127 = vunpack.c.h.b16 %v5839
      %v6128 = vunpack.c.l.b16 %v5840
      %v6129 = vunpack.c.h.b16 %v5840
      %v6130 = vunpack.c.l.b16 %v5841
      %v6131 = vunpack.c.h.b16 %v5841
      %v6132 = vunpack.c.l.b16 %v5842
      %v6133 = vunpack.c.h.b16 %v5842
      %v6134 = vunpack.c.l.b16 %v5843
      %v6135 = vunpack.c.h.b16 %v5843
      %v6136 = vunpack.c.l.b16 %v5844
      %v6137 = vunpack.c.h.b16 %v5844
      %v6138 = vunpack.c.l.b16 %v5845
      %v6139 = vunpack.c.h.b16 %v5845
      %v6140 = vunpack.c.l.b16 %v5846
      %v6141 = vunpack.c.h.b16 %v5846
      %v6142 = vunpack.c.l.b16 %v5847
      %v6143 = vunpack.c.h.b16 %v5847
      %v6144 = vunpack.c.l.b16 %v5848
      %v6145 = vunpack.c.h.b16 %v5848
      %v6146 = vunpack.c.l.b16 %v5849
      %v6147 = vunpack.c.h.b16 %v5849
      %v6148 = vunpack.c.l.b16 %v5850
      %v6149 = vunpack.c.h.b16 %v5850
      %v6150 = vunpack.c.l.b16 %v5851
      %v6151 = vunpack.c.h.b16 %v5851
      %v6152 = vunpack.c.l.b16 %v5852
      %v6153 = vunpack.c.h.b16 %v5852
      %v6154 = vunpack.c.l.b16 %v5853
      %v6155 = vunpack.c.h.b16 %v5853
      %v6156 = vunpack.c.l.b16 %v5854
      %v6157 = vunpack.c.h.b16 %v5854
      %v6158 = vunpack.c.l.b16 %v5855
      %v6159 = vunpack.c.h.b16 %v5855
      %v6160 = vunpack.c.l.b16 %v5856
      %v6161 = vunpack.c.h.b16 %v5856
      %v6162 = vunpack.c.l.b16 %v5857
      %v6163 = vunpack.c.h.b16 %v5857
      %v6164 = vunpack.c.l.b16 %v5858
      %v6165 = vunpack.c.h.b16 %v5858
      %v6166 = vunpack.c.l.b16 %v5859
      %v6167 = vunpack.c.h.b16 %v5859
      %v6168 = vunpack.c.l.b16 %v5860
      %v6169 = vunpack.c.h.b16 %v5860
      %v6170 = vunpack.c.l.b16 %v5861
      %v6171 = vunpack.c.h.b16 %v5861
      %v6172 = vunpack.c.l.b16 %v5862
      %v6173 = vunpack.c.h.b16 %v5862
      %v6174 = vunpack.c.l.b16 %v5863
      %v6175 = vunpack.c.h.b16 %v5863
      %v6176 = vunpack.c.l.b16 %v5864
      %v6177 = vunpack.c.h.b16 %v5864
      %v6178 = vunpack.c.l.b16 %v5865
      %v6179 = vunpack.c.h.b16 %v5865
      %v6180 = vunpack.c.l.b16 %v5866
      %v6181 = vunpack.c.h.b16 %v5866
      %v6182 = vunpack.c.l.b16 %v5867
      %v6183 = vunpack.c.h.b16 %v5867
      %v6184 = vunpack.c.l.b16 %v5868
      %v6185 = vunpack.c.h.b16 %v5868
      %v6186 = vunpack.c.l.b16 %v5869
      %v6187 = vunpack.c.h.b16 %v5869
      %v6188 = vunpack.c.l.b16 %v5870
      %v6189 = vunpack.c.h.b16 %v5870
      %v6190 = vunpack.c.l.b16 %v5871
      %v6191 = vunpack.c.h.b16 %v5871
      %v6192 = vunpack.c.l.b16 %v5872
      %v6193 = vunpack.c.h.b16 %v5872
      %v6194 = vunpack.c.l.b16 %v5873
      %v6195 = vunpack.c.h.b16 %v5873
      %v6196 = vunpack.c.l.b16 %v5874
      %v6197 = vunpack.c.h.b16 %v5874
      %v6198 = vunpack.c.l.b16 %v5875
      %v6199 = vunpack.c.h.b16 %v5875
      %v6200 = vunpack.c.l.b16 %v5876
      %v6201 = vunpack.c.h.b16 %v5876
      %v6202 = vunpack.c.l.b16 %v5877
      %v6203 = vunpack.c.h.b16 %v5877
      %v6204 = vunpack.c.l.b16 %v5878
      %v6205 = vunpack.c.h.b16 %v5878
      %v6206 = vunpack.c.l.b16 %v5879
      %v6207 = vunpack.c.h.b16 %v5879
      %v6208 = vunpack.c.l.b16 %v5880
      %v6209 = vunpack.c.h.b16 %v5880
      %v6210 = vunpack.c.l.b16 %v5881
      %v6211 = vunpack.c.h.b16 %v5881
      %v6212 = vunpack.c.l.b16 %v5882
      %v6213 = vunpack.c.h.b16 %v5882
      %v6214 = vunpack.c.l.b16 %v5883
      %v6215 = vunpack.c.h.b16 %v5883
      %v6216 = vunpack.c.l.b16 %v5884
      %v6217 = vunpack.c.h.b16 %v5884
      %v6218 = vunpack.c.l.b16 %v5885
      %v6219 = vunpack.c.h.b16 %v5885
      %v6220 = vunpack.c.l.b16 %v5886
      %v6221 = vunpack.c.h.b16 %v5886
      %v6222 = vunpack.c.l.b16 %v5887
      %v6223 = vunpack.c.h.b16 %v5887
      %v6224 = vunpack.c.l.b16 %v5888
      %v6225 = vunpack.c.h.b16 %v5888
      %v6226 = vunpack.c.l.b16 %v5889
      %v6227 = vunpack.c.h.b16 %v5889
      %v6228 = vunpack.c.l.b16 %v5890
      %v6229 = vunpack.c.h.b16 %v5890
      %v6230 = vunpack.c.l.b16 %v5891
      %v6231 = vunpack.c.h.b16 %v5891
      %v6232 = vunpack.c.l.b16 %v5892
      %v6233 = vunpack.c.h.b16 %v5892
      %v6234 = vunpack.c.l.b16 %v5893
      %v6235 = vunpack.c.h.b16 %v5893
      %v6236 = vunpack.c.l.b16 %v5894
      %v6237 = vunpack.c.h.b16 %v5894
      %v6238 = vpack.c.b16 %v6026, %v6022
      %v6239 = vpack.c.b16 %v6027, %v6023
      %v6240 = vpack.c.b16 %v6028, %v6024
      %v6241 = vpack.c.b16 %v6029, %v6025
      %v6242 = vpack.c.b16 %v6034, %v6030
      %v6243 = vpack.c.b16 %v6035, %v6031
      %v6244 = vpack.c.b16 %v6036, %v6032
      %v6245 = vpack.c.b16 %v6037, %v6033
      %v6246 = vpack.c.b16 %v6042, %v6038
      %v6247 = vpack.c.b16 %v6043, %v6039
      %v6248 = vpack.c.b16 %v6044, %v6040
      %v6249 = vpack.c.b16 %v6045, %v6041
      %v6250 = vpack.c.b16 %v6050, %v6046
      %v6251 = vpack.c.b16 %v6051, %v6047
      %v6252 = vpack.c.b16 %v6052, %v6048
      %v6253 = vpack.c.b16 %v6053, %v6049
      %v6254 = vpack.c.b16 %v6058, %v6054
      %v6255 = vpack.c.b16 %v6059, %v6055
      %v6256 = vpack.c.b16 %v6060, %v6056
      %v6257 = vpack.c.b16 %v6061, %v6057
      %v6258 = vpack.c.b16 %v6066, %v6062
      %v6259 = vpack.c.b16 %v6067, %v6063
      %v6260 = vpack.c.b16 %v6068, %v6064
      %v6261 = vpack.c.b16 %v6069, %v6065
      %v6262 = vpack.c.b16 %v6074, %v6070
      %v6263 = vpack.c.b16 %v6075, %v6071
      %v6264 = vpack.c.b16 %v6076, %v6072
      %v6265 = vpack.c.b16 %v6077, %v6073
      %v6266 = vpack.c.b16 %v6082, %v6078
      %v6267 = vpack.c.b16 %v6083, %v6079
      %v6268 = vpack.c.b16 %v6084, %v6080
      %v6269 = vpack.c.b16 %v6085, %v6081
      %v6270 = vpack.c.b16 %v6090, %v6086
      %v6271 = vpack.c.b16 %v6091, %v6087
      %v6272 = vpack.c.b16 %v6092, %v6088
      %v6273 = vpack.c.b16 %v6093, %v6089
      %v6274 = vpack.c.b16 %v6098, %v6094
      %v6275 = vpack.c.b16 %v6099, %v6095
      %v6276 = vpack.c.b16 %v6100, %v6096
      %v6277 = vpack.c.b16 %v6101, %v6097
      %v6278 = vpack.c.b16 %v6106, %v6102
      %v6279 = vpack.c.b16 %v6107, %v6103
      %v6280 = vpack.c.b16 %v6108, %v6104
      %v6281 = vpack.c.b16 %v6109, %v6105
      %v6282 = vpack.c.b16 %v6114, %v6110
      %v6283 = vpack.c.b16 %v6115, %v6111
      %v6284 = vpack.c.b16 %v6116, %v6112
      %v6285 = vpack.c.b16 %v6117, %v6113
      %v6286 = vpack.c.b16 %v6122, %v6118
      %v6287 = vpack.c.b16 %v6123, %v6119
      %v6288 = vpack.c.b16 %v6124, %v6120
      %v6289 = vpack.c.b16 %v6125, %v6121
      %v6290 = vpack.c.b16 %v6130, %v6126
      %v6291 = vpack.c.b16 %v6131, %v6127
      %v6292 = vpack.c.b16 %v6132, %v6128
      %v6293 = vpack.c.b16 %v6133, %v6129
      %v6294 = vpack.c.b16 %v6138, %v6134
      %v6295 = vpack.c.b16 %v6139, %v6135
      %v6296 = vpack.c.b16 %v6140, %v6136
      %v6297 = vpack.c.b16 %v6141, %v6137
      %v6298 = vpack.c.b16 %v6146, %v6142
      %v6299 = vpack.c.b16 %v6147, %v6143
      %v6300 = vpack.c.b16 %v6148, %v6144
      %v6301 = vpack.c.b16 %v6149, %v6145
      %v6302 = vpack.c.b16 %v6154, %v6150
      %v6303 = vpack.c.b16 %v6155, %v6151
      %v6304 = vpack.c.b16 %v6156, %v6152
      %v6305 = vpack.c.b16 %v6157, %v6153
      %v6306 = vpack.c.b16 %v6162, %v6158
      %v6307 = vpack.c.b16 %v6163, %v6159
      %v6308 = vpack.c.b16 %v6164, %v6160
      %v6309 = vpack.c.b16 %v6165, %v6161
      %v6310 = vpack.c.b16 %v6170, %v6166
      %v6311 = vpack.c.b16 %v6171, %v6167
      %v6312 = vpack.c.b16 %v6172, %v6168
      %v6313 = vpack.c.b16 %v6173, %v6169
      %v6314 = vpack.c.b16 %v6178, %v6174
      %v6315 = vpack.c.b16 %v6179, %v6175
      %v6316 = vpack.c.b16 %v6180, %v6176
      %v6317 = vpack.c.b16 %v6181, %v6177
      %v6318 = vpack.c.b16 %v6186, %v6182
      %v6319 = vpack.c.b16 %v6187, %v6183
      %v6320 = vpack.c.b16 %v6188, %v6184
      %v6321 = vpack.c.b16 %v6189, %v6185
      %v6322 = vpack.c.b16 %v6194, %v6190
      %v6323 = vpack.c.b16 %v6195, %v6191
      %v6324 = vpack.c.b16 %v6196, %v6192
      %v6325 = vpack.c.b16 %v6197, %v6193
      %v6326 = vpack.c.b16 %v6202, %v6198
      %v6327 = vpack.c.b16 %v6203, %v6199
      %v6328 = vpack.c.b16 %v6204, %v6200
      %v6329 = vpack.c.b16 %v6205, %v6201
      %v6330 = vpack.c.b16 %v6210, %v6206
      %v6331 = vpack.c.b16 %v6211, %v6207
      %v6332 = vpack.c.b16 %v6212, %v6208
      %v6333 = vpack.c.b16 %v6213, %v6209
      %v6334 = vpack.c.b16 %v6218, %v6214
      %v6335 = vpack.c.b16 %v6219, %v6215
      %v6336 = vpack.c.b16 %v6220, %v6216
      %v6337 = vpack.c.b16 %v6221, %v6217
      %v6338 = vpack.c.b16 %v6226, %v6222
      %v6339 = vpack.c.b16 %v6227, %v6223
      %v6340 = vpack.c.b16 %v6228, %v6224
      %v6341 = vpack.c.b16 %v6229, %v6225
      %v6342 = vpack.c.b16 %v6234, %v6230
      %v6343 = vpack.c.b16 %v6235, %v6231
      %v6344 = vpack.c.b16 %v6236, %v6232
      %v6345 = vpack.c.b16 %v6237, %v6233
      %v6455 = vsel %vm3493, %v5910, 0
      %6457 = vmatprep.subr.bf16.mxu0 %v6267
      %6458 = vmatpush1.bf16.msra.mxu0 %v6266
      %6459 = vmatprep.subr.bf16.mxu0 %v6263
      %6460 = vmatpush1.bf16.msra.mxu0 %v6262
      %6461 = vmatprep.subr.bf16.mxu0 %v6259
      %6462 = vmatpush1.bf16.msra.mxu0 %v6258
      %6463 = vmatprep.subr.bf16.mxu0 %v6255
      %6464 = vmatpush1.bf16.msra.mxu0 %v6254
      %6465 = vmatprep.subr.bf16.mxu0 %v6251
      %6466 = vmatpush1.bf16.msra.mxu0 %v6250
      %6467 = vmatprep.subr.bf16.mxu0 %v6247
      %6468 = vmatpush1.bf16.msra.mxu0 %v6246
      %6469 = vmatprep.subr.bf16.mxu0 %v6243
      %6470 = vmatpush1.bf16.msra.mxu0 %v6242
      %6471 = vmatprep.subr.bf16.mxu0 %v6239
      %6472 = vmatpush1.bf16.msra.mxu0 %v6238
      %6473 = vmatprep.subr.bf16.mxu0 %v6299
      %6474 = vmatpush2.bf16.msra.mxu0 %v6298
      %6475 = vmatprep.subr.bf16.mxu0 %v6295
      %6476 = vmatpush2.bf16.msra.mxu0 %v6294
      %6477 = vmatprep.subr.bf16.mxu0 %v6291
      %6478 = vmatpush2.bf16.msra.mxu0 %v6290
      %6479 = vmatprep.subr.bf16.mxu0 %v6287
      %6480 = vmatpush2.bf16.msra.mxu0 %v6286
      %6481 = vmatprep.subr.bf16.mxu0 %v6283
      %6482 = vmatpush2.bf16.msra.mxu0 %v6282
      %6483 = vmatprep.subr.bf16.mxu0 %v6279
      %6484 = vmatpush2.bf16.msra.mxu0 %v6278
      %6485 = vmatprep.subr.bf16.mxu0 %v6275
      %6486 = vmatpush2.bf16.msra.mxu0 %v6274
      %6487 = vmatprep.subr.bf16.mxu0 %v6271
      %6488 = vmatpush2.bf16.msra.mxu0 %v6270
      %6489 = vmatprep.mubr.bf16.mxu0 %v5908
      %6490 = vmatmul.mubr.bf16.gmra.mxu0 %v5907
      %v6491 = vpop.f32.mrf.mxu0
      %v6492 = vadd.f32 %v5899, %v6491
      %v6493 = vpop.f32.mrf.mxu0
      %v6494 = vadd.f32 %v5899, %v6493
      %v6495 = vpop.f32.mrf.mxu0
      %v6496 = vpop.f32.mrf.mxu0
      %6497 = vdwg.mxu0
      %6498 = vmatprep.subr.bf16.mxu0 %v6331
      %6499 = vmatpush1.bf16.msra.mxu0 %v6330
      %6500 = vmatprep.subr.bf16.mxu0 %v6327
      %6501 = vmatpush1.bf16.msra.mxu0 %v6326
      %6502 = vmatprep.subr.bf16.mxu0 %v6323
      %6503 = vmatpush1.bf16.msra.mxu0 %v6322
      %6504 = vmatprep.subr.bf16.mxu0 %v6319
      %6505 = vmatpush1.bf16.msra.mxu0 %v6318
      %6506 = vmatprep.subr.bf16.mxu0 %v6315
      %6507 = vmatpush1.bf16.msra.mxu0 %v6314
      %6508 = vmatprep.subr.bf16.mxu0 %v6311
      %6509 = vmatpush1.bf16.msra.mxu0 %v6310
      %6510 = vmatprep.subr.bf16.mxu0 %v6307
      %6511 = vmatpush1.bf16.msra.mxu0 %v6306
      %6512 = vmatprep.subr.bf16.mxu0 %v6303
      %6513 = vmatpush1.bf16.msra.mxu0 %v6302
      %6514 = vmatprep.subr.bf16.mxu0 0
      %6515 = vmatpush2.bf16.msra.mxu0 0
      %6516 = vmatprep.subr.bf16.mxu0 0
      %6517 = vmatpush2.bf16.msra.mxu0 0
      %6518 = vmatprep.subr.bf16.mxu0 0
      %6519 = vmatpush2.bf16.msra.mxu0 0
      %6520 = vmatprep.subr.bf16.mxu0 0
      %6521 = vmatpush2.bf16.msra.mxu0 0
      %6522 = vmatprep.subr.bf16.mxu0 0
      %6523 = vmatpush2.bf16.msra.mxu0 0
      %6524 = vmatprep.subr.bf16.mxu0 %v6343
      %6525 = vmatpush2.bf16.msra.mxu0 %v6342
      %6526 = vmatprep.subr.bf16.mxu0 %v6339
      %6527 = vmatpush2.bf16.msra.mxu0 %v6338
      %6528 = vmatprep.subr.bf16.mxu0 %v6335
      %6529 = vmatpush2.bf16.msra.mxu0 %v6334
      %6530 = vmatprep.mubr.bf16.mxu0 %v6455
      %6531 = vmatmul.mubr.bf16.gmra.mxu0 %v5909
      %v6532 = vpop.f32.mrf.mxu0
      %v6533 = vadd.f32 %v6492, %v6532
      %v6534 = vpop.f32.mrf.mxu0
      %v6535 = vadd.f32 %v6494, %v6534
      %v6536 = vpop.f32.mrf.mxu0
      %v6537 = vpop.f32.mrf.mxu0
      %6538 = vdwg.mxu0
      %6539 = vmatprep.subr.bf16.mxu0 %v6269
      %6540 = vmatpush1.bf16.msra.mxu0 %v6268
      %6541 = vmatprep.subr.bf16.mxu0 %v6265
      %6542 = vmatpush1.bf16.msra.mxu0 %v6264
      %6543 = vmatprep.subr.bf16.mxu0 %v6261
      %6544 = vmatpush1.bf16.msra.mxu0 %v6260
      %6545 = vmatprep.subr.bf16.mxu0 %v6257
      %6546 = vmatpush1.bf16.msra.mxu0 %v6256
      %6547 = vmatprep.subr.bf16.mxu0 %v6253
      %6548 = vmatpush1.bf16.msra.mxu0 %v6252
      %6549 = vmatprep.subr.bf16.mxu0 %v6249
      %6550 = vmatpush1.bf16.msra.mxu0 %v6248
      %6551 = vmatprep.subr.bf16.mxu0 %v6245
      %6552 = vmatpush1.bf16.msra.mxu0 %v6244
      %6553 = vmatprep.subr.bf16.mxu0 %v6241
      %6554 = vmatpush1.bf16.msra.mxu0 %v6240
      %6555 = vmatprep.subr.bf16.mxu0 %v6301
      %6556 = vmatpush2.bf16.msra.mxu0 %v6300
      %6557 = vmatprep.subr.bf16.mxu0 %v6297
      %6558 = vmatpush2.bf16.msra.mxu0 %v6296
      %6559 = vmatprep.subr.bf16.mxu0 %v6293
      %6560 = vmatpush2.bf16.msra.mxu0 %v6292
      %6561 = vmatprep.subr.bf16.mxu0 %v6289
      %6562 = vmatpush2.bf16.msra.mxu0 %v6288
      %6563 = vmatprep.subr.bf16.mxu0 %v6285
      %6564 = vmatpush2.bf16.msra.mxu0 %v6284
      %6565 = vmatprep.subr.bf16.mxu0 %v6281
      %6566 = vmatpush2.bf16.msra.mxu0 %v6280
      %6567 = vmatprep.subr.bf16.mxu0 %v6277
      %6568 = vmatpush2.bf16.msra.mxu0 %v6276
      %6569 = vmatprep.subr.bf16.mxu0 %v6273
      %6570 = vmatpush2.bf16.msra.mxu0 %v6272
      %6571 = vmatprep.mubr.bf16.mxu0 %v5908
      %6572 = vmatmul.mubr.bf16.gmra.mxu0 %v5907
      %v6573 = vpop.f32.mrf.mxu0
      %v6574 = vadd.f32 %v5899, %v6573
      %v6575 = vpop.f32.mrf.mxu0
      %v6576 = vadd.f32 %v5899, %v6575
      %v6577 = vpop.f32.mrf.mxu0
      %v6578 = vpop.f32.mrf.mxu0
      %6579 = vdwg.mxu0
      %6580 = vmatprep.subr.bf16.mxu0 %v6333
      %6581 = vmatpush1.bf16.msra.mxu0 %v6332
      %6582 = vmatprep.subr.bf16.mxu0 %v6329
      %6583 = vmatpush1.bf16.msra.mxu0 %v6328
      %6584 = vmatprep.subr.bf16.mxu0 %v6325
      %6585 = vmatpush1.bf16.msra.mxu0 %v6324
      %6586 = vmatprep.subr.bf16.mxu0 %v6321
      %6587 = vmatpush1.bf16.msra.mxu0 %v6320
      %6588 = vmatprep.subr.bf16.mxu0 %v6317
      %6589 = vmatpush1.bf16.msra.mxu0 %v6316
      %6590 = vmatprep.subr.bf16.mxu0 %v6313
      %6591 = vmatpush1.bf16.msra.mxu0 %v6312
      %6592 = vmatprep.subr.bf16.mxu0 %v6309
      %6593 = vmatpush1.bf16.msra.mxu0 %v6308
      %6594 = vmatprep.subr.bf16.mxu0 %v6305
      %6595 = vmatpush1.bf16.msra.mxu0 %v6304
      %6596 = vmatprep.subr.bf16.mxu0 0
      %6597 = vmatpush2.bf16.msra.mxu0 0
      %6598 = vmatprep.subr.bf16.mxu0 0
      %6599 = vmatpush2.bf16.msra.mxu0 0
      %6600 = vmatprep.subr.bf16.mxu0 0
      %6601 = vmatpush2.bf16.msra.mxu0 0
      %6602 = vmatprep.subr.bf16.mxu0 0
      %6603 = vmatpush2.bf16.msra.mxu0 0
      %6604 = vmatprep.subr.bf16.mxu0 0
      %6605 = vmatpush2.bf16.msra.mxu0 0
      %6606 = vmatprep.subr.bf16.mxu0 %v6345
      %6607 = vmatpush2.bf16.msra.mxu0 %v6344
      %6608 = vmatprep.subr.bf16.mxu0 %v6341
      %6609 = vmatpush2.bf16.msra.mxu0 %v6340
      %6610 = vmatprep.subr.bf16.mxu0 %v6337
      %6611 = vmatpush2.bf16.msra.mxu0 %v6336
      %6612 = vmatprep.mubr.bf16.mxu0 %v6455
      %6613 = vmatmul.mubr.bf16.gmra.mxu0 %v5909
      %v6614 = vpop.f32.mrf.mxu0
      %v6615 = vadd.f32 %v6574, %v6614
      %v6616 = vpop.f32.mrf.mxu0
      %v6617 = vadd.f32 %v6576, %v6616
      %v6618 = vpop.f32.mrf.mxu0
      %v6619 = vpop.f32.mrf.mxu0
      %6620 = vdwg.mxu0
      %v6621 = vmax.f32 %v6533, 0.0
      %v6622 = vmax.f32 %v6535, 0.0
      %v6623 = vmax.f32 %v6615, 0.0
      %v6624 = vmax.f32 %v6617, 0.0
      %6625 = vst [vmem:[%s251] sm:$0xff] %v6621
      %6626 = vst [vmem:[%s251 + $0x8] sm:$0xff] %v6622
      %6627 = vst [vmem:[%s251 + $0x10] sm:$0xff] %v6623
      %6628 = vst [vmem:[%s251 + $0x18] sm:$0xff] %v6624
      %p6629 = scmp.lt.s32.totalorder %s17, 1
      %s6630 = scalar_select %p6629, %s17, 1
      %s6631 = smul.addr %s6630, 4
      %s6632 = smul.addr %s6631, 8
      %s6633 = scalar_lea.vmem %s6, %s6632
      // Predicated region
      $region45: #{conv_relu_encoder3d_forward.1} parent=43 // pred_check
        %p6634 = pneg %p166
      $region46: #{conv_relu_encoder3d_forward.1} parent=43 // pred_check_branch
        %6636 = sbr.rel (%p6634) target = $region48
      $region47: #{conv_relu_encoder3d_forward.1} parent=43 // pred_region
        _
      $region48: #{conv_relu_encoder3d_forward.1} parent=43 // pred_fallthru
        _
    $region44: #{conv_relu_encoder3d_forward.1} parent=5 // pred_fallthru
      _
    %p6637 = scmp.le.s32.totalorder 2, %s12
    // Predicated region
    $region49: #{conv_relu_encoder3d_forward.1} parent=5 // pred_check
      %p6638 = pneg %p6637
    $region50: #{conv_relu_encoder3d_forward.1} parent=5 // pred_check_branch
      %6640 = sbr.rel (%p6638) target = $region52
    $region51: #{conv_relu_encoder3d_forward.1} parent=5 // pred_region
      %s6641 = ssub.s32 %s12, 2
      // Predicated region
      $region53: #{conv_relu_encoder3d_forward.1} parent=51 // pred_check
        %p6642 = pneg %p172
      $region54: #{conv_relu_encoder3d_forward.1} parent=51 // pred_check_branch
        %6644 = sbr.rel (%p6642) target = $region56
      $region55: #{conv_relu_encoder3d_forward.1} parent=51 // pred_region
        %p6645 = scmp.lt.s32.totalorder %s18, 1
        %s6646 = scalar_select %p6645, %s18, 1
        %s6647 = smul.addr %s6646, 4
        %s6648 = smul.addr %s6647, 8
        %s6649 = scalar_lea.vmem %s6, %s6648
      $region56: #{conv_relu_encoder3d_forward.1} parent=51 // pred_fallthru
        _
    $region52: #{conv_relu_encoder3d_forward.1} parent=5 // pred_fallthru
      _
  $region6: #{conv_relu_encoder3d_forward.1} parent=0 // loop_footer
    %s16 = sadd.s32 1, %s12
  $region7: #{conv_relu_encoder3d_forward.1} parent=0 // loop_footer_branch
    %11 = sbr.rel target = $region3
  $region8: #{conv_relu_encoder3d_forward.1} parent=0 // loop_exit
    _

</llo_original>
